<compile_context>
chip_gen: v5e
topology: v5e:2x2
jax: 0.10.0
libtpu: 0.0.40
codegen_flags: <defaults>
</compile_context>

<pallas_src>
import numpy as np

import jax
import jax.numpy as jnp
from jax.experimental import pallas as pl
from jax.experimental.pallas import tpu as pltpu


# ----------------------------------------------------------------------------
# Offline packing: dense torch conv weights -> banded (Toeplitz) matmul weights
# ----------------------------------------------------------------------------
def pack_conv_banded(w, b, *, win):
    """w: (Cout, Cin, kh, kw) torch layout, b: (Cout,).  Returns
    band (kh, Win*Cin, Wo*Cout) and bias_row (1, Wo*Cout) such that, with the
    activation stored as X[h, w*Cin + c], the conv output (before ReLU) is
        Y = sum_dy X[dy:dy+Ho, :] @ band[dy] + bias_row .
    Output w-blocks are permuted even-w-first so the 2x2 max-pool along W is a
    contiguous lane-halves max."""
    w = np.asarray(w, np.float32)
    b = np.asarray(b, np.float32)
    cout, cin, kh, kw = w.shape
    wo = win - kw + 1
    worder = list(range(0, wo, 2)) + list(range(1, wo, 2))       # even w first
    band = np.zeros((kh, win * cin, wo * cout), np.float32)
    for dy in range(kh):
        for j, o in enumerate(worder):
            for dx in range(kw):
                wi = o + dx
                band[dy, wi * cin:(wi + 1) * cin, j * cout:(j + 1) * cout] = w[:, :, dy, dx].T
    bias_row = np.tile(b[None, :], (1, wo))                      # same bias for every w block
    return jnp.asarray(band), jnp.asarray(bias_row)


def pack_fc10(w, b):
    """fc10 weight (256, 512) with torch NCHW-flatten columns (c*4 + h*2 + w, C=128,H=W=2)
    -> (512, 256) with columns reordered to our NHWC-flatten order h*256 + w*128 + c."""
    w = np.asarray(w, np.float32)
    b = np.asarray(b, np.float32)
    out_f = w.shape[0]
    w4 = w.reshape(out_f, 128, 2, 2)                             # (out, c, h, w)
    w_nhwc = w4.transpose(0, 2, 3, 1).reshape(out_f, 512)        # cols: h*256 + w*128 + c
    return jnp.asarray(np.ascontiguousarray(w_nhwc.T)), jnp.asarray(b[None, :])


# ----------------------------------------------------------------------------
# In-kernel helpers (straight-line, fully unrolled; only dots / slices / maxes)
# ----------------------------------------------------------------------------
def _conv_relu_poolw(src_ref, band_ref, bias, *, kh, ho, wo, cout, lead=None):
    """Banded conv + bias + ReLU + W-direction 2x2 max.  Returns (ho, (wo//2)*cout)."""
    def load(dy):
        if lead is None:
            return src_ref[pl.ds(dy, ho), :]
        return src_ref[lead, pl.ds(dy, ho), :]

    acc = jnp.dot(load(0), band_ref[0], preferred_element_type=jnp.float32)
    for dy in range(1, kh):
        acc = acc + jnp.dot(load(dy), band_ref[dy], preferred_element_type=jnp.float32)
    y = jnp.maximum(acc + bias, 0.0)                  # (ho, wo*cout), even-w blocks first
    e, w2 = (wo + 1) // 2, wo // 2
    # pooled w-block p = max(block for w=2p, block for w=2p+1); both halves are contiguous.
    return jnp.maximum(y[:, :w2 * cout], y[:, e * cout:(e + w2) * cout])


def _forward_kernel(x_ref,
                    band0_ref, bias0_ref,
                    band3_ref, bias3_ref,
                    band6_ref, bias6_ref,
                    w1_ref, b1_ref, w2_ref, b2_ref,
                    o_ref,
                    p1_ref, p2_ref, p3_ref):
    # ---- layers 0..2: conv 3x3 (3->32) + ReLU + pool -> p1 (15, 15*32=480) ----
    pw = _conv_relu_poolw(x_ref, band0_ref, bias0_ref[...],
                          kh=3, ho=30, wo=30, cout=32, lead=0)    # (30, 480)
    for i in range(15):                                           # H-direction pool
        p1_ref[pl.ds(i, 1), :] = jnp.maximum(pw[2 * i:2 * i + 1, :], pw[2 * i + 1:2 * i + 2, :])

    # ---- layers 3..5: conv 2x2 (32->64) + ReLU + pool -> p2 (7, 7*64=448) ----
    pw = _conv_relu_poolw(p1_ref, band3_ref, bias3_ref[...],
                          kh=2, ho=14, wo=14, cout=64)            # (14, 448)
    for i in range(7):
        p2_ref[pl.ds(i, 1), :] = jnp.maximum(pw[2 * i:2 * i + 1, :], pw[2 * i + 1:2 * i + 2, :])

    # ---- layers 6..8: conv 3x3 (64->128) + ReLU + pool -> p3 (1, 512) flat NHWC ----
    pw = _conv_relu_poolw(p2_ref, band6_ref, bias6_ref[...],
                          kh=3, ho=5, wo=5, cout=128)             # (5, 256)  (row 4 dropped below)
    for i in range(2):
        p3_ref[:, pl.ds(i * 256, 256)] = jnp.maximum(pw[2 * i:2 * i + 1, :],
                                                     pw[2 * i + 1:2 * i + 2, :])

    # ---- layers 9..12: flatten (done by construction), FC 512->256, ReLU, FC 256->10 ----
    feat = p3_ref[...]                                            # (1, 512)
    hid = jnp.dot(feat, w1_ref[...], preferred_element_type=jnp.float32) + b1_ref[...]
    hid = jnp.maximum(hid, 0.0)
    logits = jnp.dot(hid, w2_ref[...], preferred_element_type=jnp.float32) + b2_ref[...]
    o_ref[0] = logits.astype(o_ref.dtype)                         # (1, 10)


# ----------------------------------------------------------------------------
# pallas_call wrapper: one launch for the whole network, grid over the batch
# ----------------------------------------------------------------------------
def _full_spec(shape):
    ndim = len(shape)
    return pl.BlockSpec(shape, lambda n, _nd=ndim: (0,) * _nd)


def cnn_forward(x2d, params):
    """x2d: (N, 32, 96) f32 with lane index = w*3 + c (NHWC flattened over (W, C))."""
    n = x2d.shape[0]
    band0, bias0 = params["conv0"]
    band3, bias3 = params["conv3"]
    band6, bias6 = params["conv6"]
    w1, b1 = params["fc10"]
    w2, b2 = params["fc12"]

    out = pl.pallas_call(
        _forward_kernel,
        grid=(n,),
        in_specs=[
            pl.BlockSpec((1, 32, 96), lambda i: (i, 0, 0)),
            _full_spec(band0.shape), _full_spec(bias0.shape),
            _full_spec(band3.shape), _full_spec(bias3.shape),
            _full_spec(band6.shape), _full_spec(bias6.shape),
            _full_spec(w1.shape), _full_spec(b1.shape),
            _full_spec(w2.shape), _full_spec(b2.shape),
        ],
        out_specs=pl.BlockSpec((1, 1, 10), lambda i: (i, 0, 0)),
        out_shape=jax.ShapeDtypeStruct((n, 1, 10), jnp.float32),
        scratch_shapes=[
            pltpu.VMEM((15, 480), jnp.float32),   # pool1 output
            pltpu.VMEM((7, 448), jnp.float32),    # pool2 output
            pltpu.VMEM((1, 512), jnp.float32),    # pool3 output, already flattened (NHWC)
        ],
        compiler_params=pltpu.CompilerParams(
            dimension_semantics=("parallel",),
            vmem_limit_bytes=40 * 1024 * 1024,    # ~8.5 MB of banded weights (x2 if buffered)
        ),
    )(x2d, band0, bias0, band3, bias3, band6, bias6, w1, b1, w2, b2)
    return out[:, 0, :]                            # (N, 10)


@jax.jit
def forward(x_nchw, params):
    # TODO(synk): the tiny (N,3,32,32) NCHW->NHWC transpose (~12 KB/image) is left to XLA;
    # it could be folded into the banded conv0 weight at the cost of a 3x larger band.
    n = x_nchw.shape[0]
    x = jnp.transpose(x_nchw, (0, 2, 3, 1)).astype(jnp.float32).reshape(n, 32, 96)
    return cnn_forward(x, params)


# ----------------------------------------------------------------------------
# Deterministic PyTorch-style parameter init + offline packing
# ----------------------------------------------------------------------------
def init_conv(key, cout, cin, kh, kw):
    k1, k2 = jax.random.split(key)
    bound = 1.0 / np.sqrt(cin * kh * kw)
    w = jax.random.uniform(k1, (cout, cin, kh, kw), jnp.float32, -bound, bound)
    b = jax.random.uniform(k2, (cout,), jnp.float32, -bound, bound)
    return w, b


def init_linear(key, cout, cin):
    k1, k2 = jax.random.split(key)
    bound = 1.0 / np.sqrt(cin)
    w = jax.random.uniform(k1, (cout, cin), jnp.float32, -bound, bound)
    b = jax.random.uniform(k2, (cout,), jnp.float32, -bound, bound)
    return w, b


def make_params(seed=42):
    key = jax.random.PRNGKey(seed)
    ks = jax.random.split(key, 5)
    w0, b0 = init_conv(ks[0], 32, 3, 3, 3)
    w3, b3 = init_conv(ks[1], 64, 32, 2, 2)
    w6, b6 = init_conv(ks[2], 128, 64, 3, 3)
    w10, b10 = init_linear(ks[3], 256, 512)
    w12, b12 = init_linear(ks[4], 10, 256)
    packed = {
        "conv0": pack_conv_banded(w0, b0, win=32),   # -> band (3, 96, 960)
        "conv3": pack_conv_banded(w3, b3, win=15),   # -> band (2, 480, 896)
        "conv6": pack_conv_banded(w6, b6, win=7),    # -> band (3, 448, 640)
        "fc10": pack_fc10(w10, b10),                 # -> (512, 256), (1, 256)
        "fc12": (jnp.asarray(np.asarray(w12).T), jnp.asarray(np.asarray(b12)[None, :])),
    }
    raw = (w0, b0, w3, b3, w6, b6, w10, b10, w12, b12)
    return packed, raw


# ----------------------------------------------------------------------------
# Pure-JAX reference (matches the PyTorch Model.forward) for a sanity check
# ----------------------------------------------------------------------------
def reference_forward(x, raw):
    w0, b0, w3, b3, w6, b6, w10, b10, w12, b12 = raw

    def conv(x, w, b):
        y = jax.lax.conv_general_dilated(x, w, (1, 1), "VALID",
                                         dimension_numbers=("NCHW", "OIHW", "NCHW"))
        return jax.nn.relu(y + b[None, :, None, None])

    def pool(x):
        return jax.lax.reduce_window(x, -jnp.inf, jax.lax.max,
                                     (1, 1, 2, 2), (1, 1, 2, 2), "VALID")

    x = pool(conv(x, w0, b0))
    x = pool(conv(x, w3, b3))
    x = pool(conv(x, w6, b6))
    x = x.reshape(x.shape[0], -1)                 # torch NCHW flatten -> 512
    x = jax.nn.relu(x @ w10.T + b10)
    return x @ w12.T + b12


if __name__ == "__main__":
    # Spatial size must be 32x32 so the flattened features == 512 (Linear(512, 256)).
    x = jax.random.normal(jax.random.PRNGKey(0), (2, 3, 32, 32), dtype=jnp.float32)

    params, raw = make_params()
    out = jax.block_until_ready(forward(x, params))
    assert out.shape == (2, 10), out.shape

    ref = jax.block_until_ready(reference_forward(x, raw))
    np.testing.assert_allclose(np.asarray(out), np.asarray(ref), rtol=2e-2, atol=2e-2)
    print("KERNEL_OK")
</pallas_src>

<mosaic_0001>
module attributes {stable_mosaic.version = 11 : i64} {
  func.func @_forward_kernel(%arg0: i32, %arg1: memref<1x32x96xf32, #tpu.memory_space<vmem>>, %arg2: memref<3x96x960xf32, #tpu.memory_space<vmem>>, %arg3: memref<1x960xf32, #tpu.memory_space<vmem>>, %arg4: memref<2x480x896xf32, #tpu.memory_space<vmem>>, %arg5: memref<1x896xf32, #tpu.memory_space<vmem>>, %arg6: memref<3x448x640xf32, #tpu.memory_space<vmem>>, %arg7: memref<1x640xf32, #tpu.memory_space<vmem>>, %arg8: memref<512x256xf32, #tpu.memory_space<vmem>>, %arg9: memref<1x256xf32, #tpu.memory_space<vmem>>, %arg10: memref<256x10xf32, #tpu.memory_space<vmem>>, %arg11: memref<1x10xf32, #tpu.memory_space<vmem>>, %arg12: memref<1x1x10xf32, #tpu.memory_space<vmem>>, %arg13: memref<15x480xf32, #tpu.memory_space<vmem>>, %arg14: memref<7x448xf32, #tpu.memory_space<vmem>>, %arg15: memref<1x512xf32, #tpu.memory_space<vmem>>) attributes {dimension_semantics = [#tpu.dimension_semantics<parallel>], iteration_bounds = array<i64: 2>, scalar_prefetch = 0 : i64, scratch_operands = 3 : i64, tpu.core_type = #tpu.core_type<tc>, window_params = [{transform_indices = @transform_0, window_bounds = array<i64: 1, 32, 96>}, {pipeline_mode = #tpu.pipeline_mode<synchronous>, transform_indices = @transform_1, window_bounds = array<i64: 3, 96, 960>}, {pipeline_mode = #tpu.pipeline_mode<synchronous>, transform_indices = @transform_2, window_bounds = array<i64: 1, 960>}, {pipeline_mode = #tpu.pipeline_mode<synchronous>, transform_indices = @transform_3, window_bounds = array<i64: 2, 480, 896>}, {pipeline_mode = #tpu.pipeline_mode<synchronous>, transform_indices = @transform_4, window_bounds = array<i64: 1, 896>}, {pipeline_mode = #tpu.pipeline_mode<synchronous>, transform_indices = @transform_5, window_bounds = array<i64: 3, 448, 640>}, {pipeline_mode = #tpu.pipeline_mode<synchronous>, transform_indices = @transform_6, window_bounds = array<i64: 1, 640>}, {pipeline_mode = #tpu.pipeline_mode<synchronous>, transform_indices = @transform_7, window_bounds = array<i64: 512, 256>}, {pipeline_mode = #tpu.pipeline_mode<synchronous>, transform_indices = @transform_8, window_bounds = array<i64: 1, 256>}, {pipeline_mode = #tpu.pipeline_mode<synchronous>, transform_indices = @transform_9, window_bounds = array<i64: 256, 10>}, {pipeline_mode = #tpu.pipeline_mode<synchronous>, transform_indices = @transform_10, window_bounds = array<i64: 1, 10>}, {transform_indices = @transform_11, window_bounds = array<i64: 1, 1, 10>}]} {
    %c0 = arith.constant 0 : index
    %c0_0 = arith.constant 0 : index
    %0 = vector.load %arg3[%c0, %c0_0] : memref<1x960xf32, #tpu.memory_space<vmem>>, vector<1x960xf32>
    %c0_1 = arith.constant 0 : index
    %c0_2 = arith.constant 0 : index
    %c0_3 = arith.constant 0 : index
    %1 = vector.load %arg1[%c0_1, %c0_2, %c0_3] : memref<1x32x96xf32, #tpu.memory_space<vmem>>, vector<1x30x96xf32>
    %2 = vector.shape_cast %1 : vector<1x30x96xf32> to vector<30x96xf32>
    %c0_4 = arith.constant 0 : index
    %c0_5 = arith.constant 0 : index
    %c0_6 = arith.constant 0 : index
    %3 = vector.load %arg2[%c0_4, %c0_5, %c0_6] : memref<3x96x960xf32, #tpu.memory_space<vmem>>, vector<1x96x960xf32>
    %4 = vector.shape_cast %3 : vector<1x96x960xf32> to vector<96x960xf32>
    %cst = arith.constant dense<0.000000e+00> : vector<30x960xf32>
    %5 = tpu.matmul %2, %4, %cst {dimension_numbers = #tpu.dot_dimension_numbers<[1], [0], [0], [1], [0, 0, 1, 1], [], []>} : vector<30x96xf32>, vector<96x960xf32>, vector<30x960xf32> -> vector<30x960xf32>
    %c0_7 = arith.constant 0 : index
    %c1 = arith.constant 1 : index
    %c0_8 = arith.constant 0 : index
    %6 = vector.load %arg1[%c0_7, %c1, %c0_8] : memref<1x32x96xf32, #tpu.memory_space<vmem>>, vector<1x30x96xf32>
    %7 = vector.shape_cast %6 : vector<1x30x96xf32> to vector<30x96xf32>
    %c1_9 = arith.constant 1 : index
    %c0_10 = arith.constant 0 : index
    %c0_11 = arith.constant 0 : index
    %8 = vector.load %arg2[%c1_9, %c0_10, %c0_11] : memref<3x96x960xf32, #tpu.memory_space<vmem>>, vector<1x96x960xf32>
    %9 = vector.shape_cast %8 : vector<1x96x960xf32> to vector<96x960xf32>
    %cst_12 = arith.constant dense<0.000000e+00> : vector<30x960xf32>
    %10 = tpu.matmul %7, %9, %cst_12 {dimension_numbers = #tpu.dot_dimension_numbers<[1], [0], [0], [1], [0, 0, 1, 1], [], []>} : vector<30x96xf32>, vector<96x960xf32>, vector<30x960xf32> -> vector<30x960xf32>
    %11 = arith.addf %5, %10 : vector<30x960xf32>
    %c0_13 = arith.constant 0 : index
    %c2 = arith.constant 2 : index
    %c0_14 = arith.constant 0 : index
    %12 = vector.load %arg1[%c0_13, %c2, %c0_14] : memref<1x32x96xf32, #tpu.memory_space<vmem>>, vector<1x30x96xf32>
    %13 = vector.shape_cast %12 : vector<1x30x96xf32> to vector<30x96xf32>
    %c2_15 = arith.constant 2 : index
    %c0_16 = arith.constant 0 : index
    %c0_17 = arith.constant 0 : index
    %14 = vector.load %arg2[%c2_15, %c0_16, %c0_17] : memref<3x96x960xf32, #tpu.memory_space<vmem>>, vector<1x96x960xf32>
    %15 = vector.shape_cast %14 : vector<1x96x960xf32> to vector<96x960xf32>
    %cst_18 = arith.constant dense<0.000000e+00> : vector<30x960xf32>
    %16 = tpu.matmul %13, %15, %cst_18 {dimension_numbers = #tpu.dot_dimension_numbers<[1], [0], [0], [1], [0, 0, 1, 1], [], []>} : vector<30x96xf32>, vector<96x960xf32>, vector<30x960xf32> -> vector<30x960xf32>
    %17 = arith.addf %11, %16 : vector<30x960xf32>
    %18 = vector.broadcast %0 : vector<1x960xf32> to vector<30x960xf32>
    %19 = arith.addf %17, %18 : vector<30x960xf32>
    %cst_19 = arith.constant 0.000000e+00 : f32
    %20 = vector.broadcast %cst_19 : f32 to vector<30x960xf32>
    %21 = arith.maximumf %19, %20 : vector<30x960xf32>
    %22 = vector.extract_strided_slice %21 {offsets = [0, 0], sizes = [30, 480], strides = [1, 1]} : vector<30x960xf32> to vector<30x480xf32>
    %23 = vector.extract_strided_slice %21 {offsets = [0, 480], sizes = [30, 480], strides = [1, 1]} : vector<30x960xf32> to vector<30x480xf32>
    %24 = arith.maximumf %22, %23 : vector<30x480xf32>
    %25 = vector.extract_strided_slice %24 {offsets = [0, 0], sizes = [1, 480], strides = [1, 1]} : vector<30x480xf32> to vector<1x480xf32>
    %26 = vector.extract_strided_slice %24 {offsets = [1, 0], sizes = [1, 480], strides = [1, 1]} : vector<30x480xf32> to vector<1x480xf32>
    %27 = arith.maximumf %25, %26 : vector<1x480xf32>
    %c0_20 = arith.constant 0 : index
    %c0_21 = arith.constant 0 : index
    %28 = vector.load %arg13[%c0_20, %c0_21] : memref<15x480xf32, #tpu.memory_space<vmem>>, vector<1x480xf32>
    tpu.vector_store %arg13[%c0_20, %c0_21], %27 {strides = array<i32>} : memref<15x480xf32, #tpu.memory_space<vmem>>, vector<1x480xf32>,
    %29 = vector.extract_strided_slice %24 {offsets = [2, 0], sizes = [1, 480], strides = [1, 1]} : vector<30x480xf32> to vector<1x480xf32>
    %30 = vector.extract_strided_slice %24 {offsets = [3, 0], sizes = [1, 480], strides = [1, 1]} : vector<30x480xf32> to vector<1x480xf32>
    %31 = arith.maximumf %29, %30 : vector<1x480xf32>
    %c1_22 = arith.constant 1 : index
    %c0_23 = arith.constant 0 : index
    %32 = vector.load %arg13[%c1_22, %c0_23] : memref<15x480xf32, #tpu.memory_space<vmem>>, vector<1x480xf32>
    tpu.vector_store %arg13[%c1_22, %c0_23], %31 {strides = array<i32>} : memref<15x480xf32, #tpu.memory_space<vmem>>, vector<1x480xf32>,
    %33 = vector.extract_strided_slice %24 {offsets = [4, 0], sizes = [1, 480], strides = [1, 1]} : vector<30x480xf32> to vector<1x480xf32>
    %34 = vector.extract_strided_slice %24 {offsets = [5, 0], sizes = [1, 480], strides = [1, 1]} : vector<30x480xf32> to vector<1x480xf32>
    %35 = arith.maximumf %33, %34 : vector<1x480xf32>
    %c2_24 = arith.constant 2 : index
    %c0_25 = arith.constant 0 : index
    %36 = vector.load %arg13[%c2_24, %c0_25] : memref<15x480xf32, #tpu.memory_space<vmem>>, vector<1x480xf32>
    tpu.vector_store %arg13[%c2_24, %c0_25], %35 {strides = array<i32>} : memref<15x480xf32, #tpu.memory_space<vmem>>, vector<1x480xf32>,
    %37 = vector.extract_strided_slice %24 {offsets = [6, 0], sizes = [1, 480], strides = [1, 1]} : vector<30x480xf32> to vector<1x480xf32>
    %38 = vector.extract_strided_slice %24 {offsets = [7, 0], sizes = [1, 480], strides = [1, 1]} : vector<30x480xf32> to vector<1x480xf32>
    %39 = arith.maximumf %37, %38 : vector<1x480xf32>
    %c3 = arith.constant 3 : index
    %c0_26 = arith.constant 0 : index
    %40 = vector.load %arg13[%c3, %c0_26] : memref<15x480xf32, #tpu.memory_space<vmem>>, vector<1x480xf32>
    tpu.vector_store %arg13[%c3, %c0_26], %39 {strides = array<i32>} : memref<15x480xf32, #tpu.memory_space<vmem>>, vector<1x480xf32>,
    %41 = vector.extract_strided_slice %24 {offsets = [8, 0], sizes = [1, 480], strides = [1, 1]} : vector<30x480xf32> to vector<1x480xf32>
    %42 = vector.extract_strided_slice %24 {offsets = [9, 0], sizes = [1, 480], strides = [1, 1]} : vector<30x480xf32> to vector<1x480xf32>
    %43 = arith.maximumf %41, %42 : vector<1x480xf32>
    %c4 = arith.constant 4 : index
    %c0_27 = arith.constant 0 : index
    %44 = vector.load %arg13[%c4, %c0_27] : memref<15x480xf32, #tpu.memory_space<vmem>>, vector<1x480xf32>
    tpu.vector_store %arg13[%c4, %c0_27], %43 {strides = array<i32>} : memref<15x480xf32, #tpu.memory_space<vmem>>, vector<1x480xf32>,
    %45 = vector.extract_strided_slice %24 {offsets = [10, 0], sizes = [1, 480], strides = [1, 1]} : vector<30x480xf32> to vector<1x480xf32>
    %46 = vector.extract_strided_slice %24 {offsets = [11, 0], sizes = [1, 480], strides = [1, 1]} : vector<30x480xf32> to vector<1x480xf32>
    %47 = arith.maximumf %45, %46 : vector<1x480xf32>
    %c5 = arith.constant 5 : index
    %c0_28 = arith.constant 0 : index
    %48 = vector.load %arg13[%c5, %c0_28] : memref<15x480xf32, #tpu.memory_space<vmem>>, vector<1x480xf32>
    tpu.vector_store %arg13[%c5, %c0_28], %47 {strides = array<i32>} : memref<15x480xf32, #tpu.memory_space<vmem>>, vector<1x480xf32>,
    %49 = vector.extract_strided_slice %24 {offsets = [12, 0], sizes = [1, 480], strides = [1, 1]} : vector<30x480xf32> to vector<1x480xf32>
    %50 = vector.extract_strided_slice %24 {offsets = [13, 0], sizes = [1, 480], strides = [1, 1]} : vector<30x480xf32> to vector<1x480xf32>
    %51 = arith.maximumf %49, %50 : vector<1x480xf32>
    %c6 = arith.constant 6 : index
    %c0_29 = arith.constant 0 : index
    %52 = vector.load %arg13[%c6, %c0_29] : memref<15x480xf32, #tpu.memory_space<vmem>>, vector<1x480xf32>
    tpu.vector_store %arg13[%c6, %c0_29], %51 {strides = array<i32>} : memref<15x480xf32, #tpu.memory_space<vmem>>, vector<1x480xf32>,
    %53 = vector.extract_strided_slice %24 {offsets = [14, 0], sizes = [1, 480], strides = [1, 1]} : vector<30x480xf32> to vector<1x480xf32>
    %54 = vector.extract_strided_slice %24 {offsets = [15, 0], sizes = [1, 480], strides = [1, 1]} : vector<30x480xf32> to vector<1x480xf32>
    %55 = arith.maximumf %53, %54 : vector<1x480xf32>
    %c7 = arith.constant 7 : index
    %c0_30 = arith.constant 0 : index
    %56 = vector.load %arg13[%c7, %c0_30] : memref<15x480xf32, #tpu.memory_space<vmem>>, vector<1x480xf32>
    tpu.vector_store %arg13[%c7, %c0_30], %55 {strides = array<i32>} : memref<15x480xf32, #tpu.memory_space<vmem>>, vector<1x480xf32>,
    %57 = vector.extract_strided_slice %24 {offsets = [16, 0], sizes = [1, 480], strides = [1, 1]} : vector<30x480xf32> to vector<1x480xf32>
    %58 = vector.extract_strided_slice %24 {offsets = [17, 0], sizes = [1, 480], strides = [1, 1]} : vector<30x480xf32> to vector<1x480xf32>
    %59 = arith.maximumf %57, %58 : vector<1x480xf32>
    %c8 = arith.constant 8 : index
    %c0_31 = arith.constant 0 : index
    %60 = vector.load %arg13[%c8, %c0_31] : memref<15x480xf32, #tpu.memory_space<vmem>>, vector<1x480xf32>
    tpu.vector_store %arg13[%c8, %c0_31], %59 {strides = array<i32>} : memref<15x480xf32, #tpu.memory_space<vmem>>, vector<1x480xf32>,
    %61 = vector.extract_strided_slice %24 {offsets = [18, 0], sizes = [1, 480], strides = [1, 1]} : vector<30x480xf32> to vector<1x480xf32>
    %62 = vector.extract_strided_slice %24 {offsets = [19, 0], sizes = [1, 480], strides = [1, 1]} : vector<30x480xf32> to vector<1x480xf32>
    %63 = arith.maximumf %61, %62 : vector<1x480xf32>
    %c9 = arith.constant 9 : index
    %c0_32 = arith.constant 0 : index
    %64 = vector.load %arg13[%c9, %c0_32] : memref<15x480xf32, #tpu.memory_space<vmem>>, vector<1x480xf32>
    tpu.vector_store %arg13[%c9, %c0_32], %63 {strides = array<i32>} : memref<15x480xf32, #tpu.memory_space<vmem>>, vector<1x480xf32>,
    %65 = vector.extract_strided_slice %24 {offsets = [20, 0], sizes = [1, 480], strides = [1, 1]} : vector<30x480xf32> to vector<1x480xf32>
    %66 = vector.extract_strided_slice %24 {offsets = [21, 0], sizes = [1, 480], strides = [1, 1]} : vector<30x480xf32> to vector<1x480xf32>
    %67 = arith.maximumf %65, %66 : vector<1x480xf32>
    %c10 = arith.constant 10 : index
    %c0_33 = arith.constant 0 : index
    %68 = vector.load %arg13[%c10, %c0_33] : memref<15x480xf32, #tpu.memory_space<vmem>>, vector<1x480xf32>
    tpu.vector_store %arg13[%c10, %c0_33], %67 {strides = array<i32>} : memref<15x480xf32, #tpu.memory_space<vmem>>, vector<1x480xf32>,
    %69 = vector.extract_strided_slice %24 {offsets = [22, 0], sizes = [1, 480], strides = [1, 1]} : vector<30x480xf32> to vector<1x480xf32>
    %70 = vector.extract_strided_slice %24 {offsets = [23, 0], sizes = [1, 480], strides = [1, 1]} : vector<30x480xf32> to vector<1x480xf32>
    %71 = arith.maximumf %69, %70 : vector<1x480xf32>
    %c11 = arith.constant 11 : index
    %c0_34 = arith.constant 0 : index
    %72 = vector.load %arg13[%c11, %c0_34] : memref<15x480xf32, #tpu.memory_space<vmem>>, vector<1x480xf32>
    tpu.vector_store %arg13[%c11, %c0_34], %71 {strides = array<i32>} : memref<15x480xf32, #tpu.memory_space<vmem>>, vector<1x480xf32>,
    %73 = vector.extract_strided_slice %24 {offsets = [24, 0], sizes = [1, 480], strides = [1, 1]} : vector<30x480xf32> to vector<1x480xf32>
    %74 = vector.extract_strided_slice %24 {offsets = [25, 0], sizes = [1, 480], strides = [1, 1]} : vector<30x480xf32> to vector<1x480xf32>
    %75 = arith.maximumf %73, %74 : vector<1x480xf32>
    %c12 = arith.constant 12 : index
    %c0_35 = arith.constant 0 : index
    %76 = vector.load %arg13[%c12, %c0_35] : memref<15x480xf32, #tpu.memory_space<vmem>>, vector<1x480xf32>
    tpu.vector_store %arg13[%c12, %c0_35], %75 {strides = array<i32>} : memref<15x480xf32, #tpu.memory_space<vmem>>, vector<1x480xf32>,
    %77 = vector.extract_strided_slice %24 {offsets = [26, 0], sizes = [1, 480], strides = [1, 1]} : vector<30x480xf32> to vector<1x480xf32>
    %78 = vector.extract_strided_slice %24 {offsets = [27, 0], sizes = [1, 480], strides = [1, 1]} : vector<30x480xf32> to vector<1x480xf32>
    %79 = arith.maximumf %77, %78 : vector<1x480xf32>
    %c13 = arith.constant 13 : index
    %c0_36 = arith.constant 0 : index
    %80 = vector.load %arg13[%c13, %c0_36] : memref<15x480xf32, #tpu.memory_space<vmem>>, vector<1x480xf32>
    tpu.vector_store %arg13[%c13, %c0_36], %79 {strides = array<i32>} : memref<15x480xf32, #tpu.memory_space<vmem>>, vector<1x480xf32>,
    %81 = vector.extract_strided_slice %24 {offsets = [28, 0], sizes = [1, 480], strides = [1, 1]} : vector<30x480xf32> to vector<1x480xf32>
    %82 = vector.extract_strided_slice %24 {offsets = [29, 0], sizes = [1, 480], strides = [1, 1]} : vector<30x480xf32> to vector<1x480xf32>
    %83 = arith.maximumf %81, %82 : vector<1x480xf32>
    %c14 = arith.constant 14 : index
    %c0_37 = arith.constant 0 : index
    %84 = vector.load %arg13[%c14, %c0_37] : memref<15x480xf32, #tpu.memory_space<vmem>>, vector<1x480xf32>
    tpu.vector_store %arg13[%c14, %c0_37], %83 {strides = array<i32>} : memref<15x480xf32, #tpu.memory_space<vmem>>, vector<1x480xf32>,
    %c0_38 = arith.constant 0 : index
    %c0_39 = arith.constant 0 : index
    %85 = vector.load %arg5[%c0_38, %c0_39] : memref<1x896xf32, #tpu.memory_space<vmem>>, vector<1x896xf32>
    %c0_40 = arith.constant 0 : index
    %c0_41 = arith.constant 0 : index
    %86 = vector.load %arg13[%c0_40, %c0_41] : memref<15x480xf32, #tpu.memory_space<vmem>>, vector<14x480xf32>
    %c0_42 = arith.constant 0 : index
    %c0_43 = arith.constant 0 : index
    %c0_44 = arith.constant 0 : index
    %87 = vector.load %arg4[%c0_42, %c0_43, %c0_44] : memref<2x480x896xf32, #tpu.memory_space<vmem>>, vector<1x480x896xf32>
    %88 = vector.shape_cast %87 : vector<1x480x896xf32> to vector<480x896xf32>
    %cst_45 = arith.constant dense<0.000000e+00> : vector<14x896xf32>
    %89 = tpu.matmul %86, %88, %cst_45 {dimension_numbers = #tpu.dot_dimension_numbers<[1], [0], [0], [1], [0, 0, 1, 1], [], []>} : vector<14x480xf32>, vector<480x896xf32>, vector<14x896xf32> -> vector<14x896xf32>
    %c1_46 = arith.constant 1 : index
    %c0_47 = arith.constant 0 : index
    %90 = vector.load %arg13[%c1_46, %c0_47] : memref<15x480xf32, #tpu.memory_space<vmem>>, vector<14x480xf32>
    %c1_48 = arith.constant 1 : index
    %c0_49 = arith.constant 0 : index
    %c0_50 = arith.constant 0 : index
    %91 = vector.load %arg4[%c1_48, %c0_49, %c0_50] : memref<2x480x896xf32, #tpu.memory_space<vmem>>, vector<1x480x896xf32>
    %92 = vector.shape_cast %91 : vector<1x480x896xf32> to vector<480x896xf32>
    %cst_51 = arith.constant dense<0.000000e+00> : vector<14x896xf32>
    %93 = tpu.matmul %90, %92, %cst_51 {dimension_numbers = #tpu.dot_dimension_numbers<[1], [0], [0], [1], [0, 0, 1, 1], [], []>} : vector<14x480xf32>, vector<480x896xf32>, vector<14x896xf32> -> vector<14x896xf32>
    %94 = arith.addf %89, %93 : vector<14x896xf32>
    %95 = vector.broadcast %85 : vector<1x896xf32> to vector<14x896xf32>
    %96 = arith.addf %94, %95 : vector<14x896xf32>
    %cst_52 = arith.constant 0.000000e+00 : f32
    %97 = vector.broadcast %cst_52 : f32 to vector<14x896xf32>
    %98 = arith.maximumf %96, %97 : vector<14x896xf32>
    %99 = vector.extract_strided_slice %98 {offsets = [0, 0], sizes = [14, 448], strides = [1, 1]} : vector<14x896xf32> to vector<14x448xf32>
    %100 = vector.extract_strided_slice %98 {offsets = [0, 448], sizes = [14, 448], strides = [1, 1]} : vector<14x896xf32> to vector<14x448xf32>
    %101 = arith.maximumf %99, %100 : vector<14x448xf32>
    %102 = vector.extract_strided_slice %101 {offsets = [0, 0], sizes = [1, 448], strides = [1, 1]} : vector<14x448xf32> to vector<1x448xf32>
    %103 = vector.extract_strided_slice %101 {offsets = [1, 0], sizes = [1, 448], strides = [1, 1]} : vector<14x448xf32> to vector<1x448xf32>
    %104 = arith.maximumf %102, %103 : vector<1x448xf32>
    %c0_53 = arith.constant 0 : index
    %c0_54 = arith.constant 0 : index
    %105 = vector.load %arg14[%c0_53, %c0_54] : memref<7x448xf32, #tpu.memory_space<vmem>>, vector<1x448xf32>
    tpu.vector_store %arg14[%c0_53, %c0_54], %104 {strides = array<i32>} : memref<7x448xf32, #tpu.memory_space<vmem>>, vector<1x448xf32>,
    %106 = vector.extract_strided_slice %101 {offsets = [2, 0], sizes = [1, 448], strides = [1, 1]} : vector<14x448xf32> to vector<1x448xf32>
    %107 = vector.extract_strided_slice %101 {offsets = [3, 0], sizes = [1, 448], strides = [1, 1]} : vector<14x448xf32> to vector<1x448xf32>
    %108 = arith.maximumf %106, %107 : vector<1x448xf32>
    %c1_55 = arith.constant 1 : index
    %c0_56 = arith.constant 0 : index
    %109 = vector.load %arg14[%c1_55, %c0_56] : memref<7x448xf32, #tpu.memory_space<vmem>>, vector<1x448xf32>
    tpu.vector_store %arg14[%c1_55, %c0_56], %108 {strides = array<i32>} : memref<7x448xf32, #tpu.memory_space<vmem>>, vector<1x448xf32>,
    %110 = vector.extract_strided_slice %101 {offsets = [4, 0], sizes = [1, 448], strides = [1, 1]} : vector<14x448xf32> to vector<1x448xf32>
    %111 = vector.extract_strided_slice %101 {offsets = [5, 0], sizes = [1, 448], strides = [1, 1]} : vector<14x448xf32> to vector<1x448xf32>
    %112 = arith.maximumf %110, %111 : vector<1x448xf32>
    %c2_57 = arith.constant 2 : index
    %c0_58 = arith.constant 0 : index
    %113 = vector.load %arg14[%c2_57, %c0_58] : memref<7x448xf32, #tpu.memory_space<vmem>>, vector<1x448xf32>
    tpu.vector_store %arg14[%c2_57, %c0_58], %112 {strides = array<i32>} : memref<7x448xf32, #tpu.memory_space<vmem>>, vector<1x448xf32>,
    %114 = vector.extract_strided_slice %101 {offsets = [6, 0], sizes = [1, 448], strides = [1, 1]} : vector<14x448xf32> to vector<1x448xf32>
    %115 = vector.extract_strided_slice %101 {offsets = [7, 0], sizes = [1, 448], strides = [1, 1]} : vector<14x448xf32> to vector<1x448xf32>
    %116 = arith.maximumf %114, %115 : vector<1x448xf32>
    %c3_59 = arith.constant 3 : index
    %c0_60 = arith.constant 0 : index
    %117 = vector.load %arg14[%c3_59, %c0_60] : memref<7x448xf32, #tpu.memory_space<vmem>>, vector<1x448xf32>
    tpu.vector_store %arg14[%c3_59, %c0_60], %116 {strides = array<i32>} : memref<7x448xf32, #tpu.memory_space<vmem>>, vector<1x448xf32>,
    %118 = vector.extract_strided_slice %101 {offsets = [8, 0], sizes = [1, 448], strides = [1, 1]} : vector<14x448xf32> to vector<1x448xf32>
    %119 = vector.extract_strided_slice %101 {offsets = [9, 0], sizes = [1, 448], strides = [1, 1]} : vector<14x448xf32> to vector<1x448xf32>
    %120 = arith.maximumf %118, %119 : vector<1x448xf32>
    %c4_61 = arith.constant 4 : index
    %c0_62 = arith.constant 0 : index
    %121 = vector.load %arg14[%c4_61, %c0_62] : memref<7x448xf32, #tpu.memory_space<vmem>>, vector<1x448xf32>
    tpu.vector_store %arg14[%c4_61, %c0_62], %120 {strides = array<i32>} : memref<7x448xf32, #tpu.memory_space<vmem>>, vector<1x448xf32>,
    %122 = vector.extract_strided_slice %101 {offsets = [10, 0], sizes = [1, 448], strides = [1, 1]} : vector<14x448xf32> to vector<1x448xf32>
    %123 = vector.extract_strided_slice %101 {offsets = [11, 0], sizes = [1, 448], strides = [1, 1]} : vector<14x448xf32> to vector<1x448xf32>
    %124 = arith.maximumf %122, %123 : vector<1x448xf32>
    %c5_63 = arith.constant 5 : index
    %c0_64 = arith.constant 0 : index
    %125 = vector.load %arg14[%c5_63, %c0_64] : memref<7x448xf32, #tpu.memory_space<vmem>>, vector<1x448xf32>
    tpu.vector_store %arg14[%c5_63, %c0_64], %124 {strides = array<i32>} : memref<7x448xf32, #tpu.memory_space<vmem>>, vector<1x448xf32>,
    %126 = vector.extract_strided_slice %101 {offsets = [12, 0], sizes = [1, 448], strides = [1, 1]} : vector<14x448xf32> to vector<1x448xf32>
    %127 = vector.extract_strided_slice %101 {offsets = [13, 0], sizes = [1, 448], strides = [1, 1]} : vector<14x448xf32> to vector<1x448xf32>
    %128 = arith.maximumf %126, %127 : vector<1x448xf32>
    %c6_65 = arith.constant 6 : index
    %c0_66 = arith.constant 0 : index
    %129 = vector.load %arg14[%c6_65, %c0_66] : memref<7x448xf32, #tpu.memory_space<vmem>>, vector<1x448xf32>
    tpu.vector_store %arg14[%c6_65, %c0_66], %128 {strides = array<i32>} : memref<7x448xf32, #tpu.memory_space<vmem>>, vector<1x448xf32>,
    %c0_67 = arith.constant 0 : index
    %c0_68 = arith.constant 0 : index
    %130 = vector.load %arg7[%c0_67, %c0_68] : memref<1x640xf32, #tpu.memory_space<vmem>>, vector<1x640xf32>
    %c0_69 = arith.constant 0 : index
    %c0_70 = arith.constant 0 : index
    %131 = vector.load %arg14[%c0_69, %c0_70] : memref<7x448xf32, #tpu.memory_space<vmem>>, vector<5x448xf32>
    %c0_71 = arith.constant 0 : index
    %c0_72 = arith.constant 0 : index
    %c0_73 = arith.constant 0 : index
    %132 = vector.load %arg6[%c0_71, %c0_72, %c0_73] : memref<3x448x640xf32, #tpu.memory_space<vmem>>, vector<1x448x640xf32>
    %133 = vector.shape_cast %132 : vector<1x448x640xf32> to vector<448x640xf32>
    %cst_74 = arith.constant dense<0.000000e+00> : vector<5x640xf32>
    %134 = tpu.matmul %131, %133, %cst_74 {dimension_numbers = #tpu.dot_dimension_numbers<[1], [0], [0], [1], [0, 0, 1, 1], [], []>} : vector<5x448xf32>, vector<448x640xf32>, vector<5x640xf32> -> vector<5x640xf32>
    %c1_75 = arith.constant 1 : index
    %c0_76 = arith.constant 0 : index
    %135 = vector.load %arg14[%c1_75, %c0_76] : memref<7x448xf32, #tpu.memory_space<vmem>>, vector<5x448xf32>
    %c1_77 = arith.constant 1 : index
    %c0_78 = arith.constant 0 : index
    %c0_79 = arith.constant 0 : index
    %136 = vector.load %arg6[%c1_77, %c0_78, %c0_79] : memref<3x448x640xf32, #tpu.memory_space<vmem>>, vector<1x448x640xf32>
    %137 = vector.shape_cast %136 : vector<1x448x640xf32> to vector<448x640xf32>
    %cst_80 = arith.constant dense<0.000000e+00> : vector<5x640xf32>
    %138 = tpu.matmul %135, %137, %cst_80 {dimension_numbers = #tpu.dot_dimension_numbers<[1], [0], [0], [1], [0, 0, 1, 1], [], []>} : vector<5x448xf32>, vector<448x640xf32>, vector<5x640xf32> -> vector<5x640xf32>
    %139 = arith.addf %134, %138 : vector<5x640xf32>
    %c2_81 = arith.constant 2 : index
    %c0_82 = arith.constant 0 : index
    %140 = vector.load %arg14[%c2_81, %c0_82] : memref<7x448xf32, #tpu.memory_space<vmem>>, vector<5x448xf32>
    %c2_83 = arith.constant 2 : index
    %c0_84 = arith.constant 0 : index
    %c0_85 = arith.constant 0 : index
    %141 = vector.load %arg6[%c2_83, %c0_84, %c0_85] : memref<3x448x640xf32, #tpu.memory_space<vmem>>, vector<1x448x640xf32>
    %142 = vector.shape_cast %141 : vector<1x448x640xf32> to vector<448x640xf32>
    %cst_86 = arith.constant dense<0.000000e+00> : vector<5x640xf32>
    %143 = tpu.matmul %140, %142, %cst_86 {dimension_numbers = #tpu.dot_dimension_numbers<[1], [0], [0], [1], [0, 0, 1, 1], [], []>} : vector<5x448xf32>, vector<448x640xf32>, vector<5x640xf32> -> vector<5x640xf32>
    %144 = arith.addf %139, %143 : vector<5x640xf32>
    %145 = vector.broadcast %130 : vector<1x640xf32> to vector<5x640xf32>
    %146 = arith.addf %144, %145 : vector<5x640xf32>
    %cst_87 = arith.constant 0.000000e+00 : f32
    %147 = vector.broadcast %cst_87 : f32 to vector<5x640xf32>
    %148 = arith.maximumf %146, %147 : vector<5x640xf32>
    %149 = vector.extract_strided_slice %148 {offsets = [0, 0], sizes = [5, 256], strides = [1, 1]} : vector<5x640xf32> to vector<5x256xf32>
    %150 = vector.extract_strided_slice %148 {offsets = [0, 384], sizes = [5, 256], strides = [1, 1]} : vector<5x640xf32> to vector<5x256xf32>
    %151 = arith.maximumf %149, %150 : vector<5x256xf32>
    %152 = vector.extract_strided_slice %151 {offsets = [0, 0], sizes = [1, 256], strides = [1, 1]} : vector<5x256xf32> to vector<1x256xf32>
    %153 = vector.extract_strided_slice %151 {offsets = [1, 0], sizes = [1, 256], strides = [1, 1]} : vector<5x256xf32> to vector<1x256xf32>
    %154 = arith.maximumf %152, %153 : vector<1x256xf32>
    %c0_88 = arith.constant 0 : index
    %c0_89 = arith.constant 0 : index
    %155 = vector.load %arg15[%c0_88, %c0_89] : memref<1x512xf32, #tpu.memory_space<vmem>>, vector<1x256xf32>
    tpu.vector_store %arg15[%c0_88, %c0_89], %154 {strides = array<i32>} : memref<1x512xf32, #tpu.memory_space<vmem>>, vector<1x256xf32>,
    %156 = vector.extract_strided_slice %151 {offsets = [2, 0], sizes = [1, 256], strides = [1, 1]} : vector<5x256xf32> to vector<1x256xf32>
    %157 = vector.extract_strided_slice %151 {offsets = [3, 0], sizes = [1, 256], strides = [1, 1]} : vector<5x256xf32> to vector<1x256xf32>
    %158 = arith.maximumf %156, %157 : vector<1x256xf32>
    %c0_90 = arith.constant 0 : index
    %c256 = arith.constant 256 : index
    %159 = vector.load %arg15[%c0_90, %c256] : memref<1x512xf32, #tpu.memory_space<vmem>>, vector<1x256xf32>
    tpu.vector_store %arg15[%c0_90, %c256], %158 {strides = array<i32>} : memref<1x512xf32, #tpu.memory_space<vmem>>, vector<1x256xf32>,
    %c0_91 = arith.constant 0 : index
    %c0_92 = arith.constant 0 : index
    %160 = vector.load %arg15[%c0_91, %c0_92] : memref<1x512xf32, #tpu.memory_space<vmem>>, vector<1x512xf32>
    %c0_93 = arith.constant 0 : index
    %c0_94 = arith.constant 0 : index
    %161 = vector.load %arg8[%c0_93, %c0_94] : memref<512x256xf32, #tpu.memory_space<vmem>>, vector<512x256xf32>
    %cst_95 = arith.constant dense<0.000000e+00> : vector<1x256xf32>
    %162 = tpu.matmul %160, %161, %cst_95 {dimension_numbers = #tpu.dot_dimension_numbers<[1], [0], [0], [1], [0, 0, 1, 1], [], []>} : vector<1x512xf32>, vector<512x256xf32>, vector<1x256xf32> -> vector<1x256xf32>
    %c0_96 = arith.constant 0 : index
    %c0_97 = arith.constant 0 : index
    %163 = vector.load %arg9[%c0_96, %c0_97] : memref<1x256xf32, #tpu.memory_space<vmem>>, vector<1x256xf32>
    %164 = arith.addf %162, %163 : vector<1x256xf32>
    %cst_98 = arith.constant 0.000000e+00 : f32
    %165 = vector.broadcast %cst_98 : f32 to vector<1x256xf32>
    %166 = arith.maximumf %164, %165 : vector<1x256xf32>
    %c0_99 = arith.constant 0 : index
    %c0_100 = arith.constant 0 : index
    %167 = vector.load %arg10[%c0_99, %c0_100] : memref<256x10xf32, #tpu.memory_space<vmem>>, vector<256x10xf32>
    %cst_101 = arith.constant dense<0.000000e+00> : vector<1x10xf32>
    %168 = tpu.matmul %166, %167, %cst_101 {dimension_numbers = #tpu.dot_dimension_numbers<[1], [0], [0], [1], [0, 0, 1, 1], [], []>} : vector<1x256xf32>, vector<256x10xf32>, vector<1x10xf32> -> vector<1x10xf32>
    %c0_102 = arith.constant 0 : index
    %c0_103 = arith.constant 0 : index
    %169 = vector.load %arg11[%c0_102, %c0_103] : memref<1x10xf32, #tpu.memory_space<vmem>>, vector<1x10xf32>
    %170 = arith.addf %168, %169 : vector<1x10xf32>
    %c0_104 = arith.constant 0 : index
    %c0_105 = arith.constant 0 : index
    %c0_106 = arith.constant 0 : index
    %171 = vector.load %arg12[%c0_104, %c0_105, %c0_106] : memref<1x1x10xf32, #tpu.memory_space<vmem>>, vector<1x1x10xf32>
    %172 = vector.shape_cast %171 : vector<1x1x10xf32> to vector<1x10xf32>
    %173 = vector.shape_cast %170 : vector<1x10xf32> to vector<1x1x10xf32>
    tpu.vector_store %arg12[%c0_104, %c0_105, %c0_106], %173 {strides = array<i32>} : memref<1x1x10xf32, #tpu.memory_space<vmem>>, vector<1x1x10xf32>,
    return
  }
  func.func @transform_0(%arg0: i32) -> (i32, i32, i32) {
    %c0_i32 = arith.constant 0 : i32
    %c0_i32_0 = arith.constant 0 : i32
    %c0_i32_1 = arith.constant 0 : i32
    return %arg0, %c0_i32, %c0_i32_0 : i32, i32, i32
  }
  func.func @transform_1(%arg0: i32) -> (i32, i32, i32) {
    %c0_i32 = arith.constant 0 : i32
    %c0_i32_0 = arith.constant 0 : i32
    %c0_i32_1 = arith.constant 0 : i32
    %c0_i32_2 = arith.constant 0 : i32
    return %c0_i32, %c0_i32_0, %c0_i32_1 : i32, i32, i32
  }
  func.func @transform_2(%arg0: i32) -> (i32, i32) {
    %c0_i32 = arith.constant 0 : i32
    %c0_i32_0 = arith.constant 0 : i32
    %c0_i32_1 = arith.constant 0 : i32
    return %c0_i32, %c0_i32_0 : i32, i32
  }
  func.func @transform_3(%arg0: i32) -> (i32, i32, i32) {
    %c0_i32 = arith.constant 0 : i32
    %c0_i32_0 = arith.constant 0 : i32
    %c0_i32_1 = arith.constant 0 : i32
    %c0_i32_2 = arith.constant 0 : i32
    return %c0_i32, %c0_i32_0, %c0_i32_1 : i32, i32, i32
  }
  func.func @transform_4(%arg0: i32) -> (i32, i32) {
    %c0_i32 = arith.constant 0 : i32
    %c0_i32_0 = arith.constant 0 : i32
    %c0_i32_1 = arith.constant 0 : i32
    return %c0_i32, %c0_i32_0 : i32, i32
  }
  func.func @transform_5(%arg0: i32) -> (i32, i32, i32) {
    %c0_i32 = arith.constant 0 : i32
    %c0_i32_0 = arith.constant 0 : i32
    %c0_i32_1 = arith.constant 0 : i32
    %c0_i32_2 = arith.constant 0 : i32
    return %c0_i32, %c0_i32_0, %c0_i32_1 : i32, i32, i32
  }
  func.func @transform_6(%arg0: i32) -> (i32, i32) {
    %c0_i32 = arith.constant 0 : i32
    %c0_i32_0 = arith.constant 0 : i32
    %c0_i32_1 = arith.constant 0 : i32
    return %c0_i32, %c0_i32_0 : i32, i32
  }
  func.func @transform_7(%arg0: i32) -> (i32, i32) {
    %c0_i32 = arith.constant 0 : i32
    %c0_i32_0 = arith.constant 0 : i32
    %c0_i32_1 = arith.constant 0 : i32
    return %c0_i32, %c0_i32_0 : i32, i32
  }
  func.func @transform_8(%arg0: i32) -> (i32, i32) {
    %c0_i32 = arith.constant 0 : i32
    %c0_i32_0 = arith.constant 0 : i32
    %c0_i32_1 = arith.constant 0 : i32
    return %c0_i32, %c0_i32_0 : i32, i32
  }
  func.func @transform_9(%arg0: i32) -> (i32, i32) {
    %c0_i32 = arith.constant 0 : i32
    %c0_i32_0 = arith.constant 0 : i32
    %c0_i32_1 = arith.constant 0 : i32
    return %c0_i32, %c0_i32_0 : i32, i32
  }
  func.func @transform_10(%arg0: i32) -> (i32, i32) {
    %c0_i32 = arith.constant 0 : i32
    %c0_i32_0 = arith.constant 0 : i32
    %c0_i32_1 = arith.constant 0 : i32
    return %c0_i32, %c0_i32_0 : i32, i32
  }
  func.func @transform_11(%arg0: i32) -> (i32, i32, i32) {
    %c0_i32 = arith.constant 0 : i32
    %c0_i32_0 = arith.constant 0 : i32
    %c0_i32_1 = arith.constant 0 : i32
    return %arg0, %c0_i32, %c0_i32_0 : i32, i32, i32
  }
}

</mosaic_0001>

<llo_original>
// kernel: forward.1
$region0: #{forward.1}
  #allocation0 [shape = 'u32[]', space=smem, size = 0x4, offset = 0x4, fixed_abs, tag = 'smem constant byte address 0x4 - core index']
  #allocation1 [shape = 'u32[72,128]{1,0:T(1,128)}', space=vmem, size = 0x9000, scoped, tag = 'internal scratch']
  #allocation2 [shape = 'f32[15,480]{1,0:T(8,128)}', space=vmem, size = 0x8000, scoped, tag = 'scratch operand']
  #allocation3 [shape = 'f32[7,448]{1,0:T(8,128)}', space=vmem, size = 0x4000, scoped, tag = 'scratch operand']
  #allocation4 [shape = 'f32[1,512]{1,0:T(1,128)}', space=vmem, size = 0x800, scoped, tag = 'scratch operand']
  %s0 = inlined_call_operand.vmem [shape: f32[2,32,96], index: 0, kind: input, shape index: {}]
  %s1 = inlined_call_operand.hbm [shape: f32[3,96,960], index: 1, kind: input, shape index: {}]
  %s2 = inlined_call_operand.hbm [shape: f32[1,960], index: 2, kind: input, shape index: {}]
  %s3 = inlined_call_operand.hbm [shape: f32[2,480,896], index: 3, kind: input, shape index: {}]
  %s4 = inlined_call_operand.hbm [shape: f32[1,896], index: 4, kind: input, shape index: {}]
  %s5 = inlined_call_operand.hbm [shape: f32[3,448,640], index: 5, kind: input, shape index: {}]
  %s6 = inlined_call_operand.hbm [shape: f32[1,640], index: 6, kind: input, shape index: {}]
  %s7 = inlined_call_operand.hbm [shape: f32[512,256], index: 7, kind: input, shape index: {}]
  %s8 = inlined_call_operand.hbm [shape: f32[1,256], index: 8, kind: input, shape index: {}]
  %s9 = inlined_call_operand.vmem [shape: f32[256,10], index: 9, kind: input, shape index: {}]
  %s10 = inlined_call_operand.hbm [shape: f32[1,10], index: 10, kind: input, shape index: {}]
  %s11 = inlined_call_operand.hbm [shape: f32[2,1,10], index: 11, kind: output, shape index: {}]
  %s12 = sld [smem:[#allocation0]]
  $region113: #{forward.1} parent=0
    _
  %s14 = ssub.s32 1, %s12
  %s15 = scalar_select 0, %s14, %s12
  $region1: #{forward.1} parent=0
    #allocation5 [shape = 'u8[1179648]{0}', space=vmem, size = 0x120000, scoped, tag = 'input window, operand 1, single buffered']
    #allocation6 [shape = 's32[2]{0}', space=sflag, size = 0x8, scoped, tag = 'scoped memory for forward.1']
    #allocation7 [shape = 's32[2]{0}', space=sflag, size = 0x8, scoped, tag = 'scoped memory for forward.1']
    #allocation8 [shape = 'u8[4096]{0}', space=vmem, size = 0x1000, scoped, tag = 'input window, operand 2, single buffered']
    #allocation9 [shape = 's32[1]{0}', space=sflag, size = 0x4, scoped, tag = 'scoped memory for forward.1']
    #allocation10 [shape = 'u8[3440640]{0}', space=vmem, size = 0x348000, scoped, tag = 'input window, operand 3, single buffered']
    #allocation11 [shape = 'u8[3584]{0}', space=vmem, size = 0x1000, scoped, tag = 'input window, operand 4, single buffered']
    #allocation12 [shape = 's32[1]{0}', space=sflag, size = 0x4, scoped, tag = 'scoped memory for forward.1']
    #allocation13 [shape = 'u8[3440640]{0}', space=vmem, size = 0x348000, scoped, tag = 'input window, operand 5, single buffered']
    #allocation14 [shape = 'u8[2560]{0}', space=vmem, size = 0xc00, scoped, tag = 'input window, operand 6, single buffered']
    #allocation15 [shape = 's32[1]{0}', space=sflag, size = 0x4, scoped, tag = 'scoped memory for forward.1']
    #allocation16 [shape = 'u8[524288]{0}', space=vmem, size = 0x80000, scoped, tag = 'input window, operand 7, single buffered']
    #allocation17 [shape = 'u8[1024]{0}', space=vmem, size = 0x400, scoped, tag = 'input window, operand 8, single buffered']
    #allocation18 [shape = 's32[1]{0}', space=sflag, size = 0x4, scoped, tag = 'scoped memory for forward.1']
    #allocation19 [shape = 'u8[512]{0}', space=vmem, size = 0x400, scoped, tag = 'input window, operand 10, single buffered']
    #allocation20 [shape = 'u8[1024]{0}', space=vmem, size = 0x400, scoped, tag = 'output window, operand 0']
    %16 = vsyncpa [#allocation6], 0
    %17 = vsyncpa [#allocation9], 0
    %18 = vsyncpa [#allocation12], 0
    %19 = vsyncpa [#allocation15], 0
    %20 = vsyncpa [#allocation18], 0
    %21 = vsyncpa [#allocation7], 0
    %s22 = scalar_lea.sflag [#allocation7], 1
    %23 = vsyncpa %s22, 0
    loop: start=0, step=1, limit=4
    $region2: #{forward.1} parent=1 // loop_pre_header
      _
    $region3: #{forward.1} parent=1 // loop_header
      %s25 = sphi 0, %s29
      %p26 = scmp.ge.s32.totalorder %s25, 4
      %s35 = sphi 0, %s37
      %s38 = sphi 0, %s35
      %s39 = sphi 0, %s38
      %s55 = sphi 0, %s39
      %s59 = sphi 0, %s59
      %s61 = sphi 0, %s59
      %s62 = sphi 0, %s61
      %s76 = sphi 0, %s62
      %s80 = sphi 0, %s80
      %s82 = sphi 0, %s80
      %s83 = sphi 0, %s82
      %s97 = sphi 0, %s83
      %s101 = sphi 0, %s101
      %s103 = sphi 0, %s101
      %s104 = sphi 0, %s103
      %s118 = sphi 0, %s104
      %s122 = sphi 0, %s122
      %s124 = sphi 0, %s122
      %s125 = sphi 0, %s124
      %s139 = sphi 0, %s125
      %s143 = sphi 0, %s143
      %s145 = sphi 0, %s143
      %s146 = sphi 0, %s145
      %s160 = sphi 0, %s146
      %s164 = sphi 0, %s164
      %s166 = sphi 0, %s164
      %s167 = sphi 0, %s166
      %s181 = sphi 0, %s167
      %s185 = sphi 0, %s185
      %s187 = sphi 0, %s185
      %s188 = sphi 0, %s187
      %s202 = sphi 0, %s188
      %s206 = sphi 0, %s206
      %s208 = sphi 0, %s206
      %s209 = sphi 0, %s208
      %s223 = sphi 0, %s209
      %s227 = sphi 0, %s227
      %s229 = sphi 0, %s227
      %s230 = sphi 0, %s229
      %s244 = sphi 0, %s230
      %s248 = sphi 0, %s248
      %s250 = sphi 0, %s248
      %s251 = sphi 0, %s250
      %s265 = sphi 0, %s251
      %s271 = sphi 0, %s273
      %s274 = sphi 0, %s271
      %s275 = sphi 0, %s274
      %s291 = sphi 0, %s275
    $region4: #{forward.1} parent=1 // loop_header_branch
      %28 = sbr.rel (%p26) target = $region8
    $region5: #{forward.1} parent=1 // loop_body
      %s30 = ssub.s32 %s25, 1
      %s31 = ssub.s32 %s25, 2
      %s32 = sadd.s32 %s25, 1
      %s33 = ssub.s32 %s25, %s32
      %p34 = scmp.eq.s32.totalorder %s33, 0
      %s36 = sadd.s32 %s35, 1
      %s37 = scalar_select %p34, %s35, %s36
      %p40 = pneg %p34
      %p41 = scmp.eq.s32.totalorder %s25, 1
      %p42 = por %p40, %p41
      %p43 = scmp.ne.s32.totalorder %s35, %s38
      %p44 = scmp.eq.s32.totalorder %s25, 0
      %p45 = por %p43, %p44
      %p46 = scmp.ne.s32.totalorder %s35, %s38
      %p47 = scmp.eq.s32.totalorder %s30, 1
      %p48 = por %p46, %p47
      %p49 = scmp.ne.s32.totalorder %s38, %s39
      %p50 = scmp.eq.s32.totalorder %s30, 0
      %p51 = por %p49, %p50
      %p52 = scmp.ne.s32.totalorder %s38, %s39
      %p53 = scmp.eq.s32.totalorder %s31, 1
      %p54 = por %p52, %p53
      %p56 = scmp.ne.s32.totalorder %s39, %s55
      %p57 = scmp.eq.s32.totalorder %s31, 0
      %p58 = por %p56, %p57
      %s60 = sadd.s32 %s59, 1
      %p63 = scmp.eq.s32.totalorder %s25, 1
      %p64 = scmp.ne.s32.totalorder %s59, %s61
      %p65 = scmp.eq.s32.totalorder %s25, 0
      %p66 = por %p64, %p65
      %p67 = scmp.ne.s32.totalorder %s59, %s61
      %p68 = scmp.eq.s32.totalorder %s30, 1
      %p69 = por %p67, %p68
      %p70 = scmp.ne.s32.totalorder %s61, %s62
      %p71 = scmp.eq.s32.totalorder %s30, 0
      %p72 = por %p70, %p71
      %p73 = scmp.ne.s32.totalorder %s61, %s62
      %p74 = scmp.eq.s32.totalorder %s31, 1
      %p75 = por %p73, %p74
      %p77 = scmp.ne.s32.totalorder %s62, %s76
      %p78 = scmp.eq.s32.totalorder %s31, 0
      %p79 = por %p77, %p78
      %s81 = sadd.s32 %s80, 1
      %p84 = scmp.eq.s32.totalorder %s25, 1
      %p85 = scmp.ne.s32.totalorder %s80, %s82
      %p86 = scmp.eq.s32.totalorder %s25, 0
      %p87 = por %p85, %p86
      %p88 = scmp.ne.s32.totalorder %s80, %s82
      %p89 = scmp.eq.s32.totalorder %s30, 1
      %p90 = por %p88, %p89
      %p91 = scmp.ne.s32.totalorder %s82, %s83
      %p92 = scmp.eq.s32.totalorder %s30, 0
      %p93 = por %p91, %p92
      %p94 = scmp.ne.s32.totalorder %s82, %s83
      %p95 = scmp.eq.s32.totalorder %s31, 1
      %p96 = por %p94, %p95
      %p98 = scmp.ne.s32.totalorder %s83, %s97
      %p99 = scmp.eq.s32.totalorder %s31, 0
      %p100 = por %p98, %p99
      %s102 = sadd.s32 %s101, 1
      %p105 = scmp.eq.s32.totalorder %s25, 1
      %p106 = scmp.ne.s32.totalorder %s101, %s103
      %p107 = scmp.eq.s32.totalorder %s25, 0
      %p108 = por %p106, %p107
      %p109 = scmp.ne.s32.totalorder %s101, %s103
      %p110 = scmp.eq.s32.totalorder %s30, 1
      %p111 = por %p109, %p110
      %p112 = scmp.ne.s32.totalorder %s103, %s104
      %p113 = scmp.eq.s32.totalorder %s30, 0
      %p114 = por %p112, %p113
      %p115 = scmp.ne.s32.totalorder %s103, %s104
      %p116 = scmp.eq.s32.totalorder %s31, 1
      %p117 = por %p115, %p116
      %p119 = scmp.ne.s32.totalorder %s104, %s118
      %p120 = scmp.eq.s32.totalorder %s31, 0
      %p121 = por %p119, %p120
      %s123 = sadd.s32 %s122, 1
      %p126 = scmp.eq.s32.totalorder %s25, 1
      %p127 = scmp.ne.s32.totalorder %s122, %s124
      %p128 = scmp.eq.s32.totalorder %s25, 0
      %p129 = por %p127, %p128
      %p130 = scmp.ne.s32.totalorder %s122, %s124
      %p131 = scmp.eq.s32.totalorder %s30, 1
      %p132 = por %p130, %p131
      %p133 = scmp.ne.s32.totalorder %s124, %s125
      %p134 = scmp.eq.s32.totalorder %s30, 0
      %p135 = por %p133, %p134
      %p136 = scmp.ne.s32.totalorder %s124, %s125
      %p137 = scmp.eq.s32.totalorder %s31, 1
      %p138 = por %p136, %p137
      %p140 = scmp.ne.s32.totalorder %s125, %s139
      %p141 = scmp.eq.s32.totalorder %s31, 0
      %p142 = por %p140, %p141
      %s144 = sadd.s32 %s143, 1
      %p147 = scmp.eq.s32.totalorder %s25, 1
      %p148 = scmp.ne.s32.totalorder %s143, %s145
      %p149 = scmp.eq.s32.totalorder %s25, 0
      %p150 = por %p148, %p149
      %p151 = scmp.ne.s32.totalorder %s143, %s145
      %p152 = scmp.eq.s32.totalorder %s30, 1
      %p153 = por %p151, %p152
      %p154 = scmp.ne.s32.totalorder %s145, %s146
      %p155 = scmp.eq.s32.totalorder %s30, 0
      %p156 = por %p154, %p155
      %p157 = scmp.ne.s32.totalorder %s145, %s146
      %p158 = scmp.eq.s32.totalorder %s31, 1
      %p159 = por %p157, %p158
      %p161 = scmp.ne.s32.totalorder %s146, %s160
      %p162 = scmp.eq.s32.totalorder %s31, 0
      %p163 = por %p161, %p162
      %s165 = sadd.s32 %s164, 1
      %p168 = scmp.eq.s32.totalorder %s25, 1
      %p169 = scmp.ne.s32.totalorder %s164, %s166
      %p170 = scmp.eq.s32.totalorder %s25, 0
      %p171 = por %p169, %p170
      %p172 = scmp.ne.s32.totalorder %s164, %s166
      %p173 = scmp.eq.s32.totalorder %s30, 1
      %p174 = por %p172, %p173
      %p175 = scmp.ne.s32.totalorder %s166, %s167
      %p176 = scmp.eq.s32.totalorder %s30, 0
      %p177 = por %p175, %p176
      %p178 = scmp.ne.s32.totalorder %s166, %s167
      %p179 = scmp.eq.s32.totalorder %s31, 1
      %p180 = por %p178, %p179
      %p182 = scmp.ne.s32.totalorder %s167, %s181
      %p183 = scmp.eq.s32.totalorder %s31, 0
      %p184 = por %p182, %p183
      %s186 = sadd.s32 %s185, 1
      %p189 = scmp.eq.s32.totalorder %s25, 1
      %p190 = scmp.ne.s32.totalorder %s185, %s187
      %p191 = scmp.eq.s32.totalorder %s25, 0
      %p192 = por %p190, %p191
      %p193 = scmp.ne.s32.totalorder %s185, %s187
      %p194 = scmp.eq.s32.totalorder %s30, 1
      %p195 = por %p193, %p194
      %p196 = scmp.ne.s32.totalorder %s187, %s188
      %p197 = scmp.eq.s32.totalorder %s30, 0
      %p198 = por %p196, %p197
      %p199 = scmp.ne.s32.totalorder %s187, %s188
      %p200 = scmp.eq.s32.totalorder %s31, 1
      %p201 = por %p199, %p200
      %p203 = scmp.ne.s32.totalorder %s188, %s202
      %p204 = scmp.eq.s32.totalorder %s31, 0
      %p205 = por %p203, %p204
      %s207 = sadd.s32 %s206, 1
      %p210 = scmp.eq.s32.totalorder %s25, 1
      %p211 = scmp.ne.s32.totalorder %s206, %s208
      %p212 = scmp.eq.s32.totalorder %s25, 0
      %p213 = por %p211, %p212
      %p214 = scmp.ne.s32.totalorder %s206, %s208
      %p215 = scmp.eq.s32.totalorder %s30, 1
      %p216 = por %p214, %p215
      %p217 = scmp.ne.s32.totalorder %s208, %s209
      %p218 = scmp.eq.s32.totalorder %s30, 0
      %p219 = por %p217, %p218
      %p220 = scmp.ne.s32.totalorder %s208, %s209
      %p221 = scmp.eq.s32.totalorder %s31, 1
      %p222 = por %p220, %p221
      %p224 = scmp.ne.s32.totalorder %s209, %s223
      %p225 = scmp.eq.s32.totalorder %s31, 0
      %p226 = por %p224, %p225
      %s228 = sadd.s32 %s227, 1
      %p231 = scmp.eq.s32.totalorder %s25, 1
      %p232 = scmp.ne.s32.totalorder %s227, %s229
      %p233 = scmp.eq.s32.totalorder %s25, 0
      %p234 = por %p232, %p233
      %p235 = scmp.ne.s32.totalorder %s227, %s229
      %p236 = scmp.eq.s32.totalorder %s30, 1
      %p237 = por %p235, %p236
      %p238 = scmp.ne.s32.totalorder %s229, %s230
      %p239 = scmp.eq.s32.totalorder %s30, 0
      %p240 = por %p238, %p239
      %p241 = scmp.ne.s32.totalorder %s229, %s230
      %p242 = scmp.eq.s32.totalorder %s31, 1
      %p243 = por %p241, %p242
      %p245 = scmp.ne.s32.totalorder %s230, %s244
      %p246 = scmp.eq.s32.totalorder %s31, 0
      %p247 = por %p245, %p246
      %s249 = sadd.s32 %s248, 1
      %p252 = scmp.eq.s32.totalorder %s25, 1
      %p253 = scmp.ne.s32.totalorder %s248, %s250
      %p254 = scmp.eq.s32.totalorder %s25, 0
      %p255 = por %p253, %p254
      %p256 = scmp.ne.s32.totalorder %s248, %s250
      %p257 = scmp.eq.s32.totalorder %s30, 1
      %p258 = por %p256, %p257
      %p259 = scmp.ne.s32.totalorder %s250, %s251
      %p260 = scmp.eq.s32.totalorder %s30, 0
      %p261 = por %p259, %p260
      %p262 = scmp.ne.s32.totalorder %s250, %s251
      %p263 = scmp.eq.s32.totalorder %s31, 1
      %p264 = por %p262, %p263
      %p266 = scmp.ne.s32.totalorder %s251, %s265
      %p267 = scmp.eq.s32.totalorder %s31, 0
      %p268 = por %p266, %p267
      %s269 = ssub.s32 %s25, %s32
      %p270 = scmp.eq.s32.totalorder %s269, 0
      %s272 = sadd.s32 %s271, 1
      %s273 = scalar_select %p270, %s271, %s272
      %p276 = pneg %p270
      %p277 = scmp.eq.s32.totalorder %s25, 1
      %p278 = por %p276, %p277
      %p279 = scmp.ne.s32.totalorder %s271, %s274
      %p280 = scmp.eq.s32.totalorder %s25, 0
      %p281 = por %p279, %p280
      %p282 = scmp.ne.s32.totalorder %s271, %s274
      %p283 = scmp.eq.s32.totalorder %s30, 1
      %p284 = por %p282, %p283
      %p285 = scmp.ne.s32.totalorder %s274, %s275
      %p286 = scmp.eq.s32.totalorder %s30, 0
      %p287 = por %p285, %p286
      %p288 = scmp.ne.s32.totalorder %s274, %s275
      %p289 = scmp.eq.s32.totalorder %s31, 1
      %p290 = por %p288, %p289
      %p292 = scmp.ne.s32.totalorder %s275, %s291
      %p293 = scmp.eq.s32.totalorder %s31, 0
      %p294 = por %p292, %p293
      %p295 = scmp.le.s32.totalorder 1, %s25
      %p296 = scmp.lt.s32.totalorder %s25, 3
      %p297 = pnand %p295, %p296
      %p298 = pneg %p297
      // Predicated region
      $region9: #{forward.1} parent=5 // pred_check
        _
      $region10: #{forward.1} parent=5 // pred_check_branch
        %300 = sbr.rel (%p297) target = $region12
      $region11: #{forward.1} parent=5 // pred_region
        %s301 = ssub.s32 %s25, 1
        // Predicated region
        $region13: #{forward.1} parent=11 // pred_check
          %p302 = pneg %p72
        $region14: #{forward.1} parent=11 // pred_check_branch
          %304 = sbr.rel (%p302) target = $region16
        $region15: #{forward.1} parent=11 // pred_region
          %306 = vsyncadd [#allocation6], 0
          %s307 = sshll.u32 %s1, 4
          %s308 = int_to_ptr.hbm [resolvable:$true] %s307
          %s309 = sshll.u32 [#allocation5], 4
          %s310 = int_to_ptr.vmem [resolvable:$true] %s309
          %315 = dma.hbm_to_vmem [thread:$0]  %s308, 36864, %s310, [#allocation6], 1024, 1024, 64
        $region16: #{forward.1} parent=11 // pred_fallthru
          _
        // Predicated region
        $region17: #{forward.1} parent=11 // pred_check
          %p316 = pneg %p93
        $region18: #{forward.1} parent=11 // pred_check_branch
          %318 = sbr.rel (%p316) target = $region20
        $region19: #{forward.1} parent=11 // pred_region
          %320 = vsyncadd [#allocation9], 0
          %s322 = sshll.u32 %s2, 4
          %s323 = int_to_ptr.hbm [resolvable:$true] %s322
          %s324 = sshll.u32 [#allocation8], 4
          %s325 = int_to_ptr.vmem [resolvable:$true] %s324
          %327 = dma.hbm_to_vmem [thread:$0]  %s323, 128, %s325, [#allocation9]
        $region20: #{forward.1} parent=11 // pred_fallthru
          _
        // Predicated region
        $region21: #{forward.1} parent=11 // pred_check
          %p328 = pneg %p114
        $region22: #{forward.1} parent=11 // pred_check_branch
          %330 = sbr.rel (%p328) target = $region24
        $region23: #{forward.1} parent=11 // pred_region
          %332 = vsyncadd [#allocation9], 0
          %s333 = sshll.u32 %s3, 4
          %s334 = int_to_ptr.hbm [resolvable:$true] %s333
          %s335 = sshll.u32 [#allocation10], 4
          %s336 = int_to_ptr.vmem [resolvable:$true] %s335
          %341 = dma.hbm_to_vmem [thread:$0]  %s334, 107520, %s336, [#allocation9], 896, 896, 56
        $region24: #{forward.1} parent=11 // pred_fallthru
          _
        // Predicated region
        $region25: #{forward.1} parent=11 // pred_check
          %p342 = pneg %p135
        $region26: #{forward.1} parent=11 // pred_check_branch
          %344 = sbr.rel (%p342) target = $region28
        $region27: #{forward.1} parent=11 // pred_region
          %346 = vsyncadd [#allocation12], 0
          %s348 = sshll.u32 %s4, 4
          %s349 = int_to_ptr.hbm [resolvable:$true] %s348
          %s350 = sshll.u32 [#allocation11], 4
          %s351 = int_to_ptr.vmem [resolvable:$true] %s350
          %353 = dma.hbm_to_vmem [thread:$0]  %s349, 112, %s351, [#allocation12]
        $region28: #{forward.1} parent=11 // pred_fallthru
          _
        // Predicated region
        $region29: #{forward.1} parent=11 // pred_check
          %p354 = pneg %p156
        $region30: #{forward.1} parent=11 // pred_check_branch
          %356 = sbr.rel (%p354) target = $region32
        $region31: #{forward.1} parent=11 // pred_region
          %358 = vsyncadd [#allocation12], 0
          %s359 = sshll.u32 %s5, 4
          %s360 = int_to_ptr.hbm [resolvable:$true] %s359
          %s361 = sshll.u32 [#allocation13], 4
          %s362 = int_to_ptr.vmem [resolvable:$true] %s361
          %367 = dma.hbm_to_vmem [thread:$0]  %s360, 107520, %s362, [#allocation12], 640, 640, 40
        $region32: #{forward.1} parent=11 // pred_fallthru
          _
        // Predicated region
        $region33: #{forward.1} parent=11 // pred_check
          %p368 = pneg %p177
        $region34: #{forward.1} parent=11 // pred_check_branch
          %370 = sbr.rel (%p368) target = $region36
        $region35: #{forward.1} parent=11 // pred_region
          %372 = vsyncadd [#allocation15], 0
          %s374 = sshll.u32 %s6, 4
          %s375 = int_to_ptr.hbm [resolvable:$true] %s374
          %s376 = sshll.u32 [#allocation14], 4
          %s377 = int_to_ptr.vmem [resolvable:$true] %s376
          %379 = dma.hbm_to_vmem [thread:$0]  %s375, 80, %s377, [#allocation15]
        $region36: #{forward.1} parent=11 // pred_fallthru
          _
        // Predicated region
        $region37: #{forward.1} parent=11 // pred_check
          %p380 = pneg %p198
        $region38: #{forward.1} parent=11 // pred_check_branch
          %382 = sbr.rel (%p380) target = $region40
        $region39: #{forward.1} parent=11 // pred_region
          %384 = vsyncadd [#allocation15], 0
          %s385 = sshll.u32 %s7, 4
          %s386 = int_to_ptr.hbm [resolvable:$true] %s385
          %s387 = sshll.u32 [#allocation16], 4
          %s388 = int_to_ptr.vmem [resolvable:$true] %s387
          %393 = dma.hbm_to_vmem [thread:$0]  %s386, 16384, %s388, [#allocation15], 256, 256, 16
        $region40: #{forward.1} parent=11 // pred_fallthru
          _
        // Predicated region
        $region41: #{forward.1} parent=11 // pred_check
          %p394 = pneg %p219
        $region42: #{forward.1} parent=11 // pred_check_branch
          %396 = sbr.rel (%p394) target = $region44
        $region43: #{forward.1} parent=11 // pred_region
          %398 = vsyncadd [#allocation18], 0
          %s400 = sshll.u32 %s8, 4
          %s401 = int_to_ptr.hbm [resolvable:$true] %s400
          %s402 = sshll.u32 [#allocation17], 4
          %s403 = int_to_ptr.vmem [resolvable:$true] %s402
          %405 = dma.hbm_to_vmem [thread:$0]  %s401, 32, %s403, [#allocation18]
        $region44: #{forward.1} parent=11 // pred_fallthru
          _
        // Predicated region
        $region45: #{forward.1} parent=11 // pred_check
          %p406 = pneg %p240
        $region46: #{forward.1} parent=11 // pred_check_branch
          %408 = sbr.rel (%p406) target = $region48
        $region47: #{forward.1} parent=11 // pred_region
          _
        $region48: #{forward.1} parent=11 // pred_fallthru
          _
        // Predicated region
        $region49: #{forward.1} parent=11 // pred_check
          %p409 = pneg %p261
        $region50: #{forward.1} parent=11 // pred_check_branch
          %411 = sbr.rel (%p409) target = $region52
        $region51: #{forward.1} parent=11 // pred_region
          %413 = vsyncadd [#allocation18], 0
          %s415 = sshll.u32 %s10, 4
          %s416 = int_to_ptr.hbm [resolvable:$true] %s415
          %s417 = sshll.u32 [#allocation19], 4
          %s418 = int_to_ptr.vmem [resolvable:$true] %s417
          %420 = dma.hbm_to_vmem [thread:$0]  %s416, 16, %s418, [#allocation18]
        $region52: #{forward.1} parent=11 // pred_fallthru
          _
      $region12: #{forward.1} parent=5 // pred_fallthru
        _
      %p421 = scmp.lt.s32.totalorder %s25, 2
      // Predicated region
      $region53: #{forward.1} parent=5 // pred_check
        %p422 = pneg %p421
      $region54: #{forward.1} parent=5 // pred_check_branch
        %424 = sbr.rel (%p422) target = $region56
      $region55: #{forward.1} parent=5 // pred_region
        // Predicated region
        $region57: #{forward.1} parent=55 // pred_check
          %p425 = pneg %p45
        $region58: #{forward.1} parent=55 // pred_check_branch
          %427 = sbr.rel (%p425) target = $region60
        $region59: #{forward.1} parent=55 // pred_region
          %p428 = scmp.lt.s32.totalorder %s25, 1
          %s429 = scalar_select %p428, %s25, 1
          %s430 = smul.addr %s429, 4
          %s431 = smul.addr %s430, 8
          %s432 = scalar_lea.vmem %s0, %s431
        $region60: #{forward.1} parent=55 // pred_fallthru
          _
      $region56: #{forward.1} parent=5 // pred_fallthru
        _
      %p433 = scmp.le.s32.totalorder 1, %s25
      %p434 = scmp.lt.s32.totalorder %s25, 3
      %p435 = pnand %p433, %p434
      %p436 = pneg %p435
      // Predicated region
      $region61: #{forward.1} parent=5 // pred_check
        _
      $region62: #{forward.1} parent=5 // pred_check_branch
        %438 = sbr.rel (%p435) target = $region64
      $region63: #{forward.1} parent=5 // pred_region
        %s439 = ssub.s32 %s25, 1
        // Predicated region
        $region65: #{forward.1} parent=63 // pred_check
          %p440 = pneg %p72
        $region66: #{forward.1} parent=63 // pred_check_branch
          %442 = sbr.rel (%p440) target = $region68
        $region67: #{forward.1} parent=63 // pred_region
          %444 = dma.done [#allocation6], 36864
        $region68: #{forward.1} parent=63 // pred_fallthru
          _
        // Predicated region
        $region69: #{forward.1} parent=63 // pred_check
          %p445 = pneg %p93
        $region70: #{forward.1} parent=63 // pred_check_branch
          %447 = sbr.rel (%p445) target = $region72
        $region71: #{forward.1} parent=63 // pred_region
          %449 = dma.done [#allocation9], 128
        $region72: #{forward.1} parent=63 // pred_fallthru
          _
        // Predicated region
        $region73: #{forward.1} parent=63 // pred_check
          %p450 = pneg %p114
        $region74: #{forward.1} parent=63 // pred_check_branch
          %452 = sbr.rel (%p450) target = $region76
        $region75: #{forward.1} parent=63 // pred_region
          %454 = dma.done [#allocation9], 107520
        $region76: #{forward.1} parent=63 // pred_fallthru
          _
        // Predicated region
        $region77: #{forward.1} parent=63 // pred_check
          %p455 = pneg %p135
        $region78: #{forward.1} parent=63 // pred_check_branch
          %457 = sbr.rel (%p455) target = $region80
        $region79: #{forward.1} parent=63 // pred_region
          %459 = dma.done [#allocation12], 112
        $region80: #{forward.1} parent=63 // pred_fallthru
          _
        // Predicated region
        $region81: #{forward.1} parent=63 // pred_check
          %p460 = pneg %p156
        $region82: #{forward.1} parent=63 // pred_check_branch
          %462 = sbr.rel (%p460) target = $region84
        $region83: #{forward.1} parent=63 // pred_region
          %464 = dma.done [#allocation12], 107520
        $region84: #{forward.1} parent=63 // pred_fallthru
          _
        // Predicated region
        $region85: #{forward.1} parent=63 // pred_check
          %p465 = pneg %p177
        $region86: #{forward.1} parent=63 // pred_check_branch
          %467 = sbr.rel (%p465) target = $region88
        $region87: #{forward.1} parent=63 // pred_region
          %469 = dma.done [#allocation15], 80
        $region88: #{forward.1} parent=63 // pred_fallthru
          _
        // Predicated region
        $region89: #{forward.1} parent=63 // pred_check
          %p470 = pneg %p198
        $region90: #{forward.1} parent=63 // pred_check_branch
          %472 = sbr.rel (%p470) target = $region92
        $region91: #{forward.1} parent=63 // pred_region
          %474 = dma.done [#allocation15], 16384
        $region92: #{forward.1} parent=63 // pred_fallthru
          _
        // Predicated region
        $region93: #{forward.1} parent=63 // pred_check
          %p475 = pneg %p219
        $region94: #{forward.1} parent=63 // pred_check_branch
          %477 = sbr.rel (%p475) target = $region96
        $region95: #{forward.1} parent=63 // pred_region
          %479 = dma.done [#allocation18], 32
        $region96: #{forward.1} parent=63 // pred_fallthru
          _
        // Predicated region
        $region97: #{forward.1} parent=63 // pred_check
          %p480 = pneg %p261
        $region98: #{forward.1} parent=63 // pred_check_branch
          %482 = sbr.rel (%p480) target = $region100
        $region99: #{forward.1} parent=63 // pred_region
          %484 = dma.done [#allocation18], 16
        $region100: #{forward.1} parent=63 // pred_fallthru
          _
        %p485 = scmp.lt.s32.totalorder %s30, 1
        %s486 = scalar_select %p485, %s30, 1
        %s487 = smul.addr %s486, 4
        %s488 = smul.addr %s487, 8
        %s489 = scalar_lea.vmem %s0, %s488
        %p490 = pneg %p51
        %p491 = pneg %p48
        %p492 = pneg %p72
        %p493 = pneg %p69
        %p494 = pneg %p93
        %p495 = pneg %p90
        %p496 = pneg %p114
        %p497 = pneg %p111
        %p498 = pneg %p135
        %p499 = pneg %p132
        %p500 = pneg %p156
        %p501 = pneg %p153
        %p502 = pneg %p177
        %p503 = pneg %p174
        %p504 = pneg %p198
        %p505 = pneg %p195
        %p506 = pneg %p219
        %p507 = pneg %p216
        %p508 = pneg %p240
        %p509 = pneg %p237
        %p510 = pneg %p261
        %p511 = pneg %p258
        %p512 = pneg %p287
        %p513 = pneg %p284
        %s514 = sand.u32 %s274, 1
        %s515 = scalar_lea.sflag [#allocation7], %s514
        %s516 = sand.u32 %s274, 1
        %s517 = scalar_lea.vmem [#allocation20], %s516
        %p518 = scmp.lt.s32.totalorder %s30, 1
        %s519 = scalar_select %p518, %s30, 1
        %s520 = smul.addr %s519, 4
        %s521 = smul.addr %s520, 8
        %s522 = scalar_lea.vmem %s0, %s521
        %v523 = vld [vmem:[#allocation8] sm:$0xff]
        %v524 = vld [vmem:[%s522] sm:$0xff]
        %v525 = vld [vmem:[%s522 + $0x8] sm:$0xff]
        %v526 = vld [vmem:[%s522 + $0x10] sm:$0xff]
        %v527 = vld [vmem:[%s522 + $0x18] sm:$0x3f]
        %v528 = vld [vmem:[#allocation5] sm:$0xff]
        %v529 = vld [vmem:[#allocation5 + $0x8] sm:$0xff]
        %v530 = vld [vmem:[#allocation5 + $0x10] sm:$0xff]
        %v531 = vld [vmem:[#allocation5 + $0x18] sm:$0xff]
        %v532 = vld [vmem:[#allocation5 + $0x20] sm:$0xff]
        %v533 = vld [vmem:[#allocation5 + $0x28] sm:$0xff]
        %v534 = vld [vmem:[#allocation5 + $0x30] sm:$0xff]
        %v535 = vld [vmem:[#allocation5 + $0x38] sm:$0xff]
        %v536 = vld [vmem:[#allocation5 + $0x40] sm:$0xff]
        %v537 = vld [vmem:[#allocation5 + $0x48] sm:$0xff]
        %v538 = vld [vmem:[#allocation5 + $0x50] sm:$0xff]
        %v539 = vld [vmem:[#allocation5 + $0x58] sm:$0xff]
        %v540 = vld [vmem:[#allocation5 + $0x60] sm:$0xff]
        %v541 = vld [vmem:[#allocation5 + $0x68] sm:$0xff]
        %v542 = vld [vmem:[#allocation5 + $0x70] sm:$0xff]
        %v543 = vld [vmem:[#allocation5 + $0x78] sm:$0xff]
        %v544 = vld [vmem:[#allocation5 + $0x80] sm:$0xff]
        %v545 = vld [vmem:[#allocation5 + $0x88] sm:$0xff]
        %v546 = vld [vmem:[#allocation5 + $0x90] sm:$0xff]
        %v547 = vld [vmem:[#allocation5 + $0x98] sm:$0xff]
        %v548 = vld [vmem:[#allocation5 + $0xa0] sm:$0xff]
        %v549 = vld [vmem:[#allocation5 + $0xa8] sm:$0xff]
        %v550 = vld [vmem:[#allocation5 + $0xb0] sm:$0xff]
        %v551 = vld [vmem:[#allocation5 + $0xb8] sm:$0xff]
        %v552 = vld [vmem:[#allocation5 + $0xc0] sm:$0xff]
        %v553 = vld [vmem:[#allocation5 + $0xc8] sm:$0xff]
        %v554 = vld [vmem:[#allocation5 + $0xd0] sm:$0xff]
        %v555 = vld [vmem:[#allocation5 + $0xd8] sm:$0xff]
        %v556 = vld [vmem:[#allocation5 + $0xe0] sm:$0xff]
        %v557 = vld [vmem:[#allocation5 + $0xe8] sm:$0xff]
        %v558 = vld [vmem:[#allocation5 + $0xf0] sm:$0xff]
        %v559 = vld [vmem:[#allocation5 + $0xf8] sm:$0xff]
        %v560 = vld [vmem:[#allocation5 + $0x100] sm:$0xff]
        %v561 = vld [vmem:[#allocation5 + $0x108] sm:$0xff]
        %v562 = vld [vmem:[#allocation5 + $0x110] sm:$0xff]
        %v563 = vld [vmem:[#allocation5 + $0x118] sm:$0xff]
        %v564 = vld [vmem:[#allocation5 + $0x120] sm:$0xff]
        %v565 = vld [vmem:[#allocation5 + $0x128] sm:$0xff]
        %v566 = vld [vmem:[#allocation5 + $0x130] sm:$0xff]
        %v567 = vld [vmem:[#allocation5 + $0x138] sm:$0xff]
        %v568 = vld [vmem:[#allocation5 + $0x140] sm:$0xff]
        %v569 = vld [vmem:[#allocation5 + $0x148] sm:$0xff]
        %v570 = vld [vmem:[#allocation5 + $0x150] sm:$0xff]
        %v571 = vld [vmem:[#allocation5 + $0x158] sm:$0xff]
        %v572 = vld [vmem:[#allocation5 + $0x160] sm:$0xff]
        %v573 = vld [vmem:[#allocation5 + $0x168] sm:$0xff]
        %v574 = vld [vmem:[#allocation5 + $0x170] sm:$0xff]
        %v575 = vld [vmem:[#allocation5 + $0x178] sm:$0xff]
        %v576 = vld [vmem:[#allocation5 + $0x180] sm:$0xff]
        %v577 = vld [vmem:[#allocation5 + $0x188] sm:$0xff]
        %v578 = vld [vmem:[#allocation5 + $0x190] sm:$0xff]
        %v579 = vld [vmem:[#allocation5 + $0x198] sm:$0xff]
        %v580 = vld [vmem:[#allocation5 + $0x1a0] sm:$0xff]
        %v581 = vld [vmem:[#allocation5 + $0x1a8] sm:$0xff]
        %v582 = vld [vmem:[#allocation5 + $0x1b0] sm:$0xff]
        %v583 = vld [vmem:[#allocation5 + $0x1b8] sm:$0xff]
        %v584 = vld [vmem:[#allocation5 + $0x1c0] sm:$0xff]
        %v585 = vld [vmem:[#allocation5 + $0x1c8] sm:$0xff]
        %v586 = vld [vmem:[#allocation5 + $0x1d0] sm:$0xff]
        %v587 = vld [vmem:[#allocation5 + $0x1d8] sm:$0xff]
        %v588 = vld [vmem:[#allocation5 + $0x1e0] sm:$0xff]
        %v589 = vld [vmem:[#allocation5 + $0x1e8] sm:$0xff]
        %v590 = vld [vmem:[#allocation5 + $0x1f0] sm:$0xff]
        %v591 = vld [vmem:[#allocation5 + $0x1f8] sm:$0xff]
        %v592 = vld [vmem:[#allocation5 + $0x200] sm:$0xff]
        %v593 = vld [vmem:[#allocation5 + $0x208] sm:$0xff]
        %v594 = vld [vmem:[#allocation5 + $0x210] sm:$0xff]
        %v595 = vld [vmem:[#allocation5 + $0x218] sm:$0xff]
        %v596 = vld [vmem:[#allocation5 + $0x220] sm:$0xff]
        %v597 = vld [vmem:[#allocation5 + $0x228] sm:$0xff]
        %v598 = vld [vmem:[#allocation5 + $0x230] sm:$0xff]
        %v599 = vld [vmem:[#allocation5 + $0x238] sm:$0xff]
        %v600 = vld [vmem:[#allocation5 + $0x240] sm:$0xff]
        %v601 = vld [vmem:[#allocation5 + $0x248] sm:$0xff]
        %v602 = vld [vmem:[#allocation5 + $0x250] sm:$0xff]
        %v603 = vld [vmem:[#allocation5 + $0x258] sm:$0xff]
        %v604 = vld [vmem:[#allocation5 + $0x260] sm:$0xff]
        %v605 = vld [vmem:[#allocation5 + $0x268] sm:$0xff]
        %v606 = vld [vmem:[#allocation5 + $0x270] sm:$0xff]
        %v607 = vld [vmem:[#allocation5 + $0x278] sm:$0xff]
        %v608 = vld [vmem:[#allocation5 + $0x280] sm:$0xff]
        %v609 = vld [vmem:[#allocation5 + $0x288] sm:$0xff]
        %v610 = vld [vmem:[#allocation5 + $0x290] sm:$0xff]
        %v611 = vld [vmem:[#allocation5 + $0x298] sm:$0xff]
        %v612 = vld [vmem:[#allocation5 + $0x2a0] sm:$0xff]
        %v613 = vld [vmem:[#allocation5 + $0x2a8] sm:$0xff]
        %v614 = vld [vmem:[#allocation5 + $0x2b0] sm:$0xff]
        %v615 = vld [vmem:[#allocation5 + $0x2b8] sm:$0xff]
        %v616 = vld [vmem:[#allocation5 + $0x2c0] sm:$0xff]
        %v617 = vld [vmem:[#allocation5 + $0x2c8] sm:$0xff]
        %v618 = vld [vmem:[#allocation5 + $0x2d0] sm:$0xff]
        %v619 = vld [vmem:[#allocation5 + $0x2d8] sm:$0xff]
        %v620 = vld [vmem:[#allocation5 + $0x2e0] sm:$0xff]
        %v621 = vld [vmem:[#allocation5 + $0x2e8] sm:$0xff]
        %v622 = vld [vmem:[#allocation5 + $0x2f0] sm:$0xff]
        %v623 = vld [vmem:[#allocation5 + $0x2f8] sm:$0xff]
        %v624 = vld [vmem:[%s522 + $0x1] sm:$0xff]
        %v625 = vld [vmem:[%s522 + $0x9] sm:$0xff]
        %v626 = vld [vmem:[%s522 + $0x11] sm:$0xff]
        %v627 = vld [vmem:[%s522 + $0x19] sm:$0x3f]
        %s628 = scalar_lea.vmem [#allocation5], 768
        %v629 = vld [vmem:[%s628] sm:$0xff]
        %v630 = vld [vmem:[%s628 + $0x8] sm:$0xff]
        %v631 = vld [vmem:[%s628 + $0x10] sm:$0xff]
        %v632 = vld [vmem:[%s628 + $0x18] sm:$0xff]
        %v633 = vld [vmem:[%s628 + $0x20] sm:$0xff]
        %v634 = vld [vmem:[%s628 + $0x28] sm:$0xff]
        %v635 = vld [vmem:[%s628 + $0x30] sm:$0xff]
        %v636 = vld [vmem:[%s628 + $0x38] sm:$0xff]
        %v637 = vld [vmem:[%s628 + $0x40] sm:$0xff]
        %v638 = vld [vmem:[%s628 + $0x48] sm:$0xff]
        %v639 = vld [vmem:[%s628 + $0x50] sm:$0xff]
        %v640 = vld [vmem:[%s628 + $0x58] sm:$0xff]
        %v641 = vld [vmem:[%s628 + $0x60] sm:$0xff]
        %v642 = vld [vmem:[%s628 + $0x68] sm:$0xff]
        %v643 = vld [vmem:[%s628 + $0x70] sm:$0xff]
        %v644 = vld [vmem:[%s628 + $0x78] sm:$0xff]
        %v645 = vld [vmem:[%s628 + $0x80] sm:$0xff]
        %v646 = vld [vmem:[%s628 + $0x88] sm:$0xff]
        %v647 = vld [vmem:[%s628 + $0x90] sm:$0xff]
        %v648 = vld [vmem:[%s628 + $0x98] sm:$0xff]
        %v649 = vld [vmem:[%s628 + $0xa0] sm:$0xff]
        %v650 = vld [vmem:[%s628 + $0xa8] sm:$0xff]
        %v651 = vld [vmem:[%s628 + $0xb0] sm:$0xff]
        %v652 = vld [vmem:[%s628 + $0xb8] sm:$0xff]
        %v653 = vld [vmem:[%s628 + $0xc0] sm:$0xff]
        %v654 = vld [vmem:[%s628 + $0xc8] sm:$0xff]
        %v655 = vld [vmem:[%s628 + $0xd0] sm:$0xff]
        %v656 = vld [vmem:[%s628 + $0xd8] sm:$0xff]
        %v657 = vld [vmem:[%s628 + $0xe0] sm:$0xff]
        %v658 = vld [vmem:[%s628 + $0xe8] sm:$0xff]
        %v659 = vld [vmem:[%s628 + $0xf0] sm:$0xff]
        %v660 = vld [vmem:[%s628 + $0xf8] sm:$0xff]
        %v661 = vld [vmem:[%s628 + $0x100] sm:$0xff]
        %v662 = vld [vmem:[%s628 + $0x108] sm:$0xff]
        %v663 = vld [vmem:[%s628 + $0x110] sm:$0xff]
        %v664 = vld [vmem:[%s628 + $0x118] sm:$0xff]
        %v665 = vld [vmem:[%s628 + $0x120] sm:$0xff]
        %v666 = vld [vmem:[%s628 + $0x128] sm:$0xff]
        %v667 = vld [vmem:[%s628 + $0x130] sm:$0xff]
        %v668 = vld [vmem:[%s628 + $0x138] sm:$0xff]
        %v669 = vld [vmem:[%s628 + $0x140] sm:$0xff]
        %v670 = vld [vmem:[%s628 + $0x148] sm:$0xff]
        %v671 = vld [vmem:[%s628 + $0x150] sm:$0xff]
        %v672 = vld [vmem:[%s628 + $0x158] sm:$0xff]
        %v673 = vld [vmem:[%s628 + $0x160] sm:$0xff]
        %v674 = vld [vmem:[%s628 + $0x168] sm:$0xff]
        %v675 = vld [vmem:[%s628 + $0x170] sm:$0xff]
        %v676 = vld [vmem:[%s628 + $0x178] sm:$0xff]
        %v677 = vld [vmem:[%s628 + $0x180] sm:$0xff]
        %v678 = vld [vmem:[%s628 + $0x188] sm:$0xff]
        %v679 = vld [vmem:[%s628 + $0x190] sm:$0xff]
        %v680 = vld [vmem:[%s628 + $0x198] sm:$0xff]
        %v681 = vld [vmem:[%s628 + $0x1a0] sm:$0xff]
        %v682 = vld [vmem:[%s628 + $0x1a8] sm:$0xff]
        %v683 = vld [vmem:[%s628 + $0x1b0] sm:$0xff]
        %v684 = vld [vmem:[%s628 + $0x1b8] sm:$0xff]
        %v685 = vld [vmem:[%s628 + $0x1c0] sm:$0xff]
        %v686 = vld [vmem:[%s628 + $0x1c8] sm:$0xff]
        %v687 = vld [vmem:[%s628 + $0x1d0] sm:$0xff]
        %v688 = vld [vmem:[%s628 + $0x1d8] sm:$0xff]
        %v689 = vld [vmem:[%s628 + $0x1e0] sm:$0xff]
        %v690 = vld [vmem:[%s628 + $0x1e8] sm:$0xff]
        %v691 = vld [vmem:[%s628 + $0x1f0] sm:$0xff]
        %v692 = vld [vmem:[%s628 + $0x1f8] sm:$0xff]
        %v693 = vld [vmem:[%s628 + $0x200] sm:$0xff]
        %v694 = vld [vmem:[%s628 + $0x208] sm:$0xff]
        %v695 = vld [vmem:[%s628 + $0x210] sm:$0xff]
        %v696 = vld [vmem:[%s628 + $0x218] sm:$0xff]
        %v697 = vld [vmem:[%s628 + $0x220] sm:$0xff]
        %v698 = vld [vmem:[%s628 + $0x228] sm:$0xff]
        %v699 = vld [vmem:[%s628 + $0x230] sm:$0xff]
        %v700 = vld [vmem:[%s628 + $0x238] sm:$0xff]
        %v701 = vld [vmem:[%s628 + $0x240] sm:$0xff]
        %v702 = vld [vmem:[%s628 + $0x248] sm:$0xff]
        %v703 = vld [vmem:[%s628 + $0x250] sm:$0xff]
        %v704 = vld [vmem:[%s628 + $0x258] sm:$0xff]
        %v705 = vld [vmem:[%s628 + $0x260] sm:$0xff]
        %v706 = vld [vmem:[%s628 + $0x268] sm:$0xff]
        %v707 = vld [vmem:[%s628 + $0x270] sm:$0xff]
        %v708 = vld [vmem:[%s628 + $0x278] sm:$0xff]
        %v709 = vld [vmem:[%s628 + $0x280] sm:$0xff]
        %v710 = vld [vmem:[%s628 + $0x288] sm:$0xff]
        %v711 = vld [vmem:[%s628 + $0x290] sm:$0xff]
        %v712 = vld [vmem:[%s628 + $0x298] sm:$0xff]
        %v713 = vld [vmem:[%s628 + $0x2a0] sm:$0xff]
        %v714 = vld [vmem:[%s628 + $0x2a8] sm:$0xff]
        %v715 = vld [vmem:[%s628 + $0x2b0] sm:$0xff]
        %v716 = vld [vmem:[%s628 + $0x2b8] sm:$0xff]
        %v717 = vld [vmem:[%s628 + $0x2c0] sm:$0xff]
        %v718 = vld [vmem:[%s628 + $0x2c8] sm:$0xff]
        %v719 = vld [vmem:[%s628 + $0x2d0] sm:$0xff]
        %v720 = vld [vmem:[%s628 + $0x2d8] sm:$0xff]
        %v721 = vld [vmem:[%s628 + $0x2e0] sm:$0xff]
        %v722 = vld [vmem:[%s628 + $0x2e8] sm:$0xff]
        %v723 = vld [vmem:[%s628 + $0x2f0] sm:$0xff]
        %v724 = vld [vmem:[%s628 + $0x2f8] sm:$0xff]
        %vm725 = vcmask 785408
        %v727 = vsel %vm725, %v624, 0
        %v730 = vsel %vm725, %v625, 0
        %v733 = vsel %vm725, %v626, 0
        %v736 = vsel %vm725, %v627, 0
        %738 = vmatpush.msra.mxu0 0.0
        %739 = vmatpush.msra.mxu0 0.0
        %740 = vmatpush.msra.mxu0 0.0
        %741 = vmatpush.msra.mxu0 0.0
        %742 = vmatpush.msra.mxu0 %v717
        %743 = vmatpush.msra.mxu0 %v709
        %744 = vmatpush.msra.mxu0 %v701
        %745 = vmatpush.msra.mxu0 %v693
        %746 = vmatpush.msra.mxu0 %v685
        %747 = vmatpush.msra.mxu0 %v677
        %748 = vmatpush.msra.mxu0 %v669
        %749 = vmatpush.msra.mxu0 %v661
        %750 = vmatpush.msra.mxu0 %v653
        %751 = vmatpush.msra.mxu0 %v645
        %752 = vmatpush.msra.mxu0 %v637
        %753 = vmatpush.msra.mxu0 %v629
        %754 = vmatmul.f32.gmra.mxu0 %v727
        %v755 = vpop.f32.mrf.mxu0
        %v756 = vadd.f32 0.0, %v755
        %757 = vmatmul.f32.gmra.mxu0 %v730
        %v758 = vpop.f32.mrf.mxu0
        %v759 = vadd.f32 0.0, %v758
        %760 = vmatmul.f32.gmra.mxu0 %v733
        %v761 = vpop.f32.mrf.mxu0
        %v762 = vadd.f32 0.0, %v761
        %763 = vmatmul.f32.gmra.mxu0 %v736
        %v764 = vpop.f32.mrf.mxu0
        %v765 = vadd.f32 0.0, %v764
        %766 = vdwg.mxu0
        %767 = vmatpush.msra.mxu0 0.0
        %768 = vmatpush.msra.mxu0 0.0
        %769 = vmatpush.msra.mxu0 0.0
        %770 = vmatpush.msra.mxu0 0.0
        %771 = vmatpush.msra.mxu0 %v718
        %772 = vmatpush.msra.mxu0 %v710
        %773 = vmatpush.msra.mxu0 %v702
        %774 = vmatpush.msra.mxu0 %v694
        %775 = vmatpush.msra.mxu0 %v686
        %776 = vmatpush.msra.mxu0 %v678
        %777 = vmatpush.msra.mxu0 %v670
        %778 = vmatpush.msra.mxu0 %v662
        %779 = vmatpush.msra.mxu0 %v654
        %780 = vmatpush.msra.mxu0 %v646
        %781 = vmatpush.msra.mxu0 %v638
        %782 = vmatpush.msra.mxu0 %v630
        %783 = vmatmul.f32.gmra.mxu0 %v727
        %v784 = vpop.f32.mrf.mxu0
        %v785 = vadd.f32 0.0, %v784
        %786 = vmatmul.f32.gmra.mxu0 %v730
        %v787 = vpop.f32.mrf.mxu0
        %v788 = vadd.f32 0.0, %v787
        %789 = vmatmul.f32.gmra.mxu0 %v733
        %v790 = vpop.f32.mrf.mxu0
        %v791 = vadd.f32 0.0, %v790
        %792 = vmatmul.f32.gmra.mxu0 %v736
        %v793 = vpop.f32.mrf.mxu0
        %v794 = vadd.f32 0.0, %v793
        %795 = vdwg.mxu0
        %796 = vmatpush.msra.mxu0 0.0
        %797 = vmatpush.msra.mxu0 0.0
        %798 = vmatpush.msra.mxu0 0.0
        %799 = vmatpush.msra.mxu0 0.0
        %800 = vmatpush.msra.mxu0 %v719
        %801 = vmatpush.msra.mxu0 %v711
        %802 = vmatpush.msra.mxu0 %v703
        %803 = vmatpush.msra.mxu0 %v695
        %804 = vmatpush.msra.mxu0 %v687
        %805 = vmatpush.msra.mxu0 %v679
        %806 = vmatpush.msra.mxu0 %v671
        %807 = vmatpush.msra.mxu0 %v663
        %808 = vmatpush.msra.mxu0 %v655
        %809 = vmatpush.msra.mxu0 %v647
        %810 = vmatpush.msra.mxu0 %v639
        %811 = vmatpush.msra.mxu0 %v631
        %812 = vmatmul.f32.gmra.mxu0 %v727
        %v813 = vpop.f32.mrf.mxu0
        %v814 = vadd.f32 0.0, %v813
        %815 = vmatmul.f32.gmra.mxu0 %v730
        %v816 = vpop.f32.mrf.mxu0
        %v817 = vadd.f32 0.0, %v816
        %818 = vmatmul.f32.gmra.mxu0 %v733
        %v819 = vpop.f32.mrf.mxu0
        %v820 = vadd.f32 0.0, %v819
        %821 = vmatmul.f32.gmra.mxu0 %v736
        %v822 = vpop.f32.mrf.mxu0
        %v823 = vadd.f32 0.0, %v822
        %824 = vdwg.mxu0
        %825 = vmatpush.msra.mxu0 0.0
        %826 = vmatpush.msra.mxu0 0.0
        %827 = vmatpush.msra.mxu0 0.0
        %828 = vmatpush.msra.mxu0 0.0
        %829 = vmatpush.msra.mxu0 %v720
        %830 = vmatpush.msra.mxu0 %v712
        %831 = vmatpush.msra.mxu0 %v704
        %832 = vmatpush.msra.mxu0 %v696
        %833 = vmatpush.msra.mxu0 %v688
        %834 = vmatpush.msra.mxu0 %v680
        %835 = vmatpush.msra.mxu0 %v672
        %836 = vmatpush.msra.mxu0 %v664
        %837 = vmatpush.msra.mxu0 %v656
        %838 = vmatpush.msra.mxu0 %v648
        %839 = vmatpush.msra.mxu0 %v640
        %840 = vmatpush.msra.mxu0 %v632
        %841 = vmatmul.f32.gmra.mxu0 %v727
        %v842 = vpop.f32.mrf.mxu0
        %v843 = vadd.f32 0.0, %v842
        %844 = vmatmul.f32.gmra.mxu0 %v730
        %v845 = vpop.f32.mrf.mxu0
        %v846 = vadd.f32 0.0, %v845
        %847 = vmatmul.f32.gmra.mxu0 %v733
        %v848 = vpop.f32.mrf.mxu0
        %v849 = vadd.f32 0.0, %v848
        %850 = vmatmul.f32.gmra.mxu0 %v736
        %v851 = vpop.f32.mrf.mxu0
        %v852 = vadd.f32 0.0, %v851
        %853 = vdwg.mxu0
        %854 = vmatpush.msra.mxu0 0.0
        %855 = vmatpush.msra.mxu0 0.0
        %856 = vmatpush.msra.mxu0 0.0
        %857 = vmatpush.msra.mxu0 0.0
        %858 = vmatpush.msra.mxu0 %v721
        %859 = vmatpush.msra.mxu0 %v713
        %860 = vmatpush.msra.mxu0 %v705
        %861 = vmatpush.msra.mxu0 %v697
        %862 = vmatpush.msra.mxu0 %v689
        %863 = vmatpush.msra.mxu0 %v681
        %864 = vmatpush.msra.mxu0 %v673
        %865 = vmatpush.msra.mxu0 %v665
        %866 = vmatpush.msra.mxu0 %v657
        %867 = vmatpush.msra.mxu0 %v649
        %868 = vmatpush.msra.mxu0 %v641
        %869 = vmatpush.msra.mxu0 %v633
        %870 = vmatmul.f32.gmra.mxu0 %v727
        %v871 = vpop.f32.mrf.mxu0
        %v872 = vadd.f32 0.0, %v871
        %873 = vmatmul.f32.gmra.mxu0 %v730
        %v874 = vpop.f32.mrf.mxu0
        %v875 = vadd.f32 0.0, %v874
        %876 = vmatmul.f32.gmra.mxu0 %v733
        %v877 = vpop.f32.mrf.mxu0
        %v878 = vadd.f32 0.0, %v877
        %879 = vmatmul.f32.gmra.mxu0 %v736
        %v880 = vpop.f32.mrf.mxu0
        %v881 = vadd.f32 0.0, %v880
        %882 = vdwg.mxu0
        %883 = vmatpush.msra.mxu0 0.0
        %884 = vmatpush.msra.mxu0 0.0
        %885 = vmatpush.msra.mxu0 0.0
        %886 = vmatpush.msra.mxu0 0.0
        %887 = vmatpush.msra.mxu0 %v722
        %888 = vmatpush.msra.mxu0 %v714
        %889 = vmatpush.msra.mxu0 %v706
        %890 = vmatpush.msra.mxu0 %v698
        %891 = vmatpush.msra.mxu0 %v690
        %892 = vmatpush.msra.mxu0 %v682
        %893 = vmatpush.msra.mxu0 %v674
        %894 = vmatpush.msra.mxu0 %v666
        %895 = vmatpush.msra.mxu0 %v658
        %896 = vmatpush.msra.mxu0 %v650
        %897 = vmatpush.msra.mxu0 %v642
        %898 = vmatpush.msra.mxu0 %v634
        %899 = vmatmul.f32.gmra.mxu0 %v727
        %v900 = vpop.f32.mrf.mxu0
        %v901 = vadd.f32 0.0, %v900
        %902 = vmatmul.f32.gmra.mxu0 %v730
        %v903 = vpop.f32.mrf.mxu0
        %v904 = vadd.f32 0.0, %v903
        %905 = vmatmul.f32.gmra.mxu0 %v733
        %v906 = vpop.f32.mrf.mxu0
        %v907 = vadd.f32 0.0, %v906
        %908 = vmatmul.f32.gmra.mxu0 %v736
        %v909 = vpop.f32.mrf.mxu0
        %v910 = vadd.f32 0.0, %v909
        %911 = vdwg.mxu0
        %912 = vmatpush.msra.mxu0 0.0
        %913 = vmatpush.msra.mxu0 0.0
        %914 = vmatpush.msra.mxu0 0.0
        %915 = vmatpush.msra.mxu0 0.0
        %916 = vmatpush.msra.mxu0 %v723
        %917 = vmatpush.msra.mxu0 %v715
        %918 = vmatpush.msra.mxu0 %v707
        %919 = vmatpush.msra.mxu0 %v699
        %920 = vmatpush.msra.mxu0 %v691
        %921 = vmatpush.msra.mxu0 %v683
        %922 = vmatpush.msra.mxu0 %v675
        %923 = vmatpush.msra.mxu0 %v667
        %924 = vmatpush.msra.mxu0 %v659
        %925 = vmatpush.msra.mxu0 %v651
        %926 = vmatpush.msra.mxu0 %v643
        %927 = vmatpush.msra.mxu0 %v635
        %928 = vmatmul.f32.gmra.mxu0 %v727
        %v929 = vpop.f32.mrf.mxu0
        %v930 = vadd.f32 0.0, %v929
        %931 = vmatmul.f32.gmra.mxu0 %v730
        %v932 = vpop.f32.mrf.mxu0
        %v933 = vadd.f32 0.0, %v932
        %934 = vmatmul.f32.gmra.mxu0 %v733
        %v935 = vpop.f32.mrf.mxu0
        %v936 = vadd.f32 0.0, %v935
        %937 = vmatmul.f32.gmra.mxu0 %v736
        %v938 = vpop.f32.mrf.mxu0
        %v939 = vadd.f32 0.0, %v938
        %940 = vdwg.mxu0
        %941 = vmatpush.msra.mxu0 0.0
        %942 = vmatpush.msra.mxu0 0.0
        %943 = vmatpush.msra.mxu0 0.0
        %944 = vmatpush.msra.mxu0 0.0
        %945 = vmatpush.msra.mxu0 %v724
        %946 = vmatpush.msra.mxu0 %v716
        %947 = vmatpush.msra.mxu0 %v708
        %948 = vmatpush.msra.mxu0 %v700
        %949 = vmatpush.msra.mxu0 %v692
        %950 = vmatpush.msra.mxu0 %v684
        %951 = vmatpush.msra.mxu0 %v676
        %952 = vmatpush.msra.mxu0 %v668
        %953 = vmatpush.msra.mxu0 %v660
        %954 = vmatpush.msra.mxu0 %v652
        %955 = vmatpush.msra.mxu0 %v644
        %956 = vmatpush.msra.mxu0 %v636
        %957 = vmatmul.f32.gmra.mxu0 %v727
        %v958 = vpop.f32.mrf.mxu0
        %v959 = vadd.f32 0.0, %v958
        %960 = vmatmul.f32.gmra.mxu0 %v730
        %v961 = vpop.f32.mrf.mxu0
        %v962 = vadd.f32 0.0, %v961
        %963 = vmatmul.f32.gmra.mxu0 %v733
        %v964 = vpop.f32.mrf.mxu0
        %v965 = vadd.f32 0.0, %v964
        %966 = vmatmul.f32.gmra.mxu0 %v736
        %v967 = vpop.f32.mrf.mxu0
        %v968 = vadd.f32 0.0, %v967
        %969 = vdwg.mxu0
        %v971 = vsel %vm725, %v524, 0
        %v974 = vsel %vm725, %v525, 0
        %v977 = vsel %vm725, %v526, 0
        %v980 = vsel %vm725, %v527, 0
        %982 = vmatpush.msra.mxu0 0.0
        %983 = vmatpush.msra.mxu0 0.0
        %984 = vmatpush.msra.mxu0 0.0
        %985 = vmatpush.msra.mxu0 0.0
        %986 = vmatpush.msra.mxu0 %v616
        %987 = vmatpush.msra.mxu0 %v608
        %988 = vmatpush.msra.mxu0 %v600
        %989 = vmatpush.msra.mxu0 %v592
        %990 = vmatpush.msra.mxu0 %v584
        %991 = vmatpush.msra.mxu0 %v576
        %992 = vmatpush.msra.mxu0 %v568
        %993 = vmatpush.msra.mxu0 %v560
        %994 = vmatpush.msra.mxu0 %v552
        %995 = vmatpush.msra.mxu0 %v544
        %996 = vmatpush.msra.mxu0 %v536
        %997 = vmatpush.msra.mxu0 %v528
        %998 = vmatmul.f32.gmra.mxu0 %v971
        %v999 = vpop.f32.mrf.mxu0
        %v1000 = vadd.f32 %v756, %v999
        %1001 = vmatmul.f32.gmra.mxu0 %v974
        %v1002 = vpop.f32.mrf.mxu0
        %v1003 = vadd.f32 %v759, %v1002
        %1004 = vmatmul.f32.gmra.mxu0 %v977
        %v1005 = vpop.f32.mrf.mxu0
        %v1006 = vadd.f32 %v762, %v1005
        %1007 = vmatmul.f32.gmra.mxu0 %v980
        %v1008 = vpop.f32.mrf.mxu0
        %v1009 = vadd.f32 %v765, %v1008
        %1010 = vdwg.mxu0
        %1011 = vmatpush.msra.mxu0 0.0
        %1012 = vmatpush.msra.mxu0 0.0
        %1013 = vmatpush.msra.mxu0 0.0
        %1014 = vmatpush.msra.mxu0 0.0
        %1015 = vmatpush.msra.mxu0 %v617
        %1016 = vmatpush.msra.mxu0 %v609
        %1017 = vmatpush.msra.mxu0 %v601
        %1018 = vmatpush.msra.mxu0 %v593
        %1019 = vmatpush.msra.mxu0 %v585
        %1020 = vmatpush.msra.mxu0 %v577
        %1021 = vmatpush.msra.mxu0 %v569
        %1022 = vmatpush.msra.mxu0 %v561
        %1023 = vmatpush.msra.mxu0 %v553
        %1024 = vmatpush.msra.mxu0 %v545
        %1025 = vmatpush.msra.mxu0 %v537
        %1026 = vmatpush.msra.mxu0 %v529
        %1027 = vmatmul.f32.gmra.mxu0 %v971
        %v1028 = vpop.f32.mrf.mxu0
        %v1029 = vadd.f32 %v785, %v1028
        %1030 = vmatmul.f32.gmra.mxu0 %v974
        %v1031 = vpop.f32.mrf.mxu0
        %v1032 = vadd.f32 %v788, %v1031
        %1033 = vmatmul.f32.gmra.mxu0 %v977
        %v1034 = vpop.f32.mrf.mxu0
        %v1035 = vadd.f32 %v791, %v1034
        %1036 = vmatmul.f32.gmra.mxu0 %v980
        %v1037 = vpop.f32.mrf.mxu0
        %v1038 = vadd.f32 %v794, %v1037
        %1039 = vdwg.mxu0
        %1040 = vmatpush.msra.mxu0 0.0
        %1041 = vmatpush.msra.mxu0 0.0
        %1042 = vmatpush.msra.mxu0 0.0
        %1043 = vmatpush.msra.mxu0 0.0
        %1044 = vmatpush.msra.mxu0 %v618
        %1045 = vmatpush.msra.mxu0 %v610
        %1046 = vmatpush.msra.mxu0 %v602
        %1047 = vmatpush.msra.mxu0 %v594
        %1048 = vmatpush.msra.mxu0 %v586
        %1049 = vmatpush.msra.mxu0 %v578
        %1050 = vmatpush.msra.mxu0 %v570
        %1051 = vmatpush.msra.mxu0 %v562
        %1052 = vmatpush.msra.mxu0 %v554
        %1053 = vmatpush.msra.mxu0 %v546
        %1054 = vmatpush.msra.mxu0 %v538
        %1055 = vmatpush.msra.mxu0 %v530
        %1056 = vmatmul.f32.gmra.mxu0 %v971
        %v1057 = vpop.f32.mrf.mxu0
        %v1058 = vadd.f32 %v814, %v1057
        %1059 = vmatmul.f32.gmra.mxu0 %v974
        %v1060 = vpop.f32.mrf.mxu0
        %v1061 = vadd.f32 %v817, %v1060
        %1062 = vmatmul.f32.gmra.mxu0 %v977
        %v1063 = vpop.f32.mrf.mxu0
        %v1064 = vadd.f32 %v820, %v1063
        %1065 = vmatmul.f32.gmra.mxu0 %v980
        %v1066 = vpop.f32.mrf.mxu0
        %v1067 = vadd.f32 %v823, %v1066
        %1068 = vdwg.mxu0
        %1069 = vmatpush.msra.mxu0 0.0
        %1070 = vmatpush.msra.mxu0 0.0
        %1071 = vmatpush.msra.mxu0 0.0
        %1072 = vmatpush.msra.mxu0 0.0
        %1073 = vmatpush.msra.mxu0 %v619
        %1074 = vmatpush.msra.mxu0 %v611
        %1075 = vmatpush.msra.mxu0 %v603
        %1076 = vmatpush.msra.mxu0 %v595
        %1077 = vmatpush.msra.mxu0 %v587
        %1078 = vmatpush.msra.mxu0 %v579
        %1079 = vmatpush.msra.mxu0 %v571
        %1080 = vmatpush.msra.mxu0 %v563
        %1081 = vmatpush.msra.mxu0 %v555
        %1082 = vmatpush.msra.mxu0 %v547
        %1083 = vmatpush.msra.mxu0 %v539
        %1084 = vmatpush.msra.mxu0 %v531
        %1085 = vmatmul.f32.gmra.mxu0 %v971
        %v1086 = vpop.f32.mrf.mxu0
        %v1087 = vadd.f32 %v843, %v1086
        %1088 = vmatmul.f32.gmra.mxu0 %v974
        %v1089 = vpop.f32.mrf.mxu0
        %v1090 = vadd.f32 %v846, %v1089
        %1091 = vmatmul.f32.gmra.mxu0 %v977
        %v1092 = vpop.f32.mrf.mxu0
        %v1093 = vadd.f32 %v849, %v1092
        %1094 = vmatmul.f32.gmra.mxu0 %v980
        %v1095 = vpop.f32.mrf.mxu0
        %v1096 = vadd.f32 %v852, %v1095
        %1097 = vdwg.mxu0
        %1098 = vmatpush.msra.mxu0 0.0
        %1099 = vmatpush.msra.mxu0 0.0
        %1100 = vmatpush.msra.mxu0 0.0
        %1101 = vmatpush.msra.mxu0 0.0
        %1102 = vmatpush.msra.mxu0 %v620
        %1103 = vmatpush.msra.mxu0 %v612
        %1104 = vmatpush.msra.mxu0 %v604
        %1105 = vmatpush.msra.mxu0 %v596
        %1106 = vmatpush.msra.mxu0 %v588
        %1107 = vmatpush.msra.mxu0 %v580
        %1108 = vmatpush.msra.mxu0 %v572
        %1109 = vmatpush.msra.mxu0 %v564
        %1110 = vmatpush.msra.mxu0 %v556
        %1111 = vmatpush.msra.mxu0 %v548
        %1112 = vmatpush.msra.mxu0 %v540
        %1113 = vmatpush.msra.mxu0 %v532
        %1114 = vmatmul.f32.gmra.mxu0 %v971
        %v1115 = vpop.f32.mrf.mxu0
        %v1116 = vadd.f32 %v872, %v1115
        %1117 = vmatmul.f32.gmra.mxu0 %v974
        %v1118 = vpop.f32.mrf.mxu0
        %v1119 = vadd.f32 %v875, %v1118
        %1120 = vmatmul.f32.gmra.mxu0 %v977
        %v1121 = vpop.f32.mrf.mxu0
        %v1122 = vadd.f32 %v878, %v1121
        %1123 = vmatmul.f32.gmra.mxu0 %v980
        %v1124 = vpop.f32.mrf.mxu0
        %v1125 = vadd.f32 %v881, %v1124
        %1126 = vdwg.mxu0
        %1127 = vmatpush.msra.mxu0 0.0
        %1128 = vmatpush.msra.mxu0 0.0
        %1129 = vmatpush.msra.mxu0 0.0
        %1130 = vmatpush.msra.mxu0 0.0
        %1131 = vmatpush.msra.mxu0 %v621
        %1132 = vmatpush.msra.mxu0 %v613
        %1133 = vmatpush.msra.mxu0 %v605
        %1134 = vmatpush.msra.mxu0 %v597
        %1135 = vmatpush.msra.mxu0 %v589
        %1136 = vmatpush.msra.mxu0 %v581
        %1137 = vmatpush.msra.mxu0 %v573
        %1138 = vmatpush.msra.mxu0 %v565
        %1139 = vmatpush.msra.mxu0 %v557
        %1140 = vmatpush.msra.mxu0 %v549
        %1141 = vmatpush.msra.mxu0 %v541
        %1142 = vmatpush.msra.mxu0 %v533
        %1143 = vmatmul.f32.gmra.mxu0 %v971
        %v1144 = vpop.f32.mrf.mxu0
        %v1145 = vadd.f32 %v901, %v1144
        %1146 = vmatmul.f32.gmra.mxu0 %v974
        %v1147 = vpop.f32.mrf.mxu0
        %v1148 = vadd.f32 %v904, %v1147
        %1149 = vmatmul.f32.gmra.mxu0 %v977
        %v1150 = vpop.f32.mrf.mxu0
        %v1151 = vadd.f32 %v907, %v1150
        %1152 = vmatmul.f32.gmra.mxu0 %v980
        %v1153 = vpop.f32.mrf.mxu0
        %v1154 = vadd.f32 %v910, %v1153
        %1155 = vdwg.mxu0
        %1156 = vmatpush.msra.mxu0 0.0
        %1157 = vmatpush.msra.mxu0 0.0
        %1158 = vmatpush.msra.mxu0 0.0
        %1159 = vmatpush.msra.mxu0 0.0
        %1160 = vmatpush.msra.mxu0 %v622
        %1161 = vmatpush.msra.mxu0 %v614
        %1162 = vmatpush.msra.mxu0 %v606
        %1163 = vmatpush.msra.mxu0 %v598
        %1164 = vmatpush.msra.mxu0 %v590
        %1165 = vmatpush.msra.mxu0 %v582
        %1166 = vmatpush.msra.mxu0 %v574
        %1167 = vmatpush.msra.mxu0 %v566
        %1168 = vmatpush.msra.mxu0 %v558
        %1169 = vmatpush.msra.mxu0 %v550
        %1170 = vmatpush.msra.mxu0 %v542
        %1171 = vmatpush.msra.mxu0 %v534
        %1172 = vmatmul.f32.gmra.mxu0 %v971
        %v1173 = vpop.f32.mrf.mxu0
        %v1174 = vadd.f32 %v930, %v1173
        %1175 = vmatmul.f32.gmra.mxu0 %v974
        %v1176 = vpop.f32.mrf.mxu0
        %v1177 = vadd.f32 %v933, %v1176
        %1178 = vmatmul.f32.gmra.mxu0 %v977
        %v1179 = vpop.f32.mrf.mxu0
        %v1180 = vadd.f32 %v936, %v1179
        %1181 = vmatmul.f32.gmra.mxu0 %v980
        %v1182 = vpop.f32.mrf.mxu0
        %v1183 = vadd.f32 %v939, %v1182
        %1184 = vdwg.mxu0
        %1185 = vmatpush.msra.mxu0 0.0
        %1186 = vmatpush.msra.mxu0 0.0
        %1187 = vmatpush.msra.mxu0 0.0
        %1188 = vmatpush.msra.mxu0 0.0
        %1189 = vmatpush.msra.mxu0 %v623
        %1190 = vmatpush.msra.mxu0 %v615
        %1191 = vmatpush.msra.mxu0 %v607
        %1192 = vmatpush.msra.mxu0 %v599
        %1193 = vmatpush.msra.mxu0 %v591
        %1194 = vmatpush.msra.mxu0 %v583
        %1195 = vmatpush.msra.mxu0 %v575
        %1196 = vmatpush.msra.mxu0 %v567
        %1197 = vmatpush.msra.mxu0 %v559
        %1198 = vmatpush.msra.mxu0 %v551
        %1199 = vmatpush.msra.mxu0 %v543
        %1200 = vmatpush.msra.mxu0 %v535
        %1201 = vmatmul.f32.gmra.mxu0 %v971
        %v1202 = vpop.f32.mrf.mxu0
        %v1203 = vadd.f32 %v959, %v1202
        %1204 = vmatmul.f32.gmra.mxu0 %v974
        %v1205 = vpop.f32.mrf.mxu0
        %v1206 = vadd.f32 %v962, %v1205
        %1207 = vmatmul.f32.gmra.mxu0 %v977
        %v1208 = vpop.f32.mrf.mxu0
        %v1209 = vadd.f32 %v965, %v1208
        %1210 = vmatmul.f32.gmra.mxu0 %v980
        %v1211 = vpop.f32.mrf.mxu0
        %v1212 = vadd.f32 %v968, %v1211
        %1213 = vdwg.mxu0
        %v1214 = vld [vmem:[%s522 + $0x2] sm:$0xff]
        %v1215 = vld [vmem:[%s522 + $0xa] sm:$0xff]
        %v1216 = vld [vmem:[%s522 + $0x12] sm:$0xff]
        %v1217 = vld [vmem:[%s522 + $0x1a] sm:$0x3f]
        %s1218 = scalar_lea.vmem [#allocation5], 1536
        %v1219 = vld [vmem:[%s1218] sm:$0xff]
        %v1220 = vld [vmem:[%s1218 + $0x8] sm:$0xff]
        %v1221 = vld [vmem:[%s1218 + $0x10] sm:$0xff]
        %v1222 = vld [vmem:[%s1218 + $0x18] sm:$0xff]
        %v1223 = vld [vmem:[%s1218 + $0x20] sm:$0xff]
        %v1224 = vld [vmem:[%s1218 + $0x28] sm:$0xff]
        %v1225 = vld [vmem:[%s1218 + $0x30] sm:$0xff]
        %v1226 = vld [vmem:[%s1218 + $0x38] sm:$0xff]
        %v1227 = vld [vmem:[%s1218 + $0x40] sm:$0xff]
        %v1228 = vld [vmem:[%s1218 + $0x48] sm:$0xff]
        %v1229 = vld [vmem:[%s1218 + $0x50] sm:$0xff]
        %v1230 = vld [vmem:[%s1218 + $0x58] sm:$0xff]
        %v1231 = vld [vmem:[%s1218 + $0x60] sm:$0xff]
        %v1232 = vld [vmem:[%s1218 + $0x68] sm:$0xff]
        %v1233 = vld [vmem:[%s1218 + $0x70] sm:$0xff]
        %v1234 = vld [vmem:[%s1218 + $0x78] sm:$0xff]
        %v1235 = vld [vmem:[%s1218 + $0x80] sm:$0xff]
        %v1236 = vld [vmem:[%s1218 + $0x88] sm:$0xff]
        %v1237 = vld [vmem:[%s1218 + $0x90] sm:$0xff]
        %v1238 = vld [vmem:[%s1218 + $0x98] sm:$0xff]
        %v1239 = vld [vmem:[%s1218 + $0xa0] sm:$0xff]
        %v1240 = vld [vmem:[%s1218 + $0xa8] sm:$0xff]
        %v1241 = vld [vmem:[%s1218 + $0xb0] sm:$0xff]
        %v1242 = vld [vmem:[%s1218 + $0xb8] sm:$0xff]
        %v1243 = vld [vmem:[%s1218 + $0xc0] sm:$0xff]
        %v1244 = vld [vmem:[%s1218 + $0xc8] sm:$0xff]
        %v1245 = vld [vmem:[%s1218 + $0xd0] sm:$0xff]
        %v1246 = vld [vmem:[%s1218 + $0xd8] sm:$0xff]
        %v1247 = vld [vmem:[%s1218 + $0xe0] sm:$0xff]
        %v1248 = vld [vmem:[%s1218 + $0xe8] sm:$0xff]
        %v1249 = vld [vmem:[%s1218 + $0xf0] sm:$0xff]
        %v1250 = vld [vmem:[%s1218 + $0xf8] sm:$0xff]
        %v1251 = vld [vmem:[%s1218 + $0x100] sm:$0xff]
        %v1252 = vld [vmem:[%s1218 + $0x108] sm:$0xff]
        %v1253 = vld [vmem:[%s1218 + $0x110] sm:$0xff]
        %v1254 = vld [vmem:[%s1218 + $0x118] sm:$0xff]
        %v1255 = vld [vmem:[%s1218 + $0x120] sm:$0xff]
        %v1256 = vld [vmem:[%s1218 + $0x128] sm:$0xff]
        %v1257 = vld [vmem:[%s1218 + $0x130] sm:$0xff]
        %v1258 = vld [vmem:[%s1218 + $0x138] sm:$0xff]
        %v1259 = vld [vmem:[%s1218 + $0x140] sm:$0xff]
        %v1260 = vld [vmem:[%s1218 + $0x148] sm:$0xff]
        %v1261 = vld [vmem:[%s1218 + $0x150] sm:$0xff]
        %v1262 = vld [vmem:[%s1218 + $0x158] sm:$0xff]
        %v1263 = vld [vmem:[%s1218 + $0x160] sm:$0xff]
        %v1264 = vld [vmem:[%s1218 + $0x168] sm:$0xff]
        %v1265 = vld [vmem:[%s1218 + $0x170] sm:$0xff]
        %v1266 = vld [vmem:[%s1218 + $0x178] sm:$0xff]
        %v1267 = vld [vmem:[%s1218 + $0x180] sm:$0xff]
        %v1268 = vld [vmem:[%s1218 + $0x188] sm:$0xff]
        %v1269 = vld [vmem:[%s1218 + $0x190] sm:$0xff]
        %v1270 = vld [vmem:[%s1218 + $0x198] sm:$0xff]
        %v1271 = vld [vmem:[%s1218 + $0x1a0] sm:$0xff]
        %v1272 = vld [vmem:[%s1218 + $0x1a8] sm:$0xff]
        %v1273 = vld [vmem:[%s1218 + $0x1b0] sm:$0xff]
        %v1274 = vld [vmem:[%s1218 + $0x1b8] sm:$0xff]
        %v1275 = vld [vmem:[%s1218 + $0x1c0] sm:$0xff]
        %v1276 = vld [vmem:[%s1218 + $0x1c8] sm:$0xff]
        %v1277 = vld [vmem:[%s1218 + $0x1d0] sm:$0xff]
        %v1278 = vld [vmem:[%s1218 + $0x1d8] sm:$0xff]
        %v1279 = vld [vmem:[%s1218 + $0x1e0] sm:$0xff]
        %v1280 = vld [vmem:[%s1218 + $0x1e8] sm:$0xff]
        %v1281 = vld [vmem:[%s1218 + $0x1f0] sm:$0xff]
        %v1282 = vld [vmem:[%s1218 + $0x1f8] sm:$0xff]
        %v1283 = vld [vmem:[%s1218 + $0x200] sm:$0xff]
        %v1284 = vld [vmem:[%s1218 + $0x208] sm:$0xff]
        %v1285 = vld [vmem:[%s1218 + $0x210] sm:$0xff]
        %v1286 = vld [vmem:[%s1218 + $0x218] sm:$0xff]
        %v1287 = vld [vmem:[%s1218 + $0x220] sm:$0xff]
        %v1288 = vld [vmem:[%s1218 + $0x228] sm:$0xff]
        %v1289 = vld [vmem:[%s1218 + $0x230] sm:$0xff]
        %v1290 = vld [vmem:[%s1218 + $0x238] sm:$0xff]
        %v1291 = vld [vmem:[%s1218 + $0x240] sm:$0xff]
        %v1292 = vld [vmem:[%s1218 + $0x248] sm:$0xff]
        %v1293 = vld [vmem:[%s1218 + $0x250] sm:$0xff]
        %v1294 = vld [vmem:[%s1218 + $0x258] sm:$0xff]
        %v1295 = vld [vmem:[%s1218 + $0x260] sm:$0xff]
        %v1296 = vld [vmem:[%s1218 + $0x268] sm:$0xff]
        %v1297 = vld [vmem:[%s1218 + $0x270] sm:$0xff]
        %v1298 = vld [vmem:[%s1218 + $0x278] sm:$0xff]
        %v1299 = vld [vmem:[%s1218 + $0x280] sm:$0xff]
        %v1300 = vld [vmem:[%s1218 + $0x288] sm:$0xff]
        %v1301 = vld [vmem:[%s1218 + $0x290] sm:$0xff]
        %v1302 = vld [vmem:[%s1218 + $0x298] sm:$0xff]
        %v1303 = vld [vmem:[%s1218 + $0x2a0] sm:$0xff]
        %v1304 = vld [vmem:[%s1218 + $0x2a8] sm:$0xff]
        %v1305 = vld [vmem:[%s1218 + $0x2b0] sm:$0xff]
        %v1306 = vld [vmem:[%s1218 + $0x2b8] sm:$0xff]
        %v1307 = vld [vmem:[%s1218 + $0x2c0] sm:$0xff]
        %v1308 = vld [vmem:[%s1218 + $0x2c8] sm:$0xff]
        %v1309 = vld [vmem:[%s1218 + $0x2d0] sm:$0xff]
        %v1310 = vld [vmem:[%s1218 + $0x2d8] sm:$0xff]
        %v1311 = vld [vmem:[%s1218 + $0x2e0] sm:$0xff]
        %v1312 = vld [vmem:[%s1218 + $0x2e8] sm:$0xff]
        %v1313 = vld [vmem:[%s1218 + $0x2f0] sm:$0xff]
        %v1314 = vld [vmem:[%s1218 + $0x2f8] sm:$0xff]
        %v1316 = vsel %vm725, %v1214, 0
        %v1319 = vsel %vm725, %v1215, 0
        %v1322 = vsel %vm725, %v1216, 0
        %v1325 = vsel %vm725, %v1217, 0
        %1327 = vmatpush.msra.mxu0 0.0
        %1328 = vmatpush.msra.mxu0 0.0
        %1329 = vmatpush.msra.mxu0 0.0
        %1330 = vmatpush.msra.mxu0 0.0
        %1331 = vmatpush.msra.mxu0 %v1307
        %1332 = vmatpush.msra.mxu0 %v1299
        %1333 = vmatpush.msra.mxu0 %v1291
        %1334 = vmatpush.msra.mxu0 %v1283
        %1335 = vmatpush.msra.mxu0 %v1275
        %1336 = vmatpush.msra.mxu0 %v1267
        %1337 = vmatpush.msra.mxu0 %v1259
        %1338 = vmatpush.msra.mxu0 %v1251
        %1339 = vmatpush.msra.mxu0 %v1243
        %1340 = vmatpush.msra.mxu0 %v1235
        %1341 = vmatpush.msra.mxu0 %v1227
        %1342 = vmatpush.msra.mxu0 %v1219
        %1343 = vmatmul.f32.gmra.mxu0 %v1316
        %v1344 = vpop.f32.mrf.mxu0
        %v1345 = vadd.f32 0.0, %v1344
        %1346 = vmatmul.f32.gmra.mxu0 %v1319
        %v1347 = vpop.f32.mrf.mxu0
        %v1348 = vadd.f32 0.0, %v1347
        %1349 = vmatmul.f32.gmra.mxu0 %v1322
        %v1350 = vpop.f32.mrf.mxu0
        %v1351 = vadd.f32 0.0, %v1350
        %1352 = vmatmul.f32.gmra.mxu0 %v1325
        %v1353 = vpop.f32.mrf.mxu0
        %v1354 = vadd.f32 0.0, %v1353
        %1355 = vdwg.mxu0
        %1356 = vmatpush.msra.mxu0 0.0
        %1357 = vmatpush.msra.mxu0 0.0
        %1358 = vmatpush.msra.mxu0 0.0
        %1359 = vmatpush.msra.mxu0 0.0
        %1360 = vmatpush.msra.mxu0 %v1308
        %1361 = vmatpush.msra.mxu0 %v1300
        %1362 = vmatpush.msra.mxu0 %v1292
        %1363 = vmatpush.msra.mxu0 %v1284
        %1364 = vmatpush.msra.mxu0 %v1276
        %1365 = vmatpush.msra.mxu0 %v1268
        %1366 = vmatpush.msra.mxu0 %v1260
        %1367 = vmatpush.msra.mxu0 %v1252
        %1368 = vmatpush.msra.mxu0 %v1244
        %1369 = vmatpush.msra.mxu0 %v1236
        %1370 = vmatpush.msra.mxu0 %v1228
        %1371 = vmatpush.msra.mxu0 %v1220
        %1372 = vmatmul.f32.gmra.mxu0 %v1316
        %v1373 = vpop.f32.mrf.mxu0
        %v1374 = vadd.f32 0.0, %v1373
        %1375 = vmatmul.f32.gmra.mxu0 %v1319
        %v1376 = vpop.f32.mrf.mxu0
        %v1377 = vadd.f32 0.0, %v1376
        %1378 = vmatmul.f32.gmra.mxu0 %v1322
        %v1379 = vpop.f32.mrf.mxu0
        %v1380 = vadd.f32 0.0, %v1379
        %1381 = vmatmul.f32.gmra.mxu0 %v1325
        %v1382 = vpop.f32.mrf.mxu0
        %v1383 = vadd.f32 0.0, %v1382
        %1384 = vdwg.mxu0
        %1385 = vmatpush.msra.mxu0 0.0
        %1386 = vmatpush.msra.mxu0 0.0
        %1387 = vmatpush.msra.mxu0 0.0
        %1388 = vmatpush.msra.mxu0 0.0
        %1389 = vmatpush.msra.mxu0 %v1309
        %1390 = vmatpush.msra.mxu0 %v1301
        %1391 = vmatpush.msra.mxu0 %v1293
        %1392 = vmatpush.msra.mxu0 %v1285
        %1393 = vmatpush.msra.mxu0 %v1277
        %1394 = vmatpush.msra.mxu0 %v1269
        %1395 = vmatpush.msra.mxu0 %v1261
        %1396 = vmatpush.msra.mxu0 %v1253
        %1397 = vmatpush.msra.mxu0 %v1245
        %1398 = vmatpush.msra.mxu0 %v1237
        %1399 = vmatpush.msra.mxu0 %v1229
        %1400 = vmatpush.msra.mxu0 %v1221
        %1401 = vmatmul.f32.gmra.mxu0 %v1316
        %v1402 = vpop.f32.mrf.mxu0
        %v1403 = vadd.f32 0.0, %v1402
        %1404 = vmatmul.f32.gmra.mxu0 %v1319
        %v1405 = vpop.f32.mrf.mxu0
        %v1406 = vadd.f32 0.0, %v1405
        %1407 = vmatmul.f32.gmra.mxu0 %v1322
        %v1408 = vpop.f32.mrf.mxu0
        %v1409 = vadd.f32 0.0, %v1408
        %1410 = vmatmul.f32.gmra.mxu0 %v1325
        %v1411 = vpop.f32.mrf.mxu0
        %v1412 = vadd.f32 0.0, %v1411
        %1413 = vdwg.mxu0
        %1414 = vmatpush.msra.mxu0 0.0
        %1415 = vmatpush.msra.mxu0 0.0
        %1416 = vmatpush.msra.mxu0 0.0
        %1417 = vmatpush.msra.mxu0 0.0
        %1418 = vmatpush.msra.mxu0 %v1310
        %1419 = vmatpush.msra.mxu0 %v1302
        %1420 = vmatpush.msra.mxu0 %v1294
        %1421 = vmatpush.msra.mxu0 %v1286
        %1422 = vmatpush.msra.mxu0 %v1278
        %1423 = vmatpush.msra.mxu0 %v1270
        %1424 = vmatpush.msra.mxu0 %v1262
        %1425 = vmatpush.msra.mxu0 %v1254
        %1426 = vmatpush.msra.mxu0 %v1246
        %1427 = vmatpush.msra.mxu0 %v1238
        %1428 = vmatpush.msra.mxu0 %v1230
        %1429 = vmatpush.msra.mxu0 %v1222
        %1430 = vmatmul.f32.gmra.mxu0 %v1316
        %v1431 = vpop.f32.mrf.mxu0
        %v1432 = vadd.f32 0.0, %v1431
        %1433 = vmatmul.f32.gmra.mxu0 %v1319
        %v1434 = vpop.f32.mrf.mxu0
        %v1435 = vadd.f32 0.0, %v1434
        %1436 = vmatmul.f32.gmra.mxu0 %v1322
        %v1437 = vpop.f32.mrf.mxu0
        %v1438 = vadd.f32 0.0, %v1437
        %1439 = vmatmul.f32.gmra.mxu0 %v1325
        %v1440 = vpop.f32.mrf.mxu0
        %v1441 = vadd.f32 0.0, %v1440
        %1442 = vdwg.mxu0
        %1443 = vmatpush.msra.mxu0 0.0
        %1444 = vmatpush.msra.mxu0 0.0
        %1445 = vmatpush.msra.mxu0 0.0
        %1446 = vmatpush.msra.mxu0 0.0
        %1447 = vmatpush.msra.mxu0 %v1311
        %1448 = vmatpush.msra.mxu0 %v1303
        %1449 = vmatpush.msra.mxu0 %v1295
        %1450 = vmatpush.msra.mxu0 %v1287
        %1451 = vmatpush.msra.mxu0 %v1279
        %1452 = vmatpush.msra.mxu0 %v1271
        %1453 = vmatpush.msra.mxu0 %v1263
        %1454 = vmatpush.msra.mxu0 %v1255
        %1455 = vmatpush.msra.mxu0 %v1247
        %1456 = vmatpush.msra.mxu0 %v1239
        %1457 = vmatpush.msra.mxu0 %v1231
        %1458 = vmatpush.msra.mxu0 %v1223
        %1459 = vmatmul.f32.gmra.mxu0 %v1316
        %v1460 = vpop.f32.mrf.mxu0
        %v1461 = vadd.f32 0.0, %v1460
        %1462 = vmatmul.f32.gmra.mxu0 %v1319
        %v1463 = vpop.f32.mrf.mxu0
        %v1464 = vadd.f32 0.0, %v1463
        %1465 = vmatmul.f32.gmra.mxu0 %v1322
        %v1466 = vpop.f32.mrf.mxu0
        %v1467 = vadd.f32 0.0, %v1466
        %1468 = vmatmul.f32.gmra.mxu0 %v1325
        %v1469 = vpop.f32.mrf.mxu0
        %v1470 = vadd.f32 0.0, %v1469
        %1471 = vdwg.mxu0
        %1472 = vmatpush.msra.mxu0 0.0
        %1473 = vmatpush.msra.mxu0 0.0
        %1474 = vmatpush.msra.mxu0 0.0
        %1475 = vmatpush.msra.mxu0 0.0
        %1476 = vmatpush.msra.mxu0 %v1312
        %1477 = vmatpush.msra.mxu0 %v1304
        %1478 = vmatpush.msra.mxu0 %v1296
        %1479 = vmatpush.msra.mxu0 %v1288
        %1480 = vmatpush.msra.mxu0 %v1280
        %1481 = vmatpush.msra.mxu0 %v1272
        %1482 = vmatpush.msra.mxu0 %v1264
        %1483 = vmatpush.msra.mxu0 %v1256
        %1484 = vmatpush.msra.mxu0 %v1248
        %1485 = vmatpush.msra.mxu0 %v1240
        %1486 = vmatpush.msra.mxu0 %v1232
        %1487 = vmatpush.msra.mxu0 %v1224
        %1488 = vmatmul.f32.gmra.mxu0 %v1316
        %v1489 = vpop.f32.mrf.mxu0
        %v1490 = vadd.f32 0.0, %v1489
        %1491 = vmatmul.f32.gmra.mxu0 %v1319
        %v1492 = vpop.f32.mrf.mxu0
        %v1493 = vadd.f32 0.0, %v1492
        %1494 = vmatmul.f32.gmra.mxu0 %v1322
        %v1495 = vpop.f32.mrf.mxu0
        %v1496 = vadd.f32 0.0, %v1495
        %1497 = vmatmul.f32.gmra.mxu0 %v1325
        %v1498 = vpop.f32.mrf.mxu0
        %v1499 = vadd.f32 0.0, %v1498
        %1500 = vdwg.mxu0
        %1501 = vmatpush.msra.mxu0 0.0
        %1502 = vmatpush.msra.mxu0 0.0
        %1503 = vmatpush.msra.mxu0 0.0
        %1504 = vmatpush.msra.mxu0 0.0
        %1505 = vmatpush.msra.mxu0 %v1313
        %1506 = vmatpush.msra.mxu0 %v1305
        %1507 = vmatpush.msra.mxu0 %v1297
        %1508 = vmatpush.msra.mxu0 %v1289
        %1509 = vmatpush.msra.mxu0 %v1281
        %1510 = vmatpush.msra.mxu0 %v1273
        %1511 = vmatpush.msra.mxu0 %v1265
        %1512 = vmatpush.msra.mxu0 %v1257
        %1513 = vmatpush.msra.mxu0 %v1249
        %1514 = vmatpush.msra.mxu0 %v1241
        %1515 = vmatpush.msra.mxu0 %v1233
        %1516 = vmatpush.msra.mxu0 %v1225
        %1517 = vmatmul.f32.gmra.mxu0 %v1316
        %v1518 = vpop.f32.mrf.mxu0
        %v1519 = vadd.f32 0.0, %v1518
        %1520 = vmatmul.f32.gmra.mxu0 %v1319
        %v1521 = vpop.f32.mrf.mxu0
        %v1522 = vadd.f32 0.0, %v1521
        %1523 = vmatmul.f32.gmra.mxu0 %v1322
        %v1524 = vpop.f32.mrf.mxu0
        %v1525 = vadd.f32 0.0, %v1524
        %1526 = vmatmul.f32.gmra.mxu0 %v1325
        %v1527 = vpop.f32.mrf.mxu0
        %v1528 = vadd.f32 0.0, %v1527
        %1529 = vdwg.mxu0
        %1530 = vmatpush.msra.mxu0 0.0
        %1531 = vmatpush.msra.mxu0 0.0
        %1532 = vmatpush.msra.mxu0 0.0
        %1533 = vmatpush.msra.mxu0 0.0
        %1534 = vmatpush.msra.mxu0 %v1314
        %1535 = vmatpush.msra.mxu0 %v1306
        %1536 = vmatpush.msra.mxu0 %v1298
        %1537 = vmatpush.msra.mxu0 %v1290
        %1538 = vmatpush.msra.mxu0 %v1282
        %1539 = vmatpush.msra.mxu0 %v1274
        %1540 = vmatpush.msra.mxu0 %v1266
        %1541 = vmatpush.msra.mxu0 %v1258
        %1542 = vmatpush.msra.mxu0 %v1250
        %1543 = vmatpush.msra.mxu0 %v1242
        %1544 = vmatpush.msra.mxu0 %v1234
        %1545 = vmatpush.msra.mxu0 %v1226
        %1546 = vmatmul.f32.gmra.mxu0 %v1316
        %v1547 = vpop.f32.mrf.mxu0
        %v1548 = vadd.f32 0.0, %v1547
        %1549 = vmatmul.f32.gmra.mxu0 %v1319
        %v1550 = vpop.f32.mrf.mxu0
        %v1551 = vadd.f32 0.0, %v1550
        %1552 = vmatmul.f32.gmra.mxu0 %v1322
        %v1553 = vpop.f32.mrf.mxu0
        %v1554 = vadd.f32 0.0, %v1553
        %1555 = vmatmul.f32.gmra.mxu0 %v1325
        %v1556 = vpop.f32.mrf.mxu0
        %v1557 = vadd.f32 0.0, %v1556
        %1558 = vdwg.mxu0
        %v1559 = vadd.f32 %v1000, %v1345
        %v1560 = vadd.f32 %v1029, %v1374
        %v1561 = vadd.f32 %v1058, %v1403
        %v1562 = vadd.f32 %v1087, %v1432
        %v1563 = vadd.f32 %v1116, %v1461
        %v1564 = vadd.f32 %v1145, %v1490
        %v1565 = vadd.f32 %v1174, %v1519
        %v1566 = vadd.f32 %v1203, %v1548
        %v1567 = vadd.f32 %v1003, %v1348
        %v1568 = vadd.f32 %v1032, %v1377
        %v1569 = vadd.f32 %v1061, %v1406
        %v1570 = vadd.f32 %v1090, %v1435
        %v1571 = vadd.f32 %v1119, %v1464
        %v1572 = vadd.f32 %v1148, %v1493
        %v1573 = vadd.f32 %v1177, %v1522
        %v1574 = vadd.f32 %v1206, %v1551
        %v1575 = vadd.f32 %v1006, %v1351
        %v1576 = vadd.f32 %v1035, %v1380
        %v1577 = vadd.f32 %v1064, %v1409
        %v1578 = vadd.f32 %v1093, %v1438
        %v1579 = vadd.f32 %v1122, %v1467
        %v1580 = vadd.f32 %v1151, %v1496
        %v1581 = vadd.f32 %v1180, %v1525
        %v1582 = vadd.f32 %v1209, %v1554
        %v1583 = vadd.f32 %v1009, %v1354
        %v1584 = vadd.f32 %v1038, %v1383
        %v1585 = vadd.f32 %v1067, %v1412
        %v1586 = vadd.f32 %v1096, %v1441
        %v1587 = vadd.f32 %v1125, %v1470
        %v1588 = vadd.f32 %v1154, %v1499
        %v1589 = vadd.f32 %v1183, %v1528
        %v1590 = vadd.f32 %v1212, %v1557
        %v1592 = vperm.slane %v523, 0
        %v1593 = vperm.slane %v523, 1
        %v1594 = vperm.slane %v523, 2
        %v1595 = vperm.slane %v523, 3
        %v1596 = vperm.slane %v523, 4
        %v1597 = vperm.slane %v523, 5
        %v1598 = vperm.slane %v523, 6
        %v1599 = vperm.slane %v523, 7
        %v1608 = vadd.f32 %v1559, %v1592
        %v1609 = vadd.f32 %v1560, %v1593
        %v1610 = vadd.f32 %v1561, %v1594
        %v1611 = vadd.f32 %v1562, %v1595
        %v1612 = vadd.f32 %v1563, %v1596
        %v1613 = vadd.f32 %v1564, %v1597
        %v1614 = vadd.f32 %v1565, %v1598
        %v1615 = vadd.f32 %v1566, %v1599
        %v1616 = vadd.f32 %v1567, %v1592
        %v1617 = vadd.f32 %v1568, %v1593
        %v1618 = vadd.f32 %v1569, %v1594
        %v1619 = vadd.f32 %v1570, %v1595
        %v1620 = vadd.f32 %v1571, %v1596
        %v1621 = vadd.f32 %v1572, %v1597
        %v1622 = vadd.f32 %v1573, %v1598
        %v1623 = vadd.f32 %v1574, %v1599
        %v1624 = vadd.f32 %v1575, %v1592
        %v1625 = vadd.f32 %v1576, %v1593
        %v1626 = vadd.f32 %v1577, %v1594
        %v1627 = vadd.f32 %v1578, %v1595
        %v1628 = vadd.f32 %v1579, %v1596
        %v1629 = vadd.f32 %v1580, %v1597
        %v1630 = vadd.f32 %v1581, %v1598
        %v1631 = vadd.f32 %v1582, %v1599
        %v1632 = vadd.f32 %v1583, %v1592
        %v1633 = vadd.f32 %v1584, %v1593
        %v1634 = vadd.f32 %v1585, %v1594
        %v1635 = vadd.f32 %v1586, %v1595
        %v1636 = vadd.f32 %v1587, %v1596
        %v1637 = vadd.f32 %v1588, %v1597
        %v1638 = vadd.f32 %v1589, %v1598
        %v1639 = vadd.f32 %v1590, %v1599
        %v1640 = vmax.f32 %v1608, 0.0
        %v1641 = vmax.f32 %v1609, 0.0
        %v1642 = vmax.f32 %v1610, 0.0
        %v1643 = vmax.f32 %v1611, 0.0
        %v1644 = vmax.f32 %v1612, 0.0
        %v1645 = vmax.f32 %v1613, 0.0
        %v1646 = vmax.f32 %v1614, 0.0
        %v1647 = vmax.f32 %v1615, 0.0
        %v1648 = vmax.f32 %v1616, 0.0
        %v1649 = vmax.f32 %v1617, 0.0
        %v1650 = vmax.f32 %v1618, 0.0
        %v1651 = vmax.f32 %v1619, 0.0
        %v1652 = vmax.f32 %v1620, 0.0
        %v1653 = vmax.f32 %v1621, 0.0
        %v1654 = vmax.f32 %v1622, 0.0
        %v1655 = vmax.f32 %v1623, 0.0
        %v1656 = vmax.f32 %v1624, 0.0
        %v1657 = vmax.f32 %v1625, 0.0
        %v1658 = vmax.f32 %v1626, 0.0
        %v1659 = vmax.f32 %v1627, 0.0
        %v1660 = vmax.f32 %v1628, 0.0
        %v1661 = vmax.f32 %v1629, 0.0
        %v1662 = vmax.f32 %v1630, 0.0
        %v1663 = vmax.f32 %v1631, 0.0
        %v1664 = vmax.f32 %v1632, 0.0
        %v1665 = vmax.f32 %v1633, 0.0
        %v1666 = vmax.f32 %v1634, 0.0
        %v1667 = vmax.f32 %v1635, 0.0
        %v1668 = vmax.f32 %v1636, 0.0
        %v1669 = vmax.f32 %v1637, 0.0
        %v1670 = vmax.f32 %v1638, 0.0
        %v1671 = vmax.f32 %v1639, 0.0
        %1692 = vrot.lane.b32.xlu0 %v1643, 32
        %v1693 = vpop.permute.xlu0 %1692
        %1694 = vrot.lane.b32.xlu0 %v1644, 32
        %v1695 = vpop.permute.xlu0 %1694
        %1696 = vrot.lane.b32.xlu0 %v1645, 32
        %v1697 = vpop.permute.xlu0 %1696
        %1698 = vrot.lane.b32.xlu0 %v1646, 32
        %v1699 = vpop.permute.xlu0 %1698
        %1700 = vrot.lane.b32.xlu0 %v1647, 32
        %v1701 = vpop.permute.xlu0 %1700
        %1702 = vrot.lane.b32.xlu0 %v1651, 32
        %v1703 = vpop.permute.xlu0 %1702
        %1704 = vrot.lane.b32.xlu0 %v1652, 32
        %v1705 = vpop.permute.xlu0 %1704
        %1706 = vrot.lane.b32.xlu0 %v1653, 32
        %v1707 = vpop.permute.xlu0 %1706
        %1708 = vrot.lane.b32.xlu0 %v1654, 32
        %v1709 = vpop.permute.xlu0 %1708
        %1710 = vrot.lane.b32.xlu0 %v1655, 32
        %v1711 = vpop.permute.xlu0 %1710
        %1712 = vrot.lane.b32.xlu0 %v1659, 32
        %v1713 = vpop.permute.xlu0 %1712
        %1714 = vrot.lane.b32.xlu0 %v1660, 32
        %v1715 = vpop.permute.xlu0 %1714
        %1716 = vrot.lane.b32.xlu0 %v1661, 32
        %v1717 = vpop.permute.xlu0 %1716
        %1718 = vrot.lane.b32.xlu0 %v1662, 32
        %v1719 = vpop.permute.xlu0 %1718
        %1720 = vrot.lane.b32.xlu0 %v1663, 32
        %v1721 = vpop.permute.xlu0 %1720
        %1722 = vrot.lane.b32.xlu0 %v1667, 32
        %v1723 = vpop.permute.xlu0 %1722
        %1724 = vrot.lane.b32.xlu0 %v1668, 32
        %v1725 = vpop.permute.xlu0 %1724
        %1726 = vrot.lane.b32.xlu0 %v1669, 32
        %v1727 = vpop.permute.xlu0 %1726
        %1728 = vrot.lane.b32.xlu0 %v1670, 32
        %v1729 = vpop.permute.xlu0 %1728
        %1730 = vrot.lane.b32.xlu0 %v1671, 32
        %v1731 = vpop.permute.xlu0 %1730
        %vm1732 = vcmask 261120
        %v1733 = vsel %vm1732, %v1693, %v1695
        %v1734 = vsel %vm1732, %v1695, %v1697
        %v1735 = vsel %vm1732, %v1697, %v1699
        %v1736 = vsel %vm1732, %v1699, %v1701
        %v1737 = vsel %vm1732, %v1703, %v1705
        %v1738 = vsel %vm1732, %v1705, %v1707
        %v1739 = vsel %vm1732, %v1707, %v1709
        %v1740 = vsel %vm1732, %v1709, %v1711
        %v1741 = vsel %vm1732, %v1713, %v1715
        %v1742 = vsel %vm1732, %v1715, %v1717
        %v1743 = vsel %vm1732, %v1717, %v1719
        %v1744 = vsel %vm1732, %v1719, %v1721
        %v1745 = vsel %vm1732, %v1723, %v1725
        %v1746 = vsel %vm1732, %v1725, %v1727
        %v1747 = vsel %vm1732, %v1727, %v1729
        %v1748 = vsel %vm1732, %v1729, %v1731
        %v1765 = vmax.f32 %v1640, %v1733
        %v1766 = vmax.f32 %v1641, %v1734
        %v1767 = vmax.f32 %v1642, %v1735
        %v1768 = vmax.f32 %v1643, %v1736
        %v1769 = vmax.f32 %v1648, %v1737
        %v1770 = vmax.f32 %v1649, %v1738
        %v1771 = vmax.f32 %v1650, %v1739
        %v1772 = vmax.f32 %v1651, %v1740
        %v1773 = vmax.f32 %v1656, %v1741
        %v1774 = vmax.f32 %v1657, %v1742
        %v1775 = vmax.f32 %v1658, %v1743
        %v1776 = vmax.f32 %v1659, %v1744
        %v1777 = vmax.f32 %v1664, %v1745
        %v1778 = vmax.f32 %v1665, %v1746
        %v1779 = vmax.f32 %v1666, %v1747
        %v1780 = vmax.f32 %v1667, %v1748
        %v1785 = vrot.slane %v1765, 1
        %v1786 = vrot.slane %v1766, 1
        %v1787 = vrot.slane %v1767, 1
        %v1788 = vrot.slane %v1768, 1
        %v1793 = vmax.f32 %v1765, %v1785
        %v1794 = vmax.f32 %v1766, %v1786
        %v1795 = vmax.f32 %v1767, %v1787
        %v1796 = vmax.f32 %v1768, %v1788
        %v1801 = vrot.slane %v1794, 7
        %v1802 = vrot.slane %v1795, 6
        %v1803 = vrot.slane %v1796, 5
        %vm1804 = vcmask 1040384
        %v1805 = vsel %vm1804, %v1793, %v1801
        %vm1806 = vcmask 1042434
        %v1807 = vsel %vm1806, %v1802, %v1803
        %vm1808 = vcmask 1041408
        %v1809 = vsel %vm1808, %v1805, %v1807
        %v1811 = vlaneseq
        %vm1812 = vcmp.ge.s32.totalorder %v1811, 0
        %vm1813 = vcmp.lt.s32.totalorder %v1811, 480
        %vm1814 = vmand %vm1812, %vm1813
        %1815 = vst.msk [vmem:[#allocation2] ss:$8 sm:$0xf] %vm1814, %v1809
        %1816 = vst.msk [vmem:[#allocation2] ss:$8 sm:$0x0] %vm1814, %v1809
        %1817 = vst [vmem:[#allocation1] sm:$0xff] %v1793
        %1818 = vst [vmem:[#allocation1 + $0x9] sm:$0xff] %v1794
        %1819 = vst [vmem:[#allocation1 + $0x12] sm:$0xff] %v1795
        %1820 = vst [vmem:[#allocation1 + $0x1b] sm:$0xff] %v1796
        %s1821 = scalar_lea.vmem [#allocation1], 2
        %v1822 = vld [vmem:[%s1821] ss:$9 sm:$0xff]
        %s1824 = scalar_lea.vmem [#allocation2], 1
        %1825 = vst.msk [vmem:[%s1824] ss:$8 sm:$0xf] %vm1814, %v1822
        %1826 = vst.msk [vmem:[%s1824] ss:$8 sm:$0x0] %vm1814, %v1822
        %1827 = vst [vmem:[#allocation1] sm:$0xff] %v1793
        %1828 = vst [vmem:[#allocation1 + $0x9] sm:$0xff] %v1794
        %1829 = vst [vmem:[#allocation1 + $0x12] sm:$0xff] %v1795
        %1830 = vst [vmem:[#allocation1 + $0x1b] sm:$0xff] %v1796
        %s1831 = scalar_lea.vmem [#allocation1], 4
        %v1832 = vld [vmem:[%s1831] ss:$9 sm:$0xff]
        %s1834 = scalar_lea.vmem [#allocation2], 2
        %1835 = vst.msk [vmem:[%s1834] ss:$8 sm:$0xf] %vm1814, %v1832
        %1836 = vst.msk [vmem:[%s1834] ss:$8 sm:$0x0] %vm1814, %v1832
        %1837 = vst [vmem:[#allocation1] sm:$0xff] %v1793
        %1838 = vst [vmem:[#allocation1 + $0x9] sm:$0xff] %v1794
        %1839 = vst [vmem:[#allocation1 + $0x12] sm:$0xff] %v1795
        %1840 = vst [vmem:[#allocation1 + $0x1b] sm:$0xff] %v1796
        %s1841 = scalar_lea.vmem [#allocation1], 6
        %v1842 = vld [vmem:[%s1841] ss:$9 sm:$0xff]
        %s1844 = scalar_lea.vmem [#allocation2], 3
        %1845 = vst.msk [vmem:[%s1844] ss:$8 sm:$0xf] %vm1814, %v1842
        %1846 = vst.msk [vmem:[%s1844] ss:$8 sm:$0x0] %vm1814, %v1842
        %v1851 = vrot.slane %v1769, 1
        %v1852 = vrot.slane %v1770, 1
        %v1853 = vrot.slane %v1771, 1
        %v1854 = vrot.slane %v1772, 1
        %v1859 = vmax.f32 %v1769, %v1851
        %v1860 = vmax.f32 %v1770, %v1852
        %v1861 = vmax.f32 %v1771, %v1853
        %v1862 = vmax.f32 %v1772, %v1854
        %v1867 = vrot.slane %v1860, 7
        %v1868 = vrot.slane %v1861, 6
        %v1869 = vrot.slane %v1862, 5
        %v1870 = vsel %vm1804, %v1859, %v1867
        %v1871 = vsel %vm1806, %v1868, %v1869
        %v1872 = vsel %vm1808, %v1870, %v1871
        %s1874 = scalar_lea.vmem [#allocation2], 4
        %1875 = vst.msk [vmem:[%s1874] ss:$8 sm:$0xf] %vm1814, %v1872
        %1876 = vst.msk [vmem:[%s1874] ss:$8 sm:$0x0] %vm1814, %v1872
        %1877 = vst [vmem:[#allocation1] sm:$0xff] %v1859
        %1878 = vst [vmem:[#allocation1 + $0x9] sm:$0xff] %v1860
        %1879 = vst [vmem:[#allocation1 + $0x12] sm:$0xff] %v1861
        %1880 = vst [vmem:[#allocation1 + $0x1b] sm:$0xff] %v1862
        %s1881 = scalar_lea.vmem [#allocation1], 2
        %v1882 = vld [vmem:[%s1881] ss:$9 sm:$0xff]
        %s1884 = scalar_lea.vmem [#allocation2], 5
        %1885 = vst.msk [vmem:[%s1884] ss:$8 sm:$0xf] %vm1814, %v1882
        %1886 = vst.msk [vmem:[%s1884] ss:$8 sm:$0x0] %vm1814, %v1882
        %1887 = vst [vmem:[#allocation1] sm:$0xff] %v1859
        %1888 = vst [vmem:[#allocation1 + $0x9] sm:$0xff] %v1860
        %1889 = vst [vmem:[#allocation1 + $0x12] sm:$0xff] %v1861
        %1890 = vst [vmem:[#allocation1 + $0x1b] sm:$0xff] %v1862
        %s1891 = scalar_lea.vmem [#allocation1], 4
        %v1892 = vld [vmem:[%s1891] ss:$9 sm:$0xff]
        %s1894 = scalar_lea.vmem [#allocation2], 6
        %1895 = vst.msk [vmem:[%s1894] ss:$8 sm:$0xf] %vm1814, %v1892
        %1896 = vst.msk [vmem:[%s1894] ss:$8 sm:$0x0] %vm1814, %v1892
        %1897 = vst [vmem:[#allocation1] sm:$0xff] %v1859
        %1898 = vst [vmem:[#allocation1 + $0x9] sm:$0xff] %v1860
        %1899 = vst [vmem:[#allocation1 + $0x12] sm:$0xff] %v1861
        %1900 = vst [vmem:[#allocation1 + $0x1b] sm:$0xff] %v1862
        %s1901 = scalar_lea.vmem [#allocation1], 6
        %v1902 = vld [vmem:[%s1901] ss:$9 sm:$0xff]
        %s1904 = scalar_lea.vmem [#allocation2], 7
        %1905 = vst.msk [vmem:[%s1904] ss:$8 sm:$0xf] %vm1814, %v1902
        %1906 = vst.msk [vmem:[%s1904] ss:$8 sm:$0x0] %vm1814, %v1902
        %v1911 = vrot.slane %v1773, 1
        %v1912 = vrot.slane %v1774, 1
        %v1913 = vrot.slane %v1775, 1
        %v1914 = vrot.slane %v1776, 1
        %v1919 = vmax.f32 %v1773, %v1911
        %v1920 = vmax.f32 %v1774, %v1912
        %v1921 = vmax.f32 %v1775, %v1913
        %v1922 = vmax.f32 %v1776, %v1914
        %v1927 = vrot.slane %v1920, 7
        %v1928 = vrot.slane %v1921, 6
        %v1929 = vrot.slane %v1922, 5
        %v1930 = vsel %vm1804, %v1919, %v1927
        %v1931 = vsel %vm1806, %v1928, %v1929
        %v1932 = vsel %vm1808, %v1930, %v1931
        %s1934 = scalar_lea.vmem [#allocation2], 32
        %1935 = vst.msk [vmem:[%s1934] ss:$8 sm:$0xf] %vm1814, %v1932
        %1936 = vst.msk [vmem:[%s1934] ss:$8 sm:$0x0] %vm1814, %v1932
        %1937 = vst [vmem:[#allocation1] sm:$0xff] %v1919
        %1938 = vst [vmem:[#allocation1 + $0x9] sm:$0xff] %v1920
        %1939 = vst [vmem:[#allocation1 + $0x12] sm:$0xff] %v1921
        %1940 = vst [vmem:[#allocation1 + $0x1b] sm:$0xff] %v1922
        %s1941 = scalar_lea.vmem [#allocation1], 2
        %v1942 = vld [vmem:[%s1941] ss:$9 sm:$0xff]
        %s1944 = scalar_lea.vmem [#allocation2], 33
        %1945 = vst.msk [vmem:[%s1944] ss:$8 sm:$0xf] %vm1814, %v1942
        %1946 = vst.msk [vmem:[%s1944] ss:$8 sm:$0x0] %vm1814, %v1942
        %1947 = vst [vmem:[#allocation1] sm:$0xff] %v1919
        %1948 = vst [vmem:[#allocation1 + $0x9] sm:$0xff] %v1920
        %1949 = vst [vmem:[#allocation1 + $0x12] sm:$0xff] %v1921
        %1950 = vst [vmem:[#allocation1 + $0x1b] sm:$0xff] %v1922
        %s1951 = scalar_lea.vmem [#allocation1], 4
        %v1952 = vld [vmem:[%s1951] ss:$9 sm:$0xff]
        %s1954 = scalar_lea.vmem [#allocation2], 34
        %1955 = vst.msk [vmem:[%s1954] ss:$8 sm:$0xf] %vm1814, %v1952
        %1956 = vst.msk [vmem:[%s1954] ss:$8 sm:$0x0] %vm1814, %v1952
        %1957 = vst [vmem:[#allocation1] sm:$0xff] %v1919
        %1958 = vst [vmem:[#allocation1 + $0x9] sm:$0xff] %v1920
        %1959 = vst [vmem:[#allocation1 + $0x12] sm:$0xff] %v1921
        %1960 = vst [vmem:[#allocation1 + $0x1b] sm:$0xff] %v1922
        %s1961 = scalar_lea.vmem [#allocation1], 6
        %v1962 = vld [vmem:[%s1961] ss:$9 sm:$0xff]
        %s1964 = scalar_lea.vmem [#allocation2], 35
        %1965 = vst.msk [vmem:[%s1964] ss:$8 sm:$0xf] %vm1814, %v1962
        %1966 = vst.msk [vmem:[%s1964] ss:$8 sm:$0x0] %vm1814, %v1962
        %v1971 = vrot.slane %v1777, 1
        %v1972 = vrot.slane %v1778, 1
        %v1973 = vrot.slane %v1779, 1
        %v1974 = vrot.slane %v1780, 1
        %v1979 = vmax.f32 %v1777, %v1971
        %v1980 = vmax.f32 %v1778, %v1972
        %v1981 = vmax.f32 %v1779, %v1973
        %v1982 = vmax.f32 %v1780, %v1974
        %v1987 = vrot.slane %v1980, 7
        %v1988 = vrot.slane %v1981, 6
        %v1989 = vrot.slane %v1982, 5
        %v1990 = vsel %vm1804, %v1979, %v1987
        %v1991 = vsel %vm1806, %v1988, %v1989
        %v1992 = vsel %vm1808, %v1990, %v1991
        %s1994 = scalar_lea.vmem [#allocation2], 36
        %1995 = vst.msk [vmem:[%s1994] ss:$8 sm:$0xf] %vm1814, %v1992
        %1996 = vst.msk [vmem:[%s1994] ss:$8 sm:$0x0] %vm1814, %v1992
        %1997 = vst [vmem:[#allocation1] sm:$0xff] %v1979
        %1998 = vst [vmem:[#allocation1 + $0x9] sm:$0xff] %v1980
        %1999 = vst [vmem:[#allocation1 + $0x12] sm:$0xff] %v1981
        %2000 = vst [vmem:[#allocation1 + $0x1b] sm:$0xff] %v1982
        %s2001 = scalar_lea.vmem [#allocation1], 2
        %v2002 = vld [vmem:[%s2001] ss:$9 sm:$0xff]
        %s2004 = scalar_lea.vmem [#allocation2], 37
        %2005 = vst.msk [vmem:[%s2004] ss:$8 sm:$0xf] %vm1814, %v2002
        %2006 = vst.msk [vmem:[%s2004] ss:$8 sm:$0x0] %vm1814, %v2002
        %2007 = vst [vmem:[#allocation1] sm:$0xff] %v1979
        %2008 = vst [vmem:[#allocation1 + $0x9] sm:$0xff] %v1980
        %2009 = vst [vmem:[#allocation1 + $0x12] sm:$0xff] %v1981
        %2010 = vst [vmem:[#allocation1 + $0x1b] sm:$0xff] %v1982
        %s2011 = scalar_lea.vmem [#allocation1], 4
        %v2012 = vld [vmem:[%s2011] ss:$9 sm:$0xff]
        %s2014 = scalar_lea.vmem [#allocation2], 38
        %2015 = vst.msk [vmem:[%s2014] ss:$8 sm:$0xf] %vm1814, %v2012
        %2016 = vst.msk [vmem:[%s2014] ss:$8 sm:$0x0] %vm1814, %v2012
        %v2017 = vld [vmem:[#allocation11] sm:$0xff]
        %v2018 = vld [vmem:[#allocation2] sm:$0xff]
        %v2019 = vld [vmem:[#allocation2 + $0x8] sm:$0xff]
        %v2020 = vld [vmem:[#allocation2 + $0x10] sm:$0xff]
        %v2021 = vld [vmem:[#allocation2 + $0x18] sm:$0xff]
        %v2022 = vld [vmem:[#allocation2 + $0x20] sm:$0x3f]
        %v2023 = vld [vmem:[#allocation2 + $0x28] sm:$0x3f]
        %v2024 = vld [vmem:[#allocation2 + $0x30] sm:$0x3f]
        %v2025 = vld [vmem:[#allocation2 + $0x38] sm:$0x3f]
        %v2026 = vld [vmem:[#allocation10] sm:$0xff]
        %v2027 = vld [vmem:[#allocation10 + $0x8] sm:$0xff]
        %v2028 = vld [vmem:[#allocation10 + $0x10] sm:$0xff]
        %v2029 = vld [vmem:[#allocation10 + $0x18] sm:$0xff]
        %v2030 = vld [vmem:[#allocation10 + $0x20] sm:$0xff]
        %v2031 = vld [vmem:[#allocation10 + $0x28] sm:$0xff]
        %v2032 = vld [vmem:[#allocation10 + $0x30] sm:$0xff]
        %v2033 = vld [vmem:[#allocation10 + $0x38] sm:$0xff]
        %v2034 = vld [vmem:[#allocation10 + $0x40] sm:$0xff]
        %v2035 = vld [vmem:[#allocation10 + $0x48] sm:$0xff]
        %v2036 = vld [vmem:[#allocation10 + $0x50] sm:$0xff]
        %v2037 = vld [vmem:[#allocation10 + $0x58] sm:$0xff]
        %v2038 = vld [vmem:[#allocation10 + $0x60] sm:$0xff]
        %v2039 = vld [vmem:[#allocation10 + $0x68] sm:$0xff]
        %v2040 = vld [vmem:[#allocation10 + $0x70] sm:$0xff]
        %v2041 = vld [vmem:[#allocation10 + $0x78] sm:$0xff]
        %v2042 = vld [vmem:[#allocation10 + $0x80] sm:$0xff]
        %v2043 = vld [vmem:[#allocation10 + $0x88] sm:$0xff]
        %v2044 = vld [vmem:[#allocation10 + $0x90] sm:$0xff]
        %v2045 = vld [vmem:[#allocation10 + $0x98] sm:$0xff]
        %v2046 = vld [vmem:[#allocation10 + $0xa0] sm:$0xff]
        %v2047 = vld [vmem:[#allocation10 + $0xa8] sm:$0xff]
        %v2048 = vld [vmem:[#allocation10 + $0xb0] sm:$0xff]
        %v2049 = vld [vmem:[#allocation10 + $0xb8] sm:$0xff]
        %v2050 = vld [vmem:[#allocation10 + $0xc0] sm:$0xff]
        %v2051 = vld [vmem:[#allocation10 + $0xc8] sm:$0xff]
        %v2052 = vld [vmem:[#allocation10 + $0xd0] sm:$0xff]
        %v2053 = vld [vmem:[#allocation10 + $0xd8] sm:$0xff]
        %v2054 = vld [vmem:[#allocation10 + $0xe0] sm:$0xff]
        %v2055 = vld [vmem:[#allocation10 + $0xe8] sm:$0xff]
        %v2056 = vld [vmem:[#allocation10 + $0xf0] sm:$0xff]
        %v2057 = vld [vmem:[#allocation10 + $0xf8] sm:$0xff]
        %v2058 = vld [vmem:[#allocation10 + $0x100] sm:$0xff]
        %v2059 = vld [vmem:[#allocation10 + $0x108] sm:$0xff]
        %v2060 = vld [vmem:[#allocation10 + $0x110] sm:$0xff]
        %v2061 = vld [vmem:[#allocation10 + $0x118] sm:$0xff]
        %v2062 = vld [vmem:[#allocation10 + $0x120] sm:$0xff]
        %v2063 = vld [vmem:[#allocation10 + $0x128] sm:$0xff]
        %v2064 = vld [vmem:[#allocation10 + $0x130] sm:$0xff]
        %v2065 = vld [vmem:[#allocation10 + $0x138] sm:$0xff]
        %v2066 = vld [vmem:[#allocation10 + $0x140] sm:$0xff]
        %v2067 = vld [vmem:[#allocation10 + $0x148] sm:$0xff]
        %v2068 = vld [vmem:[#allocation10 + $0x150] sm:$0xff]
        %v2069 = vld [vmem:[#allocation10 + $0x158] sm:$0xff]
        %v2070 = vld [vmem:[#allocation10 + $0x160] sm:$0xff]
        %v2071 = vld [vmem:[#allocation10 + $0x168] sm:$0xff]
        %v2072 = vld [vmem:[#allocation10 + $0x170] sm:$0xff]
        %v2073 = vld [vmem:[#allocation10 + $0x178] sm:$0xff]
        %v2074 = vld [vmem:[#allocation10 + $0x180] sm:$0xff]
        %v2075 = vld [vmem:[#allocation10 + $0x188] sm:$0xff]
        %v2076 = vld [vmem:[#allocation10 + $0x190] sm:$0xff]
        %v2077 = vld [vmem:[#allocation10 + $0x198] sm:$0xff]
        %v2078 = vld [vmem:[#allocation10 + $0x1a0] sm:$0xff]
        %v2079 = vld [vmem:[#allocation10 + $0x1a8] sm:$0xff]
        %v2080 = vld [vmem:[#allocation10 + $0x1b0] sm:$0xff]
        %v2081 = vld [vmem:[#allocation10 + $0x1b8] sm:$0xff]
        %v2082 = vld [vmem:[#allocation10 + $0x1c0] sm:$0xff]
        %v2083 = vld [vmem:[#allocation10 + $0x1c8] sm:$0xff]
        %v2084 = vld [vmem:[#allocation10 + $0x1d0] sm:$0xff]
        %v2085 = vld [vmem:[#allocation10 + $0x1d8] sm:$0xff]
        %v2086 = vld [vmem:[#allocation10 + $0x1e0] sm:$0xff]
        %v2087 = vld [vmem:[#allocation10 + $0x1e8] sm:$0xff]
        %v2088 = vld [vmem:[#allocation10 + $0x1f0] sm:$0xff]
        %v2089 = vld [vmem:[#allocation10 + $0x1f8] sm:$0xff]
        %v2090 = vld [vmem:[#allocation10 + $0x200] sm:$0xff]
        %v2091 = vld [vmem:[#allocation10 + $0x208] sm:$0xff]
        %v2092 = vld [vmem:[#allocation10 + $0x210] sm:$0xff]
        %v2093 = vld [vmem:[#allocation10 + $0x218] sm:$0xff]
        %v2094 = vld [vmem:[#allocation10 + $0x220] sm:$0xff]
        %v2095 = vld [vmem:[#allocation10 + $0x228] sm:$0xff]
        %v2096 = vld [vmem:[#allocation10 + $0x230] sm:$0xff]
        %v2097 = vld [vmem:[#allocation10 + $0x238] sm:$0xff]
        %v2098 = vld [vmem:[#allocation10 + $0x240] sm:$0xff]
        %v2099 = vld [vmem:[#allocation10 + $0x248] sm:$0xff]
        %v2100 = vld [vmem:[#allocation10 + $0x250] sm:$0xff]
        %v2101 = vld [vmem:[#allocation10 + $0x258] sm:$0xff]
        %v2102 = vld [vmem:[#allocation10 + $0x260] sm:$0xff]
        %v2103 = vld [vmem:[#allocation10 + $0x268] sm:$0xff]
        %v2104 = vld [vmem:[#allocation10 + $0x270] sm:$0xff]
        %v2105 = vld [vmem:[#allocation10 + $0x278] sm:$0xff]
        %v2106 = vld [vmem:[#allocation10 + $0x280] sm:$0xff]
        %v2107 = vld [vmem:[#allocation10 + $0x288] sm:$0xff]
        %v2108 = vld [vmem:[#allocation10 + $0x290] sm:$0xff]
        %v2109 = vld [vmem:[#allocation10 + $0x298] sm:$0xff]
        %v2110 = vld [vmem:[#allocation10 + $0x2a0] sm:$0xff]
        %v2111 = vld [vmem:[#allocation10 + $0x2a8] sm:$0xff]
        %v2112 = vld [vmem:[#allocation10 + $0x2b0] sm:$0xff]
        %v2113 = vld [vmem:[#allocation10 + $0x2b8] sm:$0xff]
        %v2114 = vld [vmem:[#allocation10 + $0x2c0] sm:$0xff]
        %v2115 = vld [vmem:[#allocation10 + $0x2c8] sm:$0xff]
        %v2116 = vld [vmem:[#allocation10 + $0x2d0] sm:$0xff]
        %v2117 = vld [vmem:[#allocation10 + $0x2d8] sm:$0xff]
        %v2118 = vld [vmem:[#allocation10 + $0x2e0] sm:$0xff]
        %v2119 = vld [vmem:[#allocation10 + $0x2e8] sm:$0xff]
        %v2120 = vld [vmem:[#allocation10 + $0x2f0] sm:$0xff]
        %v2121 = vld [vmem:[#allocation10 + $0x2f8] sm:$0xff]
        %v2122 = vld [vmem:[#allocation10 + $0x300] sm:$0xff]
        %v2123 = vld [vmem:[#allocation10 + $0x308] sm:$0xff]
        %v2124 = vld [vmem:[#allocation10 + $0x310] sm:$0xff]
        %v2125 = vld [vmem:[#allocation10 + $0x318] sm:$0xff]
        %v2126 = vld [vmem:[#allocation10 + $0x320] sm:$0xff]
        %v2127 = vld [vmem:[#allocation10 + $0x328] sm:$0xff]
        %v2128 = vld [vmem:[#allocation10 + $0x330] sm:$0xff]
        %v2129 = vld [vmem:[#allocation10 + $0x338] sm:$0xff]
        %v2130 = vld [vmem:[#allocation10 + $0x340] sm:$0xff]
        %v2131 = vld [vmem:[#allocation10 + $0x348] sm:$0xff]
        %v2132 = vld [vmem:[#allocation10 + $0x350] sm:$0xff]
        %v2133 = vld [vmem:[#allocation10 + $0x358] sm:$0xff]
        %v2134 = vld [vmem:[#allocation10 + $0x360] sm:$0xff]
        %v2135 = vld [vmem:[#allocation10 + $0x368] sm:$0xff]
        %v2136 = vld [vmem:[#allocation10 + $0x370] sm:$0xff]
        %v2137 = vld [vmem:[#allocation10 + $0x378] sm:$0xff]
        %v2138 = vld [vmem:[#allocation10 + $0x380] sm:$0xff]
        %v2139 = vld [vmem:[#allocation10 + $0x388] sm:$0xff]
        %v2140 = vld [vmem:[#allocation10 + $0x390] sm:$0xff]
        %v2141 = vld [vmem:[#allocation10 + $0x398] sm:$0xff]
        %v2142 = vld [vmem:[#allocation10 + $0x3a0] sm:$0xff]
        %v2143 = vld [vmem:[#allocation10 + $0x3a8] sm:$0xff]
        %v2144 = vld [vmem:[#allocation10 + $0x3b0] sm:$0xff]
        %v2145 = vld [vmem:[#allocation10 + $0x3b8] sm:$0xff]
        %v2146 = vld [vmem:[#allocation10 + $0x3c0] sm:$0xff]
        %v2147 = vld [vmem:[#allocation10 + $0x3c8] sm:$0xff]
        %v2148 = vld [vmem:[#allocation10 + $0x3d0] sm:$0xff]
        %v2149 = vld [vmem:[#allocation10 + $0x3d8] sm:$0xff]
        %v2150 = vld [vmem:[#allocation10 + $0x3e0] sm:$0xff]
        %v2151 = vld [vmem:[#allocation10 + $0x3e8] sm:$0xff]
        %v2152 = vld [vmem:[#allocation10 + $0x3f0] sm:$0xff]
        %v2153 = vld [vmem:[#allocation10 + $0x3f8] sm:$0xff]
        %v2154 = vld [vmem:[#allocation10 + $0x400] sm:$0xff]
        %v2155 = vld [vmem:[#allocation10 + $0x408] sm:$0xff]
        %v2156 = vld [vmem:[#allocation10 + $0x410] sm:$0xff]
        %v2157 = vld [vmem:[#allocation10 + $0x418] sm:$0xff]
        %v2158 = vld [vmem:[#allocation10 + $0x420] sm:$0xff]
        %v2159 = vld [vmem:[#allocation10 + $0x428] sm:$0xff]
        %v2160 = vld [vmem:[#allocation10 + $0x430] sm:$0xff]
        %v2161 = vld [vmem:[#allocation10 + $0x438] sm:$0xff]
        %v2162 = vld [vmem:[#allocation10 + $0x440] sm:$0xff]
        %v2163 = vld [vmem:[#allocation10 + $0x448] sm:$0xff]
        %v2164 = vld [vmem:[#allocation10 + $0x450] sm:$0xff]
        %v2165 = vld [vmem:[#allocation10 + $0x458] sm:$0xff]
        %v2166 = vld [vmem:[#allocation10 + $0x460] sm:$0xff]
        %v2167 = vld [vmem:[#allocation10 + $0x468] sm:$0xff]
        %v2168 = vld [vmem:[#allocation10 + $0x470] sm:$0xff]
        %v2169 = vld [vmem:[#allocation10 + $0x478] sm:$0xff]
        %v2170 = vld [vmem:[#allocation10 + $0x480] sm:$0xff]
        %v2171 = vld [vmem:[#allocation10 + $0x488] sm:$0xff]
        %v2172 = vld [vmem:[#allocation10 + $0x490] sm:$0xff]
        %v2173 = vld [vmem:[#allocation10 + $0x498] sm:$0xff]
        %v2174 = vld [vmem:[#allocation10 + $0x4a0] sm:$0xff]
        %v2175 = vld [vmem:[#allocation10 + $0x4a8] sm:$0xff]
        %v2176 = vld [vmem:[#allocation10 + $0x4b0] sm:$0xff]
        %v2177 = vld [vmem:[#allocation10 + $0x4b8] sm:$0xff]
        %v2178 = vld [vmem:[#allocation10 + $0x4c0] sm:$0xff]
        %v2179 = vld [vmem:[#allocation10 + $0x4c8] sm:$0xff]
        %v2180 = vld [vmem:[#allocation10 + $0x4d0] sm:$0xff]
        %v2181 = vld [vmem:[#allocation10 + $0x4d8] sm:$0xff]
        %v2182 = vld [vmem:[#allocation10 + $0x4e0] sm:$0xff]
        %v2183 = vld [vmem:[#allocation10 + $0x4e8] sm:$0xff]
        %v2184 = vld [vmem:[#allocation10 + $0x4f0] sm:$0xff]
        %v2185 = vld [vmem:[#allocation10 + $0x4f8] sm:$0xff]
        %v2186 = vld [vmem:[#allocation10 + $0x500] sm:$0xff]
        %v2187 = vld [vmem:[#allocation10 + $0x508] sm:$0xff]
        %v2188 = vld [vmem:[#allocation10 + $0x510] sm:$0xff]
        %v2189 = vld [vmem:[#allocation10 + $0x518] sm:$0xff]
        %v2190 = vld [vmem:[#allocation10 + $0x520] sm:$0xff]
        %v2191 = vld [vmem:[#allocation10 + $0x528] sm:$0xff]
        %v2192 = vld [vmem:[#allocation10 + $0x530] sm:$0xff]
        %v2193 = vld [vmem:[#allocation10 + $0x538] sm:$0xff]
        %v2194 = vld [vmem:[#allocation10 + $0x540] sm:$0xff]
        %v2195 = vld [vmem:[#allocation10 + $0x548] sm:$0xff]
        %v2196 = vld [vmem:[#allocation10 + $0x550] sm:$0xff]
        %v2197 = vld [vmem:[#allocation10 + $0x558] sm:$0xff]
        %v2198 = vld [vmem:[#allocation10 + $0x560] sm:$0xff]
        %v2199 = vld [vmem:[#allocation10 + $0x568] sm:$0xff]
        %v2200 = vld [vmem:[#allocation10 + $0x570] sm:$0xff]
        %v2201 = vld [vmem:[#allocation10 + $0x578] sm:$0xff]
        %v2202 = vld [vmem:[#allocation10 + $0x580] sm:$0xff]
        %v2203 = vld [vmem:[#allocation10 + $0x588] sm:$0xff]
        %v2204 = vld [vmem:[#allocation10 + $0x590] sm:$0xff]
        %v2205 = vld [vmem:[#allocation10 + $0x598] sm:$0xff]
        %v2206 = vld [vmem:[#allocation10 + $0x5a0] sm:$0xff]
        %v2207 = vld [vmem:[#allocation10 + $0x5a8] sm:$0xff]
        %v2208 = vld [vmem:[#allocation10 + $0x5b0] sm:$0xff]
        %v2209 = vld [vmem:[#allocation10 + $0x5b8] sm:$0xff]
        %v2210 = vld [vmem:[#allocation10 + $0x5c0] sm:$0xff]
        %v2211 = vld [vmem:[#allocation10 + $0x5c8] sm:$0xff]
        %v2212 = vld [vmem:[#allocation10 + $0x5d0] sm:$0xff]
        %v2213 = vld [vmem:[#allocation10 + $0x5d8] sm:$0xff]
        %v2214 = vld [vmem:[#allocation10 + $0x5e0] sm:$0xff]
        %v2215 = vld [vmem:[#allocation10 + $0x5e8] sm:$0xff]
        %v2216 = vld [vmem:[#allocation10 + $0x5f0] sm:$0xff]
        %v2217 = vld [vmem:[#allocation10 + $0x5f8] sm:$0xff]
        %v2218 = vld [vmem:[#allocation10 + $0x600] sm:$0xff]
        %v2219 = vld [vmem:[#allocation10 + $0x608] sm:$0xff]
        %v2220 = vld [vmem:[#allocation10 + $0x610] sm:$0xff]
        %v2221 = vld [vmem:[#allocation10 + $0x618] sm:$0xff]
        %v2222 = vld [vmem:[#allocation10 + $0x620] sm:$0xff]
        %v2223 = vld [vmem:[#allocation10 + $0x628] sm:$0xff]
        %v2224 = vld [vmem:[#allocation10 + $0x630] sm:$0xff]
        %v2225 = vld [vmem:[#allocation10 + $0x638] sm:$0xff]
        %v2226 = vld [vmem:[#allocation10 + $0x640] sm:$0xff]
        %v2227 = vld [vmem:[#allocation10 + $0x648] sm:$0xff]
        %v2228 = vld [vmem:[#allocation10 + $0x650] sm:$0xff]
        %v2229 = vld [vmem:[#allocation10 + $0x658] sm:$0xff]
        %v2230 = vld [vmem:[#allocation10 + $0x660] sm:$0xff]
        %v2231 = vld [vmem:[#allocation10 + $0x668] sm:$0xff]
        %v2232 = vld [vmem:[#allocation10 + $0x670] sm:$0xff]
        %v2233 = vld [vmem:[#allocation10 + $0x678] sm:$0xff]
        %v2234 = vld [vmem:[#allocation10 + $0x680] sm:$0xff]
        %v2235 = vld [vmem:[#allocation10 + $0x688] sm:$0xff]
        %v2236 = vld [vmem:[#allocation10 + $0x690] sm:$0xff]
        %v2237 = vld [vmem:[#allocation10 + $0x698] sm:$0xff]
        %v2238 = vld [vmem:[#allocation10 + $0x6a0] sm:$0xff]
        %v2239 = vld [vmem:[#allocation10 + $0x6a8] sm:$0xff]
        %v2240 = vld [vmem:[#allocation10 + $0x6b0] sm:$0xff]
        %v2241 = vld [vmem:[#allocation10 + $0x6b8] sm:$0xff]
        %v2242 = vld [vmem:[#allocation10 + $0x6c0] sm:$0xff]
        %v2243 = vld [vmem:[#allocation10 + $0x6c8] sm:$0xff]
        %v2244 = vld [vmem:[#allocation10 + $0x6d0] sm:$0xff]
        %v2245 = vld [vmem:[#allocation10 + $0x6d8] sm:$0xff]
        %v2246 = vld [vmem:[#allocation10 + $0x6e0] sm:$0xff]
        %v2247 = vld [vmem:[#allocation10 + $0x6e8] sm:$0xff]
        %v2248 = vld [vmem:[#allocation10 + $0x6f0] sm:$0xff]
        %v2249 = vld [vmem:[#allocation10 + $0x6f8] sm:$0xff]
        %v2250 = vld [vmem:[#allocation10 + $0x700] sm:$0xff]
        %v2251 = vld [vmem:[#allocation10 + $0x708] sm:$0xff]
        %v2252 = vld [vmem:[#allocation10 + $0x710] sm:$0xff]
        %v2253 = vld [vmem:[#allocation10 + $0x718] sm:$0xff]
        %v2254 = vld [vmem:[#allocation10 + $0x720] sm:$0xff]
        %v2255 = vld [vmem:[#allocation10 + $0x728] sm:$0xff]
        %v2256 = vld [vmem:[#allocation10 + $0x730] sm:$0xff]
        %v2257 = vld [vmem:[#allocation10 + $0x738] sm:$0xff]
        %v2258 = vld [vmem:[#allocation10 + $0x740] sm:$0xff]
        %v2259 = vld [vmem:[#allocation10 + $0x748] sm:$0xff]
        %v2260 = vld [vmem:[#allocation10 + $0x750] sm:$0xff]
        %v2261 = vld [vmem:[#allocation10 + $0x758] sm:$0xff]
        %v2262 = vld [vmem:[#allocation10 + $0x760] sm:$0xff]
        %v2263 = vld [vmem:[#allocation10 + $0x768] sm:$0xff]
        %v2264 = vld [vmem:[#allocation10 + $0x770] sm:$0xff]
        %v2265 = vld [vmem:[#allocation10 + $0x778] sm:$0xff]
        %v2266 = vld [vmem:[#allocation10 + $0x780] sm:$0xff]
        %v2267 = vld [vmem:[#allocation10 + $0x788] sm:$0xff]
        %v2268 = vld [vmem:[#allocation10 + $0x790] sm:$0xff]
        %v2269 = vld [vmem:[#allocation10 + $0x798] sm:$0xff]
        %v2270 = vld [vmem:[#allocation10 + $0x7a0] sm:$0xff]
        %v2271 = vld [vmem:[#allocation10 + $0x7a8] sm:$0xff]
        %v2272 = vld [vmem:[#allocation10 + $0x7b0] sm:$0xff]
        %v2273 = vld [vmem:[#allocation10 + $0x7b8] sm:$0xff]
        %v2274 = vld [vmem:[#allocation10 + $0x7c0] sm:$0xff]
        %v2275 = vld [vmem:[#allocation10 + $0x7c8] sm:$0xff]
        %v2276 = vld [vmem:[#allocation10 + $0x7d0] sm:$0xff]
        %v2277 = vld [vmem:[#allocation10 + $0x7d8] sm:$0xff]
        %v2278 = vld [vmem:[#allocation10 + $0x7e0] sm:$0xff]
        %v2279 = vld [vmem:[#allocation10 + $0x7e8] sm:$0xff]
        %v2280 = vld [vmem:[#allocation10 + $0x7f0] sm:$0xff]
        %v2281 = vld [vmem:[#allocation10 + $0x7f8] sm:$0xff]
        %v2282 = vld [vmem:[#allocation10 + $0x800] sm:$0xff]
        %v2283 = vld [vmem:[#allocation10 + $0x808] sm:$0xff]
        %v2284 = vld [vmem:[#allocation10 + $0x810] sm:$0xff]
        %v2285 = vld [vmem:[#allocation10 + $0x818] sm:$0xff]
        %v2286 = vld [vmem:[#allocation10 + $0x820] sm:$0xff]
        %v2287 = vld [vmem:[#allocation10 + $0x828] sm:$0xff]
        %v2288 = vld [vmem:[#allocation10 + $0x830] sm:$0xff]
        %v2289 = vld [vmem:[#allocation10 + $0x838] sm:$0xff]
        %v2290 = vld [vmem:[#allocation10 + $0x840] sm:$0xff]
        %v2291 = vld [vmem:[#allocation10 + $0x848] sm:$0xff]
        %v2292 = vld [vmem:[#allocation10 + $0x850] sm:$0xff]
        %v2293 = vld [vmem:[#allocation10 + $0x858] sm:$0xff]
        %v2294 = vld [vmem:[#allocation10 + $0x860] sm:$0xff]
        %v2295 = vld [vmem:[#allocation10 + $0x868] sm:$0xff]
        %v2296 = vld [vmem:[#allocation10 + $0x870] sm:$0xff]
        %v2297 = vld [vmem:[#allocation10 + $0x878] sm:$0xff]
        %v2298 = vld [vmem:[#allocation10 + $0x880] sm:$0xff]
        %v2299 = vld [vmem:[#allocation10 + $0x888] sm:$0xff]
        %v2300 = vld [vmem:[#allocation10 + $0x890] sm:$0xff]
        %v2301 = vld [vmem:[#allocation10 + $0x898] sm:$0xff]
        %v2302 = vld [vmem:[#allocation10 + $0x8a0] sm:$0xff]
        %v2303 = vld [vmem:[#allocation10 + $0x8a8] sm:$0xff]
        %v2304 = vld [vmem:[#allocation10 + $0x8b0] sm:$0xff]
        %v2305 = vld [vmem:[#allocation10 + $0x8b8] sm:$0xff]
        %v2306 = vld [vmem:[#allocation10 + $0x8c0] sm:$0xff]
        %v2307 = vld [vmem:[#allocation10 + $0x8c8] sm:$0xff]
        %v2308 = vld [vmem:[#allocation10 + $0x8d0] sm:$0xff]
        %v2309 = vld [vmem:[#allocation10 + $0x8d8] sm:$0xff]
        %v2310 = vld [vmem:[#allocation10 + $0x8e0] sm:$0xff]
        %v2311 = vld [vmem:[#allocation10 + $0x8e8] sm:$0xff]
        %v2312 = vld [vmem:[#allocation10 + $0x8f0] sm:$0xff]
        %v2313 = vld [vmem:[#allocation10 + $0x8f8] sm:$0xff]
        %v2314 = vld [vmem:[#allocation10 + $0x900] sm:$0xff]
        %v2315 = vld [vmem:[#allocation10 + $0x908] sm:$0xff]
        %v2316 = vld [vmem:[#allocation10 + $0x910] sm:$0xff]
        %v2317 = vld [vmem:[#allocation10 + $0x918] sm:$0xff]
        %v2318 = vld [vmem:[#allocation10 + $0x920] sm:$0xff]
        %v2319 = vld [vmem:[#allocation10 + $0x928] sm:$0xff]
        %v2320 = vld [vmem:[#allocation10 + $0x930] sm:$0xff]
        %v2321 = vld [vmem:[#allocation10 + $0x938] sm:$0xff]
        %v2322 = vld [vmem:[#allocation10 + $0x940] sm:$0xff]
        %v2323 = vld [vmem:[#allocation10 + $0x948] sm:$0xff]
        %v2324 = vld [vmem:[#allocation10 + $0x950] sm:$0xff]
        %v2325 = vld [vmem:[#allocation10 + $0x958] sm:$0xff]
        %v2326 = vld [vmem:[#allocation10 + $0x960] sm:$0xff]
        %v2327 = vld [vmem:[#allocation10 + $0x968] sm:$0xff]
        %v2328 = vld [vmem:[#allocation10 + $0x970] sm:$0xff]
        %v2329 = vld [vmem:[#allocation10 + $0x978] sm:$0xff]
        %v2330 = vld [vmem:[#allocation10 + $0x980] sm:$0xff]
        %v2331 = vld [vmem:[#allocation10 + $0x988] sm:$0xff]
        %v2332 = vld [vmem:[#allocation10 + $0x990] sm:$0xff]
        %v2333 = vld [vmem:[#allocation10 + $0x998] sm:$0xff]
        %v2334 = vld [vmem:[#allocation10 + $0x9a0] sm:$0xff]
        %v2335 = vld [vmem:[#allocation10 + $0x9a8] sm:$0xff]
        %v2336 = vld [vmem:[#allocation10 + $0x9b0] sm:$0xff]
        %v2337 = vld [vmem:[#allocation10 + $0x9b8] sm:$0xff]
        %v2338 = vld [vmem:[#allocation10 + $0x9c0] sm:$0xff]
        %v2339 = vld [vmem:[#allocation10 + $0x9c8] sm:$0xff]
        %v2340 = vld [vmem:[#allocation10 + $0x9d0] sm:$0xff]
        %v2341 = vld [vmem:[#allocation10 + $0x9d8] sm:$0xff]
        %v2342 = vld [vmem:[#allocation10 + $0x9e0] sm:$0xff]
        %v2343 = vld [vmem:[#allocation10 + $0x9e8] sm:$0xff]
        %v2344 = vld [vmem:[#allocation10 + $0x9f0] sm:$0xff]
        %v2345 = vld [vmem:[#allocation10 + $0x9f8] sm:$0xff]
        %v2346 = vld [vmem:[#allocation10 + $0xa00] sm:$0xff]
        %v2347 = vld [vmem:[#allocation10 + $0xa08] sm:$0xff]
        %v2348 = vld [vmem:[#allocation10 + $0xa10] sm:$0xff]
        %v2349 = vld [vmem:[#allocation10 + $0xa18] sm:$0xff]
        %v2350 = vld [vmem:[#allocation10 + $0xa20] sm:$0xff]
        %v2351 = vld [vmem:[#allocation10 + $0xa28] sm:$0xff]
        %v2352 = vld [vmem:[#allocation10 + $0xa30] sm:$0xff]
        %v2353 = vld [vmem:[#allocation10 + $0xa38] sm:$0xff]
        %v2354 = vld [vmem:[#allocation10 + $0xa40] sm:$0xff]
        %v2355 = vld [vmem:[#allocation10 + $0xa48] sm:$0xff]
        %v2356 = vld [vmem:[#allocation10 + $0xa50] sm:$0xff]
        %v2357 = vld [vmem:[#allocation10 + $0xa58] sm:$0xff]
        %v2358 = vld [vmem:[#allocation10 + $0xa60] sm:$0xff]
        %v2359 = vld [vmem:[#allocation10 + $0xa68] sm:$0xff]
        %v2360 = vld [vmem:[#allocation10 + $0xa70] sm:$0xff]
        %v2361 = vld [vmem:[#allocation10 + $0xa78] sm:$0xff]
        %v2362 = vld [vmem:[#allocation10 + $0xa80] sm:$0xff]
        %v2363 = vld [vmem:[#allocation10 + $0xa88] sm:$0xff]
        %v2364 = vld [vmem:[#allocation10 + $0xa90] sm:$0xff]
        %v2365 = vld [vmem:[#allocation10 + $0xa98] sm:$0xff]
        %v2366 = vld [vmem:[#allocation10 + $0xaa0] sm:$0xff]
        %v2367 = vld [vmem:[#allocation10 + $0xaa8] sm:$0xff]
        %v2368 = vld [vmem:[#allocation10 + $0xab0] sm:$0xff]
        %v2369 = vld [vmem:[#allocation10 + $0xab8] sm:$0xff]
        %v2370 = vld [vmem:[#allocation10 + $0xac0] sm:$0xff]
        %v2371 = vld [vmem:[#allocation10 + $0xac8] sm:$0xff]
        %v2372 = vld [vmem:[#allocation10 + $0xad0] sm:$0xff]
        %v2373 = vld [vmem:[#allocation10 + $0xad8] sm:$0xff]
        %v2374 = vld [vmem:[#allocation10 + $0xae0] sm:$0xff]
        %v2375 = vld [vmem:[#allocation10 + $0xae8] sm:$0xff]
        %v2376 = vld [vmem:[#allocation10 + $0xaf0] sm:$0xff]
        %v2377 = vld [vmem:[#allocation10 + $0xaf8] sm:$0xff]
        %v2378 = vld [vmem:[#allocation10 + $0xb00] sm:$0xff]
        %v2379 = vld [vmem:[#allocation10 + $0xb08] sm:$0xff]
        %v2380 = vld [vmem:[#allocation10 + $0xb10] sm:$0xff]
        %v2381 = vld [vmem:[#allocation10 + $0xb18] sm:$0xff]
        %v2382 = vld [vmem:[#allocation10 + $0xb20] sm:$0xff]
        %v2383 = vld [vmem:[#allocation10 + $0xb28] sm:$0xff]
        %v2384 = vld [vmem:[#allocation10 + $0xb30] sm:$0xff]
        %v2385 = vld [vmem:[#allocation10 + $0xb38] sm:$0xff]
        %v2386 = vld [vmem:[#allocation10 + $0xb40] sm:$0xff]
        %v2387 = vld [vmem:[#allocation10 + $0xb48] sm:$0xff]
        %v2388 = vld [vmem:[#allocation10 + $0xb50] sm:$0xff]
        %v2389 = vld [vmem:[#allocation10 + $0xb58] sm:$0xff]
        %v2390 = vld [vmem:[#allocation10 + $0xb60] sm:$0xff]
        %v2391 = vld [vmem:[#allocation10 + $0xb68] sm:$0xff]
        %v2392 = vld [vmem:[#allocation10 + $0xb70] sm:$0xff]
        %v2393 = vld [vmem:[#allocation10 + $0xb78] sm:$0xff]
        %v2394 = vld [vmem:[#allocation10 + $0xb80] sm:$0xff]
        %v2395 = vld [vmem:[#allocation10 + $0xb88] sm:$0xff]
        %v2396 = vld [vmem:[#allocation10 + $0xb90] sm:$0xff]
        %v2397 = vld [vmem:[#allocation10 + $0xb98] sm:$0xff]
        %v2398 = vld [vmem:[#allocation10 + $0xba0] sm:$0xff]
        %v2399 = vld [vmem:[#allocation10 + $0xba8] sm:$0xff]
        %v2400 = vld [vmem:[#allocation10 + $0xbb0] sm:$0xff]
        %v2401 = vld [vmem:[#allocation10 + $0xbb8] sm:$0xff]
        %v2402 = vld [vmem:[#allocation10 + $0xbc0] sm:$0xff]
        %v2403 = vld [vmem:[#allocation10 + $0xbc8] sm:$0xff]
        %v2404 = vld [vmem:[#allocation10 + $0xbd0] sm:$0xff]
        %v2405 = vld [vmem:[#allocation10 + $0xbd8] sm:$0xff]
        %v2406 = vld [vmem:[#allocation10 + $0xbe0] sm:$0xff]
        %v2407 = vld [vmem:[#allocation10 + $0xbe8] sm:$0xff]
        %v2408 = vld [vmem:[#allocation10 + $0xbf0] sm:$0xff]
        %v2409 = vld [vmem:[#allocation10 + $0xbf8] sm:$0xff]
        %v2410 = vld [vmem:[#allocation10 + $0xc00] sm:$0xff]
        %v2411 = vld [vmem:[#allocation10 + $0xc08] sm:$0xff]
        %v2412 = vld [vmem:[#allocation10 + $0xc10] sm:$0xff]
        %v2413 = vld [vmem:[#allocation10 + $0xc18] sm:$0xff]
        %v2414 = vld [vmem:[#allocation10 + $0xc20] sm:$0xff]
        %v2415 = vld [vmem:[#allocation10 + $0xc28] sm:$0xff]
        %v2416 = vld [vmem:[#allocation10 + $0xc30] sm:$0xff]
        %v2417 = vld [vmem:[#allocation10 + $0xc38] sm:$0xff]
        %v2418 = vld [vmem:[#allocation10 + $0xc40] sm:$0xff]
        %v2419 = vld [vmem:[#allocation10 + $0xc48] sm:$0xff]
        %v2420 = vld [vmem:[#allocation10 + $0xc50] sm:$0xff]
        %v2421 = vld [vmem:[#allocation10 + $0xc58] sm:$0xff]
        %v2422 = vld [vmem:[#allocation10 + $0xc60] sm:$0xff]
        %v2423 = vld [vmem:[#allocation10 + $0xc68] sm:$0xff]
        %v2424 = vld [vmem:[#allocation10 + $0xc70] sm:$0xff]
        %v2425 = vld [vmem:[#allocation10 + $0xc78] sm:$0xff]
        %v2426 = vld [vmem:[#allocation10 + $0xc80] sm:$0xff]
        %v2427 = vld [vmem:[#allocation10 + $0xc88] sm:$0xff]
        %v2428 = vld [vmem:[#allocation10 + $0xc90] sm:$0xff]
        %v2429 = vld [vmem:[#allocation10 + $0xc98] sm:$0xff]
        %v2430 = vld [vmem:[#allocation10 + $0xca0] sm:$0xff]
        %v2431 = vld [vmem:[#allocation10 + $0xca8] sm:$0xff]
        %v2432 = vld [vmem:[#allocation10 + $0xcb0] sm:$0xff]
        %v2433 = vld [vmem:[#allocation10 + $0xcb8] sm:$0xff]
        %v2434 = vld [vmem:[#allocation10 + $0xcc0] sm:$0xff]
        %v2435 = vld [vmem:[#allocation10 + $0xcc8] sm:$0xff]
        %v2436 = vld [vmem:[#allocation10 + $0xcd0] sm:$0xff]
        %v2437 = vld [vmem:[#allocation10 + $0xcd8] sm:$0xff]
        %v2438 = vld [vmem:[#allocation10 + $0xce0] sm:$0xff]
        %v2439 = vld [vmem:[#allocation10 + $0xce8] sm:$0xff]
        %v2440 = vld [vmem:[#allocation10 + $0xcf0] sm:$0xff]
        %v2441 = vld [vmem:[#allocation10 + $0xcf8] sm:$0xff]
        %v2442 = vld [vmem:[#allocation10 + $0xd00] sm:$0xff]
        %v2443 = vld [vmem:[#allocation10 + $0xd08] sm:$0xff]
        %v2444 = vld [vmem:[#allocation10 + $0xd10] sm:$0xff]
        %v2445 = vld [vmem:[#allocation10 + $0xd18] sm:$0xff]
        %v2446 = vld [vmem:[#allocation2] sm:$0xfe]
        %v2447 = vld [vmem:[#allocation2 + $0x8] sm:$0xfe]
        %v2448 = vld [vmem:[#allocation2 + $0x10] sm:$0xfe]
        %v2449 = vld [vmem:[#allocation2 + $0x18] sm:$0xfe]
        %v2450 = vld [vmem:[#allocation2 + $0x20] sm:$0x7f]
        %v2451 = vld [vmem:[#allocation2 + $0x28] sm:$0x7f]
        %v2452 = vld [vmem:[#allocation2 + $0x30] sm:$0x7f]
        %v2453 = vld [vmem:[#allocation2 + $0x38] sm:$0x7f]
        %s2454 = scalar_lea.vmem [#allocation10], 3360
        %v2455 = vld [vmem:[%s2454] sm:$0xff]
        %v2456 = vld [vmem:[%s2454 + $0x8] sm:$0xff]
        %v2457 = vld [vmem:[%s2454 + $0x10] sm:$0xff]
        %v2458 = vld [vmem:[%s2454 + $0x18] sm:$0xff]
        %v2459 = vld [vmem:[%s2454 + $0x20] sm:$0xff]
        %v2460 = vld [vmem:[%s2454 + $0x28] sm:$0xff]
        %v2461 = vld [vmem:[%s2454 + $0x30] sm:$0xff]
        %v2462 = vld [vmem:[%s2454 + $0x38] sm:$0xff]
        %v2463 = vld [vmem:[%s2454 + $0x40] sm:$0xff]
        %v2464 = vld [vmem:[%s2454 + $0x48] sm:$0xff]
        %v2465 = vld [vmem:[%s2454 + $0x50] sm:$0xff]
        %v2466 = vld [vmem:[%s2454 + $0x58] sm:$0xff]
        %v2467 = vld [vmem:[%s2454 + $0x60] sm:$0xff]
        %v2468 = vld [vmem:[%s2454 + $0x68] sm:$0xff]
        %v2469 = vld [vmem:[%s2454 + $0x70] sm:$0xff]
        %v2470 = vld [vmem:[%s2454 + $0x78] sm:$0xff]
        %v2471 = vld [vmem:[%s2454 + $0x80] sm:$0xff]
        %v2472 = vld [vmem:[%s2454 + $0x88] sm:$0xff]
        %v2473 = vld [vmem:[%s2454 + $0x90] sm:$0xff]
        %v2474 = vld [vmem:[%s2454 + $0x98] sm:$0xff]
        %v2475 = vld [vmem:[%s2454 + $0xa0] sm:$0xff]
        %v2476 = vld [vmem:[%s2454 + $0xa8] sm:$0xff]
        %v2477 = vld [vmem:[%s2454 + $0xb0] sm:$0xff]
        %v2478 = vld [vmem:[%s2454 + $0xb8] sm:$0xff]
        %v2479 = vld [vmem:[%s2454 + $0xc0] sm:$0xff]
        %v2480 = vld [vmem:[%s2454 + $0xc8] sm:$0xff]
        %v2481 = vld [vmem:[%s2454 + $0xd0] sm:$0xff]
        %v2482 = vld [vmem:[%s2454 + $0xd8] sm:$0xff]
        %v2483 = vld [vmem:[%s2454 + $0xe0] sm:$0xff]
        %v2484 = vld [vmem:[%s2454 + $0xe8] sm:$0xff]
        %v2485 = vld [vmem:[%s2454 + $0xf0] sm:$0xff]
        %v2486 = vld [vmem:[%s2454 + $0xf8] sm:$0xff]
        %v2487 = vld [vmem:[%s2454 + $0x100] sm:$0xff]
        %v2488 = vld [vmem:[%s2454 + $0x108] sm:$0xff]
        %v2489 = vld [vmem:[%s2454 + $0x110] sm:$0xff]
        %v2490 = vld [vmem:[%s2454 + $0x118] sm:$0xff]
        %v2491 = vld [vmem:[%s2454 + $0x120] sm:$0xff]
        %v2492 = vld [vmem:[%s2454 + $0x128] sm:$0xff]
        %v2493 = vld [vmem:[%s2454 + $0x130] sm:$0xff]
        %v2494 = vld [vmem:[%s2454 + $0x138] sm:$0xff]
        %v2495 = vld [vmem:[%s2454 + $0x140] sm:$0xff]
        %v2496 = vld [vmem:[%s2454 + $0x148] sm:$0xff]
        %v2497 = vld [vmem:[%s2454 + $0x150] sm:$0xff]
        %v2498 = vld [vmem:[%s2454 + $0x158] sm:$0xff]
        %v2499 = vld [vmem:[%s2454 + $0x160] sm:$0xff]
        %v2500 = vld [vmem:[%s2454 + $0x168] sm:$0xff]
        %v2501 = vld [vmem:[%s2454 + $0x170] sm:$0xff]
        %v2502 = vld [vmem:[%s2454 + $0x178] sm:$0xff]
        %v2503 = vld [vmem:[%s2454 + $0x180] sm:$0xff]
        %v2504 = vld [vmem:[%s2454 + $0x188] sm:$0xff]
        %v2505 = vld [vmem:[%s2454 + $0x190] sm:$0xff]
        %v2506 = vld [vmem:[%s2454 + $0x198] sm:$0xff]
        %v2507 = vld [vmem:[%s2454 + $0x1a0] sm:$0xff]
        %v2508 = vld [vmem:[%s2454 + $0x1a8] sm:$0xff]
        %v2509 = vld [vmem:[%s2454 + $0x1b0] sm:$0xff]
        %v2510 = vld [vmem:[%s2454 + $0x1b8] sm:$0xff]
        %v2511 = vld [vmem:[%s2454 + $0x1c0] sm:$0xff]
        %v2512 = vld [vmem:[%s2454 + $0x1c8] sm:$0xff]
        %v2513 = vld [vmem:[%s2454 + $0x1d0] sm:$0xff]
        %v2514 = vld [vmem:[%s2454 + $0x1d8] sm:$0xff]
        %v2515 = vld [vmem:[%s2454 + $0x1e0] sm:$0xff]
        %v2516 = vld [vmem:[%s2454 + $0x1e8] sm:$0xff]
        %v2517 = vld [vmem:[%s2454 + $0x1f0] sm:$0xff]
        %v2518 = vld [vmem:[%s2454 + $0x1f8] sm:$0xff]
        %v2519 = vld [vmem:[%s2454 + $0x200] sm:$0xff]
        %v2520 = vld [vmem:[%s2454 + $0x208] sm:$0xff]
        %v2521 = vld [vmem:[%s2454 + $0x210] sm:$0xff]
        %v2522 = vld [vmem:[%s2454 + $0x218] sm:$0xff]
        %v2523 = vld [vmem:[%s2454 + $0x220] sm:$0xff]
        %v2524 = vld [vmem:[%s2454 + $0x228] sm:$0xff]
        %v2525 = vld [vmem:[%s2454 + $0x230] sm:$0xff]
        %v2526 = vld [vmem:[%s2454 + $0x238] sm:$0xff]
        %v2527 = vld [vmem:[%s2454 + $0x240] sm:$0xff]
        %v2528 = vld [vmem:[%s2454 + $0x248] sm:$0xff]
        %v2529 = vld [vmem:[%s2454 + $0x250] sm:$0xff]
        %v2530 = vld [vmem:[%s2454 + $0x258] sm:$0xff]
        %v2531 = vld [vmem:[%s2454 + $0x260] sm:$0xff]
        %v2532 = vld [vmem:[%s2454 + $0x268] sm:$0xff]
        %v2533 = vld [vmem:[%s2454 + $0x270] sm:$0xff]
        %v2534 = vld [vmem:[%s2454 + $0x278] sm:$0xff]
        %v2535 = vld [vmem:[%s2454 + $0x280] sm:$0xff]
        %v2536 = vld [vmem:[%s2454 + $0x288] sm:$0xff]
        %v2537 = vld [vmem:[%s2454 + $0x290] sm:$0xff]
        %v2538 = vld [vmem:[%s2454 + $0x298] sm:$0xff]
        %v2539 = vld [vmem:[%s2454 + $0x2a0] sm:$0xff]
        %v2540 = vld [vmem:[%s2454 + $0x2a8] sm:$0xff]
        %v2541 = vld [vmem:[%s2454 + $0x2b0] sm:$0xff]
        %v2542 = vld [vmem:[%s2454 + $0x2b8] sm:$0xff]
        %v2543 = vld [vmem:[%s2454 + $0x2c0] sm:$0xff]
        %v2544 = vld [vmem:[%s2454 + $0x2c8] sm:$0xff]
        %v2545 = vld [vmem:[%s2454 + $0x2d0] sm:$0xff]
        %v2546 = vld [vmem:[%s2454 + $0x2d8] sm:$0xff]
        %v2547 = vld [vmem:[%s2454 + $0x2e0] sm:$0xff]
        %v2548 = vld [vmem:[%s2454 + $0x2e8] sm:$0xff]
        %v2549 = vld [vmem:[%s2454 + $0x2f0] sm:$0xff]
        %v2550 = vld [vmem:[%s2454 + $0x2f8] sm:$0xff]
        %v2551 = vld [vmem:[%s2454 + $0x300] sm:$0xff]
        %v2552 = vld [vmem:[%s2454 + $0x308] sm:$0xff]
        %v2553 = vld [vmem:[%s2454 + $0x310] sm:$0xff]
        %v2554 = vld [vmem:[%s2454 + $0x318] sm:$0xff]
        %v2555 = vld [vmem:[%s2454 + $0x320] sm:$0xff]
        %v2556 = vld [vmem:[%s2454 + $0x328] sm:$0xff]
        %v2557 = vld [vmem:[%s2454 + $0x330] sm:$0xff]
        %v2558 = vld [vmem:[%s2454 + $0x338] sm:$0xff]
        %v2559 = vld [vmem:[%s2454 + $0x340] sm:$0xff]
        %v2560 = vld [vmem:[%s2454 + $0x348] sm:$0xff]
        %v2561 = vld [vmem:[%s2454 + $0x350] sm:$0xff]
        %v2562 = vld [vmem:[%s2454 + $0x358] sm:$0xff]
        %v2563 = vld [vmem:[%s2454 + $0x360] sm:$0xff]
        %v2564 = vld [vmem:[%s2454 + $0x368] sm:$0xff]
        %v2565 = vld [vmem:[%s2454 + $0x370] sm:$0xff]
        %v2566 = vld [vmem:[%s2454 + $0x378] sm:$0xff]
        %v2567 = vld [vmem:[%s2454 + $0x380] sm:$0xff]
        %v2568 = vld [vmem:[%s2454 + $0x388] sm:$0xff]
        %v2569 = vld [vmem:[%s2454 + $0x390] sm:$0xff]
        %v2570 = vld [vmem:[%s2454 + $0x398] sm:$0xff]
        %v2571 = vld [vmem:[%s2454 + $0x3a0] sm:$0xff]
        %v2572 = vld [vmem:[%s2454 + $0x3a8] sm:$0xff]
        %v2573 = vld [vmem:[%s2454 + $0x3b0] sm:$0xff]
        %v2574 = vld [vmem:[%s2454 + $0x3b8] sm:$0xff]
        %v2575 = vld [vmem:[%s2454 + $0x3c0] sm:$0xff]
        %v2576 = vld [vmem:[%s2454 + $0x3c8] sm:$0xff]
        %v2577 = vld [vmem:[%s2454 + $0x3d0] sm:$0xff]
        %v2578 = vld [vmem:[%s2454 + $0x3d8] sm:$0xff]
        %v2579 = vld [vmem:[%s2454 + $0x3e0] sm:$0xff]
        %v2580 = vld [vmem:[%s2454 + $0x3e8] sm:$0xff]
        %v2581 = vld [vmem:[%s2454 + $0x3f0] sm:$0xff]
        %v2582 = vld [vmem:[%s2454 + $0x3f8] sm:$0xff]
        %v2583 = vld [vmem:[%s2454 + $0x400] sm:$0xff]
        %v2584 = vld [vmem:[%s2454 + $0x408] sm:$0xff]
        %v2585 = vld [vmem:[%s2454 + $0x410] sm:$0xff]
        %v2586 = vld [vmem:[%s2454 + $0x418] sm:$0xff]
        %v2587 = vld [vmem:[%s2454 + $0x420] sm:$0xff]
        %v2588 = vld [vmem:[%s2454 + $0x428] sm:$0xff]
        %v2589 = vld [vmem:[%s2454 + $0x430] sm:$0xff]
        %v2590 = vld [vmem:[%s2454 + $0x438] sm:$0xff]
        %v2591 = vld [vmem:[%s2454 + $0x440] sm:$0xff]
        %v2592 = vld [vmem:[%s2454 + $0x448] sm:$0xff]
        %v2593 = vld [vmem:[%s2454 + $0x450] sm:$0xff]
        %v2594 = vld [vmem:[%s2454 + $0x458] sm:$0xff]
        %v2595 = vld [vmem:[%s2454 + $0x460] sm:$0xff]
        %v2596 = vld [vmem:[%s2454 + $0x468] sm:$0xff]
        %v2597 = vld [vmem:[%s2454 + $0x470] sm:$0xff]
        %v2598 = vld [vmem:[%s2454 + $0x478] sm:$0xff]
        %v2599 = vld [vmem:[%s2454 + $0x480] sm:$0xff]
        %v2600 = vld [vmem:[%s2454 + $0x488] sm:$0xff]
        %v2601 = vld [vmem:[%s2454 + $0x490] sm:$0xff]
        %v2602 = vld [vmem:[%s2454 + $0x498] sm:$0xff]
        %v2603 = vld [vmem:[%s2454 + $0x4a0] sm:$0xff]
        %v2604 = vld [vmem:[%s2454 + $0x4a8] sm:$0xff]
        %v2605 = vld [vmem:[%s2454 + $0x4b0] sm:$0xff]
        %v2606 = vld [vmem:[%s2454 + $0x4b8] sm:$0xff]
        %v2607 = vld [vmem:[%s2454 + $0x4c0] sm:$0xff]
        %v2608 = vld [vmem:[%s2454 + $0x4c8] sm:$0xff]
        %v2609 = vld [vmem:[%s2454 + $0x4d0] sm:$0xff]
        %v2610 = vld [vmem:[%s2454 + $0x4d8] sm:$0xff]
        %v2611 = vld [vmem:[%s2454 + $0x4e0] sm:$0xff]
        %v2612 = vld [vmem:[%s2454 + $0x4e8] sm:$0xff]
        %v2613 = vld [vmem:[%s2454 + $0x4f0] sm:$0xff]
        %v2614 = vld [vmem:[%s2454 + $0x4f8] sm:$0xff]
        %v2615 = vld [vmem:[%s2454 + $0x500] sm:$0xff]
        %v2616 = vld [vmem:[%s2454 + $0x508] sm:$0xff]
        %v2617 = vld [vmem:[%s2454 + $0x510] sm:$0xff]
        %v2618 = vld [vmem:[%s2454 + $0x518] sm:$0xff]
        %v2619 = vld [vmem:[%s2454 + $0x520] sm:$0xff]
        %v2620 = vld [vmem:[%s2454 + $0x528] sm:$0xff]
        %v2621 = vld [vmem:[%s2454 + $0x530] sm:$0xff]
        %v2622 = vld [vmem:[%s2454 + $0x538] sm:$0xff]
        %v2623 = vld [vmem:[%s2454 + $0x540] sm:$0xff]
        %v2624 = vld [vmem:[%s2454 + $0x548] sm:$0xff]
        %v2625 = vld [vmem:[%s2454 + $0x550] sm:$0xff]
        %v2626 = vld [vmem:[%s2454 + $0x558] sm:$0xff]
        %v2627 = vld [vmem:[%s2454 + $0x560] sm:$0xff]
        %v2628 = vld [vmem:[%s2454 + $0x568] sm:$0xff]
        %v2629 = vld [vmem:[%s2454 + $0x570] sm:$0xff]
        %v2630 = vld [vmem:[%s2454 + $0x578] sm:$0xff]
        %v2631 = vld [vmem:[%s2454 + $0x580] sm:$0xff]
        %v2632 = vld [vmem:[%s2454 + $0x588] sm:$0xff]
        %v2633 = vld [vmem:[%s2454 + $0x590] sm:$0xff]
        %v2634 = vld [vmem:[%s2454 + $0x598] sm:$0xff]
        %v2635 = vld [vmem:[%s2454 + $0x5a0] sm:$0xff]
        %v2636 = vld [vmem:[%s2454 + $0x5a8] sm:$0xff]
        %v2637 = vld [vmem:[%s2454 + $0x5b0] sm:$0xff]
        %v2638 = vld [vmem:[%s2454 + $0x5b8] sm:$0xff]
        %v2639 = vld [vmem:[%s2454 + $0x5c0] sm:$0xff]
        %v2640 = vld [vmem:[%s2454 + $0x5c8] sm:$0xff]
        %v2641 = vld [vmem:[%s2454 + $0x5d0] sm:$0xff]
        %v2642 = vld [vmem:[%s2454 + $0x5d8] sm:$0xff]
        %v2643 = vld [vmem:[%s2454 + $0x5e0] sm:$0xff]
        %v2644 = vld [vmem:[%s2454 + $0x5e8] sm:$0xff]
        %v2645 = vld [vmem:[%s2454 + $0x5f0] sm:$0xff]
        %v2646 = vld [vmem:[%s2454 + $0x5f8] sm:$0xff]
        %v2647 = vld [vmem:[%s2454 + $0x600] sm:$0xff]
        %v2648 = vld [vmem:[%s2454 + $0x608] sm:$0xff]
        %v2649 = vld [vmem:[%s2454 + $0x610] sm:$0xff]
        %v2650 = vld [vmem:[%s2454 + $0x618] sm:$0xff]
        %v2651 = vld [vmem:[%s2454 + $0x620] sm:$0xff]
        %v2652 = vld [vmem:[%s2454 + $0x628] sm:$0xff]
        %v2653 = vld [vmem:[%s2454 + $0x630] sm:$0xff]
        %v2654 = vld [vmem:[%s2454 + $0x638] sm:$0xff]
        %v2655 = vld [vmem:[%s2454 + $0x640] sm:$0xff]
        %v2656 = vld [vmem:[%s2454 + $0x648] sm:$0xff]
        %v2657 = vld [vmem:[%s2454 + $0x650] sm:$0xff]
        %v2658 = vld [vmem:[%s2454 + $0x658] sm:$0xff]
        %v2659 = vld [vmem:[%s2454 + $0x660] sm:$0xff]
        %v2660 = vld [vmem:[%s2454 + $0x668] sm:$0xff]
        %v2661 = vld [vmem:[%s2454 + $0x670] sm:$0xff]
        %v2662 = vld [vmem:[%s2454 + $0x678] sm:$0xff]
        %v2663 = vld [vmem:[%s2454 + $0x680] sm:$0xff]
        %v2664 = vld [vmem:[%s2454 + $0x688] sm:$0xff]
        %v2665 = vld [vmem:[%s2454 + $0x690] sm:$0xff]
        %v2666 = vld [vmem:[%s2454 + $0x698] sm:$0xff]
        %v2667 = vld [vmem:[%s2454 + $0x6a0] sm:$0xff]
        %v2668 = vld [vmem:[%s2454 + $0x6a8] sm:$0xff]
        %v2669 = vld [vmem:[%s2454 + $0x6b0] sm:$0xff]
        %v2670 = vld [vmem:[%s2454 + $0x6b8] sm:$0xff]
        %v2671 = vld [vmem:[%s2454 + $0x6c0] sm:$0xff]
        %v2672 = vld [vmem:[%s2454 + $0x6c8] sm:$0xff]
        %v2673 = vld [vmem:[%s2454 + $0x6d0] sm:$0xff]
        %v2674 = vld [vmem:[%s2454 + $0x6d8] sm:$0xff]
        %v2675 = vld [vmem:[%s2454 + $0x6e0] sm:$0xff]
        %v2676 = vld [vmem:[%s2454 + $0x6e8] sm:$0xff]
        %v2677 = vld [vmem:[%s2454 + $0x6f0] sm:$0xff]
        %v2678 = vld [vmem:[%s2454 + $0x6f8] sm:$0xff]
        %v2679 = vld [vmem:[%s2454 + $0x700] sm:$0xff]
        %v2680 = vld [vmem:[%s2454 + $0x708] sm:$0xff]
        %v2681 = vld [vmem:[%s2454 + $0x710] sm:$0xff]
        %v2682 = vld [vmem:[%s2454 + $0x718] sm:$0xff]
        %v2683 = vld [vmem:[%s2454 + $0x720] sm:$0xff]
        %v2684 = vld [vmem:[%s2454 + $0x728] sm:$0xff]
        %v2685 = vld [vmem:[%s2454 + $0x730] sm:$0xff]
        %v2686 = vld [vmem:[%s2454 + $0x738] sm:$0xff]
        %v2687 = vld [vmem:[%s2454 + $0x740] sm:$0xff]
        %v2688 = vld [vmem:[%s2454 + $0x748] sm:$0xff]
        %v2689 = vld [vmem:[%s2454 + $0x750] sm:$0xff]
        %v2690 = vld [vmem:[%s2454 + $0x758] sm:$0xff]
        %v2691 = vld [vmem:[%s2454 + $0x760] sm:$0xff]
        %v2692 = vld [vmem:[%s2454 + $0x768] sm:$0xff]
        %v2693 = vld [vmem:[%s2454 + $0x770] sm:$0xff]
        %v2694 = vld [vmem:[%s2454 + $0x778] sm:$0xff]
        %v2695 = vld [vmem:[%s2454 + $0x780] sm:$0xff]
        %v2696 = vld [vmem:[%s2454 + $0x788] sm:$0xff]
        %v2697 = vld [vmem:[%s2454 + $0x790] sm:$0xff]
        %v2698 = vld [vmem:[%s2454 + $0x798] sm:$0xff]
        %v2699 = vld [vmem:[%s2454 + $0x7a0] sm:$0xff]
        %v2700 = vld [vmem:[%s2454 + $0x7a8] sm:$0xff]
        %v2701 = vld [vmem:[%s2454 + $0x7b0] sm:$0xff]
        %v2702 = vld [vmem:[%s2454 + $0x7b8] sm:$0xff]
        %v2703 = vld [vmem:[%s2454 + $0x7c0] sm:$0xff]
        %v2704 = vld [vmem:[%s2454 + $0x7c8] sm:$0xff]
        %v2705 = vld [vmem:[%s2454 + $0x7d0] sm:$0xff]
        %v2706 = vld [vmem:[%s2454 + $0x7d8] sm:$0xff]
        %v2707 = vld [vmem:[%s2454 + $0x7e0] sm:$0xff]
        %v2708 = vld [vmem:[%s2454 + $0x7e8] sm:$0xff]
        %v2709 = vld [vmem:[%s2454 + $0x7f0] sm:$0xff]
        %v2710 = vld [vmem:[%s2454 + $0x7f8] sm:$0xff]
        %v2711 = vld [vmem:[%s2454 + $0x800] sm:$0xff]
        %v2712 = vld [vmem:[%s2454 + $0x808] sm:$0xff]
        %v2713 = vld [vmem:[%s2454 + $0x810] sm:$0xff]
        %v2714 = vld [vmem:[%s2454 + $0x818] sm:$0xff]
        %v2715 = vld [vmem:[%s2454 + $0x820] sm:$0xff]
        %v2716 = vld [vmem:[%s2454 + $0x828] sm:$0xff]
        %v2717 = vld [vmem:[%s2454 + $0x830] sm:$0xff]
        %v2718 = vld [vmem:[%s2454 + $0x838] sm:$0xff]
        %v2719 = vld [vmem:[%s2454 + $0x840] sm:$0xff]
        %v2720 = vld [vmem:[%s2454 + $0x848] sm:$0xff]
        %v2721 = vld [vmem:[%s2454 + $0x850] sm:$0xff]
        %v2722 = vld [vmem:[%s2454 + $0x858] sm:$0xff]
        %v2723 = vld [vmem:[%s2454 + $0x860] sm:$0xff]
        %v2724 = vld [vmem:[%s2454 + $0x868] sm:$0xff]
        %v2725 = vld [vmem:[%s2454 + $0x870] sm:$0xff]
        %v2726 = vld [vmem:[%s2454 + $0x878] sm:$0xff]
        %v2727 = vld [vmem:[%s2454 + $0x880] sm:$0xff]
        %v2728 = vld [vmem:[%s2454 + $0x888] sm:$0xff]
        %v2729 = vld [vmem:[%s2454 + $0x890] sm:$0xff]
        %v2730 = vld [vmem:[%s2454 + $0x898] sm:$0xff]
        %v2731 = vld [vmem:[%s2454 + $0x8a0] sm:$0xff]
        %v2732 = vld [vmem:[%s2454 + $0x8a8] sm:$0xff]
        %v2733 = vld [vmem:[%s2454 + $0x8b0] sm:$0xff]
        %v2734 = vld [vmem:[%s2454 + $0x8b8] sm:$0xff]
        %v2735 = vld [vmem:[%s2454 + $0x8c0] sm:$0xff]
        %v2736 = vld [vmem:[%s2454 + $0x8c8] sm:$0xff]
        %v2737 = vld [vmem:[%s2454 + $0x8d0] sm:$0xff]
        %v2738 = vld [vmem:[%s2454 + $0x8d8] sm:$0xff]
        %v2739 = vld [vmem:[%s2454 + $0x8e0] sm:$0xff]
        %v2740 = vld [vmem:[%s2454 + $0x8e8] sm:$0xff]
        %v2741 = vld [vmem:[%s2454 + $0x8f0] sm:$0xff]
        %v2742 = vld [vmem:[%s2454 + $0x8f8] sm:$0xff]
        %v2743 = vld [vmem:[%s2454 + $0x900] sm:$0xff]
        %v2744 = vld [vmem:[%s2454 + $0x908] sm:$0xff]
        %v2745 = vld [vmem:[%s2454 + $0x910] sm:$0xff]
        %v2746 = vld [vmem:[%s2454 + $0x918] sm:$0xff]
        %v2747 = vld [vmem:[%s2454 + $0x920] sm:$0xff]
        %v2748 = vld [vmem:[%s2454 + $0x928] sm:$0xff]
        %v2749 = vld [vmem:[%s2454 + $0x930] sm:$0xff]
        %v2750 = vld [vmem:[%s2454 + $0x938] sm:$0xff]
        %v2751 = vld [vmem:[%s2454 + $0x940] sm:$0xff]
        %v2752 = vld [vmem:[%s2454 + $0x948] sm:$0xff]
        %v2753 = vld [vmem:[%s2454 + $0x950] sm:$0xff]
        %v2754 = vld [vmem:[%s2454 + $0x958] sm:$0xff]
        %v2755 = vld [vmem:[%s2454 + $0x960] sm:$0xff]
        %v2756 = vld [vmem:[%s2454 + $0x968] sm:$0xff]
        %v2757 = vld [vmem:[%s2454 + $0x970] sm:$0xff]
        %v2758 = vld [vmem:[%s2454 + $0x978] sm:$0xff]
        %v2759 = vld [vmem:[%s2454 + $0x980] sm:$0xff]
        %v2760 = vld [vmem:[%s2454 + $0x988] sm:$0xff]
        %v2761 = vld [vmem:[%s2454 + $0x990] sm:$0xff]
        %v2762 = vld [vmem:[%s2454 + $0x998] sm:$0xff]
        %v2763 = vld [vmem:[%s2454 + $0x9a0] sm:$0xff]
        %v2764 = vld [vmem:[%s2454 + $0x9a8] sm:$0xff]
        %v2765 = vld [vmem:[%s2454 + $0x9b0] sm:$0xff]
        %v2766 = vld [vmem:[%s2454 + $0x9b8] sm:$0xff]
        %v2767 = vld [vmem:[%s2454 + $0x9c0] sm:$0xff]
        %v2768 = vld [vmem:[%s2454 + $0x9c8] sm:$0xff]
        %v2769 = vld [vmem:[%s2454 + $0x9d0] sm:$0xff]
        %v2770 = vld [vmem:[%s2454 + $0x9d8] sm:$0xff]
        %v2771 = vld [vmem:[%s2454 + $0x9e0] sm:$0xff]
        %v2772 = vld [vmem:[%s2454 + $0x9e8] sm:$0xff]
        %v2773 = vld [vmem:[%s2454 + $0x9f0] sm:$0xff]
        %v2774 = vld [vmem:[%s2454 + $0x9f8] sm:$0xff]
        %v2775 = vld [vmem:[%s2454 + $0xa00] sm:$0xff]
        %v2776 = vld [vmem:[%s2454 + $0xa08] sm:$0xff]
        %v2777 = vld [vmem:[%s2454 + $0xa10] sm:$0xff]
        %v2778 = vld [vmem:[%s2454 + $0xa18] sm:$0xff]
        %v2779 = vld [vmem:[%s2454 + $0xa20] sm:$0xff]
        %v2780 = vld [vmem:[%s2454 + $0xa28] sm:$0xff]
        %v2781 = vld [vmem:[%s2454 + $0xa30] sm:$0xff]
        %v2782 = vld [vmem:[%s2454 + $0xa38] sm:$0xff]
        %v2783 = vld [vmem:[%s2454 + $0xa40] sm:$0xff]
        %v2784 = vld [vmem:[%s2454 + $0xa48] sm:$0xff]
        %v2785 = vld [vmem:[%s2454 + $0xa50] sm:$0xff]
        %v2786 = vld [vmem:[%s2454 + $0xa58] sm:$0xff]
        %v2787 = vld [vmem:[%s2454 + $0xa60] sm:$0xff]
        %v2788 = vld [vmem:[%s2454 + $0xa68] sm:$0xff]
        %v2789 = vld [vmem:[%s2454 + $0xa70] sm:$0xff]
        %v2790 = vld [vmem:[%s2454 + $0xa78] sm:$0xff]
        %v2791 = vld [vmem:[%s2454 + $0xa80] sm:$0xff]
        %v2792 = vld [vmem:[%s2454 + $0xa88] sm:$0xff]
        %v2793 = vld [vmem:[%s2454 + $0xa90] sm:$0xff]
        %v2794 = vld [vmem:[%s2454 + $0xa98] sm:$0xff]
        %v2795 = vld [vmem:[%s2454 + $0xaa0] sm:$0xff]
        %v2796 = vld [vmem:[%s2454 + $0xaa8] sm:$0xff]
        %v2797 = vld [vmem:[%s2454 + $0xab0] sm:$0xff]
        %v2798 = vld [vmem:[%s2454 + $0xab8] sm:$0xff]
        %v2799 = vld [vmem:[%s2454 + $0xac0] sm:$0xff]
        %v2800 = vld [vmem:[%s2454 + $0xac8] sm:$0xff]
        %v2801 = vld [vmem:[%s2454 + $0xad0] sm:$0xff]
        %v2802 = vld [vmem:[%s2454 + $0xad8] sm:$0xff]
        %v2803 = vld [vmem:[%s2454 + $0xae0] sm:$0xff]
        %v2804 = vld [vmem:[%s2454 + $0xae8] sm:$0xff]
        %v2805 = vld [vmem:[%s2454 + $0xaf0] sm:$0xff]
        %v2806 = vld [vmem:[%s2454 + $0xaf8] sm:$0xff]
        %v2807 = vld [vmem:[%s2454 + $0xb00] sm:$0xff]
        %v2808 = vld [vmem:[%s2454 + $0xb08] sm:$0xff]
        %v2809 = vld [vmem:[%s2454 + $0xb10] sm:$0xff]
        %v2810 = vld [vmem:[%s2454 + $0xb18] sm:$0xff]
        %v2811 = vld [vmem:[%s2454 + $0xb20] sm:$0xff]
        %v2812 = vld [vmem:[%s2454 + $0xb28] sm:$0xff]
        %v2813 = vld [vmem:[%s2454 + $0xb30] sm:$0xff]
        %v2814 = vld [vmem:[%s2454 + $0xb38] sm:$0xff]
        %v2815 = vld [vmem:[%s2454 + $0xb40] sm:$0xff]
        %v2816 = vld [vmem:[%s2454 + $0xb48] sm:$0xff]
        %v2817 = vld [vmem:[%s2454 + $0xb50] sm:$0xff]
        %v2818 = vld [vmem:[%s2454 + $0xb58] sm:$0xff]
        %v2819 = vld [vmem:[%s2454 + $0xb60] sm:$0xff]
        %v2820 = vld [vmem:[%s2454 + $0xb68] sm:$0xff]
        %v2821 = vld [vmem:[%s2454 + $0xb70] sm:$0xff]
        %v2822 = vld [vmem:[%s2454 + $0xb78] sm:$0xff]
        %v2823 = vld [vmem:[%s2454 + $0xb80] sm:$0xff]
        %v2824 = vld [vmem:[%s2454 + $0xb88] sm:$0xff]
        %v2825 = vld [vmem:[%s2454 + $0xb90] sm:$0xff]
        %v2826 = vld [vmem:[%s2454 + $0xb98] sm:$0xff]
        %v2827 = vld [vmem:[%s2454 + $0xba0] sm:$0xff]
        %v2828 = vld [vmem:[%s2454 + $0xba8] sm:$0xff]
        %v2829 = vld [vmem:[%s2454 + $0xbb0] sm:$0xff]
        %v2830 = vld [vmem:[%s2454 + $0xbb8] sm:$0xff]
        %v2831 = vld [vmem:[%s2454 + $0xbc0] sm:$0xff]
        %v2832 = vld [vmem:[%s2454 + $0xbc8] sm:$0xff]
        %v2833 = vld [vmem:[%s2454 + $0xbd0] sm:$0xff]
        %v2834 = vld [vmem:[%s2454 + $0xbd8] sm:$0xff]
        %v2835 = vld [vmem:[%s2454 + $0xbe0] sm:$0xff]
        %v2836 = vld [vmem:[%s2454 + $0xbe8] sm:$0xff]
        %v2837 = vld [vmem:[%s2454 + $0xbf0] sm:$0xff]
        %v2838 = vld [vmem:[%s2454 + $0xbf8] sm:$0xff]
        %v2839 = vld [vmem:[%s2454 + $0xc00] sm:$0xff]
        %v2840 = vld [vmem:[%s2454 + $0xc08] sm:$0xff]
        %v2841 = vld [vmem:[%s2454 + $0xc10] sm:$0xff]
        %v2842 = vld [vmem:[%s2454 + $0xc18] sm:$0xff]
        %v2843 = vld [vmem:[%s2454 + $0xc20] sm:$0xff]
        %v2844 = vld [vmem:[%s2454 + $0xc28] sm:$0xff]
        %v2845 = vld [vmem:[%s2454 + $0xc30] sm:$0xff]
        %v2846 = vld [vmem:[%s2454 + $0xc38] sm:$0xff]
        %v2847 = vld [vmem:[%s2454 + $0xc40] sm:$0xff]
        %v2848 = vld [vmem:[%s2454 + $0xc48] sm:$0xff]
        %v2849 = vld [vmem:[%s2454 + $0xc50] sm:$0xff]
        %v2850 = vld [vmem:[%s2454 + $0xc58] sm:$0xff]
        %v2851 = vld [vmem:[%s2454 + $0xc60] sm:$0xff]
        %v2852 = vld [vmem:[%s2454 + $0xc68] sm:$0xff]
        %v2853 = vld [vmem:[%s2454 + $0xc70] sm:$0xff]
        %v2854 = vld [vmem:[%s2454 + $0xc78] sm:$0xff]
        %v2855 = vld [vmem:[%s2454 + $0xc80] sm:$0xff]
        %v2856 = vld [vmem:[%s2454 + $0xc88] sm:$0xff]
        %v2857 = vld [vmem:[%s2454 + $0xc90] sm:$0xff]
        %v2858 = vld [vmem:[%s2454 + $0xc98] sm:$0xff]
        %v2859 = vld [vmem:[%s2454 + $0xca0] sm:$0xff]
        %v2860 = vld [vmem:[%s2454 + $0xca8] sm:$0xff]
        %v2861 = vld [vmem:[%s2454 + $0xcb0] sm:$0xff]
        %v2862 = vld [vmem:[%s2454 + $0xcb8] sm:$0xff]
        %v2863 = vld [vmem:[%s2454 + $0xcc0] sm:$0xff]
        %v2864 = vld [vmem:[%s2454 + $0xcc8] sm:$0xff]
        %v2865 = vld [vmem:[%s2454 + $0xcd0] sm:$0xff]
        %v2866 = vld [vmem:[%s2454 + $0xcd8] sm:$0xff]
        %v2867 = vld [vmem:[%s2454 + $0xce0] sm:$0xff]
        %v2868 = vld [vmem:[%s2454 + $0xce8] sm:$0xff]
        %v2869 = vld [vmem:[%s2454 + $0xcf0] sm:$0xff]
        %v2870 = vld [vmem:[%s2454 + $0xcf8] sm:$0xff]
        %v2871 = vld [vmem:[%s2454 + $0xd00] sm:$0xff]
        %v2872 = vld [vmem:[%s2454 + $0xd08] sm:$0xff]
        %v2873 = vld [vmem:[%s2454 + $0xd10] sm:$0xff]
        %v2874 = vld [vmem:[%s2454 + $0xd18] sm:$0xff]
        %vm2883 = vcmask 1046528
        %v2884 = vrot.slane %v2446, 1
        %v2885 = vrot.slane %v2450, 1
        %v2886 = vsel %vm2883, %v2884, %v2885
        %v2887 = vrot.slane %v2447, 1
        %v2888 = vrot.slane %v2451, 1
        %v2889 = vsel %vm2883, %v2887, %v2888
        %v2890 = vrot.slane %v2448, 1
        %v2891 = vrot.slane %v2452, 1
        %v2892 = vsel %vm2883, %v2890, %v2891
        %v2893 = vrot.slane %v2449, 1
        %v2894 = vrot.slane %v2453, 1
        %v2895 = vsel %vm2883, %v2893, %v2894
        %v2902 = vsel %vm725, %v2895, 0
        %v2904 = vsel %vm725, %v2894, 0
        %2906 = vmatpush.msra.mxu0 %v2560
        %2907 = vmatpush.msra.mxu0 %v2553
        %2908 = vmatpush.msra.mxu0 %v2546
        %2909 = vmatpush.msra.mxu0 %v2539
        %2910 = vmatpush.msra.mxu0 %v2532
        %2911 = vmatpush.msra.mxu0 %v2525
        %2912 = vmatpush.msra.mxu0 %v2518
        %2913 = vmatpush.msra.mxu0 %v2511
        %2914 = vmatpush.msra.mxu0 %v2504
        %2915 = vmatpush.msra.mxu0 %v2497
        %2916 = vmatpush.msra.mxu0 %v2490
        %2917 = vmatpush.msra.mxu0 %v2483
        %2918 = vmatpush.msra.mxu0 %v2476
        %2919 = vmatpush.msra.mxu0 %v2469
        %2920 = vmatpush.msra.mxu0 %v2462
        %2921 = vmatpush.msra.mxu0 %v2455
        %2922 = vmatmul.f32.gmra.mxu0 %v2886
        %v2923 = vpop.f32.mrf.mxu0
        %v2924 = vadd.f32 0.0, %v2923
        %2925 = vmatmul.f32.gmra.mxu0 %v2885
        %v2926 = vpop.f32.mrf.mxu0
        %v2927 = vadd.f32 0.0, %v2926
        %2928 = vdwg.mxu0
        %2929 = vmatpush.msra.mxu0 %v2672
        %2930 = vmatpush.msra.mxu0 %v2665
        %2931 = vmatpush.msra.mxu0 %v2658
        %2932 = vmatpush.msra.mxu0 %v2651
        %2933 = vmatpush.msra.mxu0 %v2644
        %2934 = vmatpush.msra.mxu0 %v2637
        %2935 = vmatpush.msra.mxu0 %v2630
        %2936 = vmatpush.msra.mxu0 %v2623
        %2937 = vmatpush.msra.mxu0 %v2616
        %2938 = vmatpush.msra.mxu0 %v2609
        %2939 = vmatpush.msra.mxu0 %v2602
        %2940 = vmatpush.msra.mxu0 %v2595
        %2941 = vmatpush.msra.mxu0 %v2588
        %2942 = vmatpush.msra.mxu0 %v2581
        %2943 = vmatpush.msra.mxu0 %v2574
        %2944 = vmatpush.msra.mxu0 %v2567
        %2945 = vmatmul.f32.gmra.mxu0 %v2889
        %v2946 = vpop.f32.mrf.mxu0
        %v2947 = vadd.f32 %v2924, %v2946
        %2948 = vmatmul.f32.gmra.mxu0 %v2888
        %v2949 = vpop.f32.mrf.mxu0
        %v2950 = vadd.f32 %v2927, %v2949
        %2951 = vdwg.mxu0
        %2952 = vmatpush.msra.mxu0 %v2784
        %2953 = vmatpush.msra.mxu0 %v2777
        %2954 = vmatpush.msra.mxu0 %v2770
        %2955 = vmatpush.msra.mxu0 %v2763
        %2956 = vmatpush.msra.mxu0 %v2756
        %2957 = vmatpush.msra.mxu0 %v2749
        %2958 = vmatpush.msra.mxu0 %v2742
        %2959 = vmatpush.msra.mxu0 %v2735
        %2960 = vmatpush.msra.mxu0 %v2728
        %2961 = vmatpush.msra.mxu0 %v2721
        %2962 = vmatpush.msra.mxu0 %v2714
        %2963 = vmatpush.msra.mxu0 %v2707
        %2964 = vmatpush.msra.mxu0 %v2700
        %2965 = vmatpush.msra.mxu0 %v2693
        %2966 = vmatpush.msra.mxu0 %v2686
        %2967 = vmatpush.msra.mxu0 %v2679
        %2968 = vmatmul.f32.gmra.mxu0 %v2892
        %v2969 = vpop.f32.mrf.mxu0
        %v2970 = vadd.f32 %v2947, %v2969
        %2971 = vmatmul.f32.gmra.mxu0 %v2891
        %v2972 = vpop.f32.mrf.mxu0
        %v2973 = vadd.f32 %v2950, %v2972
        %2974 = vdwg.mxu0
        %2975 = vmatpush.msra.mxu0 0.0
        %2976 = vmatpush.msra.mxu0 0.0
        %2977 = vmatpush.msra.mxu0 0.0
        %2978 = vmatpush.msra.mxu0 0.0
        %2979 = vmatpush.msra.mxu0 %v2868
        %2980 = vmatpush.msra.mxu0 %v2861
        %2981 = vmatpush.msra.mxu0 %v2854
        %2982 = vmatpush.msra.mxu0 %v2847
        %2983 = vmatpush.msra.mxu0 %v2840
        %2984 = vmatpush.msra.mxu0 %v2833
        %2985 = vmatpush.msra.mxu0 %v2826
        %2986 = vmatpush.msra.mxu0 %v2819
        %2987 = vmatpush.msra.mxu0 %v2812
        %2988 = vmatpush.msra.mxu0 %v2805
        %2989 = vmatpush.msra.mxu0 %v2798
        %2990 = vmatpush.msra.mxu0 %v2791
        %2991 = vmatmul.f32.gmra.mxu0 %v2902
        %v2992 = vpop.f32.mrf.mxu0
        %v2993 = vadd.f32 %v2970, %v2992
        %2994 = vmatmul.f32.gmra.mxu0 %v2904
        %v2995 = vpop.f32.mrf.mxu0
        %v2996 = vadd.f32 %v2973, %v2995
        %2997 = vdwg.mxu0
        %2998 = vmatpush.msra.mxu0 %v2561
        %2999 = vmatpush.msra.mxu0 %v2554
        %3000 = vmatpush.msra.mxu0 %v2547
        %3001 = vmatpush.msra.mxu0 %v2540
        %3002 = vmatpush.msra.mxu0 %v2533
        %3003 = vmatpush.msra.mxu0 %v2526
        %3004 = vmatpush.msra.mxu0 %v2519
        %3005 = vmatpush.msra.mxu0 %v2512
        %3006 = vmatpush.msra.mxu0 %v2505
        %3007 = vmatpush.msra.mxu0 %v2498
        %3008 = vmatpush.msra.mxu0 %v2491
        %3009 = vmatpush.msra.mxu0 %v2484
        %3010 = vmatpush.msra.mxu0 %v2477
        %3011 = vmatpush.msra.mxu0 %v2470
        %3012 = vmatpush.msra.mxu0 %v2463
        %3013 = vmatpush.msra.mxu0 %v2456
        %3014 = vmatmul.f32.gmra.mxu0 %v2886
        %v3015 = vpop.f32.mrf.mxu0
        %v3016 = vadd.f32 0.0, %v3015
        %3017 = vmatmul.f32.gmra.mxu0 %v2885
        %v3018 = vpop.f32.mrf.mxu0
        %v3019 = vadd.f32 0.0, %v3018
        %3020 = vdwg.mxu0
        %3021 = vmatpush.msra.mxu0 %v2673
        %3022 = vmatpush.msra.mxu0 %v2666
        %3023 = vmatpush.msra.mxu0 %v2659
        %3024 = vmatpush.msra.mxu0 %v2652
        %3025 = vmatpush.msra.mxu0 %v2645
        %3026 = vmatpush.msra.mxu0 %v2638
        %3027 = vmatpush.msra.mxu0 %v2631
        %3028 = vmatpush.msra.mxu0 %v2624
        %3029 = vmatpush.msra.mxu0 %v2617
        %3030 = vmatpush.msra.mxu0 %v2610
        %3031 = vmatpush.msra.mxu0 %v2603
        %3032 = vmatpush.msra.mxu0 %v2596
        %3033 = vmatpush.msra.mxu0 %v2589
        %3034 = vmatpush.msra.mxu0 %v2582
        %3035 = vmatpush.msra.mxu0 %v2575
        %3036 = vmatpush.msra.mxu0 %v2568
        %3037 = vmatmul.f32.gmra.mxu0 %v2889
        %v3038 = vpop.f32.mrf.mxu0
        %v3039 = vadd.f32 %v3016, %v3038
        %3040 = vmatmul.f32.gmra.mxu0 %v2888
        %v3041 = vpop.f32.mrf.mxu0
        %v3042 = vadd.f32 %v3019, %v3041
        %3043 = vdwg.mxu0
        %3044 = vmatpush.msra.mxu0 %v2785
        %3045 = vmatpush.msra.mxu0 %v2778
        %3046 = vmatpush.msra.mxu0 %v2771
        %3047 = vmatpush.msra.mxu0 %v2764
        %3048 = vmatpush.msra.mxu0 %v2757
        %3049 = vmatpush.msra.mxu0 %v2750
        %3050 = vmatpush.msra.mxu0 %v2743
        %3051 = vmatpush.msra.mxu0 %v2736
        %3052 = vmatpush.msra.mxu0 %v2729
        %3053 = vmatpush.msra.mxu0 %v2722
        %3054 = vmatpush.msra.mxu0 %v2715
        %3055 = vmatpush.msra.mxu0 %v2708
        %3056 = vmatpush.msra.mxu0 %v2701
        %3057 = vmatpush.msra.mxu0 %v2694
        %3058 = vmatpush.msra.mxu0 %v2687
        %3059 = vmatpush.msra.mxu0 %v2680
        %3060 = vmatmul.f32.gmra.mxu0 %v2892
        %v3061 = vpop.f32.mrf.mxu0
        %v3062 = vadd.f32 %v3039, %v3061
        %3063 = vmatmul.f32.gmra.mxu0 %v2891
        %v3064 = vpop.f32.mrf.mxu0
        %v3065 = vadd.f32 %v3042, %v3064
        %3066 = vdwg.mxu0
        %3067 = vmatpush.msra.mxu0 0.0
        %3068 = vmatpush.msra.mxu0 0.0
        %3069 = vmatpush.msra.mxu0 0.0
        %3070 = vmatpush.msra.mxu0 0.0
        %3071 = vmatpush.msra.mxu0 %v2869
        %3072 = vmatpush.msra.mxu0 %v2862
        %3073 = vmatpush.msra.mxu0 %v2855
        %3074 = vmatpush.msra.mxu0 %v2848
        %3075 = vmatpush.msra.mxu0 %v2841
        %3076 = vmatpush.msra.mxu0 %v2834
        %3077 = vmatpush.msra.mxu0 %v2827
        %3078 = vmatpush.msra.mxu0 %v2820
        %3079 = vmatpush.msra.mxu0 %v2813
        %3080 = vmatpush.msra.mxu0 %v2806
        %3081 = vmatpush.msra.mxu0 %v2799
        %3082 = vmatpush.msra.mxu0 %v2792
        %3083 = vmatmul.f32.gmra.mxu0 %v2902
        %v3084 = vpop.f32.mrf.mxu0
        %v3085 = vadd.f32 %v3062, %v3084
        %3086 = vmatmul.f32.gmra.mxu0 %v2904
        %v3087 = vpop.f32.mrf.mxu0
        %v3088 = vadd.f32 %v3065, %v3087
        %3089 = vdwg.mxu0
        %3090 = vmatpush.msra.mxu0 %v2562
        %3091 = vmatpush.msra.mxu0 %v2555
        %3092 = vmatpush.msra.mxu0 %v2548
        %3093 = vmatpush.msra.mxu0 %v2541
        %3094 = vmatpush.msra.mxu0 %v2534
        %3095 = vmatpush.msra.mxu0 %v2527
        %3096 = vmatpush.msra.mxu0 %v2520
        %3097 = vmatpush.msra.mxu0 %v2513
        %3098 = vmatpush.msra.mxu0 %v2506
        %3099 = vmatpush.msra.mxu0 %v2499
        %3100 = vmatpush.msra.mxu0 %v2492
        %3101 = vmatpush.msra.mxu0 %v2485
        %3102 = vmatpush.msra.mxu0 %v2478
        %3103 = vmatpush.msra.mxu0 %v2471
        %3104 = vmatpush.msra.mxu0 %v2464
        %3105 = vmatpush.msra.mxu0 %v2457
        %3106 = vmatmul.f32.gmra.mxu0 %v2886
        %v3107 = vpop.f32.mrf.mxu0
        %v3108 = vadd.f32 0.0, %v3107
        %3109 = vmatmul.f32.gmra.mxu0 %v2885
        %v3110 = vpop.f32.mrf.mxu0
        %v3111 = vadd.f32 0.0, %v3110
        %3112 = vdwg.mxu0
        %3113 = vmatpush.msra.mxu0 %v2674
        %3114 = vmatpush.msra.mxu0 %v2667
        %3115 = vmatpush.msra.mxu0 %v2660
        %3116 = vmatpush.msra.mxu0 %v2653
        %3117 = vmatpush.msra.mxu0 %v2646
        %3118 = vmatpush.msra.mxu0 %v2639
        %3119 = vmatpush.msra.mxu0 %v2632
        %3120 = vmatpush.msra.mxu0 %v2625
        %3121 = vmatpush.msra.mxu0 %v2618
        %3122 = vmatpush.msra.mxu0 %v2611
        %3123 = vmatpush.msra.mxu0 %v2604
        %3124 = vmatpush.msra.mxu0 %v2597
        %3125 = vmatpush.msra.mxu0 %v2590
        %3126 = vmatpush.msra.mxu0 %v2583
        %3127 = vmatpush.msra.mxu0 %v2576
        %3128 = vmatpush.msra.mxu0 %v2569
        %3129 = vmatmul.f32.gmra.mxu0 %v2889
        %v3130 = vpop.f32.mrf.mxu0
        %v3131 = vadd.f32 %v3108, %v3130
        %3132 = vmatmul.f32.gmra.mxu0 %v2888
        %v3133 = vpop.f32.mrf.mxu0
        %v3134 = vadd.f32 %v3111, %v3133
        %3135 = vdwg.mxu0
        %3136 = vmatpush.msra.mxu0 %v2786
        %3137 = vmatpush.msra.mxu0 %v2779
        %3138 = vmatpush.msra.mxu0 %v2772
        %3139 = vmatpush.msra.mxu0 %v2765
        %3140 = vmatpush.msra.mxu0 %v2758
        %3141 = vmatpush.msra.mxu0 %v2751
        %3142 = vmatpush.msra.mxu0 %v2744
        %3143 = vmatpush.msra.mxu0 %v2737
        %3144 = vmatpush.msra.mxu0 %v2730
        %3145 = vmatpush.msra.mxu0 %v2723
        %3146 = vmatpush.msra.mxu0 %v2716
        %3147 = vmatpush.msra.mxu0 %v2709
        %3148 = vmatpush.msra.mxu0 %v2702
        %3149 = vmatpush.msra.mxu0 %v2695
        %3150 = vmatpush.msra.mxu0 %v2688
        %3151 = vmatpush.msra.mxu0 %v2681
        %3152 = vmatmul.f32.gmra.mxu0 %v2892
        %v3153 = vpop.f32.mrf.mxu0
        %v3154 = vadd.f32 %v3131, %v3153
        %3155 = vmatmul.f32.gmra.mxu0 %v2891
        %v3156 = vpop.f32.mrf.mxu0
        %v3157 = vadd.f32 %v3134, %v3156
        %3158 = vdwg.mxu0
        %3159 = vmatpush.msra.mxu0 0.0
        %3160 = vmatpush.msra.mxu0 0.0
        %3161 = vmatpush.msra.mxu0 0.0
        %3162 = vmatpush.msra.mxu0 0.0
        %3163 = vmatpush.msra.mxu0 %v2870
        %3164 = vmatpush.msra.mxu0 %v2863
        %3165 = vmatpush.msra.mxu0 %v2856
        %3166 = vmatpush.msra.mxu0 %v2849
        %3167 = vmatpush.msra.mxu0 %v2842
        %3168 = vmatpush.msra.mxu0 %v2835
        %3169 = vmatpush.msra.mxu0 %v2828
        %3170 = vmatpush.msra.mxu0 %v2821
        %3171 = vmatpush.msra.mxu0 %v2814
        %3172 = vmatpush.msra.mxu0 %v2807
        %3173 = vmatpush.msra.mxu0 %v2800
        %3174 = vmatpush.msra.mxu0 %v2793
        %3175 = vmatmul.f32.gmra.mxu0 %v2902
        %v3176 = vpop.f32.mrf.mxu0
        %v3177 = vadd.f32 %v3154, %v3176
        %3178 = vmatmul.f32.gmra.mxu0 %v2904
        %v3179 = vpop.f32.mrf.mxu0
        %v3180 = vadd.f32 %v3157, %v3179
        %3181 = vdwg.mxu0
        %3182 = vmatpush.msra.mxu0 %v2563
        %3183 = vmatpush.msra.mxu0 %v2556
        %3184 = vmatpush.msra.mxu0 %v2549
        %3185 = vmatpush.msra.mxu0 %v2542
        %3186 = vmatpush.msra.mxu0 %v2535
        %3187 = vmatpush.msra.mxu0 %v2528
        %3188 = vmatpush.msra.mxu0 %v2521
        %3189 = vmatpush.msra.mxu0 %v2514
        %3190 = vmatpush.msra.mxu0 %v2507
        %3191 = vmatpush.msra.mxu0 %v2500
        %3192 = vmatpush.msra.mxu0 %v2493
        %3193 = vmatpush.msra.mxu0 %v2486
        %3194 = vmatpush.msra.mxu0 %v2479
        %3195 = vmatpush.msra.mxu0 %v2472
        %3196 = vmatpush.msra.mxu0 %v2465
        %3197 = vmatpush.msra.mxu0 %v2458
        %3198 = vmatmul.f32.gmra.mxu0 %v2886
        %v3199 = vpop.f32.mrf.mxu0
        %v3200 = vadd.f32 0.0, %v3199
        %3201 = vmatmul.f32.gmra.mxu0 %v2885
        %v3202 = vpop.f32.mrf.mxu0
        %v3203 = vadd.f32 0.0, %v3202
        %3204 = vdwg.mxu0
        %3205 = vmatpush.msra.mxu0 %v2675
        %3206 = vmatpush.msra.mxu0 %v2668
        %3207 = vmatpush.msra.mxu0 %v2661
        %3208 = vmatpush.msra.mxu0 %v2654
        %3209 = vmatpush.msra.mxu0 %v2647
        %3210 = vmatpush.msra.mxu0 %v2640
        %3211 = vmatpush.msra.mxu0 %v2633
        %3212 = vmatpush.msra.mxu0 %v2626
        %3213 = vmatpush.msra.mxu0 %v2619
        %3214 = vmatpush.msra.mxu0 %v2612
        %3215 = vmatpush.msra.mxu0 %v2605
        %3216 = vmatpush.msra.mxu0 %v2598
        %3217 = vmatpush.msra.mxu0 %v2591
        %3218 = vmatpush.msra.mxu0 %v2584
        %3219 = vmatpush.msra.mxu0 %v2577
        %3220 = vmatpush.msra.mxu0 %v2570
        %3221 = vmatmul.f32.gmra.mxu0 %v2889
        %v3222 = vpop.f32.mrf.mxu0
        %v3223 = vadd.f32 %v3200, %v3222
        %3224 = vmatmul.f32.gmra.mxu0 %v2888
        %v3225 = vpop.f32.mrf.mxu0
        %v3226 = vadd.f32 %v3203, %v3225
        %3227 = vdwg.mxu0
        %3228 = vmatpush.msra.mxu0 %v2787
        %3229 = vmatpush.msra.mxu0 %v2780
        %3230 = vmatpush.msra.mxu0 %v2773
        %3231 = vmatpush.msra.mxu0 %v2766
        %3232 = vmatpush.msra.mxu0 %v2759
        %3233 = vmatpush.msra.mxu0 %v2752
        %3234 = vmatpush.msra.mxu0 %v2745
        %3235 = vmatpush.msra.mxu0 %v2738
        %3236 = vmatpush.msra.mxu0 %v2731
        %3237 = vmatpush.msra.mxu0 %v2724
        %3238 = vmatpush.msra.mxu0 %v2717
        %3239 = vmatpush.msra.mxu0 %v2710
        %3240 = vmatpush.msra.mxu0 %v2703
        %3241 = vmatpush.msra.mxu0 %v2696
        %3242 = vmatpush.msra.mxu0 %v2689
        %3243 = vmatpush.msra.mxu0 %v2682
        %3244 = vmatmul.f32.gmra.mxu0 %v2892
        %v3245 = vpop.f32.mrf.mxu0
        %v3246 = vadd.f32 %v3223, %v3245
        %3247 = vmatmul.f32.gmra.mxu0 %v2891
        %v3248 = vpop.f32.mrf.mxu0
        %v3249 = vadd.f32 %v3226, %v3248
        %3250 = vdwg.mxu0
        %3251 = vmatpush.msra.mxu0 0.0
        %3252 = vmatpush.msra.mxu0 0.0
        %3253 = vmatpush.msra.mxu0 0.0
        %3254 = vmatpush.msra.mxu0 0.0
        %3255 = vmatpush.msra.mxu0 %v2871
        %3256 = vmatpush.msra.mxu0 %v2864
        %3257 = vmatpush.msra.mxu0 %v2857
        %3258 = vmatpush.msra.mxu0 %v2850
        %3259 = vmatpush.msra.mxu0 %v2843
        %3260 = vmatpush.msra.mxu0 %v2836
        %3261 = vmatpush.msra.mxu0 %v2829
        %3262 = vmatpush.msra.mxu0 %v2822
        %3263 = vmatpush.msra.mxu0 %v2815
        %3264 = vmatpush.msra.mxu0 %v2808
        %3265 = vmatpush.msra.mxu0 %v2801
        %3266 = vmatpush.msra.mxu0 %v2794
        %3267 = vmatmul.f32.gmra.mxu0 %v2902
        %v3268 = vpop.f32.mrf.mxu0
        %v3269 = vadd.f32 %v3246, %v3268
        %3270 = vmatmul.f32.gmra.mxu0 %v2904
        %v3271 = vpop.f32.mrf.mxu0
        %v3272 = vadd.f32 %v3249, %v3271
        %3273 = vdwg.mxu0
        %3274 = vmatpush.msra.mxu0 %v2564
        %3275 = vmatpush.msra.mxu0 %v2557
        %3276 = vmatpush.msra.mxu0 %v2550
        %3277 = vmatpush.msra.mxu0 %v2543
        %3278 = vmatpush.msra.mxu0 %v2536
        %3279 = vmatpush.msra.mxu0 %v2529
        %3280 = vmatpush.msra.mxu0 %v2522
        %3281 = vmatpush.msra.mxu0 %v2515
        %3282 = vmatpush.msra.mxu0 %v2508
        %3283 = vmatpush.msra.mxu0 %v2501
        %3284 = vmatpush.msra.mxu0 %v2494
        %3285 = vmatpush.msra.mxu0 %v2487
        %3286 = vmatpush.msra.mxu0 %v2480
        %3287 = vmatpush.msra.mxu0 %v2473
        %3288 = vmatpush.msra.mxu0 %v2466
        %3289 = vmatpush.msra.mxu0 %v2459
        %3290 = vmatmul.f32.gmra.mxu0 %v2886
        %v3291 = vpop.f32.mrf.mxu0
        %v3292 = vadd.f32 0.0, %v3291
        %3293 = vmatmul.f32.gmra.mxu0 %v2885
        %v3294 = vpop.f32.mrf.mxu0
        %v3295 = vadd.f32 0.0, %v3294
        %3296 = vdwg.mxu0
        %3297 = vmatpush.msra.mxu0 %v2676
        %3298 = vmatpush.msra.mxu0 %v2669
        %3299 = vmatpush.msra.mxu0 %v2662
        %3300 = vmatpush.msra.mxu0 %v2655
        %3301 = vmatpush.msra.mxu0 %v2648
        %3302 = vmatpush.msra.mxu0 %v2641
        %3303 = vmatpush.msra.mxu0 %v2634
        %3304 = vmatpush.msra.mxu0 %v2627
        %3305 = vmatpush.msra.mxu0 %v2620
        %3306 = vmatpush.msra.mxu0 %v2613
        %3307 = vmatpush.msra.mxu0 %v2606
        %3308 = vmatpush.msra.mxu0 %v2599
        %3309 = vmatpush.msra.mxu0 %v2592
        %3310 = vmatpush.msra.mxu0 %v2585
        %3311 = vmatpush.msra.mxu0 %v2578
        %3312 = vmatpush.msra.mxu0 %v2571
        %3313 = vmatmul.f32.gmra.mxu0 %v2889
        %v3314 = vpop.f32.mrf.mxu0
        %v3315 = vadd.f32 %v3292, %v3314
        %3316 = vmatmul.f32.gmra.mxu0 %v2888
        %v3317 = vpop.f32.mrf.mxu0
        %v3318 = vadd.f32 %v3295, %v3317
        %3319 = vdwg.mxu0
        %3320 = vmatpush.msra.mxu0 %v2788
        %3321 = vmatpush.msra.mxu0 %v2781
        %3322 = vmatpush.msra.mxu0 %v2774
        %3323 = vmatpush.msra.mxu0 %v2767
        %3324 = vmatpush.msra.mxu0 %v2760
        %3325 = vmatpush.msra.mxu0 %v2753
        %3326 = vmatpush.msra.mxu0 %v2746
        %3327 = vmatpush.msra.mxu0 %v2739
        %3328 = vmatpush.msra.mxu0 %v2732
        %3329 = vmatpush.msra.mxu0 %v2725
        %3330 = vmatpush.msra.mxu0 %v2718
        %3331 = vmatpush.msra.mxu0 %v2711
        %3332 = vmatpush.msra.mxu0 %v2704
        %3333 = vmatpush.msra.mxu0 %v2697
        %3334 = vmatpush.msra.mxu0 %v2690
        %3335 = vmatpush.msra.mxu0 %v2683
        %3336 = vmatmul.f32.gmra.mxu0 %v2892
        %v3337 = vpop.f32.mrf.mxu0
        %v3338 = vadd.f32 %v3315, %v3337
        %3339 = vmatmul.f32.gmra.mxu0 %v2891
        %v3340 = vpop.f32.mrf.mxu0
        %v3341 = vadd.f32 %v3318, %v3340
        %3342 = vdwg.mxu0
        %3343 = vmatpush.msra.mxu0 0.0
        %3344 = vmatpush.msra.mxu0 0.0
        %3345 = vmatpush.msra.mxu0 0.0
        %3346 = vmatpush.msra.mxu0 0.0
        %3347 = vmatpush.msra.mxu0 %v2872
        %3348 = vmatpush.msra.mxu0 %v2865
        %3349 = vmatpush.msra.mxu0 %v2858
        %3350 = vmatpush.msra.mxu0 %v2851
        %3351 = vmatpush.msra.mxu0 %v2844
        %3352 = vmatpush.msra.mxu0 %v2837
        %3353 = vmatpush.msra.mxu0 %v2830
        %3354 = vmatpush.msra.mxu0 %v2823
        %3355 = vmatpush.msra.mxu0 %v2816
        %3356 = vmatpush.msra.mxu0 %v2809
        %3357 = vmatpush.msra.mxu0 %v2802
        %3358 = vmatpush.msra.mxu0 %v2795
        %3359 = vmatmul.f32.gmra.mxu0 %v2902
        %v3360 = vpop.f32.mrf.mxu0
        %v3361 = vadd.f32 %v3338, %v3360
        %3362 = vmatmul.f32.gmra.mxu0 %v2904
        %v3363 = vpop.f32.mrf.mxu0
        %v3364 = vadd.f32 %v3341, %v3363
        %3365 = vdwg.mxu0
        %3366 = vmatpush.msra.mxu0 %v2565
        %3367 = vmatpush.msra.mxu0 %v2558
        %3368 = vmatpush.msra.mxu0 %v2551
        %3369 = vmatpush.msra.mxu0 %v2544
        %3370 = vmatpush.msra.mxu0 %v2537
        %3371 = vmatpush.msra.mxu0 %v2530
        %3372 = vmatpush.msra.mxu0 %v2523
        %3373 = vmatpush.msra.mxu0 %v2516
        %3374 = vmatpush.msra.mxu0 %v2509
        %3375 = vmatpush.msra.mxu0 %v2502
        %3376 = vmatpush.msra.mxu0 %v2495
        %3377 = vmatpush.msra.mxu0 %v2488
        %3378 = vmatpush.msra.mxu0 %v2481
        %3379 = vmatpush.msra.mxu0 %v2474
        %3380 = vmatpush.msra.mxu0 %v2467
        %3381 = vmatpush.msra.mxu0 %v2460
        %3382 = vmatmul.f32.gmra.mxu0 %v2886
        %v3383 = vpop.f32.mrf.mxu0
        %v3384 = vadd.f32 0.0, %v3383
        %3385 = vmatmul.f32.gmra.mxu0 %v2885
        %v3386 = vpop.f32.mrf.mxu0
        %v3387 = vadd.f32 0.0, %v3386
        %3388 = vdwg.mxu0
        %3389 = vmatpush.msra.mxu0 %v2677
        %3390 = vmatpush.msra.mxu0 %v2670
        %3391 = vmatpush.msra.mxu0 %v2663
        %3392 = vmatpush.msra.mxu0 %v2656
        %3393 = vmatpush.msra.mxu0 %v2649
        %3394 = vmatpush.msra.mxu0 %v2642
        %3395 = vmatpush.msra.mxu0 %v2635
        %3396 = vmatpush.msra.mxu0 %v2628
        %3397 = vmatpush.msra.mxu0 %v2621
        %3398 = vmatpush.msra.mxu0 %v2614
        %3399 = vmatpush.msra.mxu0 %v2607
        %3400 = vmatpush.msra.mxu0 %v2600
        %3401 = vmatpush.msra.mxu0 %v2593
        %3402 = vmatpush.msra.mxu0 %v2586
        %3403 = vmatpush.msra.mxu0 %v2579
        %3404 = vmatpush.msra.mxu0 %v2572
        %3405 = vmatmul.f32.gmra.mxu0 %v2889
        %v3406 = vpop.f32.mrf.mxu0
        %v3407 = vadd.f32 %v3384, %v3406
        %3408 = vmatmul.f32.gmra.mxu0 %v2888
        %v3409 = vpop.f32.mrf.mxu0
        %v3410 = vadd.f32 %v3387, %v3409
        %3411 = vdwg.mxu0
        %3412 = vmatpush.msra.mxu0 %v2789
        %3413 = vmatpush.msra.mxu0 %v2782
        %3414 = vmatpush.msra.mxu0 %v2775
        %3415 = vmatpush.msra.mxu0 %v2768
        %3416 = vmatpush.msra.mxu0 %v2761
        %3417 = vmatpush.msra.mxu0 %v2754
        %3418 = vmatpush.msra.mxu0 %v2747
        %3419 = vmatpush.msra.mxu0 %v2740
        %3420 = vmatpush.msra.mxu0 %v2733
        %3421 = vmatpush.msra.mxu0 %v2726
        %3422 = vmatpush.msra.mxu0 %v2719
        %3423 = vmatpush.msra.mxu0 %v2712
        %3424 = vmatpush.msra.mxu0 %v2705
        %3425 = vmatpush.msra.mxu0 %v2698
        %3426 = vmatpush.msra.mxu0 %v2691
        %3427 = vmatpush.msra.mxu0 %v2684
        %3428 = vmatmul.f32.gmra.mxu0 %v2892
        %v3429 = vpop.f32.mrf.mxu0
        %v3430 = vadd.f32 %v3407, %v3429
        %3431 = vmatmul.f32.gmra.mxu0 %v2891
        %v3432 = vpop.f32.mrf.mxu0
        %v3433 = vadd.f32 %v3410, %v3432
        %3434 = vdwg.mxu0
        %3435 = vmatpush.msra.mxu0 0.0
        %3436 = vmatpush.msra.mxu0 0.0
        %3437 = vmatpush.msra.mxu0 0.0
        %3438 = vmatpush.msra.mxu0 0.0
        %3439 = vmatpush.msra.mxu0 %v2873
        %3440 = vmatpush.msra.mxu0 %v2866
        %3441 = vmatpush.msra.mxu0 %v2859
        %3442 = vmatpush.msra.mxu0 %v2852
        %3443 = vmatpush.msra.mxu0 %v2845
        %3444 = vmatpush.msra.mxu0 %v2838
        %3445 = vmatpush.msra.mxu0 %v2831
        %3446 = vmatpush.msra.mxu0 %v2824
        %3447 = vmatpush.msra.mxu0 %v2817
        %3448 = vmatpush.msra.mxu0 %v2810
        %3449 = vmatpush.msra.mxu0 %v2803
        %3450 = vmatpush.msra.mxu0 %v2796
        %3451 = vmatmul.f32.gmra.mxu0 %v2902
        %v3452 = vpop.f32.mrf.mxu0
        %v3453 = vadd.f32 %v3430, %v3452
        %3454 = vmatmul.f32.gmra.mxu0 %v2904
        %v3455 = vpop.f32.mrf.mxu0
        %v3456 = vadd.f32 %v3433, %v3455
        %3457 = vdwg.mxu0
        %3458 = vmatpush.msra.mxu0 %v2566
        %3459 = vmatpush.msra.mxu0 %v2559
        %3460 = vmatpush.msra.mxu0 %v2552
        %3461 = vmatpush.msra.mxu0 %v2545
        %3462 = vmatpush.msra.mxu0 %v2538
        %3463 = vmatpush.msra.mxu0 %v2531
        %3464 = vmatpush.msra.mxu0 %v2524
        %3465 = vmatpush.msra.mxu0 %v2517
        %3466 = vmatpush.msra.mxu0 %v2510
        %3467 = vmatpush.msra.mxu0 %v2503
        %3468 = vmatpush.msra.mxu0 %v2496
        %3469 = vmatpush.msra.mxu0 %v2489
        %3470 = vmatpush.msra.mxu0 %v2482
        %3471 = vmatpush.msra.mxu0 %v2475
        %3472 = vmatpush.msra.mxu0 %v2468
        %3473 = vmatpush.msra.mxu0 %v2461
        %3474 = vmatmul.f32.gmra.mxu0 %v2886
        %v3475 = vpop.f32.mrf.mxu0
        %v3476 = vadd.f32 0.0, %v3475
        %3477 = vmatmul.f32.gmra.mxu0 %v2885
        %v3478 = vpop.f32.mrf.mxu0
        %v3479 = vadd.f32 0.0, %v3478
        %3480 = vdwg.mxu0
        %3481 = vmatpush.msra.mxu0 %v2678
        %3482 = vmatpush.msra.mxu0 %v2671
        %3483 = vmatpush.msra.mxu0 %v2664
        %3484 = vmatpush.msra.mxu0 %v2657
        %3485 = vmatpush.msra.mxu0 %v2650
        %3486 = vmatpush.msra.mxu0 %v2643
        %3487 = vmatpush.msra.mxu0 %v2636
        %3488 = vmatpush.msra.mxu0 %v2629
        %3489 = vmatpush.msra.mxu0 %v2622
        %3490 = vmatpush.msra.mxu0 %v2615
        %3491 = vmatpush.msra.mxu0 %v2608
        %3492 = vmatpush.msra.mxu0 %v2601
        %3493 = vmatpush.msra.mxu0 %v2594
        %3494 = vmatpush.msra.mxu0 %v2587
        %3495 = vmatpush.msra.mxu0 %v2580
        %3496 = vmatpush.msra.mxu0 %v2573
        %3497 = vmatmul.f32.gmra.mxu0 %v2889
        %v3498 = vpop.f32.mrf.mxu0
        %v3499 = vadd.f32 %v3476, %v3498
        %3500 = vmatmul.f32.gmra.mxu0 %v2888
        %v3501 = vpop.f32.mrf.mxu0
        %v3502 = vadd.f32 %v3479, %v3501
        %3503 = vdwg.mxu0
        %3504 = vmatpush.msra.mxu0 %v2790
        %3505 = vmatpush.msra.mxu0 %v2783
        %3506 = vmatpush.msra.mxu0 %v2776
        %3507 = vmatpush.msra.mxu0 %v2769
        %3508 = vmatpush.msra.mxu0 %v2762
        %3509 = vmatpush.msra.mxu0 %v2755
        %3510 = vmatpush.msra.mxu0 %v2748
        %3511 = vmatpush.msra.mxu0 %v2741
        %3512 = vmatpush.msra.mxu0 %v2734
        %3513 = vmatpush.msra.mxu0 %v2727
        %3514 = vmatpush.msra.mxu0 %v2720
        %3515 = vmatpush.msra.mxu0 %v2713
        %3516 = vmatpush.msra.mxu0 %v2706
        %3517 = vmatpush.msra.mxu0 %v2699
        %3518 = vmatpush.msra.mxu0 %v2692
        %3519 = vmatpush.msra.mxu0 %v2685
        %3520 = vmatmul.f32.gmra.mxu0 %v2892
        %v3521 = vpop.f32.mrf.mxu0
        %v3522 = vadd.f32 %v3499, %v3521
        %3523 = vmatmul.f32.gmra.mxu0 %v2891
        %v3524 = vpop.f32.mrf.mxu0
        %v3525 = vadd.f32 %v3502, %v3524
        %3526 = vdwg.mxu0
        %3527 = vmatpush.msra.mxu0 0.0
        %3528 = vmatpush.msra.mxu0 0.0
        %3529 = vmatpush.msra.mxu0 0.0
        %3530 = vmatpush.msra.mxu0 0.0
        %3531 = vmatpush.msra.mxu0 %v2874
        %3532 = vmatpush.msra.mxu0 %v2867
        %3533 = vmatpush.msra.mxu0 %v2860
        %3534 = vmatpush.msra.mxu0 %v2853
        %3535 = vmatpush.msra.mxu0 %v2846
        %3536 = vmatpush.msra.mxu0 %v2839
        %3537 = vmatpush.msra.mxu0 %v2832
        %3538 = vmatpush.msra.mxu0 %v2825
        %3539 = vmatpush.msra.mxu0 %v2818
        %3540 = vmatpush.msra.mxu0 %v2811
        %3541 = vmatpush.msra.mxu0 %v2804
        %3542 = vmatpush.msra.mxu0 %v2797
        %3543 = vmatmul.f32.gmra.mxu0 %v2902
        %v3544 = vpop.f32.mrf.mxu0
        %v3545 = vadd.f32 %v3522, %v3544
        %3546 = vmatmul.f32.gmra.mxu0 %v2904
        %v3547 = vpop.f32.mrf.mxu0
        %v3548 = vadd.f32 %v3525, %v3547
        %3549 = vdwg.mxu0
        %v3551 = vsel %vm725, %v2021, 0
        %v3554 = vsel %vm725, %v2025, 0
        %3556 = vmatpush.msra.mxu0 %v2131
        %3557 = vmatpush.msra.mxu0 %v2124
        %3558 = vmatpush.msra.mxu0 %v2117
        %3559 = vmatpush.msra.mxu0 %v2110
        %3560 = vmatpush.msra.mxu0 %v2103
        %3561 = vmatpush.msra.mxu0 %v2096
        %3562 = vmatpush.msra.mxu0 %v2089
        %3563 = vmatpush.msra.mxu0 %v2082
        %3564 = vmatpush.msra.mxu0 %v2075
        %3565 = vmatpush.msra.mxu0 %v2068
        %3566 = vmatpush.msra.mxu0 %v2061
        %3567 = vmatpush.msra.mxu0 %v2054
        %3568 = vmatpush.msra.mxu0 %v2047
        %3569 = vmatpush.msra.mxu0 %v2040
        %3570 = vmatpush.msra.mxu0 %v2033
        %3571 = vmatpush.msra.mxu0 %v2026
        %3572 = vmatmul.f32.gmra.mxu0 %v2018
        %v3573 = vpop.f32.mrf.mxu0
        %v3574 = vadd.f32 %v2993, %v3573
        %3575 = vmatmul.f32.gmra.mxu0 %v2022
        %v3576 = vpop.f32.mrf.mxu0
        %v3577 = vadd.f32 %v2996, %v3576
        %3578 = vdwg.mxu0
        %3579 = vmatpush.msra.mxu0 %v2243
        %3580 = vmatpush.msra.mxu0 %v2236
        %3581 = vmatpush.msra.mxu0 %v2229
        %3582 = vmatpush.msra.mxu0 %v2222
        %3583 = vmatpush.msra.mxu0 %v2215
        %3584 = vmatpush.msra.mxu0 %v2208
        %3585 = vmatpush.msra.mxu0 %v2201
        %3586 = vmatpush.msra.mxu0 %v2194
        %3587 = vmatpush.msra.mxu0 %v2187
        %3588 = vmatpush.msra.mxu0 %v2180
        %3589 = vmatpush.msra.mxu0 %v2173
        %3590 = vmatpush.msra.mxu0 %v2166
        %3591 = vmatpush.msra.mxu0 %v2159
        %3592 = vmatpush.msra.mxu0 %v2152
        %3593 = vmatpush.msra.mxu0 %v2145
        %3594 = vmatpush.msra.mxu0 %v2138
        %3595 = vmatmul.f32.gmra.mxu0 %v2019
        %v3596 = vpop.f32.mrf.mxu0
        %v3597 = vadd.f32 %v3574, %v3596
        %3598 = vmatmul.f32.gmra.mxu0 %v2023
        %v3599 = vpop.f32.mrf.mxu0
        %v3600 = vadd.f32 %v3577, %v3599
        %3601 = vdwg.mxu0
        %3602 = vmatpush.msra.mxu0 %v2355
        %3603 = vmatpush.msra.mxu0 %v2348
        %3604 = vmatpush.msra.mxu0 %v2341
        %3605 = vmatpush.msra.mxu0 %v2334
        %3606 = vmatpush.msra.mxu0 %v2327
        %3607 = vmatpush.msra.mxu0 %v2320
        %3608 = vmatpush.msra.mxu0 %v2313
        %3609 = vmatpush.msra.mxu0 %v2306
        %3610 = vmatpush.msra.mxu0 %v2299
        %3611 = vmatpush.msra.mxu0 %v2292
        %3612 = vmatpush.msra.mxu0 %v2285
        %3613 = vmatpush.msra.mxu0 %v2278
        %3614 = vmatpush.msra.mxu0 %v2271
        %3615 = vmatpush.msra.mxu0 %v2264
        %3616 = vmatpush.msra.mxu0 %v2257
        %3617 = vmatpush.msra.mxu0 %v2250
        %3618 = vmatmul.f32.gmra.mxu0 %v2020
        %v3619 = vpop.f32.mrf.mxu0
        %v3620 = vadd.f32 %v3597, %v3619
        %3621 = vmatmul.f32.gmra.mxu0 %v2024
        %v3622 = vpop.f32.mrf.mxu0
        %v3623 = vadd.f32 %v3600, %v3622
        %3624 = vdwg.mxu0
        %3625 = vmatpush.msra.mxu0 0.0
        %3626 = vmatpush.msra.mxu0 0.0
        %3627 = vmatpush.msra.mxu0 0.0
        %3628 = vmatpush.msra.mxu0 0.0
        %3629 = vmatpush.msra.mxu0 %v2439
        %3630 = vmatpush.msra.mxu0 %v2432
        %3631 = vmatpush.msra.mxu0 %v2425
        %3632 = vmatpush.msra.mxu0 %v2418
        %3633 = vmatpush.msra.mxu0 %v2411
        %3634 = vmatpush.msra.mxu0 %v2404
        %3635 = vmatpush.msra.mxu0 %v2397
        %3636 = vmatpush.msra.mxu0 %v2390
        %3637 = vmatpush.msra.mxu0 %v2383
        %3638 = vmatpush.msra.mxu0 %v2376
        %3639 = vmatpush.msra.mxu0 %v2369
        %3640 = vmatpush.msra.mxu0 %v2362
        %3641 = vmatmul.f32.gmra.mxu0 %v3551
        %v3642 = vpop.f32.mrf.mxu0
        %v3643 = vadd.f32 %v3620, %v3642
        %3644 = vmatmul.f32.gmra.mxu0 %v3554
        %v3645 = vpop.f32.mrf.mxu0
        %v3646 = vadd.f32 %v3623, %v3645
        %3647 = vdwg.mxu0
        %3648 = vmatpush.msra.mxu0 %v2132
        %3649 = vmatpush.msra.mxu0 %v2125
        %3650 = vmatpush.msra.mxu0 %v2118
        %3651 = vmatpush.msra.mxu0 %v2111
        %3652 = vmatpush.msra.mxu0 %v2104
        %3653 = vmatpush.msra.mxu0 %v2097
        %3654 = vmatpush.msra.mxu0 %v2090
        %3655 = vmatpush.msra.mxu0 %v2083
        %3656 = vmatpush.msra.mxu0 %v2076
        %3657 = vmatpush.msra.mxu0 %v2069
        %3658 = vmatpush.msra.mxu0 %v2062
        %3659 = vmatpush.msra.mxu0 %v2055
        %3660 = vmatpush.msra.mxu0 %v2048
        %3661 = vmatpush.msra.mxu0 %v2041
        %3662 = vmatpush.msra.mxu0 %v2034
        %3663 = vmatpush.msra.mxu0 %v2027
        %3664 = vmatmul.f32.gmra.mxu0 %v2018
        %v3665 = vpop.f32.mrf.mxu0
        %v3666 = vadd.f32 %v3085, %v3665
        %3667 = vmatmul.f32.gmra.mxu0 %v2022
        %v3668 = vpop.f32.mrf.mxu0
        %v3669 = vadd.f32 %v3088, %v3668
        %3670 = vdwg.mxu0
        %3671 = vmatpush.msra.mxu0 %v2244
        %3672 = vmatpush.msra.mxu0 %v2237
        %3673 = vmatpush.msra.mxu0 %v2230
        %3674 = vmatpush.msra.mxu0 %v2223
        %3675 = vmatpush.msra.mxu0 %v2216
        %3676 = vmatpush.msra.mxu0 %v2209
        %3677 = vmatpush.msra.mxu0 %v2202
        %3678 = vmatpush.msra.mxu0 %v2195
        %3679 = vmatpush.msra.mxu0 %v2188
        %3680 = vmatpush.msra.mxu0 %v2181
        %3681 = vmatpush.msra.mxu0 %v2174
        %3682 = vmatpush.msra.mxu0 %v2167
        %3683 = vmatpush.msra.mxu0 %v2160
        %3684 = vmatpush.msra.mxu0 %v2153
        %3685 = vmatpush.msra.mxu0 %v2146
        %3686 = vmatpush.msra.mxu0 %v2139
        %3687 = vmatmul.f32.gmra.mxu0 %v2019
        %v3688 = vpop.f32.mrf.mxu0
        %v3689 = vadd.f32 %v3666, %v3688
        %3690 = vmatmul.f32.gmra.mxu0 %v2023
        %v3691 = vpop.f32.mrf.mxu0
        %v3692 = vadd.f32 %v3669, %v3691
        %3693 = vdwg.mxu0
        %3694 = vmatpush.msra.mxu0 %v2356
        %3695 = vmatpush.msra.mxu0 %v2349
        %3696 = vmatpush.msra.mxu0 %v2342
        %3697 = vmatpush.msra.mxu0 %v2335
        %3698 = vmatpush.msra.mxu0 %v2328
        %3699 = vmatpush.msra.mxu0 %v2321
        %3700 = vmatpush.msra.mxu0 %v2314
        %3701 = vmatpush.msra.mxu0 %v2307
        %3702 = vmatpush.msra.mxu0 %v2300
        %3703 = vmatpush.msra.mxu0 %v2293
        %3704 = vmatpush.msra.mxu0 %v2286
        %3705 = vmatpush.msra.mxu0 %v2279
        %3706 = vmatpush.msra.mxu0 %v2272
        %3707 = vmatpush.msra.mxu0 %v2265
        %3708 = vmatpush.msra.mxu0 %v2258
        %3709 = vmatpush.msra.mxu0 %v2251
        %3710 = vmatmul.f32.gmra.mxu0 %v2020
        %v3711 = vpop.f32.mrf.mxu0
        %v3712 = vadd.f32 %v3689, %v3711
        %3713 = vmatmul.f32.gmra.mxu0 %v2024
        %v3714 = vpop.f32.mrf.mxu0
        %v3715 = vadd.f32 %v3692, %v3714
        %3716 = vdwg.mxu0
        %3717 = vmatpush.msra.mxu0 0.0
        %3718 = vmatpush.msra.mxu0 0.0
        %3719 = vmatpush.msra.mxu0 0.0
        %3720 = vmatpush.msra.mxu0 0.0
        %3721 = vmatpush.msra.mxu0 %v2440
        %3722 = vmatpush.msra.mxu0 %v2433
        %3723 = vmatpush.msra.mxu0 %v2426
        %3724 = vmatpush.msra.mxu0 %v2419
        %3725 = vmatpush.msra.mxu0 %v2412
        %3726 = vmatpush.msra.mxu0 %v2405
        %3727 = vmatpush.msra.mxu0 %v2398
        %3728 = vmatpush.msra.mxu0 %v2391
        %3729 = vmatpush.msra.mxu0 %v2384
        %3730 = vmatpush.msra.mxu0 %v2377
        %3731 = vmatpush.msra.mxu0 %v2370
        %3732 = vmatpush.msra.mxu0 %v2363
        %3733 = vmatmul.f32.gmra.mxu0 %v3551
        %v3734 = vpop.f32.mrf.mxu0
        %v3735 = vadd.f32 %v3712, %v3734
        %3736 = vmatmul.f32.gmra.mxu0 %v3554
        %v3737 = vpop.f32.mrf.mxu0
        %v3738 = vadd.f32 %v3715, %v3737
        %3739 = vdwg.mxu0
        %3740 = vmatpush.msra.mxu0 %v2133
        %3741 = vmatpush.msra.mxu0 %v2126
        %3742 = vmatpush.msra.mxu0 %v2119
        %3743 = vmatpush.msra.mxu0 %v2112
        %3744 = vmatpush.msra.mxu0 %v2105
        %3745 = vmatpush.msra.mxu0 %v2098
        %3746 = vmatpush.msra.mxu0 %v2091
        %3747 = vmatpush.msra.mxu0 %v2084
        %3748 = vmatpush.msra.mxu0 %v2077
        %3749 = vmatpush.msra.mxu0 %v2070
        %3750 = vmatpush.msra.mxu0 %v2063
        %3751 = vmatpush.msra.mxu0 %v2056
        %3752 = vmatpush.msra.mxu0 %v2049
        %3753 = vmatpush.msra.mxu0 %v2042
        %3754 = vmatpush.msra.mxu0 %v2035
        %3755 = vmatpush.msra.mxu0 %v2028
        %3756 = vmatmul.f32.gmra.mxu0 %v2018
        %v3757 = vpop.f32.mrf.mxu0
        %v3758 = vadd.f32 %v3177, %v3757
        %3759 = vmatmul.f32.gmra.mxu0 %v2022
        %v3760 = vpop.f32.mrf.mxu0
        %v3761 = vadd.f32 %v3180, %v3760
        %3762 = vdwg.mxu0
        %3763 = vmatpush.msra.mxu0 %v2245
        %3764 = vmatpush.msra.mxu0 %v2238
        %3765 = vmatpush.msra.mxu0 %v2231
        %3766 = vmatpush.msra.mxu0 %v2224
        %3767 = vmatpush.msra.mxu0 %v2217
        %3768 = vmatpush.msra.mxu0 %v2210
        %3769 = vmatpush.msra.mxu0 %v2203
        %3770 = vmatpush.msra.mxu0 %v2196
        %3771 = vmatpush.msra.mxu0 %v2189
        %3772 = vmatpush.msra.mxu0 %v2182
        %3773 = vmatpush.msra.mxu0 %v2175
        %3774 = vmatpush.msra.mxu0 %v2168
        %3775 = vmatpush.msra.mxu0 %v2161
        %3776 = vmatpush.msra.mxu0 %v2154
        %3777 = vmatpush.msra.mxu0 %v2147
        %3778 = vmatpush.msra.mxu0 %v2140
        %3779 = vmatmul.f32.gmra.mxu0 %v2019
        %v3780 = vpop.f32.mrf.mxu0
        %v3781 = vadd.f32 %v3758, %v3780
        %3782 = vmatmul.f32.gmra.mxu0 %v2023
        %v3783 = vpop.f32.mrf.mxu0
        %v3784 = vadd.f32 %v3761, %v3783
        %3785 = vdwg.mxu0
        %3786 = vmatpush.msra.mxu0 %v2357
        %3787 = vmatpush.msra.mxu0 %v2350
        %3788 = vmatpush.msra.mxu0 %v2343
        %3789 = vmatpush.msra.mxu0 %v2336
        %3790 = vmatpush.msra.mxu0 %v2329
        %3791 = vmatpush.msra.mxu0 %v2322
        %3792 = vmatpush.msra.mxu0 %v2315
        %3793 = vmatpush.msra.mxu0 %v2308
        %3794 = vmatpush.msra.mxu0 %v2301
        %3795 = vmatpush.msra.mxu0 %v2294
        %3796 = vmatpush.msra.mxu0 %v2287
        %3797 = vmatpush.msra.mxu0 %v2280
        %3798 = vmatpush.msra.mxu0 %v2273
        %3799 = vmatpush.msra.mxu0 %v2266
        %3800 = vmatpush.msra.mxu0 %v2259
        %3801 = vmatpush.msra.mxu0 %v2252
        %3802 = vmatmul.f32.gmra.mxu0 %v2020
        %v3803 = vpop.f32.mrf.mxu0
        %v3804 = vadd.f32 %v3781, %v3803
        %3805 = vmatmul.f32.gmra.mxu0 %v2024
        %v3806 = vpop.f32.mrf.mxu0
        %v3807 = vadd.f32 %v3784, %v3806
        %3808 = vdwg.mxu0
        %3809 = vmatpush.msra.mxu0 0.0
        %3810 = vmatpush.msra.mxu0 0.0
        %3811 = vmatpush.msra.mxu0 0.0
        %3812 = vmatpush.msra.mxu0 0.0
        %3813 = vmatpush.msra.mxu0 %v2441
        %3814 = vmatpush.msra.mxu0 %v2434
        %3815 = vmatpush.msra.mxu0 %v2427
        %3816 = vmatpush.msra.mxu0 %v2420
        %3817 = vmatpush.msra.mxu0 %v2413
        %3818 = vmatpush.msra.mxu0 %v2406
        %3819 = vmatpush.msra.mxu0 %v2399
        %3820 = vmatpush.msra.mxu0 %v2392
        %3821 = vmatpush.msra.mxu0 %v2385
        %3822 = vmatpush.msra.mxu0 %v2378
        %3823 = vmatpush.msra.mxu0 %v2371
        %3824 = vmatpush.msra.mxu0 %v2364
        %3825 = vmatmul.f32.gmra.mxu0 %v3551
        %v3826 = vpop.f32.mrf.mxu0
        %v3827 = vadd.f32 %v3804, %v3826
        %3828 = vmatmul.f32.gmra.mxu0 %v3554
        %v3829 = vpop.f32.mrf.mxu0
        %v3830 = vadd.f32 %v3807, %v3829
        %3831 = vdwg.mxu0
        %3832 = vmatpush.msra.mxu0 %v2134
        %3833 = vmatpush.msra.mxu0 %v2127
        %3834 = vmatpush.msra.mxu0 %v2120
        %3835 = vmatpush.msra.mxu0 %v2113
        %3836 = vmatpush.msra.mxu0 %v2106
        %3837 = vmatpush.msra.mxu0 %v2099
        %3838 = vmatpush.msra.mxu0 %v2092
        %3839 = vmatpush.msra.mxu0 %v2085
        %3840 = vmatpush.msra.mxu0 %v2078
        %3841 = vmatpush.msra.mxu0 %v2071
        %3842 = vmatpush.msra.mxu0 %v2064
        %3843 = vmatpush.msra.mxu0 %v2057
        %3844 = vmatpush.msra.mxu0 %v2050
        %3845 = vmatpush.msra.mxu0 %v2043
        %3846 = vmatpush.msra.mxu0 %v2036
        %3847 = vmatpush.msra.mxu0 %v2029
        %3848 = vmatmul.f32.gmra.mxu0 %v2018
        %v3849 = vpop.f32.mrf.mxu0
        %v3850 = vadd.f32 %v3269, %v3849
        %3851 = vmatmul.f32.gmra.mxu0 %v2022
        %v3852 = vpop.f32.mrf.mxu0
        %v3853 = vadd.f32 %v3272, %v3852
        %3854 = vdwg.mxu0
        %3855 = vmatpush.msra.mxu0 %v2246
        %3856 = vmatpush.msra.mxu0 %v2239
        %3857 = vmatpush.msra.mxu0 %v2232
        %3858 = vmatpush.msra.mxu0 %v2225
        %3859 = vmatpush.msra.mxu0 %v2218
        %3860 = vmatpush.msra.mxu0 %v2211
        %3861 = vmatpush.msra.mxu0 %v2204
        %3862 = vmatpush.msra.mxu0 %v2197
        %3863 = vmatpush.msra.mxu0 %v2190
        %3864 = vmatpush.msra.mxu0 %v2183
        %3865 = vmatpush.msra.mxu0 %v2176
        %3866 = vmatpush.msra.mxu0 %v2169
        %3867 = vmatpush.msra.mxu0 %v2162
        %3868 = vmatpush.msra.mxu0 %v2155
        %3869 = vmatpush.msra.mxu0 %v2148
        %3870 = vmatpush.msra.mxu0 %v2141
        %3871 = vmatmul.f32.gmra.mxu0 %v2019
        %v3872 = vpop.f32.mrf.mxu0
        %v3873 = vadd.f32 %v3850, %v3872
        %3874 = vmatmul.f32.gmra.mxu0 %v2023
        %v3875 = vpop.f32.mrf.mxu0
        %v3876 = vadd.f32 %v3853, %v3875
        %3877 = vdwg.mxu0
        %3878 = vmatpush.msra.mxu0 %v2358
        %3879 = vmatpush.msra.mxu0 %v2351
        %3880 = vmatpush.msra.mxu0 %v2344
        %3881 = vmatpush.msra.mxu0 %v2337
        %3882 = vmatpush.msra.mxu0 %v2330
        %3883 = vmatpush.msra.mxu0 %v2323
        %3884 = vmatpush.msra.mxu0 %v2316
        %3885 = vmatpush.msra.mxu0 %v2309
        %3886 = vmatpush.msra.mxu0 %v2302
        %3887 = vmatpush.msra.mxu0 %v2295
        %3888 = vmatpush.msra.mxu0 %v2288
        %3889 = vmatpush.msra.mxu0 %v2281
        %3890 = vmatpush.msra.mxu0 %v2274
        %3891 = vmatpush.msra.mxu0 %v2267
        %3892 = vmatpush.msra.mxu0 %v2260
        %3893 = vmatpush.msra.mxu0 %v2253
        %3894 = vmatmul.f32.gmra.mxu0 %v2020
        %v3895 = vpop.f32.mrf.mxu0
        %v3896 = vadd.f32 %v3873, %v3895
        %3897 = vmatmul.f32.gmra.mxu0 %v2024
        %v3898 = vpop.f32.mrf.mxu0
        %v3899 = vadd.f32 %v3876, %v3898
        %3900 = vdwg.mxu0
        %3901 = vmatpush.msra.mxu0 0.0
        %3902 = vmatpush.msra.mxu0 0.0
        %3903 = vmatpush.msra.mxu0 0.0
        %3904 = vmatpush.msra.mxu0 0.0
        %3905 = vmatpush.msra.mxu0 %v2442
        %3906 = vmatpush.msra.mxu0 %v2435
        %3907 = vmatpush.msra.mxu0 %v2428
        %3908 = vmatpush.msra.mxu0 %v2421
        %3909 = vmatpush.msra.mxu0 %v2414
        %3910 = vmatpush.msra.mxu0 %v2407
        %3911 = vmatpush.msra.mxu0 %v2400
        %3912 = vmatpush.msra.mxu0 %v2393
        %3913 = vmatpush.msra.mxu0 %v2386
        %3914 = vmatpush.msra.mxu0 %v2379
        %3915 = vmatpush.msra.mxu0 %v2372
        %3916 = vmatpush.msra.mxu0 %v2365
        %3917 = vmatmul.f32.gmra.mxu0 %v3551
        %v3918 = vpop.f32.mrf.mxu0
        %v3919 = vadd.f32 %v3896, %v3918
        %3920 = vmatmul.f32.gmra.mxu0 %v3554
        %v3921 = vpop.f32.mrf.mxu0
        %v3922 = vadd.f32 %v3899, %v3921
        %3923 = vdwg.mxu0
        %3924 = vmatpush.msra.mxu0 %v2135
        %3925 = vmatpush.msra.mxu0 %v2128
        %3926 = vmatpush.msra.mxu0 %v2121
        %3927 = vmatpush.msra.mxu0 %v2114
        %3928 = vmatpush.msra.mxu0 %v2107
        %3929 = vmatpush.msra.mxu0 %v2100
        %3930 = vmatpush.msra.mxu0 %v2093
        %3931 = vmatpush.msra.mxu0 %v2086
        %3932 = vmatpush.msra.mxu0 %v2079
        %3933 = vmatpush.msra.mxu0 %v2072
        %3934 = vmatpush.msra.mxu0 %v2065
        %3935 = vmatpush.msra.mxu0 %v2058
        %3936 = vmatpush.msra.mxu0 %v2051
        %3937 = vmatpush.msra.mxu0 %v2044
        %3938 = vmatpush.msra.mxu0 %v2037
        %3939 = vmatpush.msra.mxu0 %v2030
        %3940 = vmatmul.f32.gmra.mxu0 %v2018
        %v3941 = vpop.f32.mrf.mxu0
        %v3942 = vadd.f32 %v3361, %v3941
        %3943 = vmatmul.f32.gmra.mxu0 %v2022
        %v3944 = vpop.f32.mrf.mxu0
        %v3945 = vadd.f32 %v3364, %v3944
        %3946 = vdwg.mxu0
        %3947 = vmatpush.msra.mxu0 %v2247
        %3948 = vmatpush.msra.mxu0 %v2240
        %3949 = vmatpush.msra.mxu0 %v2233
        %3950 = vmatpush.msra.mxu0 %v2226
        %3951 = vmatpush.msra.mxu0 %v2219
        %3952 = vmatpush.msra.mxu0 %v2212
        %3953 = vmatpush.msra.mxu0 %v2205
        %3954 = vmatpush.msra.mxu0 %v2198
        %3955 = vmatpush.msra.mxu0 %v2191
        %3956 = vmatpush.msra.mxu0 %v2184
        %3957 = vmatpush.msra.mxu0 %v2177
        %3958 = vmatpush.msra.mxu0 %v2170
        %3959 = vmatpush.msra.mxu0 %v2163
        %3960 = vmatpush.msra.mxu0 %v2156
        %3961 = vmatpush.msra.mxu0 %v2149
        %3962 = vmatpush.msra.mxu0 %v2142
        %3963 = vmatmul.f32.gmra.mxu0 %v2019
        %v3964 = vpop.f32.mrf.mxu0
        %v3965 = vadd.f32 %v3942, %v3964
        %3966 = vmatmul.f32.gmra.mxu0 %v2023
        %v3967 = vpop.f32.mrf.mxu0
        %v3968 = vadd.f32 %v3945, %v3967
        %3969 = vdwg.mxu0
        %3970 = vmatpush.msra.mxu0 %v2359
        %3971 = vmatpush.msra.mxu0 %v2352
        %3972 = vmatpush.msra.mxu0 %v2345
        %3973 = vmatpush.msra.mxu0 %v2338
        %3974 = vmatpush.msra.mxu0 %v2331
        %3975 = vmatpush.msra.mxu0 %v2324
        %3976 = vmatpush.msra.mxu0 %v2317
        %3977 = vmatpush.msra.mxu0 %v2310
        %3978 = vmatpush.msra.mxu0 %v2303
        %3979 = vmatpush.msra.mxu0 %v2296
        %3980 = vmatpush.msra.mxu0 %v2289
        %3981 = vmatpush.msra.mxu0 %v2282
        %3982 = vmatpush.msra.mxu0 %v2275
        %3983 = vmatpush.msra.mxu0 %v2268
        %3984 = vmatpush.msra.mxu0 %v2261
        %3985 = vmatpush.msra.mxu0 %v2254
        %3986 = vmatmul.f32.gmra.mxu0 %v2020
        %v3987 = vpop.f32.mrf.mxu0
        %v3988 = vadd.f32 %v3965, %v3987
        %3989 = vmatmul.f32.gmra.mxu0 %v2024
        %v3990 = vpop.f32.mrf.mxu0
        %v3991 = vadd.f32 %v3968, %v3990
        %3992 = vdwg.mxu0
        %3993 = vmatpush.msra.mxu0 0.0
        %3994 = vmatpush.msra.mxu0 0.0
        %3995 = vmatpush.msra.mxu0 0.0
        %3996 = vmatpush.msra.mxu0 0.0
        %3997 = vmatpush.msra.mxu0 %v2443
        %3998 = vmatpush.msra.mxu0 %v2436
        %3999 = vmatpush.msra.mxu0 %v2429
        %4000 = vmatpush.msra.mxu0 %v2422
        %4001 = vmatpush.msra.mxu0 %v2415
        %4002 = vmatpush.msra.mxu0 %v2408
        %4003 = vmatpush.msra.mxu0 %v2401
        %4004 = vmatpush.msra.mxu0 %v2394
        %4005 = vmatpush.msra.mxu0 %v2387
        %4006 = vmatpush.msra.mxu0 %v2380
        %4007 = vmatpush.msra.mxu0 %v2373
        %4008 = vmatpush.msra.mxu0 %v2366
        %4009 = vmatmul.f32.gmra.mxu0 %v3551
        %v4010 = vpop.f32.mrf.mxu0
        %v4011 = vadd.f32 %v3988, %v4010
        %4012 = vmatmul.f32.gmra.mxu0 %v3554
        %v4013 = vpop.f32.mrf.mxu0
        %v4014 = vadd.f32 %v3991, %v4013
        %4015 = vdwg.mxu0
        %4016 = vmatpush.msra.mxu0 %v2136
        %4017 = vmatpush.msra.mxu0 %v2129
        %4018 = vmatpush.msra.mxu0 %v2122
        %4019 = vmatpush.msra.mxu0 %v2115
        %4020 = vmatpush.msra.mxu0 %v2108
        %4021 = vmatpush.msra.mxu0 %v2101
        %4022 = vmatpush.msra.mxu0 %v2094
        %4023 = vmatpush.msra.mxu0 %v2087
        %4024 = vmatpush.msra.mxu0 %v2080
        %4025 = vmatpush.msra.mxu0 %v2073
        %4026 = vmatpush.msra.mxu0 %v2066
        %4027 = vmatpush.msra.mxu0 %v2059
        %4028 = vmatpush.msra.mxu0 %v2052
        %4029 = vmatpush.msra.mxu0 %v2045
        %4030 = vmatpush.msra.mxu0 %v2038
        %4031 = vmatpush.msra.mxu0 %v2031
        %4032 = vmatmul.f32.gmra.mxu0 %v2018
        %v4033 = vpop.f32.mrf.mxu0
        %v4034 = vadd.f32 %v3453, %v4033
        %4035 = vmatmul.f32.gmra.mxu0 %v2022
        %v4036 = vpop.f32.mrf.mxu0
        %v4037 = vadd.f32 %v3456, %v4036
        %4038 = vdwg.mxu0
        %4039 = vmatpush.msra.mxu0 %v2248
        %4040 = vmatpush.msra.mxu0 %v2241
        %4041 = vmatpush.msra.mxu0 %v2234
        %4042 = vmatpush.msra.mxu0 %v2227
        %4043 = vmatpush.msra.mxu0 %v2220
        %4044 = vmatpush.msra.mxu0 %v2213
        %4045 = vmatpush.msra.mxu0 %v2206
        %4046 = vmatpush.msra.mxu0 %v2199
        %4047 = vmatpush.msra.mxu0 %v2192
        %4048 = vmatpush.msra.mxu0 %v2185
        %4049 = vmatpush.msra.mxu0 %v2178
        %4050 = vmatpush.msra.mxu0 %v2171
        %4051 = vmatpush.msra.mxu0 %v2164
        %4052 = vmatpush.msra.mxu0 %v2157
        %4053 = vmatpush.msra.mxu0 %v2150
        %4054 = vmatpush.msra.mxu0 %v2143
        %4055 = vmatmul.f32.gmra.mxu0 %v2019
        %v4056 = vpop.f32.mrf.mxu0
        %v4057 = vadd.f32 %v4034, %v4056
        %4058 = vmatmul.f32.gmra.mxu0 %v2023
        %v4059 = vpop.f32.mrf.mxu0
        %v4060 = vadd.f32 %v4037, %v4059
        %4061 = vdwg.mxu0
        %4062 = vmatpush.msra.mxu0 %v2360
        %4063 = vmatpush.msra.mxu0 %v2353
        %4064 = vmatpush.msra.mxu0 %v2346
        %4065 = vmatpush.msra.mxu0 %v2339
        %4066 = vmatpush.msra.mxu0 %v2332
        %4067 = vmatpush.msra.mxu0 %v2325
        %4068 = vmatpush.msra.mxu0 %v2318
        %4069 = vmatpush.msra.mxu0 %v2311
        %4070 = vmatpush.msra.mxu0 %v2304
        %4071 = vmatpush.msra.mxu0 %v2297
        %4072 = vmatpush.msra.mxu0 %v2290
        %4073 = vmatpush.msra.mxu0 %v2283
        %4074 = vmatpush.msra.mxu0 %v2276
        %4075 = vmatpush.msra.mxu0 %v2269
        %4076 = vmatpush.msra.mxu0 %v2262
        %4077 = vmatpush.msra.mxu0 %v2255
        %4078 = vmatmul.f32.gmra.mxu0 %v2020
        %v4079 = vpop.f32.mrf.mxu0
        %v4080 = vadd.f32 %v4057, %v4079
        %4081 = vmatmul.f32.gmra.mxu0 %v2024
        %v4082 = vpop.f32.mrf.mxu0
        %v4083 = vadd.f32 %v4060, %v4082
        %4084 = vdwg.mxu0
        %4085 = vmatpush.msra.mxu0 0.0
        %4086 = vmatpush.msra.mxu0 0.0
        %4087 = vmatpush.msra.mxu0 0.0
        %4088 = vmatpush.msra.mxu0 0.0
        %4089 = vmatpush.msra.mxu0 %v2444
        %4090 = vmatpush.msra.mxu0 %v2437
        %4091 = vmatpush.msra.mxu0 %v2430
        %4092 = vmatpush.msra.mxu0 %v2423
        %4093 = vmatpush.msra.mxu0 %v2416
        %4094 = vmatpush.msra.mxu0 %v2409
        %4095 = vmatpush.msra.mxu0 %v2402
        %4096 = vmatpush.msra.mxu0 %v2395
        %4097 = vmatpush.msra.mxu0 %v2388
        %4098 = vmatpush.msra.mxu0 %v2381
        %4099 = vmatpush.msra.mxu0 %v2374
        %4100 = vmatpush.msra.mxu0 %v2367
        %4101 = vmatmul.f32.gmra.mxu0 %v3551
        %v4102 = vpop.f32.mrf.mxu0
        %v4103 = vadd.f32 %v4080, %v4102
        %4104 = vmatmul.f32.gmra.mxu0 %v3554
        %v4105 = vpop.f32.mrf.mxu0
        %v4106 = vadd.f32 %v4083, %v4105
        %4107 = vdwg.mxu0
        %4108 = vmatpush.msra.mxu0 %v2137
        %4109 = vmatpush.msra.mxu0 %v2130
        %4110 = vmatpush.msra.mxu0 %v2123
        %4111 = vmatpush.msra.mxu0 %v2116
        %4112 = vmatpush.msra.mxu0 %v2109
        %4113 = vmatpush.msra.mxu0 %v2102
        %4114 = vmatpush.msra.mxu0 %v2095
        %4115 = vmatpush.msra.mxu0 %v2088
        %4116 = vmatpush.msra.mxu0 %v2081
        %4117 = vmatpush.msra.mxu0 %v2074
        %4118 = vmatpush.msra.mxu0 %v2067
        %4119 = vmatpush.msra.mxu0 %v2060
        %4120 = vmatpush.msra.mxu0 %v2053
        %4121 = vmatpush.msra.mxu0 %v2046
        %4122 = vmatpush.msra.mxu0 %v2039
        %4123 = vmatpush.msra.mxu0 %v2032
        %4124 = vmatmul.f32.gmra.mxu0 %v2018
        %v4125 = vpop.f32.mrf.mxu0
        %v4126 = vadd.f32 %v3545, %v4125
        %4127 = vmatmul.f32.gmra.mxu0 %v2022
        %v4128 = vpop.f32.mrf.mxu0
        %v4129 = vadd.f32 %v3548, %v4128
        %4130 = vdwg.mxu0
        %4131 = vmatpush.msra.mxu0 %v2249
        %4132 = vmatpush.msra.mxu0 %v2242
        %4133 = vmatpush.msra.mxu0 %v2235
        %4134 = vmatpush.msra.mxu0 %v2228
        %4135 = vmatpush.msra.mxu0 %v2221
        %4136 = vmatpush.msra.mxu0 %v2214
        %4137 = vmatpush.msra.mxu0 %v2207
        %4138 = vmatpush.msra.mxu0 %v2200
        %4139 = vmatpush.msra.mxu0 %v2193
        %4140 = vmatpush.msra.mxu0 %v2186
        %4141 = vmatpush.msra.mxu0 %v2179
        %4142 = vmatpush.msra.mxu0 %v2172
        %4143 = vmatpush.msra.mxu0 %v2165
        %4144 = vmatpush.msra.mxu0 %v2158
        %4145 = vmatpush.msra.mxu0 %v2151
        %4146 = vmatpush.msra.mxu0 %v2144
        %4147 = vmatmul.f32.gmra.mxu0 %v2019
        %v4148 = vpop.f32.mrf.mxu0
        %v4149 = vadd.f32 %v4126, %v4148
        %4150 = vmatmul.f32.gmra.mxu0 %v2023
        %v4151 = vpop.f32.mrf.mxu0
        %v4152 = vadd.f32 %v4129, %v4151
        %4153 = vdwg.mxu0
        %4154 = vmatpush.msra.mxu0 %v2361
        %4155 = vmatpush.msra.mxu0 %v2354
        %4156 = vmatpush.msra.mxu0 %v2347
        %4157 = vmatpush.msra.mxu0 %v2340
        %4158 = vmatpush.msra.mxu0 %v2333
        %4159 = vmatpush.msra.mxu0 %v2326
        %4160 = vmatpush.msra.mxu0 %v2319
        %4161 = vmatpush.msra.mxu0 %v2312
        %4162 = vmatpush.msra.mxu0 %v2305
        %4163 = vmatpush.msra.mxu0 %v2298
        %4164 = vmatpush.msra.mxu0 %v2291
        %4165 = vmatpush.msra.mxu0 %v2284
        %4166 = vmatpush.msra.mxu0 %v2277
        %4167 = vmatpush.msra.mxu0 %v2270
        %4168 = vmatpush.msra.mxu0 %v2263
        %4169 = vmatpush.msra.mxu0 %v2256
        %4170 = vmatmul.f32.gmra.mxu0 %v2020
        %v4171 = vpop.f32.mrf.mxu0
        %v4172 = vadd.f32 %v4149, %v4171
        %4173 = vmatmul.f32.gmra.mxu0 %v2024
        %v4174 = vpop.f32.mrf.mxu0
        %v4175 = vadd.f32 %v4152, %v4174
        %4176 = vdwg.mxu0
        %4177 = vmatpush.msra.mxu0 0.0
        %4178 = vmatpush.msra.mxu0 0.0
        %4179 = vmatpush.msra.mxu0 0.0
        %4180 = vmatpush.msra.mxu0 0.0
        %4181 = vmatpush.msra.mxu0 %v2445
        %4182 = vmatpush.msra.mxu0 %v2438
        %4183 = vmatpush.msra.mxu0 %v2431
        %4184 = vmatpush.msra.mxu0 %v2424
        %4185 = vmatpush.msra.mxu0 %v2417
        %4186 = vmatpush.msra.mxu0 %v2410
        %4187 = vmatpush.msra.mxu0 %v2403
        %4188 = vmatpush.msra.mxu0 %v2396
        %4189 = vmatpush.msra.mxu0 %v2389
        %4190 = vmatpush.msra.mxu0 %v2382
        %4191 = vmatpush.msra.mxu0 %v2375
        %4192 = vmatpush.msra.mxu0 %v2368
        %4193 = vmatmul.f32.gmra.mxu0 %v3551
        %v4194 = vpop.f32.mrf.mxu0
        %v4195 = vadd.f32 %v4172, %v4194
        %4196 = vmatmul.f32.gmra.mxu0 %v3554
        %v4197 = vpop.f32.mrf.mxu0
        %v4198 = vadd.f32 %v4175, %v4197
        %4199 = vdwg.mxu0
        %v4201 = vperm.slane %v2017, 0
        %v4202 = vperm.slane %v2017, 1
        %v4203 = vperm.slane %v2017, 2
        %v4204 = vperm.slane %v2017, 3
        %v4205 = vperm.slane %v2017, 4
        %v4206 = vperm.slane %v2017, 5
        %v4207 = vperm.slane %v2017, 6
        %v4215 = vadd.f32 %v3643, %v4201
        %v4216 = vadd.f32 %v3735, %v4202
        %v4217 = vadd.f32 %v3827, %v4203
        %v4218 = vadd.f32 %v3919, %v4204
        %v4219 = vadd.f32 %v4011, %v4205
        %v4220 = vadd.f32 %v4103, %v4206
        %v4221 = vadd.f32 %v4195, %v4207
        %v4222 = vadd.f32 %v3646, %v4201
        %v4223 = vadd.f32 %v3738, %v4202
        %v4224 = vadd.f32 %v3830, %v4203
        %v4225 = vadd.f32 %v3922, %v4204
        %v4226 = vadd.f32 %v4014, %v4205
        %v4227 = vadd.f32 %v4106, %v4206
        %v4228 = vadd.f32 %v4198, %v4207
        %v4229 = vmax.f32 %v4215, 0.0
        %v4230 = vmax.f32 %v4216, 0.0
        %v4231 = vmax.f32 %v4217, 0.0
        %v4232 = vmax.f32 %v4218, 0.0
        %v4233 = vmax.f32 %v4219, 0.0
        %v4234 = vmax.f32 %v4220, 0.0
        %v4235 = vmax.f32 %v4221, 0.0
        %v4236 = vmax.f32 %v4222, 0.0
        %v4237 = vmax.f32 %v4223, 0.0
        %v4238 = vmax.f32 %v4224, 0.0
        %v4239 = vmax.f32 %v4225, 0.0
        %v4240 = vmax.f32 %v4226, 0.0
        %v4241 = vmax.f32 %v4227, 0.0
        %v4242 = vmax.f32 %v4228, 0.0
        %4251 = vrot.lane.b32.xlu0 %v4232, 64
        %v4252 = vpop.permute.xlu0 %4251
        %4253 = vrot.lane.b32.xlu0 %v4233, 64
        %v4254 = vpop.permute.xlu0 %4253
        %4255 = vrot.lane.b32.xlu0 %v4234, 64
        %v4256 = vpop.permute.xlu0 %4255
        %4257 = vrot.lane.b32.xlu0 %v4235, 64
        %v4258 = vpop.permute.xlu0 %4257
        %4259 = vrot.lane.b32.xlu0 %v4239, 64
        %v4260 = vpop.permute.xlu0 %4259
        %4261 = vrot.lane.b32.xlu0 %v4240, 64
        %v4262 = vpop.permute.xlu0 %4261
        %4263 = vrot.lane.b32.xlu0 %v4241, 64
        %v4264 = vpop.permute.xlu0 %4263
        %4265 = vrot.lane.b32.xlu0 %v4242, 64
        %v4266 = vpop.permute.xlu0 %4265
        %vm4267 = vcmask 523264
        %v4268 = vsel %vm4267, %v4252, %v4254
        %v4269 = vsel %vm4267, %v4254, %v4256
        %v4270 = vsel %vm4267, %v4256, %v4258
        %v4271 = vsel %vm4267, %v4260, %v4262
        %v4272 = vsel %vm4267, %v4262, %v4264
        %v4273 = vsel %vm4267, %v4264, %v4266
        %v4282 = vmax.f32 %v4229, %v4268
        %v4283 = vmax.f32 %v4230, %v4269
        %v4284 = vmax.f32 %v4231, %v4270
        %v4285 = vmax.f32 %v4232, %v4258
        %v4286 = vmax.f32 %v4236, %v4271
        %v4287 = vmax.f32 %v4237, %v4272
        %v4288 = vmax.f32 %v4238, %v4273
        %v4289 = vmax.f32 %v4239, %v4266
        %v4294 = vrot.slane %v4282, 1
        %v4295 = vrot.slane %v4283, 1
        %v4296 = vrot.slane %v4284, 1
        %v4297 = vrot.slane %v4285, 1
        %v4302 = vmax.f32 %v4282, %v4294
        %v4303 = vmax.f32 %v4283, %v4295
        %v4304 = vmax.f32 %v4284, %v4296
        %v4305 = vmax.f32 %v4285, %v4297
        %v4310 = vrot.slane %v4303, 7
        %v4311 = vrot.slane %v4304, 6
        %v4312 = vrot.slane %v4305, 5
        %v4313 = vsel %vm1804, %v4302, %v4310
        %v4314 = vsel %vm1806, %v4311, %v4312
        %v4315 = vsel %vm1808, %v4313, %v4314
        %vm4317 = vcmp.lt.s32.totalorder %v1811, 448
        %vm4318 = vmand %vm1812, %vm4317
        %4319 = vst.msk [vmem:[#allocation3] ss:$8 sm:$0xf] %vm4318, %v4315
        %4320 = vst.msk [vmem:[#allocation3] ss:$8 sm:$0x0] %vm4318, %v4315
        %4321 = vst [vmem:[#allocation1] sm:$0xff] %v4302
        %4322 = vst [vmem:[#allocation1 + $0x9] sm:$0xff] %v4303
        %4323 = vst [vmem:[#allocation1 + $0x12] sm:$0xff] %v4304
        %4324 = vst [vmem:[#allocation1 + $0x1b] sm:$0xff] %v4305
        %s4325 = scalar_lea.vmem [#allocation1], 2
        %v4326 = vld [vmem:[%s4325] ss:$9 sm:$0xff]
        %s4328 = scalar_lea.vmem [#allocation3], 1
        %4329 = vst.msk [vmem:[%s4328] ss:$8 sm:$0xf] %vm4318, %v4326
        %4330 = vst.msk [vmem:[%s4328] ss:$8 sm:$0x0] %vm4318, %v4326
        %4331 = vst [vmem:[#allocation1] sm:$0xff] %v4302
        %4332 = vst [vmem:[#allocation1 + $0x9] sm:$0xff] %v4303
        %4333 = vst [vmem:[#allocation1 + $0x12] sm:$0xff] %v4304
        %4334 = vst [vmem:[#allocation1 + $0x1b] sm:$0xff] %v4305
        %s4335 = scalar_lea.vmem [#allocation1], 4
        %v4336 = vld [vmem:[%s4335] ss:$9 sm:$0xff]
        %s4338 = scalar_lea.vmem [#allocation3], 2
        %4339 = vst.msk [vmem:[%s4338] ss:$8 sm:$0xf] %vm4318, %v4336
        %4340 = vst.msk [vmem:[%s4338] ss:$8 sm:$0x0] %vm4318, %v4336
        %4341 = vst [vmem:[#allocation1] sm:$0xff] %v4302
        %4342 = vst [vmem:[#allocation1 + $0x9] sm:$0xff] %v4303
        %4343 = vst [vmem:[#allocation1 + $0x12] sm:$0xff] %v4304
        %4344 = vst [vmem:[#allocation1 + $0x1b] sm:$0xff] %v4305
        %s4345 = scalar_lea.vmem [#allocation1], 6
        %v4346 = vld [vmem:[%s4345] ss:$9 sm:$0xff]
        %s4348 = scalar_lea.vmem [#allocation3], 3
        %4349 = vst.msk [vmem:[%s4348] ss:$8 sm:$0xf] %vm4318, %v4346
        %4350 = vst.msk [vmem:[%s4348] ss:$8 sm:$0x0] %vm4318, %v4346
        %v4355 = vrot.slane %v4286, 1
        %v4356 = vrot.slane %v4287, 1
        %v4357 = vrot.slane %v4288, 1
        %v4358 = vrot.slane %v4289, 1
        %v4363 = vmax.f32 %v4286, %v4355
        %v4364 = vmax.f32 %v4287, %v4356
        %v4365 = vmax.f32 %v4288, %v4357
        %v4366 = vmax.f32 %v4289, %v4358
        %v4371 = vrot.slane %v4364, 7
        %v4372 = vrot.slane %v4365, 6
        %v4373 = vrot.slane %v4366, 5
        %v4374 = vsel %vm1804, %v4363, %v4371
        %v4375 = vsel %vm1806, %v4372, %v4373
        %v4376 = vsel %vm1808, %v4374, %v4375
        %s4378 = scalar_lea.vmem [#allocation3], 4
        %4379 = vst.msk [vmem:[%s4378] ss:$8 sm:$0xf] %vm4318, %v4376
        %4380 = vst.msk [vmem:[%s4378] ss:$8 sm:$0x0] %vm4318, %v4376
        %4381 = vst [vmem:[#allocation1] sm:$0xff] %v4363
        %4382 = vst [vmem:[#allocation1 + $0x9] sm:$0xff] %v4364
        %4383 = vst [vmem:[#allocation1 + $0x12] sm:$0xff] %v4365
        %4384 = vst [vmem:[#allocation1 + $0x1b] sm:$0xff] %v4366
        %s4385 = scalar_lea.vmem [#allocation1], 2
        %v4386 = vld [vmem:[%s4385] ss:$9 sm:$0xff]
        %s4388 = scalar_lea.vmem [#allocation3], 5
        %4389 = vst.msk [vmem:[%s4388] ss:$8 sm:$0xf] %vm4318, %v4386
        %4390 = vst.msk [vmem:[%s4388] ss:$8 sm:$0x0] %vm4318, %v4386
        %4391 = vst [vmem:[#allocation1] sm:$0xff] %v4363
        %4392 = vst [vmem:[#allocation1 + $0x9] sm:$0xff] %v4364
        %4393 = vst [vmem:[#allocation1 + $0x12] sm:$0xff] %v4365
        %4394 = vst [vmem:[#allocation1 + $0x1b] sm:$0xff] %v4366
        %s4395 = scalar_lea.vmem [#allocation1], 4
        %v4396 = vld [vmem:[%s4395] ss:$9 sm:$0xff]
        %s4398 = scalar_lea.vmem [#allocation3], 6
        %4399 = vst.msk [vmem:[%s4398] ss:$8 sm:$0xf] %vm4318, %v4396
        %4400 = vst.msk [vmem:[%s4398] ss:$8 sm:$0x0] %vm4318, %v4396
        %v4401 = vld [vmem:[#allocation14] sm:$0x1f]
        %v4402 = vld [vmem:[#allocation3] sm:$0x1f]
        %v4403 = vld [vmem:[#allocation3 + $0x8] sm:$0x1f]
        %v4404 = vld [vmem:[#allocation3 + $0x10] sm:$0x1f]
        %v4405 = vld [vmem:[#allocation3 + $0x18] sm:$0x1f]
        %v4406 = vld [vmem:[#allocation13] sm:$0xff]
        %v4407 = vld [vmem:[#allocation13 + $0x8] sm:$0xff]
        %v4408 = vld [vmem:[#allocation13 + $0x18] sm:$0xff]
        %v4409 = vld [vmem:[#allocation13 + $0x20] sm:$0xff]
        %v4410 = vld [vmem:[#allocation13 + $0x28] sm:$0xff]
        %v4411 = vld [vmem:[#allocation13 + $0x30] sm:$0xff]
        %v4412 = vld [vmem:[#allocation13 + $0x40] sm:$0xff]
        %v4413 = vld [vmem:[#allocation13 + $0x48] sm:$0xff]
        %v4414 = vld [vmem:[#allocation13 + $0x50] sm:$0xff]
        %v4415 = vld [vmem:[#allocation13 + $0x58] sm:$0xff]
        %v4416 = vld [vmem:[#allocation13 + $0x68] sm:$0xff]
        %v4417 = vld [vmem:[#allocation13 + $0x70] sm:$0xff]
        %v4418 = vld [vmem:[#allocation13 + $0x78] sm:$0xff]
        %v4419 = vld [vmem:[#allocation13 + $0x80] sm:$0xff]
        %v4420 = vld [vmem:[#allocation13 + $0x90] sm:$0xff]
        %v4421 = vld [vmem:[#allocation13 + $0x98] sm:$0xff]
        %v4422 = vld [vmem:[#allocation13 + $0xa0] sm:$0xff]
        %v4423 = vld [vmem:[#allocation13 + $0xa8] sm:$0xff]
        %v4424 = vld [vmem:[#allocation13 + $0xb8] sm:$0xff]
        %v4425 = vld [vmem:[#allocation13 + $0xc0] sm:$0xff]
        %v4426 = vld [vmem:[#allocation13 + $0xc8] sm:$0xff]
        %v4427 = vld [vmem:[#allocation13 + $0xd0] sm:$0xff]
        %v4428 = vld [vmem:[#allocation13 + $0xe0] sm:$0xff]
        %v4429 = vld [vmem:[#allocation13 + $0xe8] sm:$0xff]
        %v4430 = vld [vmem:[#allocation13 + $0xf0] sm:$0xff]
        %v4431 = vld [vmem:[#allocation13 + $0xf8] sm:$0xff]
        %v4432 = vld [vmem:[#allocation13 + $0x108] sm:$0xff]
        %v4433 = vld [vmem:[#allocation13 + $0x110] sm:$0xff]
        %v4434 = vld [vmem:[#allocation13 + $0x118] sm:$0xff]
        %v4435 = vld [vmem:[#allocation13 + $0x120] sm:$0xff]
        %v4436 = vld [vmem:[#allocation13 + $0x130] sm:$0xff]
        %v4437 = vld [vmem:[#allocation13 + $0x138] sm:$0xff]
        %v4438 = vld [vmem:[#allocation13 + $0x140] sm:$0xff]
        %v4439 = vld [vmem:[#allocation13 + $0x148] sm:$0xff]
        %v4440 = vld [vmem:[#allocation13 + $0x158] sm:$0xff]
        %v4441 = vld [vmem:[#allocation13 + $0x160] sm:$0xff]
        %v4442 = vld [vmem:[#allocation13 + $0x168] sm:$0xff]
        %v4443 = vld [vmem:[#allocation13 + $0x170] sm:$0xff]
        %v4444 = vld [vmem:[#allocation13 + $0x180] sm:$0xff]
        %v4445 = vld [vmem:[#allocation13 + $0x188] sm:$0xff]
        %v4446 = vld [vmem:[#allocation13 + $0x190] sm:$0xff]
        %v4447 = vld [vmem:[#allocation13 + $0x198] sm:$0xff]
        %v4448 = vld [vmem:[#allocation13 + $0x1a8] sm:$0xff]
        %v4449 = vld [vmem:[#allocation13 + $0x1b0] sm:$0xff]
        %v4450 = vld [vmem:[#allocation13 + $0x1b8] sm:$0xff]
        %v4451 = vld [vmem:[#allocation13 + $0x1c0] sm:$0xff]
        %v4452 = vld [vmem:[#allocation13 + $0x1d0] sm:$0xff]
        %v4453 = vld [vmem:[#allocation13 + $0x1d8] sm:$0xff]
        %v4454 = vld [vmem:[#allocation13 + $0x1e0] sm:$0xff]
        %v4455 = vld [vmem:[#allocation13 + $0x1e8] sm:$0xff]
        %v4456 = vld [vmem:[#allocation13 + $0x1f8] sm:$0xff]
        %v4457 = vld [vmem:[#allocation13 + $0x200] sm:$0xff]
        %v4458 = vld [vmem:[#allocation13 + $0x208] sm:$0xff]
        %v4459 = vld [vmem:[#allocation13 + $0x210] sm:$0xff]
        %v4460 = vld [vmem:[#allocation13 + $0x220] sm:$0xff]
        %v4461 = vld [vmem:[#allocation13 + $0x228] sm:$0xff]
        %v4462 = vld [vmem:[#allocation13 + $0x230] sm:$0xff]
        %v4463 = vld [vmem:[#allocation13 + $0x238] sm:$0xff]
        %v4464 = vld [vmem:[#allocation13 + $0x248] sm:$0xff]
        %v4465 = vld [vmem:[#allocation13 + $0x250] sm:$0xff]
        %v4466 = vld [vmem:[#allocation13 + $0x258] sm:$0xff]
        %v4467 = vld [vmem:[#allocation13 + $0x260] sm:$0xff]
        %v4468 = vld [vmem:[#allocation13 + $0x270] sm:$0xff]
        %v4469 = vld [vmem:[#allocation13 + $0x278] sm:$0xff]
        %v4470 = vld [vmem:[#allocation13 + $0x280] sm:$0xff]
        %v4471 = vld [vmem:[#allocation13 + $0x288] sm:$0xff]
        %v4472 = vld [vmem:[#allocation13 + $0x298] sm:$0xff]
        %v4473 = vld [vmem:[#allocation13 + $0x2a0] sm:$0xff]
        %v4474 = vld [vmem:[#allocation13 + $0x2a8] sm:$0xff]
        %v4475 = vld [vmem:[#allocation13 + $0x2b0] sm:$0xff]
        %v4476 = vld [vmem:[#allocation13 + $0x2c0] sm:$0xff]
        %v4477 = vld [vmem:[#allocation13 + $0x2c8] sm:$0xff]
        %v4478 = vld [vmem:[#allocation13 + $0x2d0] sm:$0xff]
        %v4479 = vld [vmem:[#allocation13 + $0x2d8] sm:$0xff]
        %v4480 = vld [vmem:[#allocation13 + $0x2e8] sm:$0xff]
        %v4481 = vld [vmem:[#allocation13 + $0x2f0] sm:$0xff]
        %v4482 = vld [vmem:[#allocation13 + $0x2f8] sm:$0xff]
        %v4483 = vld [vmem:[#allocation13 + $0x300] sm:$0xff]
        %v4484 = vld [vmem:[#allocation13 + $0x310] sm:$0xff]
        %v4485 = vld [vmem:[#allocation13 + $0x318] sm:$0xff]
        %v4486 = vld [vmem:[#allocation13 + $0x320] sm:$0xff]
        %v4487 = vld [vmem:[#allocation13 + $0x328] sm:$0xff]
        %v4488 = vld [vmem:[#allocation13 + $0x338] sm:$0xff]
        %v4489 = vld [vmem:[#allocation13 + $0x340] sm:$0xff]
        %v4490 = vld [vmem:[#allocation13 + $0x348] sm:$0xff]
        %v4491 = vld [vmem:[#allocation13 + $0x350] sm:$0xff]
        %v4492 = vld [vmem:[#allocation13 + $0x360] sm:$0xff]
        %v4493 = vld [vmem:[#allocation13 + $0x368] sm:$0xff]
        %v4494 = vld [vmem:[#allocation13 + $0x370] sm:$0xff]
        %v4495 = vld [vmem:[#allocation13 + $0x378] sm:$0xff]
        %v4496 = vld [vmem:[#allocation13 + $0x388] sm:$0xff]
        %v4497 = vld [vmem:[#allocation13 + $0x390] sm:$0xff]
        %v4498 = vld [vmem:[#allocation13 + $0x398] sm:$0xff]
        %v4499 = vld [vmem:[#allocation13 + $0x3a0] sm:$0xff]
        %v4500 = vld [vmem:[#allocation13 + $0x3b0] sm:$0xff]
        %v4501 = vld [vmem:[#allocation13 + $0x3b8] sm:$0xff]
        %v4502 = vld [vmem:[#allocation13 + $0x3c0] sm:$0xff]
        %v4503 = vld [vmem:[#allocation13 + $0x3c8] sm:$0xff]
        %v4504 = vld [vmem:[#allocation13 + $0x3d8] sm:$0xff]
        %v4505 = vld [vmem:[#allocation13 + $0x3e0] sm:$0xff]
        %v4506 = vld [vmem:[#allocation13 + $0x3e8] sm:$0xff]
        %v4507 = vld [vmem:[#allocation13 + $0x3f0] sm:$0xff]
        %v4508 = vld [vmem:[#allocation13 + $0x400] sm:$0xff]
        %v4509 = vld [vmem:[#allocation13 + $0x408] sm:$0xff]
        %v4510 = vld [vmem:[#allocation13 + $0x410] sm:$0xff]
        %v4511 = vld [vmem:[#allocation13 + $0x418] sm:$0xff]
        %v4512 = vld [vmem:[#allocation13 + $0x428] sm:$0xff]
        %v4513 = vld [vmem:[#allocation13 + $0x430] sm:$0xff]
        %v4514 = vld [vmem:[#allocation13 + $0x438] sm:$0xff]
        %v4515 = vld [vmem:[#allocation13 + $0x440] sm:$0xff]
        %v4516 = vld [vmem:[#allocation13 + $0x450] sm:$0xff]
        %v4517 = vld [vmem:[#allocation13 + $0x458] sm:$0xff]
        %v4518 = vld [vmem:[#allocation13 + $0x460] sm:$0xff]
        %v4519 = vld [vmem:[#allocation13 + $0x468] sm:$0xff]
        %v4520 = vld [vmem:[#allocation13 + $0x478] sm:$0xff]
        %v4521 = vld [vmem:[#allocation13 + $0x480] sm:$0xff]
        %v4522 = vld [vmem:[#allocation13 + $0x488] sm:$0xff]
        %v4523 = vld [vmem:[#allocation13 + $0x490] sm:$0xff]
        %v4524 = vld [vmem:[#allocation13 + $0x4a0] sm:$0xff]
        %v4525 = vld [vmem:[#allocation13 + $0x4a8] sm:$0xff]
        %v4526 = vld [vmem:[#allocation13 + $0x4b0] sm:$0xff]
        %v4527 = vld [vmem:[#allocation13 + $0x4b8] sm:$0xff]
        %v4528 = vld [vmem:[#allocation13 + $0x4c8] sm:$0xff]
        %v4529 = vld [vmem:[#allocation13 + $0x4d0] sm:$0xff]
        %v4530 = vld [vmem:[#allocation13 + $0x4d8] sm:$0xff]
        %v4531 = vld [vmem:[#allocation13 + $0x4e0] sm:$0xff]
        %v4532 = vld [vmem:[#allocation13 + $0x4f0] sm:$0xff]
        %v4533 = vld [vmem:[#allocation13 + $0x4f8] sm:$0xff]
        %v4534 = vld [vmem:[#allocation13 + $0x500] sm:$0xff]
        %v4535 = vld [vmem:[#allocation13 + $0x508] sm:$0xff]
        %v4536 = vld [vmem:[#allocation13 + $0x518] sm:$0xff]
        %v4537 = vld [vmem:[#allocation13 + $0x520] sm:$0xff]
        %v4538 = vld [vmem:[#allocation13 + $0x528] sm:$0xff]
        %v4539 = vld [vmem:[#allocation13 + $0x530] sm:$0xff]
        %v4540 = vld [vmem:[#allocation13 + $0x540] sm:$0xff]
        %v4541 = vld [vmem:[#allocation13 + $0x548] sm:$0xff]
        %v4542 = vld [vmem:[#allocation13 + $0x550] sm:$0xff]
        %v4543 = vld [vmem:[#allocation13 + $0x558] sm:$0xff]
        %v4544 = vld [vmem:[#allocation13 + $0x568] sm:$0xff]
        %v4545 = vld [vmem:[#allocation13 + $0x570] sm:$0xff]
        %v4546 = vld [vmem:[#allocation13 + $0x578] sm:$0xff]
        %v4547 = vld [vmem:[#allocation13 + $0x580] sm:$0xff]
        %v4548 = vld [vmem:[#allocation13 + $0x590] sm:$0xff]
        %v4549 = vld [vmem:[#allocation13 + $0x598] sm:$0xff]
        %v4550 = vld [vmem:[#allocation13 + $0x5a0] sm:$0xff]
        %v4551 = vld [vmem:[#allocation13 + $0x5a8] sm:$0xff]
        %v4552 = vld [vmem:[#allocation13 + $0x5b8] sm:$0xff]
        %v4553 = vld [vmem:[#allocation13 + $0x5c0] sm:$0xff]
        %v4554 = vld [vmem:[#allocation13 + $0x5c8] sm:$0xff]
        %v4555 = vld [vmem:[#allocation13 + $0x5d0] sm:$0xff]
        %v4556 = vld [vmem:[#allocation13 + $0x5e0] sm:$0xff]
        %v4557 = vld [vmem:[#allocation13 + $0x5e8] sm:$0xff]
        %v4558 = vld [vmem:[#allocation13 + $0x5f0] sm:$0xff]
        %v4559 = vld [vmem:[#allocation13 + $0x5f8] sm:$0xff]
        %v4560 = vld [vmem:[#allocation13 + $0x608] sm:$0xff]
        %v4561 = vld [vmem:[#allocation13 + $0x610] sm:$0xff]
        %v4562 = vld [vmem:[#allocation13 + $0x618] sm:$0xff]
        %v4563 = vld [vmem:[#allocation13 + $0x620] sm:$0xff]
        %v4564 = vld [vmem:[#allocation13 + $0x630] sm:$0xff]
        %v4565 = vld [vmem:[#allocation13 + $0x638] sm:$0xff]
        %v4566 = vld [vmem:[#allocation13 + $0x640] sm:$0xff]
        %v4567 = vld [vmem:[#allocation13 + $0x648] sm:$0xff]
        %v4568 = vld [vmem:[#allocation13 + $0x658] sm:$0xff]
        %v4569 = vld [vmem:[#allocation13 + $0x660] sm:$0xff]
        %v4570 = vld [vmem:[#allocation13 + $0x668] sm:$0xff]
        %v4571 = vld [vmem:[#allocation13 + $0x670] sm:$0xff]
        %v4572 = vld [vmem:[#allocation13 + $0x680] sm:$0xff]
        %v4573 = vld [vmem:[#allocation13 + $0x688] sm:$0xff]
        %v4574 = vld [vmem:[#allocation13 + $0x690] sm:$0xff]
        %v4575 = vld [vmem:[#allocation13 + $0x698] sm:$0xff]
        %v4576 = vld [vmem:[#allocation13 + $0x6a8] sm:$0xff]
        %v4577 = vld [vmem:[#allocation13 + $0x6b0] sm:$0xff]
        %v4578 = vld [vmem:[#allocation13 + $0x6b8] sm:$0xff]
        %v4579 = vld [vmem:[#allocation13 + $0x6c0] sm:$0xff]
        %v4580 = vld [vmem:[#allocation13 + $0x6d0] sm:$0xff]
        %v4581 = vld [vmem:[#allocation13 + $0x6d8] sm:$0xff]
        %v4582 = vld [vmem:[#allocation13 + $0x6e0] sm:$0xff]
        %v4583 = vld [vmem:[#allocation13 + $0x6e8] sm:$0xff]
        %v4584 = vld [vmem:[#allocation13 + $0x6f8] sm:$0xff]
        %v4585 = vld [vmem:[#allocation13 + $0x700] sm:$0xff]
        %v4586 = vld [vmem:[#allocation13 + $0x708] sm:$0xff]
        %v4587 = vld [vmem:[#allocation13 + $0x710] sm:$0xff]
        %v4588 = vld [vmem:[#allocation13 + $0x720] sm:$0xff]
        %v4589 = vld [vmem:[#allocation13 + $0x728] sm:$0xff]
        %v4590 = vld [vmem:[#allocation13 + $0x730] sm:$0xff]
        %v4591 = vld [vmem:[#allocation13 + $0x738] sm:$0xff]
        %v4592 = vld [vmem:[#allocation13 + $0x748] sm:$0xff]
        %v4593 = vld [vmem:[#allocation13 + $0x750] sm:$0xff]
        %v4594 = vld [vmem:[#allocation13 + $0x758] sm:$0xff]
        %v4595 = vld [vmem:[#allocation13 + $0x760] sm:$0xff]
        %v4596 = vld [vmem:[#allocation13 + $0x770] sm:$0xff]
        %v4597 = vld [vmem:[#allocation13 + $0x778] sm:$0xff]
        %v4598 = vld [vmem:[#allocation13 + $0x780] sm:$0xff]
        %v4599 = vld [vmem:[#allocation13 + $0x788] sm:$0xff]
        %v4600 = vld [vmem:[#allocation13 + $0x798] sm:$0xff]
        %v4601 = vld [vmem:[#allocation13 + $0x7a0] sm:$0xff]
        %v4602 = vld [vmem:[#allocation13 + $0x7a8] sm:$0xff]
        %v4603 = vld [vmem:[#allocation13 + $0x7b0] sm:$0xff]
        %v4604 = vld [vmem:[#allocation13 + $0x7c0] sm:$0xff]
        %v4605 = vld [vmem:[#allocation13 + $0x7c8] sm:$0xff]
        %v4606 = vld [vmem:[#allocation13 + $0x7d0] sm:$0xff]
        %v4607 = vld [vmem:[#allocation13 + $0x7d8] sm:$0xff]
        %v4608 = vld [vmem:[#allocation13 + $0x7e8] sm:$0xff]
        %v4609 = vld [vmem:[#allocation13 + $0x7f0] sm:$0xff]
        %v4610 = vld [vmem:[#allocation13 + $0x7f8] sm:$0xff]
        %v4611 = vld [vmem:[#allocation13 + $0x800] sm:$0xff]
        %v4612 = vld [vmem:[#allocation13 + $0x810] sm:$0xff]
        %v4613 = vld [vmem:[#allocation13 + $0x818] sm:$0xff]
        %v4614 = vld [vmem:[#allocation13 + $0x820] sm:$0xff]
        %v4615 = vld [vmem:[#allocation13 + $0x828] sm:$0xff]
        %v4616 = vld [vmem:[#allocation13 + $0x838] sm:$0xff]
        %v4617 = vld [vmem:[#allocation13 + $0x840] sm:$0xff]
        %v4618 = vld [vmem:[#allocation13 + $0x848] sm:$0xff]
        %v4619 = vld [vmem:[#allocation13 + $0x850] sm:$0xff]
        %v4620 = vld [vmem:[#allocation13 + $0x860] sm:$0xff]
        %v4621 = vld [vmem:[#allocation13 + $0x868] sm:$0xff]
        %v4622 = vld [vmem:[#allocation13 + $0x870] sm:$0xff]
        %v4623 = vld [vmem:[#allocation13 + $0x878] sm:$0xff]
        %v4624 = vld [vmem:[#allocation13 + $0x888] sm:$0xff]
        %v4625 = vld [vmem:[#allocation13 + $0x890] sm:$0xff]
        %v4626 = vld [vmem:[#allocation13 + $0x898] sm:$0xff]
        %v4627 = vld [vmem:[#allocation13 + $0x8a0] sm:$0xff]
        %v4628 = vld [vmem:[#allocation13 + $0x8b0] sm:$0xff]
        %v4629 = vld [vmem:[#allocation13 + $0x8b8] sm:$0xff]
        %v4630 = vld [vmem:[#allocation3] sm:$0x3e]
        %v4631 = vld [vmem:[#allocation3 + $0x8] sm:$0x3e]
        %v4632 = vld [vmem:[#allocation3 + $0x10] sm:$0x3e]
        %v4633 = vld [vmem:[#allocation3 + $0x18] sm:$0x3e]
        %s4634 = scalar_lea.vmem [#allocation13], 2240
        %v4635 = vld [vmem:[%s4634] sm:$0xff]
        %v4636 = vld [vmem:[%s4634 + $0x8] sm:$0xff]
        %v4637 = vld [vmem:[%s4634 + $0x18] sm:$0xff]
        %v4638 = vld [vmem:[%s4634 + $0x20] sm:$0xff]
        %v4639 = vld [vmem:[%s4634 + $0x28] sm:$0xff]
        %v4640 = vld [vmem:[%s4634 + $0x30] sm:$0xff]
        %v4641 = vld [vmem:[%s4634 + $0x40] sm:$0xff]
        %v4642 = vld [vmem:[%s4634 + $0x48] sm:$0xff]
        %v4643 = vld [vmem:[%s4634 + $0x50] sm:$0xff]
        %v4644 = vld [vmem:[%s4634 + $0x58] sm:$0xff]
        %v4645 = vld [vmem:[%s4634 + $0x68] sm:$0xff]
        %v4646 = vld [vmem:[%s4634 + $0x70] sm:$0xff]
        %v4647 = vld [vmem:[%s4634 + $0x78] sm:$0xff]
        %v4648 = vld [vmem:[%s4634 + $0x80] sm:$0xff]
        %v4649 = vld [vmem:[%s4634 + $0x90] sm:$0xff]
        %v4650 = vld [vmem:[%s4634 + $0x98] sm:$0xff]
        %v4651 = vld [vmem:[%s4634 + $0xa0] sm:$0xff]
        %v4652 = vld [vmem:[%s4634 + $0xa8] sm:$0xff]
        %v4653 = vld [vmem:[%s4634 + $0xb8] sm:$0xff]
        %v4654 = vld [vmem:[%s4634 + $0xc0] sm:$0xff]
        %v4655 = vld [vmem:[%s4634 + $0xc8] sm:$0xff]
        %v4656 = vld [vmem:[%s4634 + $0xd0] sm:$0xff]
        %v4657 = vld [vmem:[%s4634 + $0xe0] sm:$0xff]
        %v4658 = vld [vmem:[%s4634 + $0xe8] sm:$0xff]
        %v4659 = vld [vmem:[%s4634 + $0xf0] sm:$0xff]
        %v4660 = vld [vmem:[%s4634 + $0xf8] sm:$0xff]
        %v4661 = vld [vmem:[%s4634 + $0x108] sm:$0xff]
        %v4662 = vld [vmem:[%s4634 + $0x110] sm:$0xff]
        %v4663 = vld [vmem:[%s4634 + $0x118] sm:$0xff]
        %v4664 = vld [vmem:[%s4634 + $0x120] sm:$0xff]
        %v4665 = vld [vmem:[%s4634 + $0x130] sm:$0xff]
        %v4666 = vld [vmem:[%s4634 + $0x138] sm:$0xff]
        %v4667 = vld [vmem:[%s4634 + $0x140] sm:$0xff]
        %v4668 = vld [vmem:[%s4634 + $0x148] sm:$0xff]
        %v4669 = vld [vmem:[%s4634 + $0x158] sm:$0xff]
        %v4670 = vld [vmem:[%s4634 + $0x160] sm:$0xff]
        %v4671 = vld [vmem:[%s4634 + $0x168] sm:$0xff]
        %v4672 = vld [vmem:[%s4634 + $0x170] sm:$0xff]
        %v4673 = vld [vmem:[%s4634 + $0x180] sm:$0xff]
        %v4674 = vld [vmem:[%s4634 + $0x188] sm:$0xff]
        %v4675 = vld [vmem:[%s4634 + $0x190] sm:$0xff]
        %v4676 = vld [vmem:[%s4634 + $0x198] sm:$0xff]
        %v4677 = vld [vmem:[%s4634 + $0x1a8] sm:$0xff]
        %v4678 = vld [vmem:[%s4634 + $0x1b0] sm:$0xff]
        %v4679 = vld [vmem:[%s4634 + $0x1b8] sm:$0xff]
        %v4680 = vld [vmem:[%s4634 + $0x1c0] sm:$0xff]
        %v4681 = vld [vmem:[%s4634 + $0x1d0] sm:$0xff]
        %v4682 = vld [vmem:[%s4634 + $0x1d8] sm:$0xff]
        %v4683 = vld [vmem:[%s4634 + $0x1e0] sm:$0xff]
        %v4684 = vld [vmem:[%s4634 + $0x1e8] sm:$0xff]
        %v4685 = vld [vmem:[%s4634 + $0x1f8] sm:$0xff]
        %v4686 = vld [vmem:[%s4634 + $0x200] sm:$0xff]
        %v4687 = vld [vmem:[%s4634 + $0x208] sm:$0xff]
        %v4688 = vld [vmem:[%s4634 + $0x210] sm:$0xff]
        %v4689 = vld [vmem:[%s4634 + $0x220] sm:$0xff]
        %v4690 = vld [vmem:[%s4634 + $0x228] sm:$0xff]
        %v4691 = vld [vmem:[%s4634 + $0x230] sm:$0xff]
        %v4692 = vld [vmem:[%s4634 + $0x238] sm:$0xff]
        %v4693 = vld [vmem:[%s4634 + $0x248] sm:$0xff]
        %v4694 = vld [vmem:[%s4634 + $0x250] sm:$0xff]
        %v4695 = vld [vmem:[%s4634 + $0x258] sm:$0xff]
        %v4696 = vld [vmem:[%s4634 + $0x260] sm:$0xff]
        %v4697 = vld [vmem:[%s4634 + $0x270] sm:$0xff]
        %v4698 = vld [vmem:[%s4634 + $0x278] sm:$0xff]
        %v4699 = vld [vmem:[%s4634 + $0x280] sm:$0xff]
        %v4700 = vld [vmem:[%s4634 + $0x288] sm:$0xff]
        %v4701 = vld [vmem:[%s4634 + $0x298] sm:$0xff]
        %v4702 = vld [vmem:[%s4634 + $0x2a0] sm:$0xff]
        %v4703 = vld [vmem:[%s4634 + $0x2a8] sm:$0xff]
        %v4704 = vld [vmem:[%s4634 + $0x2b0] sm:$0xff]
        %v4705 = vld [vmem:[%s4634 + $0x2c0] sm:$0xff]
        %v4706 = vld [vmem:[%s4634 + $0x2c8] sm:$0xff]
        %v4707 = vld [vmem:[%s4634 + $0x2d0] sm:$0xff]
        %v4708 = vld [vmem:[%s4634 + $0x2d8] sm:$0xff]
        %v4709 = vld [vmem:[%s4634 + $0x2e8] sm:$0xff]
        %v4710 = vld [vmem:[%s4634 + $0x2f0] sm:$0xff]
        %v4711 = vld [vmem:[%s4634 + $0x2f8] sm:$0xff]
        %v4712 = vld [vmem:[%s4634 + $0x300] sm:$0xff]
        %v4713 = vld [vmem:[%s4634 + $0x310] sm:$0xff]
        %v4714 = vld [vmem:[%s4634 + $0x318] sm:$0xff]
        %v4715 = vld [vmem:[%s4634 + $0x320] sm:$0xff]
        %v4716 = vld [vmem:[%s4634 + $0x328] sm:$0xff]
        %v4717 = vld [vmem:[%s4634 + $0x338] sm:$0xff]
        %v4718 = vld [vmem:[%s4634 + $0x340] sm:$0xff]
        %v4719 = vld [vmem:[%s4634 + $0x348] sm:$0xff]
        %v4720 = vld [vmem:[%s4634 + $0x350] sm:$0xff]
        %v4721 = vld [vmem:[%s4634 + $0x360] sm:$0xff]
        %v4722 = vld [vmem:[%s4634 + $0x368] sm:$0xff]
        %v4723 = vld [vmem:[%s4634 + $0x370] sm:$0xff]
        %v4724 = vld [vmem:[%s4634 + $0x378] sm:$0xff]
        %v4725 = vld [vmem:[%s4634 + $0x388] sm:$0xff]
        %v4726 = vld [vmem:[%s4634 + $0x390] sm:$0xff]
        %v4727 = vld [vmem:[%s4634 + $0x398] sm:$0xff]
        %v4728 = vld [vmem:[%s4634 + $0x3a0] sm:$0xff]
        %v4729 = vld [vmem:[%s4634 + $0x3b0] sm:$0xff]
        %v4730 = vld [vmem:[%s4634 + $0x3b8] sm:$0xff]
        %v4731 = vld [vmem:[%s4634 + $0x3c0] sm:$0xff]
        %v4732 = vld [vmem:[%s4634 + $0x3c8] sm:$0xff]
        %v4733 = vld [vmem:[%s4634 + $0x3d8] sm:$0xff]
        %v4734 = vld [vmem:[%s4634 + $0x3e0] sm:$0xff]
        %v4735 = vld [vmem:[%s4634 + $0x3e8] sm:$0xff]
        %v4736 = vld [vmem:[%s4634 + $0x3f0] sm:$0xff]
        %v4737 = vld [vmem:[%s4634 + $0x400] sm:$0xff]
        %v4738 = vld [vmem:[%s4634 + $0x408] sm:$0xff]
        %v4739 = vld [vmem:[%s4634 + $0x410] sm:$0xff]
        %v4740 = vld [vmem:[%s4634 + $0x418] sm:$0xff]
        %v4741 = vld [vmem:[%s4634 + $0x428] sm:$0xff]
        %v4742 = vld [vmem:[%s4634 + $0x430] sm:$0xff]
        %v4743 = vld [vmem:[%s4634 + $0x438] sm:$0xff]
        %v4744 = vld [vmem:[%s4634 + $0x440] sm:$0xff]
        %v4745 = vld [vmem:[%s4634 + $0x450] sm:$0xff]
        %v4746 = vld [vmem:[%s4634 + $0x458] sm:$0xff]
        %v4747 = vld [vmem:[%s4634 + $0x460] sm:$0xff]
        %v4748 = vld [vmem:[%s4634 + $0x468] sm:$0xff]
        %v4749 = vld [vmem:[%s4634 + $0x478] sm:$0xff]
        %v4750 = vld [vmem:[%s4634 + $0x480] sm:$0xff]
        %v4751 = vld [vmem:[%s4634 + $0x488] sm:$0xff]
        %v4752 = vld [vmem:[%s4634 + $0x490] sm:$0xff]
        %v4753 = vld [vmem:[%s4634 + $0x4a0] sm:$0xff]
        %v4754 = vld [vmem:[%s4634 + $0x4a8] sm:$0xff]
        %v4755 = vld [vmem:[%s4634 + $0x4b0] sm:$0xff]
        %v4756 = vld [vmem:[%s4634 + $0x4b8] sm:$0xff]
        %v4757 = vld [vmem:[%s4634 + $0x4c8] sm:$0xff]
        %v4758 = vld [vmem:[%s4634 + $0x4d0] sm:$0xff]
        %v4759 = vld [vmem:[%s4634 + $0x4d8] sm:$0xff]
        %v4760 = vld [vmem:[%s4634 + $0x4e0] sm:$0xff]
        %v4761 = vld [vmem:[%s4634 + $0x4f0] sm:$0xff]
        %v4762 = vld [vmem:[%s4634 + $0x4f8] sm:$0xff]
        %v4763 = vld [vmem:[%s4634 + $0x500] sm:$0xff]
        %v4764 = vld [vmem:[%s4634 + $0x508] sm:$0xff]
        %v4765 = vld [vmem:[%s4634 + $0x518] sm:$0xff]
        %v4766 = vld [vmem:[%s4634 + $0x520] sm:$0xff]
        %v4767 = vld [vmem:[%s4634 + $0x528] sm:$0xff]
        %v4768 = vld [vmem:[%s4634 + $0x530] sm:$0xff]
        %v4769 = vld [vmem:[%s4634 + $0x540] sm:$0xff]
        %v4770 = vld [vmem:[%s4634 + $0x548] sm:$0xff]
        %v4771 = vld [vmem:[%s4634 + $0x550] sm:$0xff]
        %v4772 = vld [vmem:[%s4634 + $0x558] sm:$0xff]
        %v4773 = vld [vmem:[%s4634 + $0x568] sm:$0xff]
        %v4774 = vld [vmem:[%s4634 + $0x570] sm:$0xff]
        %v4775 = vld [vmem:[%s4634 + $0x578] sm:$0xff]
        %v4776 = vld [vmem:[%s4634 + $0x580] sm:$0xff]
        %v4777 = vld [vmem:[%s4634 + $0x590] sm:$0xff]
        %v4778 = vld [vmem:[%s4634 + $0x598] sm:$0xff]
        %v4779 = vld [vmem:[%s4634 + $0x5a0] sm:$0xff]
        %v4780 = vld [vmem:[%s4634 + $0x5a8] sm:$0xff]
        %v4781 = vld [vmem:[%s4634 + $0x5b8] sm:$0xff]
        %v4782 = vld [vmem:[%s4634 + $0x5c0] sm:$0xff]
        %v4783 = vld [vmem:[%s4634 + $0x5c8] sm:$0xff]
        %v4784 = vld [vmem:[%s4634 + $0x5d0] sm:$0xff]
        %v4785 = vld [vmem:[%s4634 + $0x5e0] sm:$0xff]
        %v4786 = vld [vmem:[%s4634 + $0x5e8] sm:$0xff]
        %v4787 = vld [vmem:[%s4634 + $0x5f0] sm:$0xff]
        %v4788 = vld [vmem:[%s4634 + $0x5f8] sm:$0xff]
        %v4789 = vld [vmem:[%s4634 + $0x608] sm:$0xff]
        %v4790 = vld [vmem:[%s4634 + $0x610] sm:$0xff]
        %v4791 = vld [vmem:[%s4634 + $0x618] sm:$0xff]
        %v4792 = vld [vmem:[%s4634 + $0x620] sm:$0xff]
        %v4793 = vld [vmem:[%s4634 + $0x630] sm:$0xff]
        %v4794 = vld [vmem:[%s4634 + $0x638] sm:$0xff]
        %v4795 = vld [vmem:[%s4634 + $0x640] sm:$0xff]
        %v4796 = vld [vmem:[%s4634 + $0x648] sm:$0xff]
        %v4797 = vld [vmem:[%s4634 + $0x658] sm:$0xff]
        %v4798 = vld [vmem:[%s4634 + $0x660] sm:$0xff]
        %v4799 = vld [vmem:[%s4634 + $0x668] sm:$0xff]
        %v4800 = vld [vmem:[%s4634 + $0x670] sm:$0xff]
        %v4801 = vld [vmem:[%s4634 + $0x680] sm:$0xff]
        %v4802 = vld [vmem:[%s4634 + $0x688] sm:$0xff]
        %v4803 = vld [vmem:[%s4634 + $0x690] sm:$0xff]
        %v4804 = vld [vmem:[%s4634 + $0x698] sm:$0xff]
        %v4805 = vld [vmem:[%s4634 + $0x6a8] sm:$0xff]
        %v4806 = vld [vmem:[%s4634 + $0x6b0] sm:$0xff]
        %v4807 = vld [vmem:[%s4634 + $0x6b8] sm:$0xff]
        %v4808 = vld [vmem:[%s4634 + $0x6c0] sm:$0xff]
        %v4809 = vld [vmem:[%s4634 + $0x6d0] sm:$0xff]
        %v4810 = vld [vmem:[%s4634 + $0x6d8] sm:$0xff]
        %v4811 = vld [vmem:[%s4634 + $0x6e0] sm:$0xff]
        %v4812 = vld [vmem:[%s4634 + $0x6e8] sm:$0xff]
        %v4813 = vld [vmem:[%s4634 + $0x6f8] sm:$0xff]
        %v4814 = vld [vmem:[%s4634 + $0x700] sm:$0xff]
        %v4815 = vld [vmem:[%s4634 + $0x708] sm:$0xff]
        %v4816 = vld [vmem:[%s4634 + $0x710] sm:$0xff]
        %v4817 = vld [vmem:[%s4634 + $0x720] sm:$0xff]
        %v4818 = vld [vmem:[%s4634 + $0x728] sm:$0xff]
        %v4819 = vld [vmem:[%s4634 + $0x730] sm:$0xff]
        %v4820 = vld [vmem:[%s4634 + $0x738] sm:$0xff]
        %v4821 = vld [vmem:[%s4634 + $0x748] sm:$0xff]
        %v4822 = vld [vmem:[%s4634 + $0x750] sm:$0xff]
        %v4823 = vld [vmem:[%s4634 + $0x758] sm:$0xff]
        %v4824 = vld [vmem:[%s4634 + $0x760] sm:$0xff]
        %v4825 = vld [vmem:[%s4634 + $0x770] sm:$0xff]
        %v4826 = vld [vmem:[%s4634 + $0x778] sm:$0xff]
        %v4827 = vld [vmem:[%s4634 + $0x780] sm:$0xff]
        %v4828 = vld [vmem:[%s4634 + $0x788] sm:$0xff]
        %v4829 = vld [vmem:[%s4634 + $0x798] sm:$0xff]
        %v4830 = vld [vmem:[%s4634 + $0x7a0] sm:$0xff]
        %v4831 = vld [vmem:[%s4634 + $0x7a8] sm:$0xff]
        %v4832 = vld [vmem:[%s4634 + $0x7b0] sm:$0xff]
        %v4833 = vld [vmem:[%s4634 + $0x7c0] sm:$0xff]
        %v4834 = vld [vmem:[%s4634 + $0x7c8] sm:$0xff]
        %v4835 = vld [vmem:[%s4634 + $0x7d0] sm:$0xff]
        %v4836 = vld [vmem:[%s4634 + $0x7d8] sm:$0xff]
        %v4837 = vld [vmem:[%s4634 + $0x7e8] sm:$0xff]
        %v4838 = vld [vmem:[%s4634 + $0x7f0] sm:$0xff]
        %v4839 = vld [vmem:[%s4634 + $0x7f8] sm:$0xff]
        %v4840 = vld [vmem:[%s4634 + $0x800] sm:$0xff]
        %v4841 = vld [vmem:[%s4634 + $0x810] sm:$0xff]
        %v4842 = vld [vmem:[%s4634 + $0x818] sm:$0xff]
        %v4843 = vld [vmem:[%s4634 + $0x820] sm:$0xff]
        %v4844 = vld [vmem:[%s4634 + $0x828] sm:$0xff]
        %v4845 = vld [vmem:[%s4634 + $0x838] sm:$0xff]
        %v4846 = vld [vmem:[%s4634 + $0x840] sm:$0xff]
        %v4847 = vld [vmem:[%s4634 + $0x848] sm:$0xff]
        %v4848 = vld [vmem:[%s4634 + $0x850] sm:$0xff]
        %v4849 = vld [vmem:[%s4634 + $0x860] sm:$0xff]
        %v4850 = vld [vmem:[%s4634 + $0x868] sm:$0xff]
        %v4851 = vld [vmem:[%s4634 + $0x870] sm:$0xff]
        %v4852 = vld [vmem:[%s4634 + $0x878] sm:$0xff]
        %v4853 = vld [vmem:[%s4634 + $0x888] sm:$0xff]
        %v4854 = vld [vmem:[%s4634 + $0x890] sm:$0xff]
        %v4855 = vld [vmem:[%s4634 + $0x898] sm:$0xff]
        %v4856 = vld [vmem:[%s4634 + $0x8a0] sm:$0xff]
        %v4857 = vld [vmem:[%s4634 + $0x8b0] sm:$0xff]
        %v4858 = vld [vmem:[%s4634 + $0x8b8] sm:$0xff]
        %v4863 = vrot.slane %v4630, 1
        %v4864 = vrot.slane %v4631, 1
        %v4865 = vrot.slane %v4632, 1
        %v4866 = vrot.slane %v4633, 1
        %v4870 = vsel %vm4267, %v4866, 0
        %4872 = vmatpush.msra.mxu0 %v4695
        %4873 = vmatpush.msra.mxu0 %v4691
        %4874 = vmatpush.msra.mxu0 %v4687
        %4875 = vmatpush.msra.mxu0 %v4683
        %4876 = vmatpush.msra.mxu0 %v4679
        %4877 = vmatpush.msra.mxu0 %v4675
        %4878 = vmatpush.msra.mxu0 %v4671
        %4879 = vmatpush.msra.mxu0 %v4667
        %4880 = vmatpush.msra.mxu0 %v4663
        %4881 = vmatpush.msra.mxu0 %v4659
        %4882 = vmatpush.msra.mxu0 %v4655
        %4883 = vmatpush.msra.mxu0 %v4651
        %4884 = vmatpush.msra.mxu0 %v4647
        %4885 = vmatpush.msra.mxu0 %v4643
        %4886 = vmatpush.msra.mxu0 %v4639
        %4887 = vmatpush.msra.mxu0 %v4635
        %4888 = vmatmul.f32.gmra.mxu0 %v4863
        %v4889 = vpop.f32.mrf.mxu0
        %v4890 = vadd.f32 0.0, %v4889
        %4891 = vdwg.mxu0
        %4892 = vmatpush.msra.mxu0 %v4759
        %4893 = vmatpush.msra.mxu0 %v4755
        %4894 = vmatpush.msra.mxu0 %v4751
        %4895 = vmatpush.msra.mxu0 %v4747
        %4896 = vmatpush.msra.mxu0 %v4743
        %4897 = vmatpush.msra.mxu0 %v4739
        %4898 = vmatpush.msra.mxu0 %v4735
        %4899 = vmatpush.msra.mxu0 %v4731
        %4900 = vmatpush.msra.mxu0 %v4727
        %4901 = vmatpush.msra.mxu0 %v4723
        %4902 = vmatpush.msra.mxu0 %v4719
        %4903 = vmatpush.msra.mxu0 %v4715
        %4904 = vmatpush.msra.mxu0 %v4711
        %4905 = vmatpush.msra.mxu0 %v4707
        %4906 = vmatpush.msra.mxu0 %v4703
        %4907 = vmatpush.msra.mxu0 %v4699
        %4908 = vmatmul.f32.gmra.mxu0 %v4864
        %v4909 = vpop.f32.mrf.mxu0
        %v4910 = vadd.f32 %v4890, %v4909
        %4911 = vdwg.mxu0
        %4912 = vmatpush.msra.mxu0 %v4823
        %4913 = vmatpush.msra.mxu0 %v4819
        %4914 = vmatpush.msra.mxu0 %v4815
        %4915 = vmatpush.msra.mxu0 %v4811
        %4916 = vmatpush.msra.mxu0 %v4807
        %4917 = vmatpush.msra.mxu0 %v4803
        %4918 = vmatpush.msra.mxu0 %v4799
        %4919 = vmatpush.msra.mxu0 %v4795
        %4920 = vmatpush.msra.mxu0 %v4791
        %4921 = vmatpush.msra.mxu0 %v4787
        %4922 = vmatpush.msra.mxu0 %v4783
        %4923 = vmatpush.msra.mxu0 %v4779
        %4924 = vmatpush.msra.mxu0 %v4775
        %4925 = vmatpush.msra.mxu0 %v4771
        %4926 = vmatpush.msra.mxu0 %v4767
        %4927 = vmatpush.msra.mxu0 %v4763
        %4928 = vmatmul.f32.gmra.mxu0 %v4865
        %v4929 = vpop.f32.mrf.mxu0
        %v4930 = vadd.f32 %v4910, %v4929
        %4931 = vdwg.mxu0
        %4932 = vmatpush.msra.mxu0 0.0
        %4933 = vmatpush.msra.mxu0 0.0
        %4934 = vmatpush.msra.mxu0 0.0
        %4935 = vmatpush.msra.mxu0 0.0
        %4936 = vmatpush.msra.mxu0 0.0
        %4937 = vmatpush.msra.mxu0 0.0
        %4938 = vmatpush.msra.mxu0 0.0
        %4939 = vmatpush.msra.mxu0 0.0
        %4940 = vmatpush.msra.mxu0 %v4855
        %4941 = vmatpush.msra.mxu0 %v4851
        %4942 = vmatpush.msra.mxu0 %v4847
        %4943 = vmatpush.msra.mxu0 %v4843
        %4944 = vmatpush.msra.mxu0 %v4839
        %4945 = vmatpush.msra.mxu0 %v4835
        %4946 = vmatpush.msra.mxu0 %v4831
        %4947 = vmatpush.msra.mxu0 %v4827
        %4948 = vmatmul.f32.gmra.mxu0 %v4870
        %v4949 = vpop.f32.mrf.mxu0
        %v4950 = vadd.f32 %v4930, %v4949
        %4951 = vdwg.mxu0
        %4952 = vmatpush.msra.mxu0 %v4696
        %4953 = vmatpush.msra.mxu0 %v4692
        %4954 = vmatpush.msra.mxu0 %v4688
        %4955 = vmatpush.msra.mxu0 %v4684
        %4956 = vmatpush.msra.mxu0 %v4680
        %4957 = vmatpush.msra.mxu0 %v4676
        %4958 = vmatpush.msra.mxu0 %v4672
        %4959 = vmatpush.msra.mxu0 %v4668
        %4960 = vmatpush.msra.mxu0 %v4664
        %4961 = vmatpush.msra.mxu0 %v4660
        %4962 = vmatpush.msra.mxu0 %v4656
        %4963 = vmatpush.msra.mxu0 %v4652
        %4964 = vmatpush.msra.mxu0 %v4648
        %4965 = vmatpush.msra.mxu0 %v4644
        %4966 = vmatpush.msra.mxu0 %v4640
        %4967 = vmatpush.msra.mxu0 %v4636
        %4968 = vmatmul.f32.gmra.mxu0 %v4863
        %v4969 = vpop.f32.mrf.mxu0
        %v4970 = vadd.f32 0.0, %v4969
        %4971 = vdwg.mxu0
        %4972 = vmatpush.msra.mxu0 %v4760
        %4973 = vmatpush.msra.mxu0 %v4756
        %4974 = vmatpush.msra.mxu0 %v4752
        %4975 = vmatpush.msra.mxu0 %v4748
        %4976 = vmatpush.msra.mxu0 %v4744
        %4977 = vmatpush.msra.mxu0 %v4740
        %4978 = vmatpush.msra.mxu0 %v4736
        %4979 = vmatpush.msra.mxu0 %v4732
        %4980 = vmatpush.msra.mxu0 %v4728
        %4981 = vmatpush.msra.mxu0 %v4724
        %4982 = vmatpush.msra.mxu0 %v4720
        %4983 = vmatpush.msra.mxu0 %v4716
        %4984 = vmatpush.msra.mxu0 %v4712
        %4985 = vmatpush.msra.mxu0 %v4708
        %4986 = vmatpush.msra.mxu0 %v4704
        %4987 = vmatpush.msra.mxu0 %v4700
        %4988 = vmatmul.f32.gmra.mxu0 %v4864
        %v4989 = vpop.f32.mrf.mxu0
        %v4990 = vadd.f32 %v4970, %v4989
        %4991 = vdwg.mxu0
        %4992 = vmatpush.msra.mxu0 %v4824
        %4993 = vmatpush.msra.mxu0 %v4820
        %4994 = vmatpush.msra.mxu0 %v4816
        %4995 = vmatpush.msra.mxu0 %v4812
        %4996 = vmatpush.msra.mxu0 %v4808
        %4997 = vmatpush.msra.mxu0 %v4804
        %4998 = vmatpush.msra.mxu0 %v4800
        %4999 = vmatpush.msra.mxu0 %v4796
        %5000 = vmatpush.msra.mxu0 %v4792
        %5001 = vmatpush.msra.mxu0 %v4788
        %5002 = vmatpush.msra.mxu0 %v4784
        %5003 = vmatpush.msra.mxu0 %v4780
        %5004 = vmatpush.msra.mxu0 %v4776
        %5005 = vmatpush.msra.mxu0 %v4772
        %5006 = vmatpush.msra.mxu0 %v4768
        %5007 = vmatpush.msra.mxu0 %v4764
        %5008 = vmatmul.f32.gmra.mxu0 %v4865
        %v5009 = vpop.f32.mrf.mxu0
        %v5010 = vadd.f32 %v4990, %v5009
        %5011 = vdwg.mxu0
        %5012 = vmatpush.msra.mxu0 0.0
        %5013 = vmatpush.msra.mxu0 0.0
        %5014 = vmatpush.msra.mxu0 0.0
        %5015 = vmatpush.msra.mxu0 0.0
        %5016 = vmatpush.msra.mxu0 0.0
        %5017 = vmatpush.msra.mxu0 0.0
        %5018 = vmatpush.msra.mxu0 0.0
        %5019 = vmatpush.msra.mxu0 0.0
        %5020 = vmatpush.msra.mxu0 %v4856
        %5021 = vmatpush.msra.mxu0 %v4852
        %5022 = vmatpush.msra.mxu0 %v4848
        %5023 = vmatpush.msra.mxu0 %v4844
        %5024 = vmatpush.msra.mxu0 %v4840
        %5025 = vmatpush.msra.mxu0 %v4836
        %5026 = vmatpush.msra.mxu0 %v4832
        %5027 = vmatpush.msra.mxu0 %v4828
        %5028 = vmatmul.f32.gmra.mxu0 %v4870
        %v5029 = vpop.f32.mrf.mxu0
        %v5030 = vadd.f32 %v5010, %v5029
        %5031 = vdwg.mxu0
        %5032 = vmatpush.msra.mxu0 %v4697
        %5033 = vmatpush.msra.mxu0 %v4693
        %5034 = vmatpush.msra.mxu0 %v4689
        %5035 = vmatpush.msra.mxu0 %v4685
        %5036 = vmatpush.msra.mxu0 %v4681
        %5037 = vmatpush.msra.mxu0 %v4677
        %5038 = vmatpush.msra.mxu0 %v4673
        %5039 = vmatpush.msra.mxu0 %v4669
        %5040 = vmatpush.msra.mxu0 %v4665
        %5041 = vmatpush.msra.mxu0 %v4661
        %5042 = vmatpush.msra.mxu0 %v4657
        %5043 = vmatpush.msra.mxu0 %v4653
        %5044 = vmatpush.msra.mxu0 %v4649
        %5045 = vmatpush.msra.mxu0 %v4645
        %5046 = vmatpush.msra.mxu0 %v4641
        %5047 = vmatpush.msra.mxu0 %v4637
        %5048 = vmatmul.f32.gmra.mxu0 %v4863
        %v5049 = vpop.f32.mrf.mxu0
        %v5050 = vadd.f32 0.0, %v5049
        %5051 = vdwg.mxu0
        %5052 = vmatpush.msra.mxu0 %v4761
        %5053 = vmatpush.msra.mxu0 %v4757
        %5054 = vmatpush.msra.mxu0 %v4753
        %5055 = vmatpush.msra.mxu0 %v4749
        %5056 = vmatpush.msra.mxu0 %v4745
        %5057 = vmatpush.msra.mxu0 %v4741
        %5058 = vmatpush.msra.mxu0 %v4737
        %5059 = vmatpush.msra.mxu0 %v4733
        %5060 = vmatpush.msra.mxu0 %v4729
        %5061 = vmatpush.msra.mxu0 %v4725
        %5062 = vmatpush.msra.mxu0 %v4721
        %5063 = vmatpush.msra.mxu0 %v4717
        %5064 = vmatpush.msra.mxu0 %v4713
        %5065 = vmatpush.msra.mxu0 %v4709
        %5066 = vmatpush.msra.mxu0 %v4705
        %5067 = vmatpush.msra.mxu0 %v4701
        %5068 = vmatmul.f32.gmra.mxu0 %v4864
        %v5069 = vpop.f32.mrf.mxu0
        %v5070 = vadd.f32 %v5050, %v5069
        %5071 = vdwg.mxu0
        %5072 = vmatpush.msra.mxu0 %v4825
        %5073 = vmatpush.msra.mxu0 %v4821
        %5074 = vmatpush.msra.mxu0 %v4817
        %5075 = vmatpush.msra.mxu0 %v4813
        %5076 = vmatpush.msra.mxu0 %v4809
        %5077 = vmatpush.msra.mxu0 %v4805
        %5078 = vmatpush.msra.mxu0 %v4801
        %5079 = vmatpush.msra.mxu0 %v4797
        %5080 = vmatpush.msra.mxu0 %v4793
        %5081 = vmatpush.msra.mxu0 %v4789
        %5082 = vmatpush.msra.mxu0 %v4785
        %5083 = vmatpush.msra.mxu0 %v4781
        %5084 = vmatpush.msra.mxu0 %v4777
        %5085 = vmatpush.msra.mxu0 %v4773
        %5086 = vmatpush.msra.mxu0 %v4769
        %5087 = vmatpush.msra.mxu0 %v4765
        %5088 = vmatmul.f32.gmra.mxu0 %v4865
        %v5089 = vpop.f32.mrf.mxu0
        %v5090 = vadd.f32 %v5070, %v5089
        %5091 = vdwg.mxu0
        %5092 = vmatpush.msra.mxu0 0.0
        %5093 = vmatpush.msra.mxu0 0.0
        %5094 = vmatpush.msra.mxu0 0.0
        %5095 = vmatpush.msra.mxu0 0.0
        %5096 = vmatpush.msra.mxu0 0.0
        %5097 = vmatpush.msra.mxu0 0.0
        %5098 = vmatpush.msra.mxu0 0.0
        %5099 = vmatpush.msra.mxu0 0.0
        %5100 = vmatpush.msra.mxu0 %v4857
        %5101 = vmatpush.msra.mxu0 %v4853
        %5102 = vmatpush.msra.mxu0 %v4849
        %5103 = vmatpush.msra.mxu0 %v4845
        %5104 = vmatpush.msra.mxu0 %v4841
        %5105 = vmatpush.msra.mxu0 %v4837
        %5106 = vmatpush.msra.mxu0 %v4833
        %5107 = vmatpush.msra.mxu0 %v4829
        %5108 = vmatmul.f32.gmra.mxu0 %v4870
        %v5109 = vpop.f32.mrf.mxu0
        %v5110 = vadd.f32 %v5090, %v5109
        %5111 = vdwg.mxu0
        %5112 = vmatpush.msra.mxu0 %v4698
        %5113 = vmatpush.msra.mxu0 %v4694
        %5114 = vmatpush.msra.mxu0 %v4690
        %5115 = vmatpush.msra.mxu0 %v4686
        %5116 = vmatpush.msra.mxu0 %v4682
        %5117 = vmatpush.msra.mxu0 %v4678
        %5118 = vmatpush.msra.mxu0 %v4674
        %5119 = vmatpush.msra.mxu0 %v4670
        %5120 = vmatpush.msra.mxu0 %v4666
        %5121 = vmatpush.msra.mxu0 %v4662
        %5122 = vmatpush.msra.mxu0 %v4658
        %5123 = vmatpush.msra.mxu0 %v4654
        %5124 = vmatpush.msra.mxu0 %v4650
        %5125 = vmatpush.msra.mxu0 %v4646
        %5126 = vmatpush.msra.mxu0 %v4642
        %5127 = vmatpush.msra.mxu0 %v4638
        %5128 = vmatmul.f32.gmra.mxu0 %v4863
        %v5129 = vpop.f32.mrf.mxu0
        %v5130 = vadd.f32 0.0, %v5129
        %5131 = vdwg.mxu0
        %5132 = vmatpush.msra.mxu0 %v4762
        %5133 = vmatpush.msra.mxu0 %v4758
        %5134 = vmatpush.msra.mxu0 %v4754
        %5135 = vmatpush.msra.mxu0 %v4750
        %5136 = vmatpush.msra.mxu0 %v4746
        %5137 = vmatpush.msra.mxu0 %v4742
        %5138 = vmatpush.msra.mxu0 %v4738
        %5139 = vmatpush.msra.mxu0 %v4734
        %5140 = vmatpush.msra.mxu0 %v4730
        %5141 = vmatpush.msra.mxu0 %v4726
        %5142 = vmatpush.msra.mxu0 %v4722
        %5143 = vmatpush.msra.mxu0 %v4718
        %5144 = vmatpush.msra.mxu0 %v4714
        %5145 = vmatpush.msra.mxu0 %v4710
        %5146 = vmatpush.msra.mxu0 %v4706
        %5147 = vmatpush.msra.mxu0 %v4702
        %5148 = vmatmul.f32.gmra.mxu0 %v4864
        %v5149 = vpop.f32.mrf.mxu0
        %v5150 = vadd.f32 %v5130, %v5149
        %5151 = vdwg.mxu0
        %5152 = vmatpush.msra.mxu0 %v4826
        %5153 = vmatpush.msra.mxu0 %v4822
        %5154 = vmatpush.msra.mxu0 %v4818
        %5155 = vmatpush.msra.mxu0 %v4814
        %5156 = vmatpush.msra.mxu0 %v4810
        %5157 = vmatpush.msra.mxu0 %v4806
        %5158 = vmatpush.msra.mxu0 %v4802
        %5159 = vmatpush.msra.mxu0 %v4798
        %5160 = vmatpush.msra.mxu0 %v4794
        %5161 = vmatpush.msra.mxu0 %v4790
        %5162 = vmatpush.msra.mxu0 %v4786
        %5163 = vmatpush.msra.mxu0 %v4782
        %5164 = vmatpush.msra.mxu0 %v4778
        %5165 = vmatpush.msra.mxu0 %v4774
        %5166 = vmatpush.msra.mxu0 %v4770
        %5167 = vmatpush.msra.mxu0 %v4766
        %5168 = vmatmul.f32.gmra.mxu0 %v4865
        %v5169 = vpop.f32.mrf.mxu0
        %v5170 = vadd.f32 %v5150, %v5169
        %5171 = vdwg.mxu0
        %5172 = vmatpush.msra.mxu0 0.0
        %5173 = vmatpush.msra.mxu0 0.0
        %5174 = vmatpush.msra.mxu0 0.0
        %5175 = vmatpush.msra.mxu0 0.0
        %5176 = vmatpush.msra.mxu0 0.0
        %5177 = vmatpush.msra.mxu0 0.0
        %5178 = vmatpush.msra.mxu0 0.0
        %5179 = vmatpush.msra.mxu0 0.0
        %5180 = vmatpush.msra.mxu0 %v4858
        %5181 = vmatpush.msra.mxu0 %v4854
        %5182 = vmatpush.msra.mxu0 %v4850
        %5183 = vmatpush.msra.mxu0 %v4846
        %5184 = vmatpush.msra.mxu0 %v4842
        %5185 = vmatpush.msra.mxu0 %v4838
        %5186 = vmatpush.msra.mxu0 %v4834
        %5187 = vmatpush.msra.mxu0 %v4830
        %5188 = vmatmul.f32.gmra.mxu0 %v4870
        %v5189 = vpop.f32.mrf.mxu0
        %v5190 = vadd.f32 %v5170, %v5189
        %5191 = vdwg.mxu0
        %v5193 = vsel %vm4267, %v4405, 0
        %5195 = vmatpush.msra.mxu0 %v4466
        %5196 = vmatpush.msra.mxu0 %v4462
        %5197 = vmatpush.msra.mxu0 %v4458
        %5198 = vmatpush.msra.mxu0 %v4454
        %5199 = vmatpush.msra.mxu0 %v4450
        %5200 = vmatpush.msra.mxu0 %v4446
        %5201 = vmatpush.msra.mxu0 %v4442
        %5202 = vmatpush.msra.mxu0 %v4438
        %5203 = vmatpush.msra.mxu0 %v4434
        %5204 = vmatpush.msra.mxu0 %v4430
        %5205 = vmatpush.msra.mxu0 %v4426
        %5206 = vmatpush.msra.mxu0 %v4422
        %5207 = vmatpush.msra.mxu0 %v4418
        %5208 = vmatpush.msra.mxu0 %v4414
        %5209 = vmatpush.msra.mxu0 %v4410
        %5210 = vmatpush.msra.mxu0 %v4406
        %5211 = vmatmul.f32.gmra.mxu0 %v4402
        %v5212 = vpop.f32.mrf.mxu0
        %v5213 = vadd.f32 %v4950, %v5212
        %5214 = vdwg.mxu0
        %5215 = vmatpush.msra.mxu0 %v4530
        %5216 = vmatpush.msra.mxu0 %v4526
        %5217 = vmatpush.msra.mxu0 %v4522
        %5218 = vmatpush.msra.mxu0 %v4518
        %5219 = vmatpush.msra.mxu0 %v4514
        %5220 = vmatpush.msra.mxu0 %v4510
        %5221 = vmatpush.msra.mxu0 %v4506
        %5222 = vmatpush.msra.mxu0 %v4502
        %5223 = vmatpush.msra.mxu0 %v4498
        %5224 = vmatpush.msra.mxu0 %v4494
        %5225 = vmatpush.msra.mxu0 %v4490
        %5226 = vmatpush.msra.mxu0 %v4486
        %5227 = vmatpush.msra.mxu0 %v4482
        %5228 = vmatpush.msra.mxu0 %v4478
        %5229 = vmatpush.msra.mxu0 %v4474
        %5230 = vmatpush.msra.mxu0 %v4470
        %5231 = vmatmul.f32.gmra.mxu0 %v4403
        %v5232 = vpop.f32.mrf.mxu0
        %v5233 = vadd.f32 %v5213, %v5232
        %5234 = vdwg.mxu0
        %5235 = vmatpush.msra.mxu0 %v4594
        %5236 = vmatpush.msra.mxu0 %v4590
        %5237 = vmatpush.msra.mxu0 %v4586
        %5238 = vmatpush.msra.mxu0 %v4582
        %5239 = vmatpush.msra.mxu0 %v4578
        %5240 = vmatpush.msra.mxu0 %v4574
        %5241 = vmatpush.msra.mxu0 %v4570
        %5242 = vmatpush.msra.mxu0 %v4566
        %5243 = vmatpush.msra.mxu0 %v4562
        %5244 = vmatpush.msra.mxu0 %v4558
        %5245 = vmatpush.msra.mxu0 %v4554
        %5246 = vmatpush.msra.mxu0 %v4550
        %5247 = vmatpush.msra.mxu0 %v4546
        %5248 = vmatpush.msra.mxu0 %v4542
        %5249 = vmatpush.msra.mxu0 %v4538
        %5250 = vmatpush.msra.mxu0 %v4534
        %5251 = vmatmul.f32.gmra.mxu0 %v4404
        %v5252 = vpop.f32.mrf.mxu0
        %v5253 = vadd.f32 %v5233, %v5252
        %5254 = vdwg.mxu0
        %5255 = vmatpush.msra.mxu0 0.0
        %5256 = vmatpush.msra.mxu0 0.0
        %5257 = vmatpush.msra.mxu0 0.0
        %5258 = vmatpush.msra.mxu0 0.0
        %5259 = vmatpush.msra.mxu0 0.0
        %5260 = vmatpush.msra.mxu0 0.0
        %5261 = vmatpush.msra.mxu0 0.0
        %5262 = vmatpush.msra.mxu0 0.0
        %5263 = vmatpush.msra.mxu0 %v4626
        %5264 = vmatpush.msra.mxu0 %v4622
        %5265 = vmatpush.msra.mxu0 %v4618
        %5266 = vmatpush.msra.mxu0 %v4614
        %5267 = vmatpush.msra.mxu0 %v4610
        %5268 = vmatpush.msra.mxu0 %v4606
        %5269 = vmatpush.msra.mxu0 %v4602
        %5270 = vmatpush.msra.mxu0 %v4598
        %5271 = vmatmul.f32.gmra.mxu0 %v5193
        %v5272 = vpop.f32.mrf.mxu0
        %v5273 = vadd.f32 %v5253, %v5272
        %5274 = vdwg.mxu0
        %5275 = vmatpush.msra.mxu0 %v4467
        %5276 = vmatpush.msra.mxu0 %v4463
        %5277 = vmatpush.msra.mxu0 %v4459
        %5278 = vmatpush.msra.mxu0 %v4455
        %5279 = vmatpush.msra.mxu0 %v4451
        %5280 = vmatpush.msra.mxu0 %v4447
        %5281 = vmatpush.msra.mxu0 %v4443
        %5282 = vmatpush.msra.mxu0 %v4439
        %5283 = vmatpush.msra.mxu0 %v4435
        %5284 = vmatpush.msra.mxu0 %v4431
        %5285 = vmatpush.msra.mxu0 %v4427
        %5286 = vmatpush.msra.mxu0 %v4423
        %5287 = vmatpush.msra.mxu0 %v4419
        %5288 = vmatpush.msra.mxu0 %v4415
        %5289 = vmatpush.msra.mxu0 %v4411
        %5290 = vmatpush.msra.mxu0 %v4407
        %5291 = vmatmul.f32.gmra.mxu0 %v4402
        %v5292 = vpop.f32.mrf.mxu0
        %v5293 = vadd.f32 %v5030, %v5292
        %5294 = vdwg.mxu0
        %5295 = vmatpush.msra.mxu0 %v4531
        %5296 = vmatpush.msra.mxu0 %v4527
        %5297 = vmatpush.msra.mxu0 %v4523
        %5298 = vmatpush.msra.mxu0 %v4519
        %5299 = vmatpush.msra.mxu0 %v4515
        %5300 = vmatpush.msra.mxu0 %v4511
        %5301 = vmatpush.msra.mxu0 %v4507
        %5302 = vmatpush.msra.mxu0 %v4503
        %5303 = vmatpush.msra.mxu0 %v4499
        %5304 = vmatpush.msra.mxu0 %v4495
        %5305 = vmatpush.msra.mxu0 %v4491
        %5306 = vmatpush.msra.mxu0 %v4487
        %5307 = vmatpush.msra.mxu0 %v4483
        %5308 = vmatpush.msra.mxu0 %v4479
        %5309 = vmatpush.msra.mxu0 %v4475
        %5310 = vmatpush.msra.mxu0 %v4471
        %5311 = vmatmul.f32.gmra.mxu0 %v4403
        %v5312 = vpop.f32.mrf.mxu0
        %v5313 = vadd.f32 %v5293, %v5312
        %5314 = vdwg.mxu0
        %5315 = vmatpush.msra.mxu0 %v4595
        %5316 = vmatpush.msra.mxu0 %v4591
        %5317 = vmatpush.msra.mxu0 %v4587
        %5318 = vmatpush.msra.mxu0 %v4583
        %5319 = vmatpush.msra.mxu0 %v4579
        %5320 = vmatpush.msra.mxu0 %v4575
        %5321 = vmatpush.msra.mxu0 %v4571
        %5322 = vmatpush.msra.mxu0 %v4567
        %5323 = vmatpush.msra.mxu0 %v4563
        %5324 = vmatpush.msra.mxu0 %v4559
        %5325 = vmatpush.msra.mxu0 %v4555
        %5326 = vmatpush.msra.mxu0 %v4551
        %5327 = vmatpush.msra.mxu0 %v4547
        %5328 = vmatpush.msra.mxu0 %v4543
        %5329 = vmatpush.msra.mxu0 %v4539
        %5330 = vmatpush.msra.mxu0 %v4535
        %5331 = vmatmul.f32.gmra.mxu0 %v4404
        %v5332 = vpop.f32.mrf.mxu0
        %v5333 = vadd.f32 %v5313, %v5332
        %5334 = vdwg.mxu0
        %5335 = vmatpush.msra.mxu0 0.0
        %5336 = vmatpush.msra.mxu0 0.0
        %5337 = vmatpush.msra.mxu0 0.0
        %5338 = vmatpush.msra.mxu0 0.0
        %5339 = vmatpush.msra.mxu0 0.0
        %5340 = vmatpush.msra.mxu0 0.0
        %5341 = vmatpush.msra.mxu0 0.0
        %5342 = vmatpush.msra.mxu0 0.0
        %5343 = vmatpush.msra.mxu0 %v4627
        %5344 = vmatpush.msra.mxu0 %v4623
        %5345 = vmatpush.msra.mxu0 %v4619
        %5346 = vmatpush.msra.mxu0 %v4615
        %5347 = vmatpush.msra.mxu0 %v4611
        %5348 = vmatpush.msra.mxu0 %v4607
        %5349 = vmatpush.msra.mxu0 %v4603
        %5350 = vmatpush.msra.mxu0 %v4599
        %5351 = vmatmul.f32.gmra.mxu0 %v5193
        %v5352 = vpop.f32.mrf.mxu0
        %v5353 = vadd.f32 %v5333, %v5352
        %5354 = vdwg.mxu0
        %5355 = vmatpush.msra.mxu0 %v4468
        %5356 = vmatpush.msra.mxu0 %v4464
        %5357 = vmatpush.msra.mxu0 %v4460
        %5358 = vmatpush.msra.mxu0 %v4456
        %5359 = vmatpush.msra.mxu0 %v4452
        %5360 = vmatpush.msra.mxu0 %v4448
        %5361 = vmatpush.msra.mxu0 %v4444
        %5362 = vmatpush.msra.mxu0 %v4440
        %5363 = vmatpush.msra.mxu0 %v4436
        %5364 = vmatpush.msra.mxu0 %v4432
        %5365 = vmatpush.msra.mxu0 %v4428
        %5366 = vmatpush.msra.mxu0 %v4424
        %5367 = vmatpush.msra.mxu0 %v4420
        %5368 = vmatpush.msra.mxu0 %v4416
        %5369 = vmatpush.msra.mxu0 %v4412
        %5370 = vmatpush.msra.mxu0 %v4408
        %5371 = vmatmul.f32.gmra.mxu0 %v4402
        %v5372 = vpop.f32.mrf.mxu0
        %v5373 = vadd.f32 %v5110, %v5372
        %5374 = vdwg.mxu0
        %5375 = vmatpush.msra.mxu0 %v4532
        %5376 = vmatpush.msra.mxu0 %v4528
        %5377 = vmatpush.msra.mxu0 %v4524
        %5378 = vmatpush.msra.mxu0 %v4520
        %5379 = vmatpush.msra.mxu0 %v4516
        %5380 = vmatpush.msra.mxu0 %v4512
        %5381 = vmatpush.msra.mxu0 %v4508
        %5382 = vmatpush.msra.mxu0 %v4504
        %5383 = vmatpush.msra.mxu0 %v4500
        %5384 = vmatpush.msra.mxu0 %v4496
        %5385 = vmatpush.msra.mxu0 %v4492
        %5386 = vmatpush.msra.mxu0 %v4488
        %5387 = vmatpush.msra.mxu0 %v4484
        %5388 = vmatpush.msra.mxu0 %v4480
        %5389 = vmatpush.msra.mxu0 %v4476
        %5390 = vmatpush.msra.mxu0 %v4472
        %5391 = vmatmul.f32.gmra.mxu0 %v4403
        %v5392 = vpop.f32.mrf.mxu0
        %v5393 = vadd.f32 %v5373, %v5392
        %5394 = vdwg.mxu0
        %5395 = vmatpush.msra.mxu0 %v4596
        %5396 = vmatpush.msra.mxu0 %v4592
        %5397 = vmatpush.msra.mxu0 %v4588
        %5398 = vmatpush.msra.mxu0 %v4584
        %5399 = vmatpush.msra.mxu0 %v4580
        %5400 = vmatpush.msra.mxu0 %v4576
        %5401 = vmatpush.msra.mxu0 %v4572
        %5402 = vmatpush.msra.mxu0 %v4568
        %5403 = vmatpush.msra.mxu0 %v4564
        %5404 = vmatpush.msra.mxu0 %v4560
        %5405 = vmatpush.msra.mxu0 %v4556
        %5406 = vmatpush.msra.mxu0 %v4552
        %5407 = vmatpush.msra.mxu0 %v4548
        %5408 = vmatpush.msra.mxu0 %v4544
        %5409 = vmatpush.msra.mxu0 %v4540
        %5410 = vmatpush.msra.mxu0 %v4536
        %5411 = vmatmul.f32.gmra.mxu0 %v4404
        %v5412 = vpop.f32.mrf.mxu0
        %v5413 = vadd.f32 %v5393, %v5412
        %5414 = vdwg.mxu0
        %5415 = vmatpush.msra.mxu0 0.0
        %5416 = vmatpush.msra.mxu0 0.0
        %5417 = vmatpush.msra.mxu0 0.0
        %5418 = vmatpush.msra.mxu0 0.0
        %5419 = vmatpush.msra.mxu0 0.0
        %5420 = vmatpush.msra.mxu0 0.0
        %5421 = vmatpush.msra.mxu0 0.0
        %5422 = vmatpush.msra.mxu0 0.0
        %5423 = vmatpush.msra.mxu0 %v4628
        %5424 = vmatpush.msra.mxu0 %v4624
        %5425 = vmatpush.msra.mxu0 %v4620
        %5426 = vmatpush.msra.mxu0 %v4616
        %5427 = vmatpush.msra.mxu0 %v4612
        %5428 = vmatpush.msra.mxu0 %v4608
        %5429 = vmatpush.msra.mxu0 %v4604
        %5430 = vmatpush.msra.mxu0 %v4600
        %5431 = vmatmul.f32.gmra.mxu0 %v5193
        %v5432 = vpop.f32.mrf.mxu0
        %v5433 = vadd.f32 %v5413, %v5432
        %5434 = vdwg.mxu0
        %5435 = vmatpush.msra.mxu0 %v4469
        %5436 = vmatpush.msra.mxu0 %v4465
        %5437 = vmatpush.msra.mxu0 %v4461
        %5438 = vmatpush.msra.mxu0 %v4457
        %5439 = vmatpush.msra.mxu0 %v4453
        %5440 = vmatpush.msra.mxu0 %v4449
        %5441 = vmatpush.msra.mxu0 %v4445
        %5442 = vmatpush.msra.mxu0 %v4441
        %5443 = vmatpush.msra.mxu0 %v4437
        %5444 = vmatpush.msra.mxu0 %v4433
        %5445 = vmatpush.msra.mxu0 %v4429
        %5446 = vmatpush.msra.mxu0 %v4425
        %5447 = vmatpush.msra.mxu0 %v4421
        %5448 = vmatpush.msra.mxu0 %v4417
        %5449 = vmatpush.msra.mxu0 %v4413
        %5450 = vmatpush.msra.mxu0 %v4409
        %5451 = vmatmul.f32.gmra.mxu0 %v4402
        %v5452 = vpop.f32.mrf.mxu0
        %v5453 = vadd.f32 %v5190, %v5452
        %5454 = vdwg.mxu0
        %5455 = vmatpush.msra.mxu0 %v4533
        %5456 = vmatpush.msra.mxu0 %v4529
        %5457 = vmatpush.msra.mxu0 %v4525
        %5458 = vmatpush.msra.mxu0 %v4521
        %5459 = vmatpush.msra.mxu0 %v4517
        %5460 = vmatpush.msra.mxu0 %v4513
        %5461 = vmatpush.msra.mxu0 %v4509
        %5462 = vmatpush.msra.mxu0 %v4505
        %5463 = vmatpush.msra.mxu0 %v4501
        %5464 = vmatpush.msra.mxu0 %v4497
        %5465 = vmatpush.msra.mxu0 %v4493
        %5466 = vmatpush.msra.mxu0 %v4489
        %5467 = vmatpush.msra.mxu0 %v4485
        %5468 = vmatpush.msra.mxu0 %v4481
        %5469 = vmatpush.msra.mxu0 %v4477
        %5470 = vmatpush.msra.mxu0 %v4473
        %5471 = vmatmul.f32.gmra.mxu0 %v4403
        %v5472 = vpop.f32.mrf.mxu0
        %v5473 = vadd.f32 %v5453, %v5472
        %5474 = vdwg.mxu0
        %5475 = vmatpush.msra.mxu0 %v4597
        %5476 = vmatpush.msra.mxu0 %v4593
        %5477 = vmatpush.msra.mxu0 %v4589
        %5478 = vmatpush.msra.mxu0 %v4585
        %5479 = vmatpush.msra.mxu0 %v4581
        %5480 = vmatpush.msra.mxu0 %v4577
        %5481 = vmatpush.msra.mxu0 %v4573
        %5482 = vmatpush.msra.mxu0 %v4569
        %5483 = vmatpush.msra.mxu0 %v4565
        %5484 = vmatpush.msra.mxu0 %v4561
        %5485 = vmatpush.msra.mxu0 %v4557
        %5486 = vmatpush.msra.mxu0 %v4553
        %5487 = vmatpush.msra.mxu0 %v4549
        %5488 = vmatpush.msra.mxu0 %v4545
        %5489 = vmatpush.msra.mxu0 %v4541
        %5490 = vmatpush.msra.mxu0 %v4537
        %5491 = vmatmul.f32.gmra.mxu0 %v4404
        %v5492 = vpop.f32.mrf.mxu0
        %v5493 = vadd.f32 %v5473, %v5492
        %5494 = vdwg.mxu0
        %5495 = vmatpush.msra.mxu0 0.0
        %5496 = vmatpush.msra.mxu0 0.0
        %5497 = vmatpush.msra.mxu0 0.0
        %5498 = vmatpush.msra.mxu0 0.0
        %5499 = vmatpush.msra.mxu0 0.0
        %5500 = vmatpush.msra.mxu0 0.0
        %5501 = vmatpush.msra.mxu0 0.0
        %5502 = vmatpush.msra.mxu0 0.0
        %5503 = vmatpush.msra.mxu0 %v4629
        %5504 = vmatpush.msra.mxu0 %v4625
        %5505 = vmatpush.msra.mxu0 %v4621
        %5506 = vmatpush.msra.mxu0 %v4617
        %5507 = vmatpush.msra.mxu0 %v4613
        %5508 = vmatpush.msra.mxu0 %v4609
        %5509 = vmatpush.msra.mxu0 %v4605
        %5510 = vmatpush.msra.mxu0 %v4601
        %5511 = vmatmul.f32.gmra.mxu0 %v5193
        %v5512 = vpop.f32.mrf.mxu0
        %v5513 = vadd.f32 %v5493, %v5512
        %5514 = vdwg.mxu0
        %v5515 = vld [vmem:[#allocation3] sm:$0x7c]
        %v5516 = vld [vmem:[#allocation3 + $0x8] sm:$0x7c]
        %v5517 = vld [vmem:[#allocation3 + $0x10] sm:$0x7c]
        %v5518 = vld [vmem:[#allocation3 + $0x18] sm:$0x7c]
        %s5519 = scalar_lea.vmem [#allocation13], 4480
        %v5520 = vld [vmem:[%s5519] sm:$0xff]
        %v5521 = vld [vmem:[%s5519 + $0x8] sm:$0xff]
        %v5522 = vld [vmem:[%s5519 + $0x18] sm:$0xff]
        %v5523 = vld [vmem:[%s5519 + $0x20] sm:$0xff]
        %v5524 = vld [vmem:[%s5519 + $0x28] sm:$0xff]
        %v5525 = vld [vmem:[%s5519 + $0x30] sm:$0xff]
        %v5526 = vld [vmem:[%s5519 + $0x40] sm:$0xff]
        %v5527 = vld [vmem:[%s5519 + $0x48] sm:$0xff]
        %v5528 = vld [vmem:[%s5519 + $0x50] sm:$0xff]
        %v5529 = vld [vmem:[%s5519 + $0x58] sm:$0xff]
        %v5530 = vld [vmem:[%s5519 + $0x68] sm:$0xff]
        %v5531 = vld [vmem:[%s5519 + $0x70] sm:$0xff]
        %v5532 = vld [vmem:[%s5519 + $0x78] sm:$0xff]
        %v5533 = vld [vmem:[%s5519 + $0x80] sm:$0xff]
        %v5534 = vld [vmem:[%s5519 + $0x90] sm:$0xff]
        %v5535 = vld [vmem:[%s5519 + $0x98] sm:$0xff]
        %v5536 = vld [vmem:[%s5519 + $0xa0] sm:$0xff]
        %v5537 = vld [vmem:[%s5519 + $0xa8] sm:$0xff]
        %v5538 = vld [vmem:[%s5519 + $0xb8] sm:$0xff]
        %v5539 = vld [vmem:[%s5519 + $0xc0] sm:$0xff]
        %v5540 = vld [vmem:[%s5519 + $0xc8] sm:$0xff]
        %v5541 = vld [vmem:[%s5519 + $0xd0] sm:$0xff]
        %v5542 = vld [vmem:[%s5519 + $0xe0] sm:$0xff]
        %v5543 = vld [vmem:[%s5519 + $0xe8] sm:$0xff]
        %v5544 = vld [vmem:[%s5519 + $0xf0] sm:$0xff]
        %v5545 = vld [vmem:[%s5519 + $0xf8] sm:$0xff]
        %v5546 = vld [vmem:[%s5519 + $0x108] sm:$0xff]
        %v5547 = vld [vmem:[%s5519 + $0x110] sm:$0xff]
        %v5548 = vld [vmem:[%s5519 + $0x118] sm:$0xff]
        %v5549 = vld [vmem:[%s5519 + $0x120] sm:$0xff]
        %v5550 = vld [vmem:[%s5519 + $0x130] sm:$0xff]
        %v5551 = vld [vmem:[%s5519 + $0x138] sm:$0xff]
        %v5552 = vld [vmem:[%s5519 + $0x140] sm:$0xff]
        %v5553 = vld [vmem:[%s5519 + $0x148] sm:$0xff]
        %v5554 = vld [vmem:[%s5519 + $0x158] sm:$0xff]
        %v5555 = vld [vmem:[%s5519 + $0x160] sm:$0xff]
        %v5556 = vld [vmem:[%s5519 + $0x168] sm:$0xff]
        %v5557 = vld [vmem:[%s5519 + $0x170] sm:$0xff]
        %v5558 = vld [vmem:[%s5519 + $0x180] sm:$0xff]
        %v5559 = vld [vmem:[%s5519 + $0x188] sm:$0xff]
        %v5560 = vld [vmem:[%s5519 + $0x190] sm:$0xff]
        %v5561 = vld [vmem:[%s5519 + $0x198] sm:$0xff]
        %v5562 = vld [vmem:[%s5519 + $0x1a8] sm:$0xff]
        %v5563 = vld [vmem:[%s5519 + $0x1b0] sm:$0xff]
        %v5564 = vld [vmem:[%s5519 + $0x1b8] sm:$0xff]
        %v5565 = vld [vmem:[%s5519 + $0x1c0] sm:$0xff]
        %v5566 = vld [vmem:[%s5519 + $0x1d0] sm:$0xff]
        %v5567 = vld [vmem:[%s5519 + $0x1d8] sm:$0xff]
        %v5568 = vld [vmem:[%s5519 + $0x1e0] sm:$0xff]
        %v5569 = vld [vmem:[%s5519 + $0x1e8] sm:$0xff]
        %v5570 = vld [vmem:[%s5519 + $0x1f8] sm:$0xff]
        %v5571 = vld [vmem:[%s5519 + $0x200] sm:$0xff]
        %v5572 = vld [vmem:[%s5519 + $0x208] sm:$0xff]
        %v5573 = vld [vmem:[%s5519 + $0x210] sm:$0xff]
        %v5574 = vld [vmem:[%s5519 + $0x220] sm:$0xff]
        %v5575 = vld [vmem:[%s5519 + $0x228] sm:$0xff]
        %v5576 = vld [vmem:[%s5519 + $0x230] sm:$0xff]
        %v5577 = vld [vmem:[%s5519 + $0x238] sm:$0xff]
        %v5578 = vld [vmem:[%s5519 + $0x248] sm:$0xff]
        %v5579 = vld [vmem:[%s5519 + $0x250] sm:$0xff]
        %v5580 = vld [vmem:[%s5519 + $0x258] sm:$0xff]
        %v5581 = vld [vmem:[%s5519 + $0x260] sm:$0xff]
        %v5582 = vld [vmem:[%s5519 + $0x270] sm:$0xff]
        %v5583 = vld [vmem:[%s5519 + $0x278] sm:$0xff]
        %v5584 = vld [vmem:[%s5519 + $0x280] sm:$0xff]
        %v5585 = vld [vmem:[%s5519 + $0x288] sm:$0xff]
        %v5586 = vld [vmem:[%s5519 + $0x298] sm:$0xff]
        %v5587 = vld [vmem:[%s5519 + $0x2a0] sm:$0xff]
        %v5588 = vld [vmem:[%s5519 + $0x2a8] sm:$0xff]
        %v5589 = vld [vmem:[%s5519 + $0x2b0] sm:$0xff]
        %v5590 = vld [vmem:[%s5519 + $0x2c0] sm:$0xff]
        %v5591 = vld [vmem:[%s5519 + $0x2c8] sm:$0xff]
        %v5592 = vld [vmem:[%s5519 + $0x2d0] sm:$0xff]
        %v5593 = vld [vmem:[%s5519 + $0x2d8] sm:$0xff]
        %v5594 = vld [vmem:[%s5519 + $0x2e8] sm:$0xff]
        %v5595 = vld [vmem:[%s5519 + $0x2f0] sm:$0xff]
        %v5596 = vld [vmem:[%s5519 + $0x2f8] sm:$0xff]
        %v5597 = vld [vmem:[%s5519 + $0x300] sm:$0xff]
        %v5598 = vld [vmem:[%s5519 + $0x310] sm:$0xff]
        %v5599 = vld [vmem:[%s5519 + $0x318] sm:$0xff]
        %v5600 = vld [vmem:[%s5519 + $0x320] sm:$0xff]
        %v5601 = vld [vmem:[%s5519 + $0x328] sm:$0xff]
        %v5602 = vld [vmem:[%s5519 + $0x338] sm:$0xff]
        %v5603 = vld [vmem:[%s5519 + $0x340] sm:$0xff]
        %v5604 = vld [vmem:[%s5519 + $0x348] sm:$0xff]
        %v5605 = vld [vmem:[%s5519 + $0x350] sm:$0xff]
        %v5606 = vld [vmem:[%s5519 + $0x360] sm:$0xff]
        %v5607 = vld [vmem:[%s5519 + $0x368] sm:$0xff]
        %v5608 = vld [vmem:[%s5519 + $0x370] sm:$0xff]
        %v5609 = vld [vmem:[%s5519 + $0x378] sm:$0xff]
        %v5610 = vld [vmem:[%s5519 + $0x388] sm:$0xff]
        %v5611 = vld [vmem:[%s5519 + $0x390] sm:$0xff]
        %v5612 = vld [vmem:[%s5519 + $0x398] sm:$0xff]
        %v5613 = vld [vmem:[%s5519 + $0x3a0] sm:$0xff]
        %v5614 = vld [vmem:[%s5519 + $0x3b0] sm:$0xff]
        %v5615 = vld [vmem:[%s5519 + $0x3b8] sm:$0xff]
        %v5616 = vld [vmem:[%s5519 + $0x3c0] sm:$0xff]
        %v5617 = vld [vmem:[%s5519 + $0x3c8] sm:$0xff]
        %v5618 = vld [vmem:[%s5519 + $0x3d8] sm:$0xff]
        %v5619 = vld [vmem:[%s5519 + $0x3e0] sm:$0xff]
        %v5620 = vld [vmem:[%s5519 + $0x3e8] sm:$0xff]
        %v5621 = vld [vmem:[%s5519 + $0x3f0] sm:$0xff]
        %v5622 = vld [vmem:[%s5519 + $0x400] sm:$0xff]
        %v5623 = vld [vmem:[%s5519 + $0x408] sm:$0xff]
        %v5624 = vld [vmem:[%s5519 + $0x410] sm:$0xff]
        %v5625 = vld [vmem:[%s5519 + $0x418] sm:$0xff]
        %v5626 = vld [vmem:[%s5519 + $0x428] sm:$0xff]
        %v5627 = vld [vmem:[%s5519 + $0x430] sm:$0xff]
        %v5628 = vld [vmem:[%s5519 + $0x438] sm:$0xff]
        %v5629 = vld [vmem:[%s5519 + $0x440] sm:$0xff]
        %v5630 = vld [vmem:[%s5519 + $0x450] sm:$0xff]
        %v5631 = vld [vmem:[%s5519 + $0x458] sm:$0xff]
        %v5632 = vld [vmem:[%s5519 + $0x460] sm:$0xff]
        %v5633 = vld [vmem:[%s5519 + $0x468] sm:$0xff]
        %v5634 = vld [vmem:[%s5519 + $0x478] sm:$0xff]
        %v5635 = vld [vmem:[%s5519 + $0x480] sm:$0xff]
        %v5636 = vld [vmem:[%s5519 + $0x488] sm:$0xff]
        %v5637 = vld [vmem:[%s5519 + $0x490] sm:$0xff]
        %v5638 = vld [vmem:[%s5519 + $0x4a0] sm:$0xff]
        %v5639 = vld [vmem:[%s5519 + $0x4a8] sm:$0xff]
        %v5640 = vld [vmem:[%s5519 + $0x4b0] sm:$0xff]
        %v5641 = vld [vmem:[%s5519 + $0x4b8] sm:$0xff]
        %v5642 = vld [vmem:[%s5519 + $0x4c8] sm:$0xff]
        %v5643 = vld [vmem:[%s5519 + $0x4d0] sm:$0xff]
        %v5644 = vld [vmem:[%s5519 + $0x4d8] sm:$0xff]
        %v5645 = vld [vmem:[%s5519 + $0x4e0] sm:$0xff]
        %v5646 = vld [vmem:[%s5519 + $0x4f0] sm:$0xff]
        %v5647 = vld [vmem:[%s5519 + $0x4f8] sm:$0xff]
        %v5648 = vld [vmem:[%s5519 + $0x500] sm:$0xff]
        %v5649 = vld [vmem:[%s5519 + $0x508] sm:$0xff]
        %v5650 = vld [vmem:[%s5519 + $0x518] sm:$0xff]
        %v5651 = vld [vmem:[%s5519 + $0x520] sm:$0xff]
        %v5652 = vld [vmem:[%s5519 + $0x528] sm:$0xff]
        %v5653 = vld [vmem:[%s5519 + $0x530] sm:$0xff]
        %v5654 = vld [vmem:[%s5519 + $0x540] sm:$0xff]
        %v5655 = vld [vmem:[%s5519 + $0x548] sm:$0xff]
        %v5656 = vld [vmem:[%s5519 + $0x550] sm:$0xff]
        %v5657 = vld [vmem:[%s5519 + $0x558] sm:$0xff]
        %v5658 = vld [vmem:[%s5519 + $0x568] sm:$0xff]
        %v5659 = vld [vmem:[%s5519 + $0x570] sm:$0xff]
        %v5660 = vld [vmem:[%s5519 + $0x578] sm:$0xff]
        %v5661 = vld [vmem:[%s5519 + $0x580] sm:$0xff]
        %v5662 = vld [vmem:[%s5519 + $0x590] sm:$0xff]
        %v5663 = vld [vmem:[%s5519 + $0x598] sm:$0xff]
        %v5664 = vld [vmem:[%s5519 + $0x5a0] sm:$0xff]
        %v5665 = vld [vmem:[%s5519 + $0x5a8] sm:$0xff]
        %v5666 = vld [vmem:[%s5519 + $0x5b8] sm:$0xff]
        %v5667 = vld [vmem:[%s5519 + $0x5c0] sm:$0xff]
        %v5668 = vld [vmem:[%s5519 + $0x5c8] sm:$0xff]
        %v5669 = vld [vmem:[%s5519 + $0x5d0] sm:$0xff]
        %v5670 = vld [vmem:[%s5519 + $0x5e0] sm:$0xff]
        %v5671 = vld [vmem:[%s5519 + $0x5e8] sm:$0xff]
        %v5672 = vld [vmem:[%s5519 + $0x5f0] sm:$0xff]
        %v5673 = vld [vmem:[%s5519 + $0x5f8] sm:$0xff]
        %v5674 = vld [vmem:[%s5519 + $0x608] sm:$0xff]
        %v5675 = vld [vmem:[%s5519 + $0x610] sm:$0xff]
        %v5676 = vld [vmem:[%s5519 + $0x618] sm:$0xff]
        %v5677 = vld [vmem:[%s5519 + $0x620] sm:$0xff]
        %v5678 = vld [vmem:[%s5519 + $0x630] sm:$0xff]
        %v5679 = vld [vmem:[%s5519 + $0x638] sm:$0xff]
        %v5680 = vld [vmem:[%s5519 + $0x640] sm:$0xff]
        %v5681 = vld [vmem:[%s5519 + $0x648] sm:$0xff]
        %v5682 = vld [vmem:[%s5519 + $0x658] sm:$0xff]
        %v5683 = vld [vmem:[%s5519 + $0x660] sm:$0xff]
        %v5684 = vld [vmem:[%s5519 + $0x668] sm:$0xff]
        %v5685 = vld [vmem:[%s5519 + $0x670] sm:$0xff]
        %v5686 = vld [vmem:[%s5519 + $0x680] sm:$0xff]
        %v5687 = vld [vmem:[%s5519 + $0x688] sm:$0xff]
        %v5688 = vld [vmem:[%s5519 + $0x690] sm:$0xff]
        %v5689 = vld [vmem:[%s5519 + $0x698] sm:$0xff]
        %v5690 = vld [vmem:[%s5519 + $0x6a8] sm:$0xff]
        %v5691 = vld [vmem:[%s5519 + $0x6b0] sm:$0xff]
        %v5692 = vld [vmem:[%s5519 + $0x6b8] sm:$0xff]
        %v5693 = vld [vmem:[%s5519 + $0x6c0] sm:$0xff]
        %v5694 = vld [vmem:[%s5519 + $0x6d0] sm:$0xff]
        %v5695 = vld [vmem:[%s5519 + $0x6d8] sm:$0xff]
        %v5696 = vld [vmem:[%s5519 + $0x6e0] sm:$0xff]
        %v5697 = vld [vmem:[%s5519 + $0x6e8] sm:$0xff]
        %v5698 = vld [vmem:[%s5519 + $0x6f8] sm:$0xff]
        %v5699 = vld [vmem:[%s5519 + $0x700] sm:$0xff]
        %v5700 = vld [vmem:[%s5519 + $0x708] sm:$0xff]
        %v5701 = vld [vmem:[%s5519 + $0x710] sm:$0xff]
        %v5702 = vld [vmem:[%s5519 + $0x720] sm:$0xff]
        %v5703 = vld [vmem:[%s5519 + $0x728] sm:$0xff]
        %v5704 = vld [vmem:[%s5519 + $0x730] sm:$0xff]
        %v5705 = vld [vmem:[%s5519 + $0x738] sm:$0xff]
        %v5706 = vld [vmem:[%s5519 + $0x748] sm:$0xff]
        %v5707 = vld [vmem:[%s5519 + $0x750] sm:$0xff]
        %v5708 = vld [vmem:[%s5519 + $0x758] sm:$0xff]
        %v5709 = vld [vmem:[%s5519 + $0x760] sm:$0xff]
        %v5710 = vld [vmem:[%s5519 + $0x770] sm:$0xff]
        %v5711 = vld [vmem:[%s5519 + $0x778] sm:$0xff]
        %v5712 = vld [vmem:[%s5519 + $0x780] sm:$0xff]
        %v5713 = vld [vmem:[%s5519 + $0x788] sm:$0xff]
        %v5714 = vld [vmem:[%s5519 + $0x798] sm:$0xff]
        %v5715 = vld [vmem:[%s5519 + $0x7a0] sm:$0xff]
        %v5716 = vld [vmem:[%s5519 + $0x7a8] sm:$0xff]
        %v5717 = vld [vmem:[%s5519 + $0x7b0] sm:$0xff]
        %v5718 = vld [vmem:[%s5519 + $0x7c0] sm:$0xff]
        %v5719 = vld [vmem:[%s5519 + $0x7c8] sm:$0xff]
        %v5720 = vld [vmem:[%s5519 + $0x7d0] sm:$0xff]
        %v5721 = vld [vmem:[%s5519 + $0x7d8] sm:$0xff]
        %v5722 = vld [vmem:[%s5519 + $0x7e8] sm:$0xff]
        %v5723 = vld [vmem:[%s5519 + $0x7f0] sm:$0xff]
        %v5724 = vld [vmem:[%s5519 + $0x7f8] sm:$0xff]
        %v5725 = vld [vmem:[%s5519 + $0x800] sm:$0xff]
        %v5726 = vld [vmem:[%s5519 + $0x810] sm:$0xff]
        %v5727 = vld [vmem:[%s5519 + $0x818] sm:$0xff]
        %v5728 = vld [vmem:[%s5519 + $0x820] sm:$0xff]
        %v5729 = vld [vmem:[%s5519 + $0x828] sm:$0xff]
        %v5730 = vld [vmem:[%s5519 + $0x838] sm:$0xff]
        %v5731 = vld [vmem:[%s5519 + $0x840] sm:$0xff]
        %v5732 = vld [vmem:[%s5519 + $0x848] sm:$0xff]
        %v5733 = vld [vmem:[%s5519 + $0x850] sm:$0xff]
        %v5734 = vld [vmem:[%s5519 + $0x860] sm:$0xff]
        %v5735 = vld [vmem:[%s5519 + $0x868] sm:$0xff]
        %v5736 = vld [vmem:[%s5519 + $0x870] sm:$0xff]
        %v5737 = vld [vmem:[%s5519 + $0x878] sm:$0xff]
        %v5738 = vld [vmem:[%s5519 + $0x888] sm:$0xff]
        %v5739 = vld [vmem:[%s5519 + $0x890] sm:$0xff]
        %v5740 = vld [vmem:[%s5519 + $0x898] sm:$0xff]
        %v5741 = vld [vmem:[%s5519 + $0x8a0] sm:$0xff]
        %v5742 = vld [vmem:[%s5519 + $0x8b0] sm:$0xff]
        %v5743 = vld [vmem:[%s5519 + $0x8b8] sm:$0xff]
        %v5748 = vrot.slane %v5515, 2
        %v5749 = vrot.slane %v5516, 2
        %v5750 = vrot.slane %v5517, 2
        %v5751 = vrot.slane %v5518, 2
        %v5755 = vsel %vm4267, %v5751, 0
        %5757 = vmatpush.msra.mxu0 %v5580
        %5758 = vmatpush.msra.mxu0 %v5576
        %5759 = vmatpush.msra.mxu0 %v5572
        %5760 = vmatpush.msra.mxu0 %v5568
        %5761 = vmatpush.msra.mxu0 %v5564
        %5762 = vmatpush.msra.mxu0 %v5560
        %5763 = vmatpush.msra.mxu0 %v5556
        %5764 = vmatpush.msra.mxu0 %v5552
        %5765 = vmatpush.msra.mxu0 %v5548
        %5766 = vmatpush.msra.mxu0 %v5544
        %5767 = vmatpush.msra.mxu0 %v5540
        %5768 = vmatpush.msra.mxu0 %v5536
        %5769 = vmatpush.msra.mxu0 %v5532
        %5770 = vmatpush.msra.mxu0 %v5528
        %5771 = vmatpush.msra.mxu0 %v5524
        %5772 = vmatpush.msra.mxu0 %v5520
        %5773 = vmatmul.f32.gmra.mxu0 %v5748
        %v5774 = vpop.f32.mrf.mxu0
        %v5775 = vadd.f32 0.0, %v5774
        %5776 = vdwg.mxu0
        %5777 = vmatpush.msra.mxu0 %v5644
        %5778 = vmatpush.msra.mxu0 %v5640
        %5779 = vmatpush.msra.mxu0 %v5636
        %5780 = vmatpush.msra.mxu0 %v5632
        %5781 = vmatpush.msra.mxu0 %v5628
        %5782 = vmatpush.msra.mxu0 %v5624
        %5783 = vmatpush.msra.mxu0 %v5620
        %5784 = vmatpush.msra.mxu0 %v5616
        %5785 = vmatpush.msra.mxu0 %v5612
        %5786 = vmatpush.msra.mxu0 %v5608
        %5787 = vmatpush.msra.mxu0 %v5604
        %5788 = vmatpush.msra.mxu0 %v5600
        %5789 = vmatpush.msra.mxu0 %v5596
        %5790 = vmatpush.msra.mxu0 %v5592
        %5791 = vmatpush.msra.mxu0 %v5588
        %5792 = vmatpush.msra.mxu0 %v5584
        %5793 = vmatmul.f32.gmra.mxu0 %v5749
        %v5794 = vpop.f32.mrf.mxu0
        %v5795 = vadd.f32 %v5775, %v5794
        %5796 = vdwg.mxu0
        %5797 = vmatpush.msra.mxu0 %v5708
        %5798 = vmatpush.msra.mxu0 %v5704
        %5799 = vmatpush.msra.mxu0 %v5700
        %5800 = vmatpush.msra.mxu0 %v5696
        %5801 = vmatpush.msra.mxu0 %v5692
        %5802 = vmatpush.msra.mxu0 %v5688
        %5803 = vmatpush.msra.mxu0 %v5684
        %5804 = vmatpush.msra.mxu0 %v5680
        %5805 = vmatpush.msra.mxu0 %v5676
        %5806 = vmatpush.msra.mxu0 %v5672
        %5807 = vmatpush.msra.mxu0 %v5668
        %5808 = vmatpush.msra.mxu0 %v5664
        %5809 = vmatpush.msra.mxu0 %v5660
        %5810 = vmatpush.msra.mxu0 %v5656
        %5811 = vmatpush.msra.mxu0 %v5652
        %5812 = vmatpush.msra.mxu0 %v5648
        %5813 = vmatmul.f32.gmra.mxu0 %v5750
        %v5814 = vpop.f32.mrf.mxu0
        %v5815 = vadd.f32 %v5795, %v5814
        %5816 = vdwg.mxu0
        %5817 = vmatpush.msra.mxu0 0.0
        %5818 = vmatpush.msra.mxu0 0.0
        %5819 = vmatpush.msra.mxu0 0.0
        %5820 = vmatpush.msra.mxu0 0.0
        %5821 = vmatpush.msra.mxu0 0.0
        %5822 = vmatpush.msra.mxu0 0.0
        %5823 = vmatpush.msra.mxu0 0.0
        %5824 = vmatpush.msra.mxu0 0.0
        %5825 = vmatpush.msra.mxu0 %v5740
        %5826 = vmatpush.msra.mxu0 %v5736
        %5827 = vmatpush.msra.mxu0 %v5732
        %5828 = vmatpush.msra.mxu0 %v5728
        %5829 = vmatpush.msra.mxu0 %v5724
        %5830 = vmatpush.msra.mxu0 %v5720
        %5831 = vmatpush.msra.mxu0 %v5716
        %5832 = vmatpush.msra.mxu0 %v5712
        %5833 = vmatmul.f32.gmra.mxu0 %v5755
        %v5834 = vpop.f32.mrf.mxu0
        %v5835 = vadd.f32 %v5815, %v5834
        %5836 = vdwg.mxu0
        %5837 = vmatpush.msra.mxu0 %v5581
        %5838 = vmatpush.msra.mxu0 %v5577
        %5839 = vmatpush.msra.mxu0 %v5573
        %5840 = vmatpush.msra.mxu0 %v5569
        %5841 = vmatpush.msra.mxu0 %v5565
        %5842 = vmatpush.msra.mxu0 %v5561
        %5843 = vmatpush.msra.mxu0 %v5557
        %5844 = vmatpush.msra.mxu0 %v5553
        %5845 = vmatpush.msra.mxu0 %v5549
        %5846 = vmatpush.msra.mxu0 %v5545
        %5847 = vmatpush.msra.mxu0 %v5541
        %5848 = vmatpush.msra.mxu0 %v5537
        %5849 = vmatpush.msra.mxu0 %v5533
        %5850 = vmatpush.msra.mxu0 %v5529
        %5851 = vmatpush.msra.mxu0 %v5525
        %5852 = vmatpush.msra.mxu0 %v5521
        %5853 = vmatmul.f32.gmra.mxu0 %v5748
        %v5854 = vpop.f32.mrf.mxu0
        %v5855 = vadd.f32 0.0, %v5854
        %5856 = vdwg.mxu0
        %5857 = vmatpush.msra.mxu0 %v5645
        %5858 = vmatpush.msra.mxu0 %v5641
        %5859 = vmatpush.msra.mxu0 %v5637
        %5860 = vmatpush.msra.mxu0 %v5633
        %5861 = vmatpush.msra.mxu0 %v5629
        %5862 = vmatpush.msra.mxu0 %v5625
        %5863 = vmatpush.msra.mxu0 %v5621
        %5864 = vmatpush.msra.mxu0 %v5617
        %5865 = vmatpush.msra.mxu0 %v5613
        %5866 = vmatpush.msra.mxu0 %v5609
        %5867 = vmatpush.msra.mxu0 %v5605
        %5868 = vmatpush.msra.mxu0 %v5601
        %5869 = vmatpush.msra.mxu0 %v5597
        %5870 = vmatpush.msra.mxu0 %v5593
        %5871 = vmatpush.msra.mxu0 %v5589
        %5872 = vmatpush.msra.mxu0 %v5585
        %5873 = vmatmul.f32.gmra.mxu0 %v5749
        %v5874 = vpop.f32.mrf.mxu0
        %v5875 = vadd.f32 %v5855, %v5874
        %5876 = vdwg.mxu0
        %5877 = vmatpush.msra.mxu0 %v5709
        %5878 = vmatpush.msra.mxu0 %v5705
        %5879 = vmatpush.msra.mxu0 %v5701
        %5880 = vmatpush.msra.mxu0 %v5697
        %5881 = vmatpush.msra.mxu0 %v5693
        %5882 = vmatpush.msra.mxu0 %v5689
        %5883 = vmatpush.msra.mxu0 %v5685
        %5884 = vmatpush.msra.mxu0 %v5681
        %5885 = vmatpush.msra.mxu0 %v5677
        %5886 = vmatpush.msra.mxu0 %v5673
        %5887 = vmatpush.msra.mxu0 %v5669
        %5888 = vmatpush.msra.mxu0 %v5665
        %5889 = vmatpush.msra.mxu0 %v5661
        %5890 = vmatpush.msra.mxu0 %v5657
        %5891 = vmatpush.msra.mxu0 %v5653
        %5892 = vmatpush.msra.mxu0 %v5649
        %5893 = vmatmul.f32.gmra.mxu0 %v5750
        %v5894 = vpop.f32.mrf.mxu0
        %v5895 = vadd.f32 %v5875, %v5894
        %5896 = vdwg.mxu0
        %5897 = vmatpush.msra.mxu0 0.0
        %5898 = vmatpush.msra.mxu0 0.0
        %5899 = vmatpush.msra.mxu0 0.0
        %5900 = vmatpush.msra.mxu0 0.0
        %5901 = vmatpush.msra.mxu0 0.0
        %5902 = vmatpush.msra.mxu0 0.0
        %5903 = vmatpush.msra.mxu0 0.0
        %5904 = vmatpush.msra.mxu0 0.0
        %5905 = vmatpush.msra.mxu0 %v5741
        %5906 = vmatpush.msra.mxu0 %v5737
        %5907 = vmatpush.msra.mxu0 %v5733
        %5908 = vmatpush.msra.mxu0 %v5729
        %5909 = vmatpush.msra.mxu0 %v5725
        %5910 = vmatpush.msra.mxu0 %v5721
        %5911 = vmatpush.msra.mxu0 %v5717
        %5912 = vmatpush.msra.mxu0 %v5713
        %5913 = vmatmul.f32.gmra.mxu0 %v5755
        %v5914 = vpop.f32.mrf.mxu0
        %v5915 = vadd.f32 %v5895, %v5914
        %5916 = vdwg.mxu0
        %5917 = vmatpush.msra.mxu0 %v5582
        %5918 = vmatpush.msra.mxu0 %v5578
        %5919 = vmatpush.msra.mxu0 %v5574
        %5920 = vmatpush.msra.mxu0 %v5570
        %5921 = vmatpush.msra.mxu0 %v5566
        %5922 = vmatpush.msra.mxu0 %v5562
        %5923 = vmatpush.msra.mxu0 %v5558
        %5924 = vmatpush.msra.mxu0 %v5554
        %5925 = vmatpush.msra.mxu0 %v5550
        %5926 = vmatpush.msra.mxu0 %v5546
        %5927 = vmatpush.msra.mxu0 %v5542
        %5928 = vmatpush.msra.mxu0 %v5538
        %5929 = vmatpush.msra.mxu0 %v5534
        %5930 = vmatpush.msra.mxu0 %v5530
        %5931 = vmatpush.msra.mxu0 %v5526
        %5932 = vmatpush.msra.mxu0 %v5522
        %5933 = vmatmul.f32.gmra.mxu0 %v5748
        %v5934 = vpop.f32.mrf.mxu0
        %v5935 = vadd.f32 0.0, %v5934
        %5936 = vdwg.mxu0
        %5937 = vmatpush.msra.mxu0 %v5646
        %5938 = vmatpush.msra.mxu0 %v5642
        %5939 = vmatpush.msra.mxu0 %v5638
        %5940 = vmatpush.msra.mxu0 %v5634
        %5941 = vmatpush.msra.mxu0 %v5630
        %5942 = vmatpush.msra.mxu0 %v5626
        %5943 = vmatpush.msra.mxu0 %v5622
        %5944 = vmatpush.msra.mxu0 %v5618
        %5945 = vmatpush.msra.mxu0 %v5614
        %5946 = vmatpush.msra.mxu0 %v5610
        %5947 = vmatpush.msra.mxu0 %v5606
        %5948 = vmatpush.msra.mxu0 %v5602
        %5949 = vmatpush.msra.mxu0 %v5598
        %5950 = vmatpush.msra.mxu0 %v5594
        %5951 = vmatpush.msra.mxu0 %v5590
        %5952 = vmatpush.msra.mxu0 %v5586
        %5953 = vmatmul.f32.gmra.mxu0 %v5749
        %v5954 = vpop.f32.mrf.mxu0
        %v5955 = vadd.f32 %v5935, %v5954
        %5956 = vdwg.mxu0
        %5957 = vmatpush.msra.mxu0 %v5710
        %5958 = vmatpush.msra.mxu0 %v5706
        %5959 = vmatpush.msra.mxu0 %v5702
        %5960 = vmatpush.msra.mxu0 %v5698
        %5961 = vmatpush.msra.mxu0 %v5694
        %5962 = vmatpush.msra.mxu0 %v5690
        %5963 = vmatpush.msra.mxu0 %v5686
        %5964 = vmatpush.msra.mxu0 %v5682
        %5965 = vmatpush.msra.mxu0 %v5678
        %5966 = vmatpush.msra.mxu0 %v5674
        %5967 = vmatpush.msra.mxu0 %v5670
        %5968 = vmatpush.msra.mxu0 %v5666
        %5969 = vmatpush.msra.mxu0 %v5662
        %5970 = vmatpush.msra.mxu0 %v5658
        %5971 = vmatpush.msra.mxu0 %v5654
        %5972 = vmatpush.msra.mxu0 %v5650
        %5973 = vmatmul.f32.gmra.mxu0 %v5750
        %v5974 = vpop.f32.mrf.mxu0
        %v5975 = vadd.f32 %v5955, %v5974
        %5976 = vdwg.mxu0
        %5977 = vmatpush.msra.mxu0 0.0
        %5978 = vmatpush.msra.mxu0 0.0
        %5979 = vmatpush.msra.mxu0 0.0
        %5980 = vmatpush.msra.mxu0 0.0
        %5981 = vmatpush.msra.mxu0 0.0
        %5982 = vmatpush.msra.mxu0 0.0
        %5983 = vmatpush.msra.mxu0 0.0
        %5984 = vmatpush.msra.mxu0 0.0
        %5985 = vmatpush.msra.mxu0 %v5742
        %5986 = vmatpush.msra.mxu0 %v5738
        %5987 = vmatpush.msra.mxu0 %v5734
        %5988 = vmatpush.msra.mxu0 %v5730
        %5989 = vmatpush.msra.mxu0 %v5726
        %5990 = vmatpush.msra.mxu0 %v5722
        %5991 = vmatpush.msra.mxu0 %v5718
        %5992 = vmatpush.msra.mxu0 %v5714
        %5993 = vmatmul.f32.gmra.mxu0 %v5755
        %v5994 = vpop.f32.mrf.mxu0
        %v5995 = vadd.f32 %v5975, %v5994
        %5996 = vdwg.mxu0
        %5997 = vmatpush.msra.mxu0 %v5583
        %5998 = vmatpush.msra.mxu0 %v5579
        %5999 = vmatpush.msra.mxu0 %v5575
        %6000 = vmatpush.msra.mxu0 %v5571
        %6001 = vmatpush.msra.mxu0 %v5567
        %6002 = vmatpush.msra.mxu0 %v5563
        %6003 = vmatpush.msra.mxu0 %v5559
        %6004 = vmatpush.msra.mxu0 %v5555
        %6005 = vmatpush.msra.mxu0 %v5551
        %6006 = vmatpush.msra.mxu0 %v5547
        %6007 = vmatpush.msra.mxu0 %v5543
        %6008 = vmatpush.msra.mxu0 %v5539
        %6009 = vmatpush.msra.mxu0 %v5535
        %6010 = vmatpush.msra.mxu0 %v5531
        %6011 = vmatpush.msra.mxu0 %v5527
        %6012 = vmatpush.msra.mxu0 %v5523
        %6013 = vmatmul.f32.gmra.mxu0 %v5748
        %v6014 = vpop.f32.mrf.mxu0
        %v6015 = vadd.f32 0.0, %v6014
        %6016 = vdwg.mxu0
        %6017 = vmatpush.msra.mxu0 %v5647
        %6018 = vmatpush.msra.mxu0 %v5643
        %6019 = vmatpush.msra.mxu0 %v5639
        %6020 = vmatpush.msra.mxu0 %v5635
        %6021 = vmatpush.msra.mxu0 %v5631
        %6022 = vmatpush.msra.mxu0 %v5627
        %6023 = vmatpush.msra.mxu0 %v5623
        %6024 = vmatpush.msra.mxu0 %v5619
        %6025 = vmatpush.msra.mxu0 %v5615
        %6026 = vmatpush.msra.mxu0 %v5611
        %6027 = vmatpush.msra.mxu0 %v5607
        %6028 = vmatpush.msra.mxu0 %v5603
        %6029 = vmatpush.msra.mxu0 %v5599
        %6030 = vmatpush.msra.mxu0 %v5595
        %6031 = vmatpush.msra.mxu0 %v5591
        %6032 = vmatpush.msra.mxu0 %v5587
        %6033 = vmatmul.f32.gmra.mxu0 %v5749
        %v6034 = vpop.f32.mrf.mxu0
        %v6035 = vadd.f32 %v6015, %v6034
        %6036 = vdwg.mxu0
        %6037 = vmatpush.msra.mxu0 %v5711
        %6038 = vmatpush.msra.mxu0 %v5707
        %6039 = vmatpush.msra.mxu0 %v5703
        %6040 = vmatpush.msra.mxu0 %v5699
        %6041 = vmatpush.msra.mxu0 %v5695
        %6042 = vmatpush.msra.mxu0 %v5691
        %6043 = vmatpush.msra.mxu0 %v5687
        %6044 = vmatpush.msra.mxu0 %v5683
        %6045 = vmatpush.msra.mxu0 %v5679
        %6046 = vmatpush.msra.mxu0 %v5675
        %6047 = vmatpush.msra.mxu0 %v5671
        %6048 = vmatpush.msra.mxu0 %v5667
        %6049 = vmatpush.msra.mxu0 %v5663
        %6050 = vmatpush.msra.mxu0 %v5659
        %6051 = vmatpush.msra.mxu0 %v5655
        %6052 = vmatpush.msra.mxu0 %v5651
        %6053 = vmatmul.f32.gmra.mxu0 %v5750
        %v6054 = vpop.f32.mrf.mxu0
        %v6055 = vadd.f32 %v6035, %v6054
        %6056 = vdwg.mxu0
        %6057 = vmatpush.msra.mxu0 0.0
        %6058 = vmatpush.msra.mxu0 0.0
        %6059 = vmatpush.msra.mxu0 0.0
        %6060 = vmatpush.msra.mxu0 0.0
        %6061 = vmatpush.msra.mxu0 0.0
        %6062 = vmatpush.msra.mxu0 0.0
        %6063 = vmatpush.msra.mxu0 0.0
        %6064 = vmatpush.msra.mxu0 0.0
        %6065 = vmatpush.msra.mxu0 %v5743
        %6066 = vmatpush.msra.mxu0 %v5739
        %6067 = vmatpush.msra.mxu0 %v5735
        %6068 = vmatpush.msra.mxu0 %v5731
        %6069 = vmatpush.msra.mxu0 %v5727
        %6070 = vmatpush.msra.mxu0 %v5723
        %6071 = vmatpush.msra.mxu0 %v5719
        %6072 = vmatpush.msra.mxu0 %v5715
        %6073 = vmatmul.f32.gmra.mxu0 %v5755
        %v6074 = vpop.f32.mrf.mxu0
        %v6075 = vadd.f32 %v6055, %v6074
        %6076 = vdwg.mxu0
        %v6077 = vadd.f32 %v5273, %v5835
        %v6078 = vadd.f32 %v5353, %v5915
        %v6079 = vadd.f32 %v5433, %v5995
        %v6080 = vadd.f32 %v5513, %v6075
        %v6082 = vperm.slane %v4401, 0
        %v6083 = vperm.slane %v4401, 1
        %v6084 = vperm.slane %v4401, 3
        %v6085 = vperm.slane %v4401, 4
        %v6090 = vadd.f32 %v6077, %v6082
        %v6091 = vadd.f32 %v6078, %v6083
        %v6092 = vadd.f32 %v6079, %v6084
        %v6093 = vadd.f32 %v6080, %v6085
        %v6094 = vmax.f32 %v6090, 0.0
        %v6095 = vmax.f32 %v6091, 0.0
        %v6096 = vmax.f32 %v6092, 0.0
        %v6097 = vmax.f32 %v6093, 0.0
        %v6098 = vmax.f32 %v6094, %v6096
        %v6099 = vmax.f32 %v6095, %v6097
        %v6102 = vrot.slane %v6098, 1
        %v6103 = vrot.slane %v6099, 1
        %v6106 = vmax.f32 %v6098, %v6102
        %v6107 = vmax.f32 %v6099, %v6103
        %v6110 = vrot.slane %v6107, 7
        %v6111 = vsel %vm1804, %v6106, %v6110
        %vm6113 = vcmp.lt.s32.totalorder %v1811, 256
        %vm6114 = vmand %vm1812, %vm6113
        %6115 = vst.msk [vmem:[#allocation4] sm:$0x3] %vm6114, %v6111
        %6116 = vst [vmem:[#allocation1] sm:$0xff] %v6106
        %6117 = vst [vmem:[#allocation1 + $0x9] sm:$0xff] %v6107
        %s6118 = scalar_lea.vmem [#allocation1], 2
        %v6119 = vld [vmem:[%s6118] ss:$9 sm:$0xff]
        %6121 = vst.msk [vmem:[#allocation4 + $0x2] sm:$0x3] %vm6114, %v6119
        %v6122 = vld [vmem:[#allocation4] sm:$0xf]
        %v6123 = vld [vmem:[#allocation16] sm:$0xff]
        %v6124 = vld [vmem:[#allocation16 + $0x8] sm:$0xff]
        %v6125 = vld [vmem:[#allocation16 + $0x10] sm:$0xff]
        %v6126 = vld [vmem:[#allocation16 + $0x18] sm:$0xff]
        %v6127 = vld [vmem:[#allocation16 + $0x20] sm:$0xff]
        %v6128 = vld [vmem:[#allocation16 + $0x28] sm:$0xff]
        %v6129 = vld [vmem:[#allocation16 + $0x30] sm:$0xff]
        %v6130 = vld [vmem:[#allocation16 + $0x38] sm:$0xff]
        %v6131 = vld [vmem:[#allocation16 + $0x40] sm:$0xff]
        %v6132 = vld [vmem:[#allocation16 + $0x48] sm:$0xff]
        %v6133 = vld [vmem:[#allocation16 + $0x50] sm:$0xff]
        %v6134 = vld [vmem:[#allocation16 + $0x58] sm:$0xff]
        %v6135 = vld [vmem:[#allocation16 + $0x60] sm:$0xff]
        %v6136 = vld [vmem:[#allocation16 + $0x68] sm:$0xff]
        %v6137 = vld [vmem:[#allocation16 + $0x70] sm:$0xff]
        %v6138 = vld [vmem:[#allocation16 + $0x78] sm:$0xff]
        %v6139 = vld [vmem:[#allocation16 + $0x80] sm:$0xff]
        %v6140 = vld [vmem:[#allocation16 + $0x88] sm:$0xff]
        %v6141 = vld [vmem:[#allocation16 + $0x90] sm:$0xff]
        %v6142 = vld [vmem:[#allocation16 + $0x98] sm:$0xff]
        %v6143 = vld [vmem:[#allocation16 + $0xa0] sm:$0xff]
        %v6144 = vld [vmem:[#allocation16 + $0xa8] sm:$0xff]
        %v6145 = vld [vmem:[#allocation16 + $0xb0] sm:$0xff]
        %v6146 = vld [vmem:[#allocation16 + $0xb8] sm:$0xff]
        %v6147 = vld [vmem:[#allocation16 + $0xc0] sm:$0xff]
        %v6148 = vld [vmem:[#allocation16 + $0xc8] sm:$0xff]
        %v6149 = vld [vmem:[#allocation16 + $0xd0] sm:$0xff]
        %v6150 = vld [vmem:[#allocation16 + $0xd8] sm:$0xff]
        %v6151 = vld [vmem:[#allocation16 + $0xe0] sm:$0xff]
        %v6152 = vld [vmem:[#allocation16 + $0xe8] sm:$0xff]
        %v6153 = vld [vmem:[#allocation16 + $0xf0] sm:$0xff]
        %v6154 = vld [vmem:[#allocation16 + $0xf8] sm:$0xff]
        %v6155 = vld [vmem:[#allocation16 + $0x100] sm:$0xff]
        %v6156 = vld [vmem:[#allocation16 + $0x108] sm:$0xff]
        %v6157 = vld [vmem:[#allocation16 + $0x110] sm:$0xff]
        %v6158 = vld [vmem:[#allocation16 + $0x118] sm:$0xff]
        %v6159 = vld [vmem:[#allocation16 + $0x120] sm:$0xff]
        %v6160 = vld [vmem:[#allocation16 + $0x128] sm:$0xff]
        %v6161 = vld [vmem:[#allocation16 + $0x130] sm:$0xff]
        %v6162 = vld [vmem:[#allocation16 + $0x138] sm:$0xff]
        %v6163 = vld [vmem:[#allocation16 + $0x140] sm:$0xff]
        %v6164 = vld [vmem:[#allocation16 + $0x148] sm:$0xff]
        %v6165 = vld [vmem:[#allocation16 + $0x150] sm:$0xff]
        %v6166 = vld [vmem:[#allocation16 + $0x158] sm:$0xff]
        %v6167 = vld [vmem:[#allocation16 + $0x160] sm:$0xff]
        %v6168 = vld [vmem:[#allocation16 + $0x168] sm:$0xff]
        %v6169 = vld [vmem:[#allocation16 + $0x170] sm:$0xff]
        %v6170 = vld [vmem:[#allocation16 + $0x178] sm:$0xff]
        %v6171 = vld [vmem:[#allocation16 + $0x180] sm:$0xff]
        %v6172 = vld [vmem:[#allocation16 + $0x188] sm:$0xff]
        %v6173 = vld [vmem:[#allocation16 + $0x190] sm:$0xff]
        %v6174 = vld [vmem:[#allocation16 + $0x198] sm:$0xff]
        %v6175 = vld [vmem:[#allocation16 + $0x1a0] sm:$0xff]
        %v6176 = vld [vmem:[#allocation16 + $0x1a8] sm:$0xff]
        %v6177 = vld [vmem:[#allocation16 + $0x1b0] sm:$0xff]
        %v6178 = vld [vmem:[#allocation16 + $0x1b8] sm:$0xff]
        %v6179 = vld [vmem:[#allocation16 + $0x1c0] sm:$0xff]
        %v6180 = vld [vmem:[#allocation16 + $0x1c8] sm:$0xff]
        %v6181 = vld [vmem:[#allocation16 + $0x1d0] sm:$0xff]
        %v6182 = vld [vmem:[#allocation16 + $0x1d8] sm:$0xff]
        %v6183 = vld [vmem:[#allocation16 + $0x1e0] sm:$0xff]
        %v6184 = vld [vmem:[#allocation16 + $0x1e8] sm:$0xff]
        %v6185 = vld [vmem:[#allocation16 + $0x1f0] sm:$0xff]
        %v6186 = vld [vmem:[#allocation16 + $0x1f8] sm:$0xff]
        %v6187 = vld [vmem:[#allocation16 + $0x200] sm:$0xff]
        %v6188 = vld [vmem:[#allocation16 + $0x208] sm:$0xff]
        %v6189 = vld [vmem:[#allocation16 + $0x210] sm:$0xff]
        %v6190 = vld [vmem:[#allocation16 + $0x218] sm:$0xff]
        %v6191 = vld [vmem:[#allocation16 + $0x220] sm:$0xff]
        %v6192 = vld [vmem:[#allocation16 + $0x228] sm:$0xff]
        %v6193 = vld [vmem:[#allocation16 + $0x230] sm:$0xff]
        %v6194 = vld [vmem:[#allocation16 + $0x238] sm:$0xff]
        %v6195 = vld [vmem:[#allocation16 + $0x240] sm:$0xff]
        %v6196 = vld [vmem:[#allocation16 + $0x248] sm:$0xff]
        %v6197 = vld [vmem:[#allocation16 + $0x250] sm:$0xff]
        %v6198 = vld [vmem:[#allocation16 + $0x258] sm:$0xff]
        %v6199 = vld [vmem:[#allocation16 + $0x260] sm:$0xff]
        %v6200 = vld [vmem:[#allocation16 + $0x268] sm:$0xff]
        %v6201 = vld [vmem:[#allocation16 + $0x270] sm:$0xff]
        %v6202 = vld [vmem:[#allocation16 + $0x278] sm:$0xff]
        %v6203 = vld [vmem:[#allocation16 + $0x280] sm:$0xff]
        %v6204 = vld [vmem:[#allocation16 + $0x288] sm:$0xff]
        %v6205 = vld [vmem:[#allocation16 + $0x290] sm:$0xff]
        %v6206 = vld [vmem:[#allocation16 + $0x298] sm:$0xff]
        %v6207 = vld [vmem:[#allocation16 + $0x2a0] sm:$0xff]
        %v6208 = vld [vmem:[#allocation16 + $0x2a8] sm:$0xff]
        %v6209 = vld [vmem:[#allocation16 + $0x2b0] sm:$0xff]
        %v6210 = vld [vmem:[#allocation16 + $0x2b8] sm:$0xff]
        %v6211 = vld [vmem:[#allocation16 + $0x2c0] sm:$0xff]
        %v6212 = vld [vmem:[#allocation16 + $0x2c8] sm:$0xff]
        %v6213 = vld [vmem:[#allocation16 + $0x2d0] sm:$0xff]
        %v6214 = vld [vmem:[#allocation16 + $0x2d8] sm:$0xff]
        %v6215 = vld [vmem:[#allocation16 + $0x2e0] sm:$0xff]
        %v6216 = vld [vmem:[#allocation16 + $0x2e8] sm:$0xff]
        %v6217 = vld [vmem:[#allocation16 + $0x2f0] sm:$0xff]
        %v6218 = vld [vmem:[#allocation16 + $0x2f8] sm:$0xff]
        %v6219 = vld [vmem:[#allocation16 + $0x300] sm:$0xff]
        %v6220 = vld [vmem:[#allocation16 + $0x308] sm:$0xff]
        %v6221 = vld [vmem:[#allocation16 + $0x310] sm:$0xff]
        %v6222 = vld [vmem:[#allocation16 + $0x318] sm:$0xff]
        %v6223 = vld [vmem:[#allocation16 + $0x320] sm:$0xff]
        %v6224 = vld [vmem:[#allocation16 + $0x328] sm:$0xff]
        %v6225 = vld [vmem:[#allocation16 + $0x330] sm:$0xff]
        %v6226 = vld [vmem:[#allocation16 + $0x338] sm:$0xff]
        %v6227 = vld [vmem:[#allocation16 + $0x340] sm:$0xff]
        %v6228 = vld [vmem:[#allocation16 + $0x348] sm:$0xff]
        %v6229 = vld [vmem:[#allocation16 + $0x350] sm:$0xff]
        %v6230 = vld [vmem:[#allocation16 + $0x358] sm:$0xff]
        %v6231 = vld [vmem:[#allocation16 + $0x360] sm:$0xff]
        %v6232 = vld [vmem:[#allocation16 + $0x368] sm:$0xff]
        %v6233 = vld [vmem:[#allocation16 + $0x370] sm:$0xff]
        %v6234 = vld [vmem:[#allocation16 + $0x378] sm:$0xff]
        %v6235 = vld [vmem:[#allocation16 + $0x380] sm:$0xff]
        %v6236 = vld [vmem:[#allocation16 + $0x388] sm:$0xff]
        %v6237 = vld [vmem:[#allocation16 + $0x390] sm:$0xff]
        %v6238 = vld [vmem:[#allocation16 + $0x398] sm:$0xff]
        %v6239 = vld [vmem:[#allocation16 + $0x3a0] sm:$0xff]
        %v6240 = vld [vmem:[#allocation16 + $0x3a8] sm:$0xff]
        %v6241 = vld [vmem:[#allocation16 + $0x3b0] sm:$0xff]
        %v6242 = vld [vmem:[#allocation16 + $0x3b8] sm:$0xff]
        %v6243 = vld [vmem:[#allocation16 + $0x3c0] sm:$0xff]
        %v6244 = vld [vmem:[#allocation16 + $0x3c8] sm:$0xff]
        %v6245 = vld [vmem:[#allocation16 + $0x3d0] sm:$0xff]
        %v6246 = vld [vmem:[#allocation16 + $0x3d8] sm:$0xff]
        %v6247 = vld [vmem:[#allocation16 + $0x3e0] sm:$0xff]
        %v6248 = vld [vmem:[#allocation16 + $0x3e8] sm:$0xff]
        %v6249 = vld [vmem:[#allocation16 + $0x3f0] sm:$0xff]
        %v6250 = vld [vmem:[#allocation16 + $0x3f8] sm:$0xff]
        %v6251 = vld [vmem:[#allocation17] sm:$0x3]
        %v6253 = vperm.slane %v6122, 0
        %v6254 = vperm.slane %v6122, 1
        %v6255 = vperm.slane %v6122, 2
        %v6256 = vperm.slane %v6122, 3
        %v6262 = vperm.slane %v6251, 0
        %v6263 = vperm.slane %v6251, 1
        %6266 = vmatpush.msra.mxu0 %v6153
        %6267 = vmatpush.msra.mxu0 %v6151
        %6268 = vmatpush.msra.mxu0 %v6149
        %6269 = vmatpush.msra.mxu0 %v6147
        %6270 = vmatpush.msra.mxu0 %v6145
        %6271 = vmatpush.msra.mxu0 %v6143
        %6272 = vmatpush.msra.mxu0 %v6141
        %6273 = vmatpush.msra.mxu0 %v6139
        %6274 = vmatpush.msra.mxu0 %v6137
        %6275 = vmatpush.msra.mxu0 %v6135
        %6276 = vmatpush.msra.mxu0 %v6133
        %6277 = vmatpush.msra.mxu0 %v6131
        %6278 = vmatpush.msra.mxu0 %v6129
        %6279 = vmatpush.msra.mxu0 %v6127
        %6280 = vmatpush.msra.mxu0 %v6125
        %6281 = vmatpush.msra.mxu0 %v6123
        %6282 = vmatmul.f32.gmra.mxu0 %v6253
        %v6283 = vpop.f32.mrf.mxu0
        %v6284 = vadd.f32 %v6262, %v6283
        %6285 = vdwg.mxu0
        %6286 = vmatpush.msra.mxu0 %v6185
        %6287 = vmatpush.msra.mxu0 %v6183
        %6288 = vmatpush.msra.mxu0 %v6181
        %6289 = vmatpush.msra.mxu0 %v6179
        %6290 = vmatpush.msra.mxu0 %v6177
        %6291 = vmatpush.msra.mxu0 %v6175
        %6292 = vmatpush.msra.mxu0 %v6173
        %6293 = vmatpush.msra.mxu0 %v6171
        %6294 = vmatpush.msra.mxu0 %v6169
        %6295 = vmatpush.msra.mxu0 %v6167
        %6296 = vmatpush.msra.mxu0 %v6165
        %6297 = vmatpush.msra.mxu0 %v6163
        %6298 = vmatpush.msra.mxu0 %v6161
        %6299 = vmatpush.msra.mxu0 %v6159
        %6300 = vmatpush.msra.mxu0 %v6157
        %6301 = vmatpush.msra.mxu0 %v6155
        %6302 = vmatmul.f32.gmra.mxu0 %v6254
        %v6303 = vpop.f32.mrf.mxu0
        %v6304 = vadd.f32 %v6284, %v6303
        %6305 = vdwg.mxu0
        %6306 = vmatpush.msra.mxu0 %v6217
        %6307 = vmatpush.msra.mxu0 %v6215
        %6308 = vmatpush.msra.mxu0 %v6213
        %6309 = vmatpush.msra.mxu0 %v6211
        %6310 = vmatpush.msra.mxu0 %v6209
        %6311 = vmatpush.msra.mxu0 %v6207
        %6312 = vmatpush.msra.mxu0 %v6205
        %6313 = vmatpush.msra.mxu0 %v6203
        %6314 = vmatpush.msra.mxu0 %v6201
        %6315 = vmatpush.msra.mxu0 %v6199
        %6316 = vmatpush.msra.mxu0 %v6197
        %6317 = vmatpush.msra.mxu0 %v6195
        %6318 = vmatpush.msra.mxu0 %v6193
        %6319 = vmatpush.msra.mxu0 %v6191
        %6320 = vmatpush.msra.mxu0 %v6189
        %6321 = vmatpush.msra.mxu0 %v6187
        %6322 = vmatmul.f32.gmra.mxu0 %v6255
        %v6323 = vpop.f32.mrf.mxu0
        %v6324 = vadd.f32 %v6304, %v6323
        %6325 = vdwg.mxu0
        %6326 = vmatpush.msra.mxu0 %v6249
        %6327 = vmatpush.msra.mxu0 %v6247
        %6328 = vmatpush.msra.mxu0 %v6245
        %6329 = vmatpush.msra.mxu0 %v6243
        %6330 = vmatpush.msra.mxu0 %v6241
        %6331 = vmatpush.msra.mxu0 %v6239
        %6332 = vmatpush.msra.mxu0 %v6237
        %6333 = vmatpush.msra.mxu0 %v6235
        %6334 = vmatpush.msra.mxu0 %v6233
        %6335 = vmatpush.msra.mxu0 %v6231
        %6336 = vmatpush.msra.mxu0 %v6229
        %6337 = vmatpush.msra.mxu0 %v6227
        %6338 = vmatpush.msra.mxu0 %v6225
        %6339 = vmatpush.msra.mxu0 %v6223
        %6340 = vmatpush.msra.mxu0 %v6221
        %6341 = vmatpush.msra.mxu0 %v6219
        %6342 = vmatmul.f32.gmra.mxu0 %v6256
        %v6343 = vpop.f32.mrf.mxu0
        %v6344 = vadd.f32 %v6324, %v6343
        %6345 = vdwg.mxu0
        %6346 = vmatpush.msra.mxu0 %v6154
        %6347 = vmatpush.msra.mxu0 %v6152
        %6348 = vmatpush.msra.mxu0 %v6150
        %6349 = vmatpush.msra.mxu0 %v6148
        %6350 = vmatpush.msra.mxu0 %v6146
        %6351 = vmatpush.msra.mxu0 %v6144
        %6352 = vmatpush.msra.mxu0 %v6142
        %6353 = vmatpush.msra.mxu0 %v6140
        %6354 = vmatpush.msra.mxu0 %v6138
        %6355 = vmatpush.msra.mxu0 %v6136
        %6356 = vmatpush.msra.mxu0 %v6134
        %6357 = vmatpush.msra.mxu0 %v6132
        %6358 = vmatpush.msra.mxu0 %v6130
        %6359 = vmatpush.msra.mxu0 %v6128
        %6360 = vmatpush.msra.mxu0 %v6126
        %6361 = vmatpush.msra.mxu0 %v6124
        %6362 = vmatmul.f32.gmra.mxu0 %v6253
        %v6363 = vpop.f32.mrf.mxu0
        %v6364 = vadd.f32 %v6263, %v6363
        %6365 = vdwg.mxu0
        %6366 = vmatpush.msra.mxu0 %v6186
        %6367 = vmatpush.msra.mxu0 %v6184
        %6368 = vmatpush.msra.mxu0 %v6182
        %6369 = vmatpush.msra.mxu0 %v6180
        %6370 = vmatpush.msra.mxu0 %v6178
        %6371 = vmatpush.msra.mxu0 %v6176
        %6372 = vmatpush.msra.mxu0 %v6174
        %6373 = vmatpush.msra.mxu0 %v6172
        %6374 = vmatpush.msra.mxu0 %v6170
        %6375 = vmatpush.msra.mxu0 %v6168
        %6376 = vmatpush.msra.mxu0 %v6166
        %6377 = vmatpush.msra.mxu0 %v6164
        %6378 = vmatpush.msra.mxu0 %v6162
        %6379 = vmatpush.msra.mxu0 %v6160
        %6380 = vmatpush.msra.mxu0 %v6158
        %6381 = vmatpush.msra.mxu0 %v6156
        %6382 = vmatmul.f32.gmra.mxu0 %v6254
        %v6383 = vpop.f32.mrf.mxu0
        %v6384 = vadd.f32 %v6364, %v6383
        %6385 = vdwg.mxu0
        %6386 = vmatpush.msra.mxu0 %v6218
        %6387 = vmatpush.msra.mxu0 %v6216
        %6388 = vmatpush.msra.mxu0 %v6214
        %6389 = vmatpush.msra.mxu0 %v6212
        %6390 = vmatpush.msra.mxu0 %v6210
        %6391 = vmatpush.msra.mxu0 %v6208
        %6392 = vmatpush.msra.mxu0 %v6206
        %6393 = vmatpush.msra.mxu0 %v6204
        %6394 = vmatpush.msra.mxu0 %v6202
        %6395 = vmatpush.msra.mxu0 %v6200
        %6396 = vmatpush.msra.mxu0 %v6198
        %6397 = vmatpush.msra.mxu0 %v6196
        %6398 = vmatpush.msra.mxu0 %v6194
        %6399 = vmatpush.msra.mxu0 %v6192
        %6400 = vmatpush.msra.mxu0 %v6190
        %6401 = vmatpush.msra.mxu0 %v6188
        %6402 = vmatmul.f32.gmra.mxu0 %v6255
        %v6403 = vpop.f32.mrf.mxu0
        %v6404 = vadd.f32 %v6384, %v6403
        %6405 = vdwg.mxu0
        %6406 = vmatpush.msra.mxu0 %v6250
        %6407 = vmatpush.msra.mxu0 %v6248
        %6408 = vmatpush.msra.mxu0 %v6246
        %6409 = vmatpush.msra.mxu0 %v6244
        %6410 = vmatpush.msra.mxu0 %v6242
        %6411 = vmatpush.msra.mxu0 %v6240
        %6412 = vmatpush.msra.mxu0 %v6238
        %6413 = vmatpush.msra.mxu0 %v6236
        %6414 = vmatpush.msra.mxu0 %v6234
        %6415 = vmatpush.msra.mxu0 %v6232
        %6416 = vmatpush.msra.mxu0 %v6230
        %6417 = vmatpush.msra.mxu0 %v6228
        %6418 = vmatpush.msra.mxu0 %v6226
        %6419 = vmatpush.msra.mxu0 %v6224
        %6420 = vmatpush.msra.mxu0 %v6222
        %6421 = vmatpush.msra.mxu0 %v6220
        %6422 = vmatmul.f32.gmra.mxu0 %v6256
        %v6423 = vpop.f32.mrf.mxu0
        %v6424 = vadd.f32 %v6404, %v6423
        %6425 = vdwg.mxu0
        %v6426 = vmax.f32 %v6344, 0.0
        %v6427 = vmax.f32 %v6424, 0.0
        %v6428 = vld [vmem:[%s9] sm:$0xff]
        %v6429 = vld [vmem:[%s9 + $0x8] sm:$0xff]
        %v6430 = vld [vmem:[%s9 + $0x10] sm:$0xff]
        %v6431 = vld [vmem:[%s9 + $0x18] sm:$0xff]
        %v6432 = vld [vmem:[%s9 + $0x20] sm:$0xff]
        %v6433 = vld [vmem:[%s9 + $0x28] sm:$0xff]
        %v6434 = vld [vmem:[%s9 + $0x30] sm:$0xff]
        %v6435 = vld [vmem:[%s9 + $0x38] sm:$0xff]
        %v6436 = vld [vmem:[%s9 + $0x40] sm:$0xff]
        %v6437 = vld [vmem:[%s9 + $0x48] sm:$0xff]
        %v6438 = vld [vmem:[%s9 + $0x50] sm:$0xff]
        %v6439 = vld [vmem:[%s9 + $0x58] sm:$0xff]
        %v6440 = vld [vmem:[%s9 + $0x60] sm:$0xff]
        %v6441 = vld [vmem:[%s9 + $0x68] sm:$0xff]
        %v6442 = vld [vmem:[%s9 + $0x70] sm:$0xff]
        %v6443 = vld [vmem:[%s9 + $0x78] sm:$0xff]
        %v6444 = vld [vmem:[%s9 + $0x80] sm:$0xff]
        %v6445 = vld [vmem:[%s9 + $0x88] sm:$0xff]
        %v6446 = vld [vmem:[%s9 + $0x90] sm:$0xff]
        %v6447 = vld [vmem:[%s9 + $0x98] sm:$0xff]
        %v6448 = vld [vmem:[%s9 + $0xa0] sm:$0xff]
        %v6449 = vld [vmem:[%s9 + $0xa8] sm:$0xff]
        %v6450 = vld [vmem:[%s9 + $0xb0] sm:$0xff]
        %v6451 = vld [vmem:[%s9 + $0xb8] sm:$0xff]
        %v6452 = vld [vmem:[%s9 + $0xc0] sm:$0xff]
        %v6453 = vld [vmem:[%s9 + $0xc8] sm:$0xff]
        %v6454 = vld [vmem:[%s9 + $0xd0] sm:$0xff]
        %v6455 = vld [vmem:[%s9 + $0xd8] sm:$0xff]
        %v6456 = vld [vmem:[%s9 + $0xe0] sm:$0xff]
        %v6457 = vld [vmem:[%s9 + $0xe8] sm:$0xff]
        %v6458 = vld [vmem:[%s9 + $0xf0] sm:$0xff]
        %v6459 = vld [vmem:[%s9 + $0xf8] sm:$0xff]
        %v6460 = vld [vmem:[#allocation19] sm:$0x1]
        %6461 = vmatpush.msra.mxu0 %v6443
        %6462 = vmatpush.msra.mxu0 %v6442
        %6463 = vmatpush.msra.mxu0 %v6441
        %6464 = vmatpush.msra.mxu0 %v6440
        %6465 = vmatpush.msra.mxu0 %v6439
        %6466 = vmatpush.msra.mxu0 %v6438
        %6467 = vmatpush.msra.mxu0 %v6437
        %6468 = vmatpush.msra.mxu0 %v6436
        %6469 = vmatpush.msra.mxu0 %v6435
        %6470 = vmatpush.msra.mxu0 %v6434
        %6471 = vmatpush.msra.mxu0 %v6433
        %6472 = vmatpush.msra.mxu0 %v6432
        %6473 = vmatpush.msra.mxu0 %v6431
        %6474 = vmatpush.msra.mxu0 %v6430
        %6475 = vmatpush.msra.mxu0 %v6429
        %6476 = vmatpush.msra.mxu0 %v6428
        %6477 = vmatmul.f32.gmra.mxu0 %v6426
        %v6478 = vpop.f32.mrf.mxu0
        %v6479 = vadd.f32 %v6460, %v6478
        %6480 = vdwg.mxu0
        %6481 = vmatpush.msra.mxu0 %v6459
        %6482 = vmatpush.msra.mxu0 %v6458
        %6483 = vmatpush.msra.mxu0 %v6457
        %6484 = vmatpush.msra.mxu0 %v6456
        %6485 = vmatpush.msra.mxu0 %v6455
        %6486 = vmatpush.msra.mxu0 %v6454
        %6487 = vmatpush.msra.mxu0 %v6453
        %6488 = vmatpush.msra.mxu0 %v6452
        %6489 = vmatpush.msra.mxu0 %v6451
        %6490 = vmatpush.msra.mxu0 %v6450
        %6491 = vmatpush.msra.mxu0 %v6449
        %6492 = vmatpush.msra.mxu0 %v6448
        %6493 = vmatpush.msra.mxu0 %v6447
        %6494 = vmatpush.msra.mxu0 %v6446
        %6495 = vmatpush.msra.mxu0 %v6445
        %6496 = vmatpush.msra.mxu0 %v6444
        %6497 = vmatmul.f32.gmra.mxu0 %v6427
        %v6498 = vpop.f32.mrf.mxu0
        %v6499 = vadd.f32 %v6479, %v6498
        %6500 = vdwg.mxu0
        %vm6501 = vcmask 73728
        %6502 = vst.msk [vmem:[%s517] sm:$0x1] %vm6501, %v6499
        %s6503 = sand.u32 %s274, 1
        %s6504 = scalar_lea.sflag [#allocation7], %s6503
        %s6505 = sand.u32 %s274, 1
        %s6506 = scalar_lea.vmem [#allocation20], %s6505
        // Predicated region
        $region101: #{forward.1} parent=63 // pred_check
          %p6507 = pneg %p284
        $region102: #{forward.1} parent=63 // pred_check_branch
          %6509 = sbr.rel (%p6507) target = $region104
        $region103: #{forward.1} parent=63 // pred_region
          %6511 = vsyncadd %s6504, 0
          %s6512 = scalar_lea.hbm %s11, %s30
          %s6514 = sshll.u32 %s6506, 4
          %s6515 = int_to_ptr.vmem [resolvable:$true] %s6514
          %s6516 = sshll.u32 %s6512, 4
          %s6517 = int_to_ptr.hbm [resolvable:$true] %s6516
          %6519 = dma.vmem_to_hbm [thread:$0]  %s6515, 16, %s6517, %s6504
        $region104: #{forward.1} parent=63 // pred_fallthru
          _
      $region64: #{forward.1} parent=5 // pred_fallthru
        _
      %p6520 = scmp.le.s32.totalorder 2, %s25
      // Predicated region
      $region105: #{forward.1} parent=5 // pred_check
        %p6521 = pneg %p6520
      $region106: #{forward.1} parent=5 // pred_check_branch
        %6523 = sbr.rel (%p6521) target = $region108
      $region107: #{forward.1} parent=5 // pred_region
        %s6524 = ssub.s32 %s25, 2
        // Predicated region
        $region109: #{forward.1} parent=107 // pred_check
          %p6525 = pneg %p290
        $region110: #{forward.1} parent=107 // pred_check_branch
          %6527 = sbr.rel (%p6525) target = $region112
        $region111: #{forward.1} parent=107 // pred_region
          %s6528 = sand.u32 %s275, 1
          %s6529 = scalar_lea.sflag [#allocation7], %s6528
          %s6530 = sand.u32 %s275, 1
          %s6531 = scalar_lea.vmem [#allocation20], %s6530
          %6533 = dma.done %s6529, 16
        $region112: #{forward.1} parent=107 // pred_fallthru
          _
      $region108: #{forward.1} parent=5 // pred_fallthru
        _
    $region6: #{forward.1} parent=1 // loop_footer
      %s29 = sadd.s32 1, %s25
    $region7: #{forward.1} parent=1 // loop_footer_branch
      %24 = sbr.rel target = $region3
    $region8: #{forward.1} parent=1 // loop_exit
      _
    %6534 = vsyncpa [#allocation6], 1
    %s6535 = scalar_lea.sflag [#allocation6], 1
    %6536 = vsyncpa %s6535, 1
    %6537 = vsyncpa [#allocation9], 1
    %6538 = vsyncpa [#allocation12], 1
    %6539 = vsyncpa [#allocation15], 1
    %6540 = vsyncpa [#allocation18], 1
    %6541 = vsyncpa [#allocation7], 1
    %s6542 = scalar_lea.sflag [#allocation7], 1
    %6543 = vsyncpa %s6542, 1

</llo_original>
